<compile_context>
chip_gen: v7x
topology: tpu7x:2x2x1
jax: 0.10.0
libtpu: 0.0.40
codegen_flags: <defaults>
</compile_context>

<pallas_src>
import functools
import math

import jax
import jax.numpy as jnp
from jax import lax
from jax.experimental import pallas as pl
from jax.experimental.pallas import tpu as pltpu


# ---------------------------------------------------------------------------
# In-kernel math helpers
# ---------------------------------------------------------------------------
def _erf(x):
    """float32 erf (Abramowitz & Stegun 7.1.26, |err| ~ 1.5e-7 + approx-recip noise).

    Built from exp / mul / add / select plus an EUP reciprocal so it lowers cleanly in
    Mosaic and keeps the VALU free for the conv FMAs.
    # TODO(synk): switch to lax.erf if a native Mosaic/EUP lowering is guaranteed.
    """
    a1, a2, a3, a4, a5 = 0.254829592, -0.284496736, 1.421413741, -1.453152027, 1.061405429
    p = 0.3275911
    ax = jnp.abs(x)
    t = pl.reciprocal(1.0 + p * ax, approx=True)           # EUP, not VALU
    poly = ((((a5 * t + a4) * t + a3) * t + a2) * t + a1) * t
    e = 1.0 - poly * jnp.exp(-ax * ax)                      # EUP exp
    return jnp.where(x < 0.0, -e, e)


def _gelu_exact(x):
    """erf-based GELU matching F.gelu(approximate='none')."""
    return 0.5 * x * (1.0 + _erf(x * 0.7071067811865476))


# ---------------------------------------------------------------------------
# Fused MSFN kernel: project_in -> 3 dilated depthwise convs -> gated product -> project_out
# ---------------------------------------------------------------------------
def _msfn_kernel(pos_ref, x_ref, w_in_ref, w1_ref, w2_ref, w3_ref, w_out_ref, o_ref,
                 *, H, W):
    """Fused MSFN for one batch element, channel-major layout.

    pos_ref   : (2, HW) int32    row 0 = flattened index p, row 1 = p % W (host-built)
    x_ref     : (1, C, HW)       NCHW input with H,W flattened -> lane-dense
    w_in_ref  : (3, hp, C) bf16  project_in weight, one (hp, C) slab per branch
    w{1,2,3}  : (hp, 9) f32      depthwise 3x3 weights, tap index = kh*3 + kw
    w_out_ref : (C, hp) bf16     project_out weight (padded hp columns are zero)
    o_ref     : (1, C, HW)
    """
    HW = H * W
    x16 = x_ref[0].astype(jnp.bfloat16)                     # (C, HW)

    pos = pos_ref[...]
    p_idx = pos[0:1, :]                                      # (1, HW) flattened position
    w_idx = pos[1:2, :]                                      # (1, HW) column (W) position

    def shifted_tap(slab, dh, dw):
        # slab[c, p] -> slab[c, p + dh*W + dw], zero outside the H x W image.
        s = dh * W + dw
        t = slab if s == 0 else pltpu.roll(slab, (-s) % HW, axis=1)   # XLU lane rotate
        m = None

        def _and(a, b):
            return b if a is None else a & b

        if dh > 0:
            m = _and(m, p_idx < (H - dh) * W)
        elif dh < 0:
            m = _and(m, p_idx >= (-dh) * W)
        if dw > 0:
            m = _and(m, w_idx < (W - dw))
        elif dw < 0:
            m = _and(m, w_idx >= (-dw))
        return t if m is None else jnp.where(m, t, 0.0)

    def branch(idx, w_dw_ref, dil):
        # project_in slice for this branch: (hp, C) x (C, HW) -> (hp, HW), bf16 MXU, f32 acc.
        yb = jnp.dot(w_in_ref[idx], x16, preferred_element_type=jnp.float32)
        wdw = w_dw_ref[...]                                  # (hp, 9) f32
        acc = None
        for kh in range(3):
            for kw in range(3):
                t = shifted_tap(yb, (kh - 1) * dil, (kw - 1) * dil)
                c = t * wdw[:, kh * 3 + kw:kh * 3 + kw + 1]  # per-channel (sublane) scale
                acc = c if acc is None else acc + c
        return acc                                           # (hp, HW) f32

    # Incremental gating: only one hp-wide slab live at a time.
    g = _gelu_exact(branch(0, w1_ref, 1))                    # dwconv1 (3x3x3 @ depth 1)
    g = g * branch(1, w2_ref, 2)                             # dwconv2, dilation 2
    g = g * branch(2, w3_ref, 3)                             # dwconv3, dilation 3

    out = jnp.dot(w_out_ref[...], g.astype(jnp.bfloat16),
                  preferred_element_type=jnp.float32)        # (C, HW)
    o_ref[0] = out.astype(o_ref.dtype)


# ---------------------------------------------------------------------------
# Wrapper
# ---------------------------------------------------------------------------
def msfn_forward(x_nchw, kparams):
    B, C, H, W = x_nchw.shape
    HW = H * W
    hp = kparams["w_in"].shape[1]

    # Free reshape of contiguous dims only -- no transposes around the kernel.
    x = x_nchw.reshape(B, C, HW)

    # Host-built index rows for the conv boundary masks
    # (avoids vector integer div/mod inside the kernel).
    p_idx = jnp.arange(HW, dtype=jnp.int32)
    pos = jnp.stack([p_idx, p_idx % W], axis=0)              # (2, HW)

    flops = B * HW * hp * (2 * 3 * C + 2 * C + 2 * 27 + 20)
    transcendentals = 2 * B * HW * hp                        # exp + reciprocal per element
    bytes_accessed = (2 * B * C * HW * 4 + pos.size * 4
                      + sum(int(v.size) * v.dtype.itemsize for v in kparams.values()))
    cost = pl.CostEstimate(flops=int(flops), transcendentals=int(transcendentals),
                           bytes_accessed=int(bytes_accessed))

    out = pl.pallas_call(
        functools.partial(_msfn_kernel, H=H, W=W),
        out_shape=jax.ShapeDtypeStruct((B, C, HW), jnp.float32),
        grid=(B,),
        in_specs=[
            pl.BlockSpec((2, HW), lambda b: (0, 0)),         # pos
            pl.BlockSpec((1, C, HW), lambda b: (b, 0, 0)),   # x
            pl.BlockSpec((3, hp, C), lambda b: (0, 0, 0)),   # w_in (bf16)
            pl.BlockSpec((hp, 9), lambda b: (0, 0)),         # dwconv1 weight
            pl.BlockSpec((hp, 9), lambda b: (0, 0)),         # dwconv2 weight
            pl.BlockSpec((hp, 9), lambda b: (0, 0)),         # dwconv3 weight
            pl.BlockSpec((C, hp), lambda b: (0, 0)),         # w_out (bf16)
        ],
        out_specs=pl.BlockSpec((1, C, HW), lambda b: (b, 0, 0)),
        compiler_params=pltpu.CompilerParams(
            dimension_semantics=("parallel",),               # v7x: one batch per TensorCore
            vmem_limit_bytes=64 * 1024 * 1024),
        cost_estimate=cost,
    )(pos, x, kparams["w_in"], kparams["w1"], kparams["w2"], kparams["w3"], kparams["w_out"])

    return out.reshape(B, C, H, W)


# ---------------------------------------------------------------------------
# Parameters: natural (reference) layout + kernel repacking
# ---------------------------------------------------------------------------
def init_msfn_params(key, dim, hidden):
    """Natural-layout parameters, all f32, all convs bias=False (deterministic)."""
    k_in, k1, k2, k3, k_out = jax.random.split(key, 5)
    w_in = jax.random.normal(k_in, (3 * hidden, dim), jnp.float32) / math.sqrt(dim)
    # dwconv1's weight below is the centre depth slice of the (hidden,1,3,3,3) Conv3d kernel:
    # with depth==1 and padding 1 the kd=0 / kd=2 slices only ever multiply zero padding.
    w1 = jax.random.normal(k1, (hidden, 3, 3), jnp.float32) / 3.0
    w2 = jax.random.normal(k2, (hidden, 3, 3), jnp.float32) / 3.0
    w3 = jax.random.normal(k3, (hidden, 3, 3), jnp.float32) / 3.0
    w_out = jax.random.normal(k_out, (dim, hidden), jnp.float32) / math.sqrt(hidden)
    return dict(w_in=w_in, w1=w1, w2=w2, w3=w3, w_out=w_out)


def pack_params(nat, dim, hidden, hp):
    """Repack natural params into the kernel's channel-major, hp-padded layout."""
    w_in_p = jnp.zeros((3, hp, dim), jnp.float32)
    for b in range(3):
        w_in_p = w_in_p.at[b, :hidden, :].set(nat["w_in"][b * hidden:(b + 1) * hidden, :])

    def pack_dw(w):                                          # (hidden,3,3) -> (hp, 9)
        return jnp.pad(w.reshape(hidden, 9), ((0, hp - hidden), (0, 0)))

    w_out_p = jnp.pad(nat["w_out"], ((0, 0), (0, hp - hidden)))
    return dict(
        w_in=w_in_p.astype(jnp.bfloat16),
        w1=pack_dw(nat["w1"]), w2=pack_dw(nat["w2"]), w3=pack_dw(nat["w3"]),
        w_out=w_out_p.astype(jnp.bfloat16),
    )


# ---------------------------------------------------------------------------
# Pure-JAX (XLA) reference of the PyTorch module, f32 throughout
# ---------------------------------------------------------------------------
def msfn_reference(x, nat, hidden):
    y = jnp.einsum('oc,bchw->bohw', nat["w_in"], x)
    x1, x2, x3 = jnp.split(y, 3, axis=1)

    def dwconv(xb, w, dil):
        return lax.conv_general_dilated(
            xb, w.reshape(hidden, 1, 3, 3), window_strides=(1, 1),
            padding=((dil, dil), (dil, dil)), rhs_dilation=(dil, dil),
            dimension_numbers=('NCHW', 'OIHW', 'NCHW'), feature_group_count=hidden)

    g = jax.nn.gelu(dwconv(x1, nat["w1"], 1), approximate=False)
    g = g * dwconv(x2, nat["w2"], 2) * dwconv(x3, nat["w3"], 3)
    return jnp.einsum('oc,bchw->bohw', nat["w_out"], g)


# ---------------------------------------------------------------------------
# Main
# ---------------------------------------------------------------------------
if __name__ == "__main__":
    dim = 32
    ffn_expansion_factor = 2.66
    hidden = int(dim * ffn_expansion_factor)                 # 85
    hp = ((hidden + 127) // 128) * 128                       # 128 (padded branch width)

    B, H, W = 2, 16, 16
    root = jax.random.PRNGKey(0)
    kx, kp = jax.random.split(root)
    x = jax.random.normal(kx, (B, dim, H, W), jnp.float32)   # NCHW, matching PyTorch

    nat = init_msfn_params(kp, dim, hidden)
    kparams = pack_params(nat, dim, hidden, hp)

    fwd = jax.jit(msfn_forward)
    out = fwd(x, kparams)
    jax.block_until_ready(out)

    assert out.shape == (B, dim, H, W), out.shape
    assert bool(jnp.all(jnp.isfinite(out)))

    # Semantic check vs. the f32 reference (bf16 MXU projections + approx-reciprocal GELU
    # give at most a couple of percent of the output's max magnitude).
    ref = msfn_reference(x, nat, hidden)
    err = float(jnp.max(jnp.abs(out - ref)) / (jnp.max(jnp.abs(ref)) + 1e-6))
    assert err < 0.05, f"kernel/reference mismatch: normalized max err = {err}"

    print("KERNEL_OK")
</pallas_src>

<mosaic_0001>
module attributes {stable_mosaic.version = 11 : i64} {
  func.func @_msfn_kernel(%arg0: i32, %arg1: memref<2x256xi32, #tpu.memory_space<vmem>>, %arg2: memref<1x32x256xf32, #tpu.memory_space<vmem>>, %arg3: memref<3x128x32xbf16, #tpu.memory_space<vmem>>, %arg4: memref<128x9xf32, #tpu.memory_space<vmem>>, %arg5: memref<128x9xf32, #tpu.memory_space<vmem>>, %arg6: memref<128x9xf32, #tpu.memory_space<vmem>>, %arg7: memref<32x128xbf16, #tpu.memory_space<vmem>>, %arg8: memref<1x32x256xf32, #tpu.memory_space<vmem>>) attributes {dimension_semantics = [#tpu.dimension_semantics<parallel>], iteration_bounds = array<i64: 2>, scalar_prefetch = 0 : i64, scratch_operands = 0 : i64, tpu.core_type = #tpu.core_type<tc>, window_params = [{pipeline_mode = #tpu.pipeline_mode<synchronous>, transform_indices = @transform_0, window_bounds = array<i64: 2, 256>}, {transform_indices = @transform_1, window_bounds = array<i64: 1, 32, 256>}, {pipeline_mode = #tpu.pipeline_mode<synchronous>, transform_indices = @transform_2, window_bounds = array<i64: 3, 128, 32>}, {pipeline_mode = #tpu.pipeline_mode<synchronous>, transform_indices = @transform_3, window_bounds = array<i64: 128, 9>}, {pipeline_mode = #tpu.pipeline_mode<synchronous>, transform_indices = @transform_4, window_bounds = array<i64: 128, 9>}, {pipeline_mode = #tpu.pipeline_mode<synchronous>, transform_indices = @transform_5, window_bounds = array<i64: 128, 9>}, {pipeline_mode = #tpu.pipeline_mode<synchronous>, transform_indices = @transform_6, window_bounds = array<i64: 32, 128>}, {transform_indices = @transform_7, window_bounds = array<i64: 1, 32, 256>}]} {
    %c0 = arith.constant 0 : index
    %c0_0 = arith.constant 0 : index
    %c0_1 = arith.constant 0 : index
    %0 = vector.load %arg2[%c0, %c0_0, %c0_1] : memref<1x32x256xf32, #tpu.memory_space<vmem>>, vector<1x32x256xf32>
    %1 = vector.shape_cast %0 : vector<1x32x256xf32> to vector<32x256xf32>
    %2 = arith.truncf %1 : vector<32x256xf32> to vector<32x256xbf16>
    %c0_2 = arith.constant 0 : index
    %c0_3 = arith.constant 0 : index
    %3 = vector.load %arg1[%c0_2, %c0_3] : memref<2x256xi32, #tpu.memory_space<vmem>>, vector<2x256xi32>
    %4 = vector.extract_strided_slice %3 {offsets = [0, 0], sizes = [1, 256], strides = [1, 1]} : vector<2x256xi32> to vector<1x256xi32>
    %5 = vector.extract_strided_slice %3 {offsets = [1, 0], sizes = [1, 256], strides = [1, 1]} : vector<2x256xi32> to vector<1x256xi32>
    %c0_4 = arith.constant 0 : index
    %c0_5 = arith.constant 0 : index
    %c0_6 = arith.constant 0 : index
    %6 = vector.load %arg3[%c0_4, %c0_5, %c0_6] : memref<3x128x32xbf16, #tpu.memory_space<vmem>>, vector<1x128x32xbf16>
    %7 = vector.shape_cast %6 : vector<1x128x32xbf16> to vector<128x32xbf16>
    %cst = arith.constant dense<0.000000e+00> : vector<128x256xf32>
    %8 = tpu.matmul %7, %2, %cst {dimension_numbers = #tpu.dot_dimension_numbers<[1], [0], [0], [1], [0, 0, 1, 1], [], []>} : vector<128x32xbf16>, vector<32x256xbf16>, vector<128x256xf32> -> vector<128x256xf32>
    %c0_7 = arith.constant 0 : index
    %c0_8 = arith.constant 0 : index
    %9 = vector.load %arg4[%c0_7, %c0_8] : memref<128x9xf32, #tpu.memory_space<vmem>>, vector<128x9xf32>
    %c17_i32 = arith.constant 17 : i32
    %10 = tpu.dynamic_rotate %8 by %c17_i32 dim 1 : vector<128x256xf32>, i32 -> vector<128x256xf32>
    %c16_i32 = arith.constant 16 : i32
    %11 = vector.broadcast %c16_i32 : i32 to vector<1x256xi32>
    %12 = arith.cmpi sge, %4, %11 : vector<1x256xi32>
    %c1_i32 = arith.constant 1 : i32
    %13 = vector.broadcast %c1_i32 : i32 to vector<1x256xi32>
    %14 = arith.cmpi sge, %5, %13 : vector<1x256xi32>
    %15 = arith.andi %12, %14 : vector<1x256xi1>
    %cst_9 = arith.constant 0.000000e+00 : f32
    %16 = vector.shape_cast %15 : vector<1x256xi1> to vector<1x256xi1>
    %17 = vector.broadcast %16 : vector<1x256xi1> to vector<128x256xi1>
    %18 = vector.broadcast %cst_9 : f32 to vector<128x256xf32>
    %19 = arith.select %17, %10, %18 : vector<128x256xi1>, vector<128x256xf32>
    %20 = vector.extract_strided_slice %9 {offsets = [0, 0], sizes = [128, 1], strides = [1, 1]} : vector<128x9xf32> to vector<128x1xf32>
    %21 = vector.broadcast %20 : vector<128x1xf32> to vector<128x256xf32>
    %22 = arith.mulf %19, %21 : vector<128x256xf32>
    %c16_i32_10 = arith.constant 16 : i32
    %23 = tpu.dynamic_rotate %8 by %c16_i32_10 dim 1 : vector<128x256xf32>, i32 -> vector<128x256xf32>
    %c16_i32_11 = arith.constant 16 : i32
    %24 = vector.broadcast %c16_i32_11 : i32 to vector<1x256xi32>
    %25 = arith.cmpi sge, %4, %24 : vector<1x256xi32>
    %cst_12 = arith.constant 0.000000e+00 : f32
    %26 = vector.shape_cast %25 : vector<1x256xi1> to vector<1x256xi1>
    %27 = vector.broadcast %26 : vector<1x256xi1> to vector<128x256xi1>
    %28 = vector.broadcast %cst_12 : f32 to vector<128x256xf32>
    %29 = arith.select %27, %23, %28 : vector<128x256xi1>, vector<128x256xf32>
    %30 = vector.extract_strided_slice %9 {offsets = [0, 1], sizes = [128, 1], strides = [1, 1]} : vector<128x9xf32> to vector<128x1xf32>
    %31 = vector.broadcast %30 : vector<128x1xf32> to vector<128x256xf32>
    %32 = arith.mulf %29, %31 : vector<128x256xf32>
    %33 = arith.addf %22, %32 : vector<128x256xf32>
    %c15_i32 = arith.constant 15 : i32
    %34 = tpu.dynamic_rotate %8 by %c15_i32 dim 1 : vector<128x256xf32>, i32 -> vector<128x256xf32>
    %c16_i32_13 = arith.constant 16 : i32
    %35 = vector.broadcast %c16_i32_13 : i32 to vector<1x256xi32>
    %36 = arith.cmpi sge, %4, %35 : vector<1x256xi32>
    %c15_i32_14 = arith.constant 15 : i32
    %37 = vector.broadcast %c15_i32_14 : i32 to vector<1x256xi32>
    %38 = arith.cmpi slt, %5, %37 : vector<1x256xi32>
    %39 = arith.andi %36, %38 : vector<1x256xi1>
    %cst_15 = arith.constant 0.000000e+00 : f32
    %40 = vector.shape_cast %39 : vector<1x256xi1> to vector<1x256xi1>
    %41 = vector.broadcast %40 : vector<1x256xi1> to vector<128x256xi1>
    %42 = vector.broadcast %cst_15 : f32 to vector<128x256xf32>
    %43 = arith.select %41, %34, %42 : vector<128x256xi1>, vector<128x256xf32>
    %44 = vector.extract_strided_slice %9 {offsets = [0, 2], sizes = [128, 1], strides = [1, 1]} : vector<128x9xf32> to vector<128x1xf32>
    %45 = vector.broadcast %44 : vector<128x1xf32> to vector<128x256xf32>
    %46 = arith.mulf %43, %45 : vector<128x256xf32>
    %47 = arith.addf %33, %46 : vector<128x256xf32>
    %c1_i32_16 = arith.constant 1 : i32
    %48 = tpu.dynamic_rotate %8 by %c1_i32_16 dim 1 : vector<128x256xf32>, i32 -> vector<128x256xf32>
    %c1_i32_17 = arith.constant 1 : i32
    %49 = vector.broadcast %c1_i32_17 : i32 to vector<1x256xi32>
    %50 = arith.cmpi sge, %5, %49 : vector<1x256xi32>
    %cst_18 = arith.constant 0.000000e+00 : f32
    %51 = vector.shape_cast %50 : vector<1x256xi1> to vector<1x256xi1>
    %52 = vector.broadcast %51 : vector<1x256xi1> to vector<128x256xi1>
    %53 = vector.broadcast %cst_18 : f32 to vector<128x256xf32>
    %54 = arith.select %52, %48, %53 : vector<128x256xi1>, vector<128x256xf32>
    %55 = vector.extract_strided_slice %9 {offsets = [0, 3], sizes = [128, 1], strides = [1, 1]} : vector<128x9xf32> to vector<128x1xf32>
    %56 = vector.broadcast %55 : vector<128x1xf32> to vector<128x256xf32>
    %57 = arith.mulf %54, %56 : vector<128x256xf32>
    %58 = arith.addf %47, %57 : vector<128x256xf32>
    %59 = vector.extract_strided_slice %9 {offsets = [0, 4], sizes = [128, 1], strides = [1, 1]} : vector<128x9xf32> to vector<128x1xf32>
    %60 = vector.broadcast %59 : vector<128x1xf32> to vector<128x256xf32>
    %61 = arith.mulf %8, %60 : vector<128x256xf32>
    %62 = arith.addf %58, %61 : vector<128x256xf32>
    %c255_i32 = arith.constant 255 : i32
    %63 = tpu.dynamic_rotate %8 by %c255_i32 dim 1 : vector<128x256xf32>, i32 -> vector<128x256xf32>
    %c15_i32_19 = arith.constant 15 : i32
    %64 = vector.broadcast %c15_i32_19 : i32 to vector<1x256xi32>
    %65 = arith.cmpi slt, %5, %64 : vector<1x256xi32>
    %cst_20 = arith.constant 0.000000e+00 : f32
    %66 = vector.shape_cast %65 : vector<1x256xi1> to vector<1x256xi1>
    %67 = vector.broadcast %66 : vector<1x256xi1> to vector<128x256xi1>
    %68 = vector.broadcast %cst_20 : f32 to vector<128x256xf32>
    %69 = arith.select %67, %63, %68 : vector<128x256xi1>, vector<128x256xf32>
    %70 = vector.extract_strided_slice %9 {offsets = [0, 5], sizes = [128, 1], strides = [1, 1]} : vector<128x9xf32> to vector<128x1xf32>
    %71 = vector.broadcast %70 : vector<128x1xf32> to vector<128x256xf32>
    %72 = arith.mulf %69, %71 : vector<128x256xf32>
    %73 = arith.addf %62, %72 : vector<128x256xf32>
    %c241_i32 = arith.constant 241 : i32
    %74 = tpu.dynamic_rotate %8 by %c241_i32 dim 1 : vector<128x256xf32>, i32 -> vector<128x256xf32>
    %c240_i32 = arith.constant 240 : i32
    %75 = vector.broadcast %c240_i32 : i32 to vector<1x256xi32>
    %76 = arith.cmpi slt, %4, %75 : vector<1x256xi32>
    %c1_i32_21 = arith.constant 1 : i32
    %77 = vector.broadcast %c1_i32_21 : i32 to vector<1x256xi32>
    %78 = arith.cmpi sge, %5, %77 : vector<1x256xi32>
    %79 = arith.andi %76, %78 : vector<1x256xi1>
    %cst_22 = arith.constant 0.000000e+00 : f32
    %80 = vector.shape_cast %79 : vector<1x256xi1> to vector<1x256xi1>
    %81 = vector.broadcast %80 : vector<1x256xi1> to vector<128x256xi1>
    %82 = vector.broadcast %cst_22 : f32 to vector<128x256xf32>
    %83 = arith.select %81, %74, %82 : vector<128x256xi1>, vector<128x256xf32>
    %84 = vector.extract_strided_slice %9 {offsets = [0, 6], sizes = [128, 1], strides = [1, 1]} : vector<128x9xf32> to vector<128x1xf32>
    %85 = vector.broadcast %84 : vector<128x1xf32> to vector<128x256xf32>
    %86 = arith.mulf %83, %85 : vector<128x256xf32>
    %87 = arith.addf %73, %86 : vector<128x256xf32>
    %c240_i32_23 = arith.constant 240 : i32
    %88 = tpu.dynamic_rotate %8 by %c240_i32_23 dim 1 : vector<128x256xf32>, i32 -> vector<128x256xf32>
    %c240_i32_24 = arith.constant 240 : i32
    %89 = vector.broadcast %c240_i32_24 : i32 to vector<1x256xi32>
    %90 = arith.cmpi slt, %4, %89 : vector<1x256xi32>
    %cst_25 = arith.constant 0.000000e+00 : f32
    %91 = vector.shape_cast %90 : vector<1x256xi1> to vector<1x256xi1>
    %92 = vector.broadcast %91 : vector<1x256xi1> to vector<128x256xi1>
    %93 = vector.broadcast %cst_25 : f32 to vector<128x256xf32>
    %94 = arith.select %92, %88, %93 : vector<128x256xi1>, vector<128x256xf32>
    %95 = vector.extract_strided_slice %9 {offsets = [0, 7], sizes = [128, 1], strides = [1, 1]} : vector<128x9xf32> to vector<128x1xf32>
    %96 = vector.broadcast %95 : vector<128x1xf32> to vector<128x256xf32>
    %97 = arith.mulf %94, %96 : vector<128x256xf32>
    %98 = arith.addf %87, %97 : vector<128x256xf32>
    %c239_i32 = arith.constant 239 : i32
    %99 = tpu.dynamic_rotate %8 by %c239_i32 dim 1 : vector<128x256xf32>, i32 -> vector<128x256xf32>
    %c240_i32_26 = arith.constant 240 : i32
    %100 = vector.broadcast %c240_i32_26 : i32 to vector<1x256xi32>
    %101 = arith.cmpi slt, %4, %100 : vector<1x256xi32>
    %c15_i32_27 = arith.constant 15 : i32
    %102 = vector.broadcast %c15_i32_27 : i32 to vector<1x256xi32>
    %103 = arith.cmpi slt, %5, %102 : vector<1x256xi32>
    %104 = arith.andi %101, %103 : vector<1x256xi1>
    %cst_28 = arith.constant 0.000000e+00 : f32
    %105 = vector.shape_cast %104 : vector<1x256xi1> to vector<1x256xi1>
    %106 = vector.broadcast %105 : vector<1x256xi1> to vector<128x256xi1>
    %107 = vector.broadcast %cst_28 : f32 to vector<128x256xf32>
    %108 = arith.select %106, %99, %107 : vector<128x256xi1>, vector<128x256xf32>
    %109 = vector.extract_strided_slice %9 {offsets = [0, 8], sizes = [128, 1], strides = [1, 1]} : vector<128x9xf32> to vector<128x1xf32>
    %110 = vector.broadcast %109 : vector<128x1xf32> to vector<128x256xf32>
    %111 = arith.mulf %108, %110 : vector<128x256xf32>
    %112 = arith.addf %98, %111 : vector<128x256xf32>
    %cst_29 = arith.constant 5.000000e-01 : f32
    %113 = vector.broadcast %cst_29 : f32 to vector<128x256xf32>
    %114 = arith.mulf %113, %112 : vector<128x256xf32>
    %cst_30 = arith.constant 0.707106769 : f32
    %115 = vector.broadcast %cst_30 : f32 to vector<128x256xf32>
    %116 = arith.mulf %112, %115 : vector<128x256xf32>
    %117 = math.absf %116 : vector<128x256xf32>
    %cst_31 = arith.constant 0.327591091 : f32
    %118 = vector.broadcast %cst_31 : f32 to vector<128x256xf32>
    %119 = arith.mulf %118, %117 : vector<128x256xf32>
    %cst_32 = arith.constant 1.000000e+00 : f32
    %120 = vector.broadcast %cst_32 : f32 to vector<128x256xf32>
    %121 = arith.addf %120, %119 : vector<128x256xf32>
    %122 = tpu.reciprocal %121 {approx = true} : vector<128x256xf32> -> vector<128x256xf32>
    %cst_33 = arith.constant 1.06140542 : f32
    %123 = vector.broadcast %cst_33 : f32 to vector<128x256xf32>
    %124 = arith.mulf %123, %122 : vector<128x256xf32>
    %cst_34 = arith.constant -1.45315206 : f32
    %125 = vector.broadcast %cst_34 : f32 to vector<128x256xf32>
    %126 = arith.addf %124, %125 : vector<128x256xf32>
    %127 = arith.mulf %126, %122 : vector<128x256xf32>
    %cst_35 = arith.constant 1.42141378 : f32
    %128 = vector.broadcast %cst_35 : f32 to vector<128x256xf32>
    %129 = arith.addf %127, %128 : vector<128x256xf32>
    %130 = arith.mulf %129, %122 : vector<128x256xf32>
    %cst_36 = arith.constant -0.284496725 : f32
    %131 = vector.broadcast %cst_36 : f32 to vector<128x256xf32>
    %132 = arith.addf %130, %131 : vector<128x256xf32>
    %133 = arith.mulf %132, %122 : vector<128x256xf32>
    %cst_37 = arith.constant 0.254829586 : f32
    %134 = vector.broadcast %cst_37 : f32 to vector<128x256xf32>
    %135 = arith.addf %133, %134 : vector<128x256xf32>
    %136 = arith.mulf %135, %122 : vector<128x256xf32>
    %cst_38 = arith.constant 0.000000e+00 : f32
    %137 = vector.broadcast %cst_38 : f32 to vector<128x256xf32>
    %138 = arith.subf %137, %117 : vector<128x256xf32>
    %139 = arith.mulf %138, %117 : vector<128x256xf32>
    %140 = math.exp %139 : vector<128x256xf32>
    %141 = arith.mulf %136, %140 : vector<128x256xf32>
    %cst_39 = arith.constant 1.000000e+00 : f32
    %142 = vector.broadcast %cst_39 : f32 to vector<128x256xf32>
    %143 = arith.subf %142, %141 : vector<128x256xf32>
    %cst_40 = arith.constant 0.000000e+00 : f32
    %144 = vector.broadcast %cst_40 : f32 to vector<128x256xf32>
    %145 = arith.cmpf olt, %116, %144 : vector<128x256xf32>
    %cst_41 = arith.constant 0.000000e+00 : f32
    %146 = vector.broadcast %cst_41 : f32 to vector<128x256xf32>
    %147 = arith.subf %146, %143 : vector<128x256xf32>
    %148 = arith.select %145, %147, %143 : vector<128x256xi1>, vector<128x256xf32>
    %cst_42 = arith.constant 1.000000e+00 : f32
    %149 = vector.broadcast %cst_42 : f32 to vector<128x256xf32>
    %150 = arith.addf %149, %148 : vector<128x256xf32>
    %151 = arith.mulf %114, %150 : vector<128x256xf32>
    %c1 = arith.constant 1 : index
    %c0_43 = arith.constant 0 : index
    %c0_44 = arith.constant 0 : index
    %152 = vector.load %arg3[%c1, %c0_43, %c0_44] : memref<3x128x32xbf16, #tpu.memory_space<vmem>>, vector<1x128x32xbf16>
    %153 = vector.shape_cast %152 : vector<1x128x32xbf16> to vector<128x32xbf16>
    %cst_45 = arith.constant dense<0.000000e+00> : vector<128x256xf32>
    %154 = tpu.matmul %153, %2, %cst_45 {dimension_numbers = #tpu.dot_dimension_numbers<[1], [0], [0], [1], [0, 0, 1, 1], [], []>} : vector<128x32xbf16>, vector<32x256xbf16>, vector<128x256xf32> -> vector<128x256xf32>
    %c0_46 = arith.constant 0 : index
    %c0_47 = arith.constant 0 : index
    %155 = vector.load %arg5[%c0_46, %c0_47] : memref<128x9xf32, #tpu.memory_space<vmem>>, vector<128x9xf32>
    %c34_i32 = arith.constant 34 : i32
    %156 = tpu.dynamic_rotate %154 by %c34_i32 dim 1 : vector<128x256xf32>, i32 -> vector<128x256xf32>
    %c32_i32 = arith.constant 32 : i32
    %157 = vector.broadcast %c32_i32 : i32 to vector<1x256xi32>
    %158 = arith.cmpi sge, %4, %157 : vector<1x256xi32>
    %c2_i32 = arith.constant 2 : i32
    %159 = vector.broadcast %c2_i32 : i32 to vector<1x256xi32>
    %160 = arith.cmpi sge, %5, %159 : vector<1x256xi32>
    %161 = arith.andi %158, %160 : vector<1x256xi1>
    %cst_48 = arith.constant 0.000000e+00 : f32
    %162 = vector.shape_cast %161 : vector<1x256xi1> to vector<1x256xi1>
    %163 = vector.broadcast %162 : vector<1x256xi1> to vector<128x256xi1>
    %164 = vector.broadcast %cst_48 : f32 to vector<128x256xf32>
    %165 = arith.select %163, %156, %164 : vector<128x256xi1>, vector<128x256xf32>
    %166 = vector.extract_strided_slice %155 {offsets = [0, 0], sizes = [128, 1], strides = [1, 1]} : vector<128x9xf32> to vector<128x1xf32>
    %167 = vector.broadcast %166 : vector<128x1xf32> to vector<128x256xf32>
    %168 = arith.mulf %165, %167 : vector<128x256xf32>
    %c32_i32_49 = arith.constant 32 : i32
    %169 = tpu.dynamic_rotate %154 by %c32_i32_49 dim 1 : vector<128x256xf32>, i32 -> vector<128x256xf32>
    %c32_i32_50 = arith.constant 32 : i32
    %170 = vector.broadcast %c32_i32_50 : i32 to vector<1x256xi32>
    %171 = arith.cmpi sge, %4, %170 : vector<1x256xi32>
    %cst_51 = arith.constant 0.000000e+00 : f32
    %172 = vector.shape_cast %171 : vector<1x256xi1> to vector<1x256xi1>
    %173 = vector.broadcast %172 : vector<1x256xi1> to vector<128x256xi1>
    %174 = vector.broadcast %cst_51 : f32 to vector<128x256xf32>
    %175 = arith.select %173, %169, %174 : vector<128x256xi1>, vector<128x256xf32>
    %176 = vector.extract_strided_slice %155 {offsets = [0, 1], sizes = [128, 1], strides = [1, 1]} : vector<128x9xf32> to vector<128x1xf32>
    %177 = vector.broadcast %176 : vector<128x1xf32> to vector<128x256xf32>
    %178 = arith.mulf %175, %177 : vector<128x256xf32>
    %179 = arith.addf %168, %178 : vector<128x256xf32>
    %c30_i32 = arith.constant 30 : i32
    %180 = tpu.dynamic_rotate %154 by %c30_i32 dim 1 : vector<128x256xf32>, i32 -> vector<128x256xf32>
    %c32_i32_52 = arith.constant 32 : i32
    %181 = vector.broadcast %c32_i32_52 : i32 to vector<1x256xi32>
    %182 = arith.cmpi sge, %4, %181 : vector<1x256xi32>
    %c14_i32 = arith.constant 14 : i32
    %183 = vector.broadcast %c14_i32 : i32 to vector<1x256xi32>
    %184 = arith.cmpi slt, %5, %183 : vector<1x256xi32>
    %185 = arith.andi %182, %184 : vector<1x256xi1>
    %cst_53 = arith.constant 0.000000e+00 : f32
    %186 = vector.shape_cast %185 : vector<1x256xi1> to vector<1x256xi1>
    %187 = vector.broadcast %186 : vector<1x256xi1> to vector<128x256xi1>
    %188 = vector.broadcast %cst_53 : f32 to vector<128x256xf32>
    %189 = arith.select %187, %180, %188 : vector<128x256xi1>, vector<128x256xf32>
    %190 = vector.extract_strided_slice %155 {offsets = [0, 2], sizes = [128, 1], strides = [1, 1]} : vector<128x9xf32> to vector<128x1xf32>
    %191 = vector.broadcast %190 : vector<128x1xf32> to vector<128x256xf32>
    %192 = arith.mulf %189, %191 : vector<128x256xf32>
    %193 = arith.addf %179, %192 : vector<128x256xf32>
    %c2_i32_54 = arith.constant 2 : i32
    %194 = tpu.dynamic_rotate %154 by %c2_i32_54 dim 1 : vector<128x256xf32>, i32 -> vector<128x256xf32>
    %c2_i32_55 = arith.constant 2 : i32
    %195 = vector.broadcast %c2_i32_55 : i32 to vector<1x256xi32>
    %196 = arith.cmpi sge, %5, %195 : vector<1x256xi32>
    %cst_56 = arith.constant 0.000000e+00 : f32
    %197 = vector.shape_cast %196 : vector<1x256xi1> to vector<1x256xi1>
    %198 = vector.broadcast %197 : vector<1x256xi1> to vector<128x256xi1>
    %199 = vector.broadcast %cst_56 : f32 to vector<128x256xf32>
    %200 = arith.select %198, %194, %199 : vector<128x256xi1>, vector<128x256xf32>
    %201 = vector.extract_strided_slice %155 {offsets = [0, 3], sizes = [128, 1], strides = [1, 1]} : vector<128x9xf32> to vector<128x1xf32>
    %202 = vector.broadcast %201 : vector<128x1xf32> to vector<128x256xf32>
    %203 = arith.mulf %200, %202 : vector<128x256xf32>
    %204 = arith.addf %193, %203 : vector<128x256xf32>
    %205 = vector.extract_strided_slice %155 {offsets = [0, 4], sizes = [128, 1], strides = [1, 1]} : vector<128x9xf32> to vector<128x1xf32>
    %206 = vector.broadcast %205 : vector<128x1xf32> to vector<128x256xf32>
    %207 = arith.mulf %154, %206 : vector<128x256xf32>
    %208 = arith.addf %204, %207 : vector<128x256xf32>
    %c254_i32 = arith.constant 254 : i32
    %209 = tpu.dynamic_rotate %154 by %c254_i32 dim 1 : vector<128x256xf32>, i32 -> vector<128x256xf32>
    %c14_i32_57 = arith.constant 14 : i32
    %210 = vector.broadcast %c14_i32_57 : i32 to vector<1x256xi32>
    %211 = arith.cmpi slt, %5, %210 : vector<1x256xi32>
    %cst_58 = arith.constant 0.000000e+00 : f32
    %212 = vector.shape_cast %211 : vector<1x256xi1> to vector<1x256xi1>
    %213 = vector.broadcast %212 : vector<1x256xi1> to vector<128x256xi1>
    %214 = vector.broadcast %cst_58 : f32 to vector<128x256xf32>
    %215 = arith.select %213, %209, %214 : vector<128x256xi1>, vector<128x256xf32>
    %216 = vector.extract_strided_slice %155 {offsets = [0, 5], sizes = [128, 1], strides = [1, 1]} : vector<128x9xf32> to vector<128x1xf32>
    %217 = vector.broadcast %216 : vector<128x1xf32> to vector<128x256xf32>
    %218 = arith.mulf %215, %217 : vector<128x256xf32>
    %219 = arith.addf %208, %218 : vector<128x256xf32>
    %c226_i32 = arith.constant 226 : i32
    %220 = tpu.dynamic_rotate %154 by %c226_i32 dim 1 : vector<128x256xf32>, i32 -> vector<128x256xf32>
    %c224_i32 = arith.constant 224 : i32
    %221 = vector.broadcast %c224_i32 : i32 to vector<1x256xi32>
    %222 = arith.cmpi slt, %4, %221 : vector<1x256xi32>
    %c2_i32_59 = arith.constant 2 : i32
    %223 = vector.broadcast %c2_i32_59 : i32 to vector<1x256xi32>
    %224 = arith.cmpi sge, %5, %223 : vector<1x256xi32>
    %225 = arith.andi %222, %224 : vector<1x256xi1>
    %cst_60 = arith.constant 0.000000e+00 : f32
    %226 = vector.shape_cast %225 : vector<1x256xi1> to vector<1x256xi1>
    %227 = vector.broadcast %226 : vector<1x256xi1> to vector<128x256xi1>
    %228 = vector.broadcast %cst_60 : f32 to vector<128x256xf32>
    %229 = arith.select %227, %220, %228 : vector<128x256xi1>, vector<128x256xf32>
    %230 = vector.extract_strided_slice %155 {offsets = [0, 6], sizes = [128, 1], strides = [1, 1]} : vector<128x9xf32> to vector<128x1xf32>
    %231 = vector.broadcast %230 : vector<128x1xf32> to vector<128x256xf32>
    %232 = arith.mulf %229, %231 : vector<128x256xf32>
    %233 = arith.addf %219, %232 : vector<128x256xf32>
    %c224_i32_61 = arith.constant 224 : i32
    %234 = tpu.dynamic_rotate %154 by %c224_i32_61 dim 1 : vector<128x256xf32>, i32 -> vector<128x256xf32>
    %c224_i32_62 = arith.constant 224 : i32
    %235 = vector.broadcast %c224_i32_62 : i32 to vector<1x256xi32>
    %236 = arith.cmpi slt, %4, %235 : vector<1x256xi32>
    %cst_63 = arith.constant 0.000000e+00 : f32
    %237 = vector.shape_cast %236 : vector<1x256xi1> to vector<1x256xi1>
    %238 = vector.broadcast %237 : vector<1x256xi1> to vector<128x256xi1>
    %239 = vector.broadcast %cst_63 : f32 to vector<128x256xf32>
    %240 = arith.select %238, %234, %239 : vector<128x256xi1>, vector<128x256xf32>
    %241 = vector.extract_strided_slice %155 {offsets = [0, 7], sizes = [128, 1], strides = [1, 1]} : vector<128x9xf32> to vector<128x1xf32>
    %242 = vector.broadcast %241 : vector<128x1xf32> to vector<128x256xf32>
    %243 = arith.mulf %240, %242 : vector<128x256xf32>
    %244 = arith.addf %233, %243 : vector<128x256xf32>
    %c222_i32 = arith.constant 222 : i32
    %245 = tpu.dynamic_rotate %154 by %c222_i32 dim 1 : vector<128x256xf32>, i32 -> vector<128x256xf32>
    %c224_i32_64 = arith.constant 224 : i32
    %246 = vector.broadcast %c224_i32_64 : i32 to vector<1x256xi32>
    %247 = arith.cmpi slt, %4, %246 : vector<1x256xi32>
    %c14_i32_65 = arith.constant 14 : i32
    %248 = vector.broadcast %c14_i32_65 : i32 to vector<1x256xi32>
    %249 = arith.cmpi slt, %5, %248 : vector<1x256xi32>
    %250 = arith.andi %247, %249 : vector<1x256xi1>
    %cst_66 = arith.constant 0.000000e+00 : f32
    %251 = vector.shape_cast %250 : vector<1x256xi1> to vector<1x256xi1>
    %252 = vector.broadcast %251 : vector<1x256xi1> to vector<128x256xi1>
    %253 = vector.broadcast %cst_66 : f32 to vector<128x256xf32>
    %254 = arith.select %252, %245, %253 : vector<128x256xi1>, vector<128x256xf32>
    %255 = vector.extract_strided_slice %155 {offsets = [0, 8], sizes = [128, 1], strides = [1, 1]} : vector<128x9xf32> to vector<128x1xf32>
    %256 = vector.broadcast %255 : vector<128x1xf32> to vector<128x256xf32>
    %257 = arith.mulf %254, %256 : vector<128x256xf32>
    %258 = arith.addf %244, %257 : vector<128x256xf32>
    %259 = arith.mulf %151, %258 : vector<128x256xf32>
    %c2 = arith.constant 2 : index
    %c0_67 = arith.constant 0 : index
    %c0_68 = arith.constant 0 : index
    %260 = vector.load %arg3[%c2, %c0_67, %c0_68] : memref<3x128x32xbf16, #tpu.memory_space<vmem>>, vector<1x128x32xbf16>
    %261 = vector.shape_cast %260 : vector<1x128x32xbf16> to vector<128x32xbf16>
    %cst_69 = arith.constant dense<0.000000e+00> : vector<128x256xf32>
    %262 = tpu.matmul %261, %2, %cst_69 {dimension_numbers = #tpu.dot_dimension_numbers<[1], [0], [0], [1], [0, 0, 1, 1], [], []>} : vector<128x32xbf16>, vector<32x256xbf16>, vector<128x256xf32> -> vector<128x256xf32>
    %c0_70 = arith.constant 0 : index
    %c0_71 = arith.constant 0 : index
    %263 = vector.load %arg6[%c0_70, %c0_71] : memref<128x9xf32, #tpu.memory_space<vmem>>, vector<128x9xf32>
    %c51_i32 = arith.constant 51 : i32
    %264 = tpu.dynamic_rotate %262 by %c51_i32 dim 1 : vector<128x256xf32>, i32 -> vector<128x256xf32>
    %c48_i32 = arith.constant 48 : i32
    %265 = vector.broadcast %c48_i32 : i32 to vector<1x256xi32>
    %266 = arith.cmpi sge, %4, %265 : vector<1x256xi32>
    %c3_i32 = arith.constant 3 : i32
    %267 = vector.broadcast %c3_i32 : i32 to vector<1x256xi32>
    %268 = arith.cmpi sge, %5, %267 : vector<1x256xi32>
    %269 = arith.andi %266, %268 : vector<1x256xi1>
    %cst_72 = arith.constant 0.000000e+00 : f32
    %270 = vector.shape_cast %269 : vector<1x256xi1> to vector<1x256xi1>
    %271 = vector.broadcast %270 : vector<1x256xi1> to vector<128x256xi1>
    %272 = vector.broadcast %cst_72 : f32 to vector<128x256xf32>
    %273 = arith.select %271, %264, %272 : vector<128x256xi1>, vector<128x256xf32>
    %274 = vector.extract_strided_slice %263 {offsets = [0, 0], sizes = [128, 1], strides = [1, 1]} : vector<128x9xf32> to vector<128x1xf32>
    %275 = vector.broadcast %274 : vector<128x1xf32> to vector<128x256xf32>
    %276 = arith.mulf %273, %275 : vector<128x256xf32>
    %c48_i32_73 = arith.constant 48 : i32
    %277 = tpu.dynamic_rotate %262 by %c48_i32_73 dim 1 : vector<128x256xf32>, i32 -> vector<128x256xf32>
    %c48_i32_74 = arith.constant 48 : i32
    %278 = vector.broadcast %c48_i32_74 : i32 to vector<1x256xi32>
    %279 = arith.cmpi sge, %4, %278 : vector<1x256xi32>
    %cst_75 = arith.constant 0.000000e+00 : f32
    %280 = vector.shape_cast %279 : vector<1x256xi1> to vector<1x256xi1>
    %281 = vector.broadcast %280 : vector<1x256xi1> to vector<128x256xi1>
    %282 = vector.broadcast %cst_75 : f32 to vector<128x256xf32>
    %283 = arith.select %281, %277, %282 : vector<128x256xi1>, vector<128x256xf32>
    %284 = vector.extract_strided_slice %263 {offsets = [0, 1], sizes = [128, 1], strides = [1, 1]} : vector<128x9xf32> to vector<128x1xf32>
    %285 = vector.broadcast %284 : vector<128x1xf32> to vector<128x256xf32>
    %286 = arith.mulf %283, %285 : vector<128x256xf32>
    %287 = arith.addf %276, %286 : vector<128x256xf32>
    %c45_i32 = arith.constant 45 : i32
    %288 = tpu.dynamic_rotate %262 by %c45_i32 dim 1 : vector<128x256xf32>, i32 -> vector<128x256xf32>
    %c48_i32_76 = arith.constant 48 : i32
    %289 = vector.broadcast %c48_i32_76 : i32 to vector<1x256xi32>
    %290 = arith.cmpi sge, %4, %289 : vector<1x256xi32>
    %c13_i32 = arith.constant 13 : i32
    %291 = vector.broadcast %c13_i32 : i32 to vector<1x256xi32>
    %292 = arith.cmpi slt, %5, %291 : vector<1x256xi32>
    %293 = arith.andi %290, %292 : vector<1x256xi1>
    %cst_77 = arith.constant 0.000000e+00 : f32
    %294 = vector.shape_cast %293 : vector<1x256xi1> to vector<1x256xi1>
    %295 = vector.broadcast %294 : vector<1x256xi1> to vector<128x256xi1>
    %296 = vector.broadcast %cst_77 : f32 to vector<128x256xf32>
    %297 = arith.select %295, %288, %296 : vector<128x256xi1>, vector<128x256xf32>
    %298 = vector.extract_strided_slice %263 {offsets = [0, 2], sizes = [128, 1], strides = [1, 1]} : vector<128x9xf32> to vector<128x1xf32>
    %299 = vector.broadcast %298 : vector<128x1xf32> to vector<128x256xf32>
    %300 = arith.mulf %297, %299 : vector<128x256xf32>
    %301 = arith.addf %287, %300 : vector<128x256xf32>
    %c3_i32_78 = arith.constant 3 : i32
    %302 = tpu.dynamic_rotate %262 by %c3_i32_78 dim 1 : vector<128x256xf32>, i32 -> vector<128x256xf32>
    %c3_i32_79 = arith.constant 3 : i32
    %303 = vector.broadcast %c3_i32_79 : i32 to vector<1x256xi32>
    %304 = arith.cmpi sge, %5, %303 : vector<1x256xi32>
    %cst_80 = arith.constant 0.000000e+00 : f32
    %305 = vector.shape_cast %304 : vector<1x256xi1> to vector<1x256xi1>
    %306 = vector.broadcast %305 : vector<1x256xi1> to vector<128x256xi1>
    %307 = vector.broadcast %cst_80 : f32 to vector<128x256xf32>
    %308 = arith.select %306, %302, %307 : vector<128x256xi1>, vector<128x256xf32>
    %309 = vector.extract_strided_slice %263 {offsets = [0, 3], sizes = [128, 1], strides = [1, 1]} : vector<128x9xf32> to vector<128x1xf32>
    %310 = vector.broadcast %309 : vector<128x1xf32> to vector<128x256xf32>
    %311 = arith.mulf %308, %310 : vector<128x256xf32>
    %312 = arith.addf %301, %311 : vector<128x256xf32>
    %313 = vector.extract_strided_slice %263 {offsets = [0, 4], sizes = [128, 1], strides = [1, 1]} : vector<128x9xf32> to vector<128x1xf32>
    %314 = vector.broadcast %313 : vector<128x1xf32> to vector<128x256xf32>
    %315 = arith.mulf %262, %314 : vector<128x256xf32>
    %316 = arith.addf %312, %315 : vector<128x256xf32>
    %c253_i32 = arith.constant 253 : i32
    %317 = tpu.dynamic_rotate %262 by %c253_i32 dim 1 : vector<128x256xf32>, i32 -> vector<128x256xf32>
    %c13_i32_81 = arith.constant 13 : i32
    %318 = vector.broadcast %c13_i32_81 : i32 to vector<1x256xi32>
    %319 = arith.cmpi slt, %5, %318 : vector<1x256xi32>
    %cst_82 = arith.constant 0.000000e+00 : f32
    %320 = vector.shape_cast %319 : vector<1x256xi1> to vector<1x256xi1>
    %321 = vector.broadcast %320 : vector<1x256xi1> to vector<128x256xi1>
    %322 = vector.broadcast %cst_82 : f32 to vector<128x256xf32>
    %323 = arith.select %321, %317, %322 : vector<128x256xi1>, vector<128x256xf32>
    %324 = vector.extract_strided_slice %263 {offsets = [0, 5], sizes = [128, 1], strides = [1, 1]} : vector<128x9xf32> to vector<128x1xf32>
    %325 = vector.broadcast %324 : vector<128x1xf32> to vector<128x256xf32>
    %326 = arith.mulf %323, %325 : vector<128x256xf32>
    %327 = arith.addf %316, %326 : vector<128x256xf32>
    %c211_i32 = arith.constant 211 : i32
    %328 = tpu.dynamic_rotate %262 by %c211_i32 dim 1 : vector<128x256xf32>, i32 -> vector<128x256xf32>
    %c208_i32 = arith.constant 208 : i32
    %329 = vector.broadcast %c208_i32 : i32 to vector<1x256xi32>
    %330 = arith.cmpi slt, %4, %329 : vector<1x256xi32>
    %c3_i32_83 = arith.constant 3 : i32
    %331 = vector.broadcast %c3_i32_83 : i32 to vector<1x256xi32>
    %332 = arith.cmpi sge, %5, %331 : vector<1x256xi32>
    %333 = arith.andi %330, %332 : vector<1x256xi1>
    %cst_84 = arith.constant 0.000000e+00 : f32
    %334 = vector.shape_cast %333 : vector<1x256xi1> to vector<1x256xi1>
    %335 = vector.broadcast %334 : vector<1x256xi1> to vector<128x256xi1>
    %336 = vector.broadcast %cst_84 : f32 to vector<128x256xf32>
    %337 = arith.select %335, %328, %336 : vector<128x256xi1>, vector<128x256xf32>
    %338 = vector.extract_strided_slice %263 {offsets = [0, 6], sizes = [128, 1], strides = [1, 1]} : vector<128x9xf32> to vector<128x1xf32>
    %339 = vector.broadcast %338 : vector<128x1xf32> to vector<128x256xf32>
    %340 = arith.mulf %337, %339 : vector<128x256xf32>
    %341 = arith.addf %327, %340 : vector<128x256xf32>
    %c208_i32_85 = arith.constant 208 : i32
    %342 = tpu.dynamic_rotate %262 by %c208_i32_85 dim 1 : vector<128x256xf32>, i32 -> vector<128x256xf32>
    %c208_i32_86 = arith.constant 208 : i32
    %343 = vector.broadcast %c208_i32_86 : i32 to vector<1x256xi32>
    %344 = arith.cmpi slt, %4, %343 : vector<1x256xi32>
    %cst_87 = arith.constant 0.000000e+00 : f32
    %345 = vector.shape_cast %344 : vector<1x256xi1> to vector<1x256xi1>
    %346 = vector.broadcast %345 : vector<1x256xi1> to vector<128x256xi1>
    %347 = vector.broadcast %cst_87 : f32 to vector<128x256xf32>
    %348 = arith.select %346, %342, %347 : vector<128x256xi1>, vector<128x256xf32>
    %349 = vector.extract_strided_slice %263 {offsets = [0, 7], sizes = [128, 1], strides = [1, 1]} : vector<128x9xf32> to vector<128x1xf32>
    %350 = vector.broadcast %349 : vector<128x1xf32> to vector<128x256xf32>
    %351 = arith.mulf %348, %350 : vector<128x256xf32>
    %352 = arith.addf %341, %351 : vector<128x256xf32>
    %c205_i32 = arith.constant 205 : i32
    %353 = tpu.dynamic_rotate %262 by %c205_i32 dim 1 : vector<128x256xf32>, i32 -> vector<128x256xf32>
    %c208_i32_88 = arith.constant 208 : i32
    %354 = vector.broadcast %c208_i32_88 : i32 to vector<1x256xi32>
    %355 = arith.cmpi slt, %4, %354 : vector<1x256xi32>
    %c13_i32_89 = arith.constant 13 : i32
    %356 = vector.broadcast %c13_i32_89 : i32 to vector<1x256xi32>
    %357 = arith.cmpi slt, %5, %356 : vector<1x256xi32>
    %358 = arith.andi %355, %357 : vector<1x256xi1>
    %cst_90 = arith.constant 0.000000e+00 : f32
    %359 = vector.shape_cast %358 : vector<1x256xi1> to vector<1x256xi1>
    %360 = vector.broadcast %359 : vector<1x256xi1> to vector<128x256xi1>
    %361 = vector.broadcast %cst_90 : f32 to vector<128x256xf32>
    %362 = arith.select %360, %353, %361 : vector<128x256xi1>, vector<128x256xf32>
    %363 = vector.extract_strided_slice %263 {offsets = [0, 8], sizes = [128, 1], strides = [1, 1]} : vector<128x9xf32> to vector<128x1xf32>
    %364 = vector.broadcast %363 : vector<128x1xf32> to vector<128x256xf32>
    %365 = arith.mulf %362, %364 : vector<128x256xf32>
    %366 = arith.addf %352, %365 : vector<128x256xf32>
    %367 = arith.mulf %259, %366 : vector<128x256xf32>
    %c0_91 = arith.constant 0 : index
    %c0_92 = arith.constant 0 : index
    %368 = vector.load %arg7[%c0_91, %c0_92] : memref<32x128xbf16, #tpu.memory_space<vmem>>, vector<32x128xbf16>
    %369 = arith.truncf %367 : vector<128x256xf32> to vector<128x256xbf16>
    %cst_93 = arith.constant dense<0.000000e+00> : vector<32x256xf32>
    %370 = tpu.matmul %368, %369, %cst_93 {dimension_numbers = #tpu.dot_dimension_numbers<[1], [0], [0], [1], [0, 0, 1, 1], [], []>} : vector<32x128xbf16>, vector<128x256xbf16>, vector<32x256xf32> -> vector<32x256xf32>
    %c0_94 = arith.constant 0 : index
    %c0_95 = arith.constant 0 : index
    %c0_96 = arith.constant 0 : index
    %371 = vector.load %arg8[%c0_94, %c0_95, %c0_96] : memref<1x32x256xf32, #tpu.memory_space<vmem>>, vector<1x32x256xf32>
    %372 = vector.shape_cast %371 : vector<1x32x256xf32> to vector<32x256xf32>
    %373 = vector.shape_cast %370 : vector<32x256xf32> to vector<1x32x256xf32>
    tpu.vector_store %arg8[%c0_94, %c0_95, %c0_96], %373 {strides = array<i32>} : memref<1x32x256xf32, #tpu.memory_space<vmem>>, vector<1x32x256xf32>,
    return
  }
  func.func @transform_0(%arg0: i32) -> (i32, i32) {
    %c0_i32 = arith.constant 0 : i32
    %c0_i32_0 = arith.constant 0 : i32
    %c0_i32_1 = arith.constant 0 : i32
    return %c0_i32, %c0_i32_0 : i32, i32
  }
  func.func @transform_1(%arg0: i32) -> (i32, i32, i32) {
    %c0_i32 = arith.constant 0 : i32
    %c0_i32_0 = arith.constant 0 : i32
    %c0_i32_1 = arith.constant 0 : i32
    return %arg0, %c0_i32, %c0_i32_0 : i32, i32, i32
  }
  func.func @transform_2(%arg0: i32) -> (i32, i32, i32) {
    %c0_i32 = arith.constant 0 : i32
    %c0_i32_0 = arith.constant 0 : i32
    %c0_i32_1 = arith.constant 0 : i32
    %c0_i32_2 = arith.constant 0 : i32
    return %c0_i32, %c0_i32_0, %c0_i32_1 : i32, i32, i32
  }
  func.func @transform_3(%arg0: i32) -> (i32, i32) {
    %c0_i32 = arith.constant 0 : i32
    %c0_i32_0 = arith.constant 0 : i32
    %c0_i32_1 = arith.constant 0 : i32
    return %c0_i32, %c0_i32_0 : i32, i32
  }
  func.func @transform_4(%arg0: i32) -> (i32, i32) {
    %c0_i32 = arith.constant 0 : i32
    %c0_i32_0 = arith.constant 0 : i32
    %c0_i32_1 = arith.constant 0 : i32
    return %c0_i32, %c0_i32_0 : i32, i32
  }
  func.func @transform_5(%arg0: i32) -> (i32, i32) {
    %c0_i32 = arith.constant 0 : i32
    %c0_i32_0 = arith.constant 0 : i32
    %c0_i32_1 = arith.constant 0 : i32
    return %c0_i32, %c0_i32_0 : i32, i32
  }
  func.func @transform_6(%arg0: i32) -> (i32, i32) {
    %c0_i32 = arith.constant 0 : i32
    %c0_i32_0 = arith.constant 0 : i32
    %c0_i32_1 = arith.constant 0 : i32
    return %c0_i32, %c0_i32_0 : i32, i32
  }
  func.func @transform_7(%arg0: i32) -> (i32, i32, i32) {
    %c0_i32 = arith.constant 0 : i32
    %c0_i32_0 = arith.constant 0 : i32
    %c0_i32_1 = arith.constant 0 : i32
    return %arg0, %c0_i32, %c0_i32_0 : i32, i32, i32
  }
}

</mosaic_0001>

<llo_original>
// kernel: msfn_forward.1
$region0: #{msfn_forward.1}
  #allocation0 [shape = 'u32[]', space=smem, size = 0x4, offset = 0x4, fixed_abs, tag = 'smem constant byte address 0x4 - core index']
  #allocation1 [shape = 'u32[144,128]{1,0:T(1,128)}', space=vmem, size = 0x12000, scoped, tag = 'internal scratch']
  %s0 = inlined_call_operand.hbm [shape: s32[2,256], index: 0, kind: input, shape index: {}]
  %s1 = inlined_call_operand.hbm [shape: f32[2,32,256], index: 1, kind: input, shape index: {}]
  %s2 = inlined_call_operand.hbm [shape: bf16[3,128,32], index: 2, kind: input, shape index: {}]
  %s3 = inlined_call_operand.hbm [shape: f32[128,9], index: 3, kind: input, shape index: {}]
  %s4 = inlined_call_operand.hbm [shape: f32[128,9], index: 4, kind: input, shape index: {}]
  %s5 = inlined_call_operand.hbm [shape: f32[128,9], index: 5, kind: input, shape index: {}]
  %s6 = inlined_call_operand.hbm [shape: bf16[32,128], index: 6, kind: input, shape index: {}]
  %s7 = inlined_call_operand.hbm [shape: f32[2,32,256], index: 7, kind: output, shape index: {}]
  %s8 = sld [smem:[#allocation0]]
  $region89: #{msfn_forward.1} parent=0
    _
  %s10 = ssub.s32 1, %s8
  %s11 = scalar_select 0, %s10, %s8
  $region1: #{msfn_forward.1} parent=0
    #allocation2 [shape = 'u8[2048]{0}', space=vmem, size = 0x800, scoped, tag = 'input window, operand 0, single buffered']
    #allocation3 [shape = 's32[2]{0}', space=sflag, size = 0x8, scoped, tag = 'scoped memory for msfn_forward.1']
    #allocation4 [shape = 's32[2]{0}', space=sflag, size = 0x8, scoped, tag = 'scoped memory for msfn_forward.1']
    #allocation5 [shape = 'u8[65536]{0}', space=vmem, size = 0x10000, scoped, tag = 'input window, operand 1']
    #allocation6 [shape = 's32[2]{0}', space=sflag, size = 0x8, scoped, tag = 'scoped memory for msfn_forward.1']
    #allocation7 [shape = 'u8[98304]{0}', space=vmem, size = 0x18000, scoped, tag = 'input window, operand 2, single buffered']
    #allocation8 [shape = 'u8[65536]{0}', space=vmem, size = 0x10000, scoped, tag = 'input window, operand 3, single buffered']
    #allocation9 [shape = 's32[1]{0}', space=sflag, size = 0x4, scoped, tag = 'scoped memory for msfn_forward.1']
    #allocation10 [shape = 'u8[65536]{0}', space=vmem, size = 0x10000, scoped, tag = 'input window, operand 4, single buffered']
    #allocation11 [shape = 'u8[65536]{0}', space=vmem, size = 0x10000, scoped, tag = 'input window, operand 5, single buffered']
    #allocation12 [shape = 's32[1]{0}', space=sflag, size = 0x4, scoped, tag = 'scoped memory for msfn_forward.1']
    #allocation13 [shape = 'u8[8192]{0}', space=vmem, size = 0x2000, scoped, tag = 'input window, operand 6, single buffered']
    #allocation14 [shape = 'u8[65536]{0}', space=vmem, size = 0x10000, scoped, tag = 'output window, operand 0']
    %12 = vsyncpa [#allocation3], 0
    %13 = vsyncpa [#allocation6], 0
    %s14 = scalar_lea.sflag [#allocation6], 1
    %15 = vsyncpa %s14, 0
    %16 = vsyncpa [#allocation9], 0
    %17 = vsyncpa [#allocation12], 0
    %18 = vsyncpa [#allocation4], 0
    %s19 = scalar_lea.sflag [#allocation4], 1
    %20 = vsyncpa %s19, 0
    loop: start=0, step=1, limit=4
    $region2: #{msfn_forward.1} parent=1 // loop_pre_header
      _
    $region3: #{msfn_forward.1} parent=1 // loop_header
      %s22 = sphi 0, %s26
      %p23 = scmp.ge.s32.totalorder %s22, 4
      %s30 = sphi 0, %s30
      %s32 = sphi 0, %s30
      %s33 = sphi 0, %s32
      %s47 = sphi 0, %s33
      %s53 = sphi 0, %s55
      %s56 = sphi 0, %s53
      %s57 = sphi 0, %s56
      %s73 = sphi 0, %s57
      %s77 = sphi 0, %s77
      %s79 = sphi 0, %s77
      %s80 = sphi 0, %s79
      %s94 = sphi 0, %s80
      %s98 = sphi 0, %s98
      %s100 = sphi 0, %s98
      %s101 = sphi 0, %s100
      %s115 = sphi 0, %s101
      %s119 = sphi 0, %s119
      %s121 = sphi 0, %s119
      %s122 = sphi 0, %s121
      %s136 = sphi 0, %s122
      %s140 = sphi 0, %s140
      %s142 = sphi 0, %s140
      %s143 = sphi 0, %s142
      %s157 = sphi 0, %s143
      %s161 = sphi 0, %s161
      %s163 = sphi 0, %s161
      %s164 = sphi 0, %s163
      %s178 = sphi 0, %s164
      %s184 = sphi 0, %s186
      %s187 = sphi 0, %s184
      %s188 = sphi 0, %s187
      %s204 = sphi 0, %s188
    $region4: #{msfn_forward.1} parent=1 // loop_header_branch
      %25 = sbr.rel (%p23) target = $region8
    $region5: #{msfn_forward.1} parent=1 // loop_body
      %s27 = ssub.s32 %s22, 1
      %s28 = ssub.s32 %s22, 2
      %s29 = sadd.s32 %s22, 1
      %s31 = sadd.s32 %s30, 1
      %p34 = scmp.eq.s32.totalorder %s22, 1
      %p35 = scmp.ne.s32.totalorder %s30, %s32
      %p36 = scmp.eq.s32.totalorder %s22, 0
      %p37 = por %p35, %p36
      %p38 = scmp.ne.s32.totalorder %s30, %s32
      %p39 = scmp.eq.s32.totalorder %s27, 1
      %p40 = por %p38, %p39
      %p41 = scmp.ne.s32.totalorder %s32, %s33
      %p42 = scmp.eq.s32.totalorder %s27, 0
      %p43 = por %p41, %p42
      %p44 = scmp.ne.s32.totalorder %s32, %s33
      %p45 = scmp.eq.s32.totalorder %s28, 1
      %p46 = por %p44, %p45
      %p48 = scmp.ne.s32.totalorder %s33, %s47
      %p49 = scmp.eq.s32.totalorder %s28, 0
      %p50 = por %p48, %p49
      %s51 = ssub.s32 %s22, %s29
      %p52 = scmp.eq.s32.totalorder %s51, 0
      %s54 = sadd.s32 %s53, 1
      %s55 = scalar_select %p52, %s53, %s54
      %p58 = pneg %p52
      %p59 = scmp.eq.s32.totalorder %s22, 1
      %p60 = por %p58, %p59
      %p61 = scmp.ne.s32.totalorder %s53, %s56
      %p62 = scmp.eq.s32.totalorder %s22, 0
      %p63 = por %p61, %p62
      %p64 = scmp.ne.s32.totalorder %s53, %s56
      %p65 = scmp.eq.s32.totalorder %s27, 1
      %p66 = por %p64, %p65
      %p67 = scmp.ne.s32.totalorder %s56, %s57
      %p68 = scmp.eq.s32.totalorder %s27, 0
      %p69 = por %p67, %p68
      %p70 = scmp.ne.s32.totalorder %s56, %s57
      %p71 = scmp.eq.s32.totalorder %s28, 1
      %p72 = por %p70, %p71
      %p74 = scmp.ne.s32.totalorder %s57, %s73
      %p75 = scmp.eq.s32.totalorder %s28, 0
      %p76 = por %p74, %p75
      %s78 = sadd.s32 %s77, 1
      %p81 = scmp.eq.s32.totalorder %s22, 1
      %p82 = scmp.ne.s32.totalorder %s77, %s79
      %p83 = scmp.eq.s32.totalorder %s22, 0
      %p84 = por %p82, %p83
      %p85 = scmp.ne.s32.totalorder %s77, %s79
      %p86 = scmp.eq.s32.totalorder %s27, 1
      %p87 = por %p85, %p86
      %p88 = scmp.ne.s32.totalorder %s79, %s80
      %p89 = scmp.eq.s32.totalorder %s27, 0
      %p90 = por %p88, %p89
      %p91 = scmp.ne.s32.totalorder %s79, %s80
      %p92 = scmp.eq.s32.totalorder %s28, 1
      %p93 = por %p91, %p92
      %p95 = scmp.ne.s32.totalorder %s80, %s94
      %p96 = scmp.eq.s32.totalorder %s28, 0
      %p97 = por %p95, %p96
      %s99 = sadd.s32 %s98, 1
      %p102 = scmp.eq.s32.totalorder %s22, 1
      %p103 = scmp.ne.s32.totalorder %s98, %s100
      %p104 = scmp.eq.s32.totalorder %s22, 0
      %p105 = por %p103, %p104
      %p106 = scmp.ne.s32.totalorder %s98, %s100
      %p107 = scmp.eq.s32.totalorder %s27, 1
      %p108 = por %p106, %p107
      %p109 = scmp.ne.s32.totalorder %s100, %s101
      %p110 = scmp.eq.s32.totalorder %s27, 0
      %p111 = por %p109, %p110
      %p112 = scmp.ne.s32.totalorder %s100, %s101
      %p113 = scmp.eq.s32.totalorder %s28, 1
      %p114 = por %p112, %p113
      %p116 = scmp.ne.s32.totalorder %s101, %s115
      %p117 = scmp.eq.s32.totalorder %s28, 0
      %p118 = por %p116, %p117
      %s120 = sadd.s32 %s119, 1
      %p123 = scmp.eq.s32.totalorder %s22, 1
      %p124 = scmp.ne.s32.totalorder %s119, %s121
      %p125 = scmp.eq.s32.totalorder %s22, 0
      %p126 = por %p124, %p125
      %p127 = scmp.ne.s32.totalorder %s119, %s121
      %p128 = scmp.eq.s32.totalorder %s27, 1
      %p129 = por %p127, %p128
      %p130 = scmp.ne.s32.totalorder %s121, %s122
      %p131 = scmp.eq.s32.totalorder %s27, 0
      %p132 = por %p130, %p131
      %p133 = scmp.ne.s32.totalorder %s121, %s122
      %p134 = scmp.eq.s32.totalorder %s28, 1
      %p135 = por %p133, %p134
      %p137 = scmp.ne.s32.totalorder %s122, %s136
      %p138 = scmp.eq.s32.totalorder %s28, 0
      %p139 = por %p137, %p138
      %s141 = sadd.s32 %s140, 1
      %p144 = scmp.eq.s32.totalorder %s22, 1
      %p145 = scmp.ne.s32.totalorder %s140, %s142
      %p146 = scmp.eq.s32.totalorder %s22, 0
      %p147 = por %p145, %p146
      %p148 = scmp.ne.s32.totalorder %s140, %s142
      %p149 = scmp.eq.s32.totalorder %s27, 1
      %p150 = por %p148, %p149
      %p151 = scmp.ne.s32.totalorder %s142, %s143
      %p152 = scmp.eq.s32.totalorder %s27, 0
      %p153 = por %p151, %p152
      %p154 = scmp.ne.s32.totalorder %s142, %s143
      %p155 = scmp.eq.s32.totalorder %s28, 1
      %p156 = por %p154, %p155
      %p158 = scmp.ne.s32.totalorder %s143, %s157
      %p159 = scmp.eq.s32.totalorder %s28, 0
      %p160 = por %p158, %p159
      %s162 = sadd.s32 %s161, 1
      %p165 = scmp.eq.s32.totalorder %s22, 1
      %p166 = scmp.ne.s32.totalorder %s161, %s163
      %p167 = scmp.eq.s32.totalorder %s22, 0
      %p168 = por %p166, %p167
      %p169 = scmp.ne.s32.totalorder %s161, %s163
      %p170 = scmp.eq.s32.totalorder %s27, 1
      %p171 = por %p169, %p170
      %p172 = scmp.ne.s32.totalorder %s163, %s164
      %p173 = scmp.eq.s32.totalorder %s27, 0
      %p174 = por %p172, %p173
      %p175 = scmp.ne.s32.totalorder %s163, %s164
      %p176 = scmp.eq.s32.totalorder %s28, 1
      %p177 = por %p175, %p176
      %p179 = scmp.ne.s32.totalorder %s164, %s178
      %p180 = scmp.eq.s32.totalorder %s28, 0
      %p181 = por %p179, %p180
      %s182 = ssub.s32 %s22, %s29
      %p183 = scmp.eq.s32.totalorder %s182, 0
      %s185 = sadd.s32 %s184, 1
      %s186 = scalar_select %p183, %s184, %s185
      %p189 = pneg %p183
      %p190 = scmp.eq.s32.totalorder %s22, 1
      %p191 = por %p189, %p190
      %p192 = scmp.ne.s32.totalorder %s184, %s187
      %p193 = scmp.eq.s32.totalorder %s22, 0
      %p194 = por %p192, %p193
      %p195 = scmp.ne.s32.totalorder %s184, %s187
      %p196 = scmp.eq.s32.totalorder %s27, 1
      %p197 = por %p195, %p196
      %p198 = scmp.ne.s32.totalorder %s187, %s188
      %p199 = scmp.eq.s32.totalorder %s27, 0
      %p200 = por %p198, %p199
      %p201 = scmp.ne.s32.totalorder %s187, %s188
      %p202 = scmp.eq.s32.totalorder %s28, 1
      %p203 = por %p201, %p202
      %p205 = scmp.ne.s32.totalorder %s188, %s204
      %p206 = scmp.eq.s32.totalorder %s28, 0
      %p207 = por %p205, %p206
      %p208 = scmp.le.s32.totalorder 1, %s22
      %p209 = scmp.lt.s32.totalorder %s22, 3
      %p210 = pnand %p208, %p209
      %p211 = pneg %p210
      // Predicated region
      $region9: #{msfn_forward.1} parent=5 // pred_check
        _
      $region10: #{msfn_forward.1} parent=5 // pred_check_branch
        %213 = sbr.rel (%p210) target = $region12
      $region11: #{msfn_forward.1} parent=5 // pred_region
        %s214 = ssub.s32 %s22, 1
        // Predicated region
        $region13: #{msfn_forward.1} parent=11 // pred_check
          %p215 = pneg %p43
        $region14: #{msfn_forward.1} parent=11 // pred_check_branch
          %217 = sbr.rel (%p215) target = $region16
        $region15: #{msfn_forward.1} parent=11 // pred_region
          %s219 = ssub.s32 64, 64
          %220 = vsyncadd [#allocation3], %s219
          %s222 = sshll.u32 [#allocation2], 4
          %s223 = int_to_ptr.vmem [resolvable:$true] %s222
          %225 = dma.hbm_to_vmem [thread:$0]  %s0, 64, %s223, [#allocation3]
        $region16: #{msfn_forward.1} parent=11 // pred_fallthru
          _
        // Predicated region
        $region17: #{msfn_forward.1} parent=11 // pred_check
          %p226 = pneg %p90
        $region18: #{msfn_forward.1} parent=11 // pred_check_branch
          %228 = sbr.rel (%p226) target = $region20
        $region19: #{msfn_forward.1} parent=11 // pred_region
          %s230 = ssub.s32 3072, 3072
          %231 = vsyncadd [#allocation6], %s230
          %s232 = sshll.u32 [#allocation7], 4
          %s233 = int_to_ptr.vmem [resolvable:$true] %s232
          %238 = dma.hbm_to_vmem [thread:$0]  %s2, 3072, %s233, [#allocation6], 64, 64, 4
        $region20: #{msfn_forward.1} parent=11 // pred_fallthru
          _
        // Predicated region
        $region21: #{msfn_forward.1} parent=11 // pred_check
          %p239 = pneg %p111
        $region22: #{msfn_forward.1} parent=11 // pred_check_branch
          %241 = sbr.rel (%p239) target = $region24
        $region23: #{msfn_forward.1} parent=11 // pred_region
          %s243 = ssub.s32 2048, 2048
          %244 = vsyncadd [#allocation9], %s243
          %s245 = sshll.u32 [#allocation8], 4
          %s246 = int_to_ptr.vmem [resolvable:$true] %s245
          %251 = dma.hbm_to_vmem [thread:$0]  %s3, 2048, %s246, [#allocation9], 128, 128, 8
        $region24: #{msfn_forward.1} parent=11 // pred_fallthru
          _
        // Predicated region
        $region25: #{msfn_forward.1} parent=11 // pred_check
          %p252 = pneg %p132
        $region26: #{msfn_forward.1} parent=11 // pred_check_branch
          %254 = sbr.rel (%p252) target = $region28
        $region27: #{msfn_forward.1} parent=11 // pred_region
          %s256 = ssub.s32 2048, 2048
          %257 = vsyncadd [#allocation9], %s256
          %s258 = sshll.u32 [#allocation10], 4
          %s259 = int_to_ptr.vmem [resolvable:$true] %s258
          %264 = dma.hbm_to_vmem [thread:$0]  %s4, 2048, %s259, [#allocation9], 128, 128, 8
        $region28: #{msfn_forward.1} parent=11 // pred_fallthru
          _
        // Predicated region
        $region29: #{msfn_forward.1} parent=11 // pred_check
          %p265 = pneg %p153
        $region30: #{msfn_forward.1} parent=11 // pred_check_branch
          %267 = sbr.rel (%p265) target = $region32
        $region31: #{msfn_forward.1} parent=11 // pred_region
          %s269 = ssub.s32 2048, 2048
          %270 = vsyncadd [#allocation12], %s269
          %s271 = sshll.u32 [#allocation11], 4
          %s272 = int_to_ptr.vmem [resolvable:$true] %s271
          %277 = dma.hbm_to_vmem [thread:$0]  %s5, 2048, %s272, [#allocation12], 128, 128, 8
        $region32: #{msfn_forward.1} parent=11 // pred_fallthru
          _
        // Predicated region
        $region33: #{msfn_forward.1} parent=11 // pred_check
          %p278 = pneg %p174
        $region34: #{msfn_forward.1} parent=11 // pred_check_branch
          %280 = sbr.rel (%p278) target = $region36
        $region35: #{msfn_forward.1} parent=11 // pred_region
          %s282 = ssub.s32 256, 256
          %283 = vsyncadd [#allocation12], %s282
          %s284 = sshll.u32 [#allocation13], 4
          %s285 = int_to_ptr.vmem [resolvable:$true] %s284
          %290 = dma.hbm_to_vmem [thread:$0]  %s6, 256, %s285, [#allocation12], 64, 64, 4
        $region36: #{msfn_forward.1} parent=11 // pred_fallthru
          _
      $region12: #{msfn_forward.1} parent=5 // pred_fallthru
        _
      %p291 = scmp.lt.s32.totalorder %s22, 2
      // Predicated region
      $region37: #{msfn_forward.1} parent=5 // pred_check
        %p292 = pneg %p291
      $region38: #{msfn_forward.1} parent=5 // pred_check_branch
        %294 = sbr.rel (%p292) target = $region40
      $region39: #{msfn_forward.1} parent=5 // pred_region
        // Predicated region
        $region41: #{msfn_forward.1} parent=39 // pred_check
          %p295 = pneg %p63
        $region42: #{msfn_forward.1} parent=39 // pred_check_branch
          %297 = sbr.rel (%p295) target = $region44
        $region43: #{msfn_forward.1} parent=39 // pred_region
          %s298 = sand.u32 %s22, 1
          %s299 = scalar_lea.sflag [#allocation6], %s298
          %s300 = sand.u32 %s53, 1
          %s301 = smul.addr %s300, 64
          %s302 = scalar_lea.vmem [#allocation5], %s301
          %s304 = ssub.s32 1024, 1024
          %305 = vsyncadd %s299, %s304
          %s306 = smul.addr %s22, 8
          %s307 = smul.addr %s306, 128
          %s308 = scalar_lea.hbm %s1, %s307
          %s309 = sshll.u32 %s302, 4
          %s310 = int_to_ptr.vmem [resolvable:$true] %s309
          %315 = dma.hbm_to_vmem [thread:$0]  %s308, 1024, %s310, %s299, 256, 256, 16
        $region44: #{msfn_forward.1} parent=39 // pred_fallthru
          _
      $region40: #{msfn_forward.1} parent=5 // pred_fallthru
        _
      %p316 = scmp.le.s32.totalorder 1, %s22
      %p317 = scmp.lt.s32.totalorder %s22, 3
      %p318 = pnand %p316, %p317
      %p319 = pneg %p318
      // Predicated region
      $region45: #{msfn_forward.1} parent=5 // pred_check
        _
      $region46: #{msfn_forward.1} parent=5 // pred_check_branch
        %321 = sbr.rel (%p318) target = $region48
      $region47: #{msfn_forward.1} parent=5 // pred_region
        %s322 = ssub.s32 %s22, 1
        // Predicated region
        $region49: #{msfn_forward.1} parent=47 // pred_check
          %p323 = pneg %p43
        $region50: #{msfn_forward.1} parent=47 // pred_check_branch
          %325 = sbr.rel (%p323) target = $region52
        $region51: #{msfn_forward.1} parent=47 // pred_region
          %326 = dma.done [#allocation3], 64
        $region52: #{msfn_forward.1} parent=47 // pred_fallthru
          _
        %s327 = sand.u32 %s27, 1
        %s328 = scalar_lea.sflag [#allocation6], %s327
        %s329 = sand.u32 %s56, 1
        %s330 = smul.addr %s329, 64
        %s331 = scalar_lea.vmem [#allocation5], %s330
        // Predicated region
        $region53: #{msfn_forward.1} parent=47 // pred_check
          %p332 = pneg %p69
        $region54: #{msfn_forward.1} parent=47 // pred_check_branch
          %334 = sbr.rel (%p332) target = $region56
        $region55: #{msfn_forward.1} parent=47 // pred_region
          %335 = dma.done %s328, 1024
        $region56: #{msfn_forward.1} parent=47 // pred_fallthru
          _
        // Predicated region
        $region57: #{msfn_forward.1} parent=47 // pred_check
          %p336 = pneg %p90
        $region58: #{msfn_forward.1} parent=47 // pred_check_branch
          %338 = sbr.rel (%p336) target = $region60
        $region59: #{msfn_forward.1} parent=47 // pred_region
          %339 = dma.done [#allocation6], 3072
        $region60: #{msfn_forward.1} parent=47 // pred_fallthru
          _
        // Predicated region
        $region61: #{msfn_forward.1} parent=47 // pred_check
          %p340 = pneg %p111
        $region62: #{msfn_forward.1} parent=47 // pred_check_branch
          %342 = sbr.rel (%p340) target = $region64
        $region63: #{msfn_forward.1} parent=47 // pred_region
          %343 = dma.done [#allocation9], 2048
        $region64: #{msfn_forward.1} parent=47 // pred_fallthru
          _
        // Predicated region
        $region65: #{msfn_forward.1} parent=47 // pred_check
          %p344 = pneg %p132
        $region66: #{msfn_forward.1} parent=47 // pred_check_branch
          %346 = sbr.rel (%p344) target = $region68
        $region67: #{msfn_forward.1} parent=47 // pred_region
          %347 = dma.done [#allocation9], 2048
        $region68: #{msfn_forward.1} parent=47 // pred_fallthru
          _
        // Predicated region
        $region69: #{msfn_forward.1} parent=47 // pred_check
          %p348 = pneg %p153
        $region70: #{msfn_forward.1} parent=47 // pred_check_branch
          %350 = sbr.rel (%p348) target = $region72
        $region71: #{msfn_forward.1} parent=47 // pred_region
          %351 = dma.done [#allocation12], 2048
        $region72: #{msfn_forward.1} parent=47 // pred_fallthru
          _
        // Predicated region
        $region73: #{msfn_forward.1} parent=47 // pred_check
          %p352 = pneg %p174
        $region74: #{msfn_forward.1} parent=47 // pred_check_branch
          %354 = sbr.rel (%p352) target = $region76
        $region75: #{msfn_forward.1} parent=47 // pred_region
          %355 = dma.done [#allocation12], 256
        $region76: #{msfn_forward.1} parent=47 // pred_fallthru
          _
        %p356 = pneg %p43
        %p357 = pneg %p40
        %s358 = sand.u32 %s27, 1
        %s359 = scalar_lea.sflag [#allocation6], %s358
        %s360 = sand.u32 %s56, 1
        %s361 = smul.addr %s360, 64
        %s362 = scalar_lea.vmem [#allocation5], %s361
        %p363 = pneg %p69
        %p364 = pneg %p66
        %p365 = pneg %p90
        %p366 = pneg %p87
        %p367 = pneg %p111
        %p368 = pneg %p108
        %p369 = pneg %p132
        %p370 = pneg %p129
        %p371 = pneg %p153
        %p372 = pneg %p150
        %p373 = pneg %p174
        %p374 = pneg %p171
        %p375 = pneg %p200
        %p376 = pneg %p197
        %s377 = sand.u32 %s187, 1
        %s378 = scalar_lea.sflag [#allocation4], %s377
        %s379 = sand.u32 %s187, 1
        %s380 = smul.addr %s379, 64
        %s381 = scalar_lea.vmem [#allocation14], %s380
        %v383 = vld [vmem:[%s331] sm:$0xff]
        %v384 = vld [vmem:[%s331 + $0x8] sm:$0xff]
        %v385 = vld [vmem:[%s331 + $0x10] sm:$0xff]
        %v386 = vld [vmem:[%s331 + $0x18] sm:$0xff]
        %v387 = vld [vmem:[%s331 + $0x20] sm:$0xff]
        %v388 = vld [vmem:[%s331 + $0x28] sm:$0xff]
        %v389 = vld [vmem:[%s331 + $0x30] sm:$0xff]
        %v390 = vld [vmem:[%s331 + $0x38] sm:$0xff]
        %v391 = vpack.c.bf16 %v385, %v383
        %v392 = vpack.c.bf16 %v386, %v384
        %v393 = vpack.c.bf16 %v389, %v387
        %v394 = vpack.c.bf16 %v390, %v388
        %v395 = vld [vmem:[#allocation2] sm:$0xf]
        %v396 = vld [vmem:[#allocation7] sm:$0xf]
        %v397 = vld [vmem:[#allocation7 + $0x4] sm:$0xf]
        %v398 = vld [vmem:[#allocation7 + $0x8] sm:$0xf]
        %v399 = vld [vmem:[#allocation7 + $0xc] sm:$0xf]
        %v400 = vld [vmem:[#allocation7 + $0x10] sm:$0xf]
        %v401 = vld [vmem:[#allocation7 + $0x14] sm:$0xf]
        %v402 = vld [vmem:[#allocation7 + $0x18] sm:$0xf]
        %v403 = vld [vmem:[#allocation7 + $0x1c] sm:$0xf]
        %v404 = vld [vmem:[#allocation7 + $0x20] sm:$0xf]
        %v405 = vld [vmem:[#allocation7 + $0x24] sm:$0xf]
        %v406 = vld [vmem:[#allocation7 + $0x28] sm:$0xf]
        %v407 = vld [vmem:[#allocation7 + $0x2c] sm:$0xf]
        %v408 = vld [vmem:[#allocation7 + $0x30] sm:$0xf]
        %v409 = vld [vmem:[#allocation7 + $0x34] sm:$0xf]
        %v410 = vld [vmem:[#allocation7 + $0x38] sm:$0xf]
        %v411 = vld [vmem:[#allocation7 + $0x3c] sm:$0xf]
        %v428 = vunpack.c.l.b16 %v396
        %v429 = vunpack.c.l.b16 %v397
        %v430 = vunpack.c.l.b16 %v398
        %v431 = vunpack.c.l.b16 %v399
        %v432 = vunpack.c.l.b16 %v400
        %v433 = vunpack.c.l.b16 %v401
        %v434 = vunpack.c.l.b16 %v402
        %v435 = vunpack.c.l.b16 %v403
        %v436 = vunpack.c.l.b16 %v404
        %v437 = vunpack.c.l.b16 %v405
        %v438 = vunpack.c.l.b16 %v406
        %v439 = vunpack.c.l.b16 %v407
        %v440 = vunpack.c.l.b16 %v408
        %v441 = vunpack.c.l.b16 %v409
        %v442 = vunpack.c.l.b16 %v410
        %v443 = vunpack.c.l.b16 %v411
        %v444 = vpack.c.b16 %v429, %v428
        %v445 = vpack.c.b16 %v431, %v430
        %v446 = vpack.c.b16 %v433, %v432
        %v447 = vpack.c.b16 %v435, %v434
        %v448 = vpack.c.b16 %v437, %v436
        %v449 = vpack.c.b16 %v439, %v438
        %v450 = vpack.c.b16 %v441, %v440
        %v451 = vpack.c.b16 %v443, %v442
        %vm452 = vcmask 261120
        %v454 = vsel %vm452, %v444, 0
        %v457 = vsel %vm452, %v445, 0
        %v460 = vsel %vm452, %v446, 0
        %v463 = vsel %vm452, %v447, 0
        %v466 = vsel %vm452, %v448, 0
        %v469 = vsel %vm452, %v449, 0
        %v472 = vsel %vm452, %v450, 0
        %v475 = vsel %vm452, %v451, 0
        %477 = vmatprep.subr.bf16.mxu0 %v392
        %478 = vmatpush1.bf16.msra.mxu0 %v391
        %479 = vmatprep.subr.bf16.mxu0 %v394
        %480 = vmatpush1.bf16.msra.mxu0 %v393
        %481 = vmatprep.subr.bf16.mxu0 0
        %482 = vmatpush1.bf16.msra.mxu0 0
        %483 = vmatprep.subr.bf16.mxu0 0
        %484 = vmatpush1.bf16.msra.mxu0 0
        %485 = vmatprep.subr.bf16.mxu0 0
        %486 = vmatpush1.bf16.msra.mxu0 0
        %487 = vmatprep.subr.bf16.mxu0 0
        %488 = vmatpush1.bf16.msra.mxu0 0
        %489 = vmatprep.subr.bf16.mxu0 0
        %490 = vmatpush1.bf16.msra.mxu0 0
        %491 = vmatprep.subr.bf16.mxu0 0
        %492 = vmatpush1.bf16.msra.mxu0 0
        %493 = vmatprep.subr.bf16.mxu0 0
        %494 = vmatpush1.bf16.msra.mxu0 0
        %495 = vmatprep.subr.bf16.mxu0 0
        %496 = vmatpush1.bf16.msra.mxu0 0
        %497 = vmatprep.subr.bf16.mxu0 0
        %498 = vmatpush1.bf16.msra.mxu0 0
        %499 = vmatprep.subr.bf16.mxu0 0
        %500 = vmatpush1.bf16.msra.mxu0 0
        %501 = vmatprep.subr.bf16.mxu0 0
        %502 = vmatpush1.bf16.msra.mxu0 0
        %503 = vmatprep.subr.bf16.mxu0 0
        %504 = vmatpush1.bf16.msra.mxu0 0
        %505 = vmatprep.subr.bf16.mxu0 0
        %506 = vmatpush1.bf16.msra.mxu0 0
        %507 = vmatprep.subr.bf16.mxu0 0
        %508 = vmatpush1.bf16.msra.mxu0 0
        %509 = vmatprep.mubr.bf16.mxu0 0
        %510 = vmatmul.mubr.bf16.gmra.mrb[0].mxu0 %v454
        %v511 = vpop.f32.mrb[0].mxu0
        %v512 = vadd.f32 0.0, %v511
        %v513 = vpop.f32.mrb[0].mxu0
        %v514 = vadd.f32 0.0, %v513
        %v515 = vpop.f32.mrb[0].mxu0
        %v516 = vadd.f32 0.0, %v515
        %v517 = vpop.f32.mrb[0].mxu0
        %v518 = vadd.f32 0.0, %v517
        %519 = vmatprep.mubr.bf16.mxu0 0
        %520 = vmatmul.mubr.bf16.gmra.mrb[0].mxu0 %v457
        %v521 = vpop.f32.mrb[0].mxu0
        %v522 = vadd.f32 0.0, %v521
        %v523 = vpop.f32.mrb[0].mxu0
        %v524 = vadd.f32 0.0, %v523
        %v525 = vpop.f32.mrb[0].mxu0
        %v526 = vadd.f32 0.0, %v525
        %v527 = vpop.f32.mrb[0].mxu0
        %v528 = vadd.f32 0.0, %v527
        %529 = vmatprep.mubr.bf16.mxu0 0
        %530 = vmatmul.mubr.bf16.gmra.mrb[0].mxu0 %v460
        %v531 = vpop.f32.mrb[0].mxu0
        %v532 = vadd.f32 0.0, %v531
        %v533 = vpop.f32.mrb[0].mxu0
        %v534 = vadd.f32 0.0, %v533
        %v535 = vpop.f32.mrb[0].mxu0
        %v536 = vadd.f32 0.0, %v535
        %v537 = vpop.f32.mrb[0].mxu0
        %v538 = vadd.f32 0.0, %v537
        %539 = vmatprep.mubr.bf16.mxu0 0
        %540 = vmatmul.mubr.bf16.gmra.mrb[0].mxu0 %v463
        %v541 = vpop.f32.mrb[0].mxu0
        %v542 = vadd.f32 0.0, %v541
        %v543 = vpop.f32.mrb[0].mxu0
        %v544 = vadd.f32 0.0, %v543
        %v545 = vpop.f32.mrb[0].mxu0
        %v546 = vadd.f32 0.0, %v545
        %v547 = vpop.f32.mrb[0].mxu0
        %v548 = vadd.f32 0.0, %v547
        %549 = vmatprep.mubr.bf16.mxu0 0
        %550 = vmatmul.mubr.bf16.gmra.mrb[0].mxu0 %v466
        %v551 = vpop.f32.mrb[0].mxu0
        %v552 = vadd.f32 0.0, %v551
        %v553 = vpop.f32.mrb[0].mxu0
        %v554 = vadd.f32 0.0, %v553
        %v555 = vpop.f32.mrb[0].mxu0
        %v556 = vadd.f32 0.0, %v555
        %v557 = vpop.f32.mrb[0].mxu0
        %v558 = vadd.f32 0.0, %v557
        %559 = vmatprep.mubr.bf16.mxu0 0
        %560 = vmatmul.mubr.bf16.gmra.mrb[0].mxu0 %v469
        %v561 = vpop.f32.mrb[0].mxu0
        %v562 = vadd.f32 0.0, %v561
        %v563 = vpop.f32.mrb[0].mxu0
        %v564 = vadd.f32 0.0, %v563
        %v565 = vpop.f32.mrb[0].mxu0
        %v566 = vadd.f32 0.0, %v565
        %v567 = vpop.f32.mrb[0].mxu0
        %v568 = vadd.f32 0.0, %v567
        %569 = vmatprep.mubr.bf16.mxu0 0
        %570 = vmatmul.mubr.bf16.gmra.mrb[0].mxu0 %v472
        %v571 = vpop.f32.mrb[0].mxu0
        %v572 = vadd.f32 0.0, %v571
        %v573 = vpop.f32.mrb[0].mxu0
        %v574 = vadd.f32 0.0, %v573
        %v575 = vpop.f32.mrb[0].mxu0
        %v576 = vadd.f32 0.0, %v575
        %v577 = vpop.f32.mrb[0].mxu0
        %v578 = vadd.f32 0.0, %v577
        %579 = vmatprep.mubr.bf16.mxu0 0
        %580 = vmatmul.mubr.bf16.gmra.mrb[0].mxu0 %v475
        %v581 = vpop.f32.mrb[0].mxu0
        %v582 = vadd.f32 0.0, %v581
        %v583 = vpop.f32.mrb[0].mxu0
        %v584 = vadd.f32 0.0, %v583
        %v585 = vpop.f32.mrb[0].mxu0
        %v586 = vadd.f32 0.0, %v585
        %v587 = vpop.f32.mrb[0].mxu0
        %v588 = vadd.f32 0.0, %v587
        %589 = vdwg.mxu0
        %v590 = vld [vmem:[#allocation8] sm:$0xff]
        %v591 = vld [vmem:[#allocation8 + $0x8] sm:$0xff]
        %v592 = vld [vmem:[#allocation8 + $0x10] sm:$0xff]
        %v593 = vld [vmem:[#allocation8 + $0x18] sm:$0xff]
        %v594 = vld [vmem:[#allocation8 + $0x20] sm:$0xff]
        %v595 = vld [vmem:[#allocation8 + $0x28] sm:$0xff]
        %v596 = vld [vmem:[#allocation8 + $0x30] sm:$0xff]
        %v597 = vld [vmem:[#allocation8 + $0x38] sm:$0xff]
        %v598 = vld [vmem:[#allocation8 + $0x40] sm:$0xff]
        %v599 = vld [vmem:[#allocation8 + $0x48] sm:$0xff]
        %v600 = vld [vmem:[#allocation8 + $0x50] sm:$0xff]
        %v601 = vld [vmem:[#allocation8 + $0x58] sm:$0xff]
        %v602 = vld [vmem:[#allocation8 + $0x60] sm:$0xff]
        %v603 = vld [vmem:[#allocation8 + $0x68] sm:$0xff]
        %v604 = vld [vmem:[#allocation8 + $0x70] sm:$0xff]
        %v605 = vld [vmem:[#allocation8 + $0x78] sm:$0xff]
        %606 = vrot.lane.b32.xlu0 %v512, 17
        %v607 = vpop.permute.xlu0 %606
        %608 = vrot.lane.b32.xlu0 %v516, 17
        %v609 = vpop.permute.xlu0 %608
        %610 = vrot.lane.b32.xlu0 %v522, 17
        %v611 = vpop.permute.xlu0 %610
        %612 = vrot.lane.b32.xlu0 %v526, 17
        %v613 = vpop.permute.xlu0 %612
        %614 = vrot.lane.b32.xlu0 %v532, 17
        %v615 = vpop.permute.xlu0 %614
        %616 = vrot.lane.b32.xlu0 %v536, 17
        %v617 = vpop.permute.xlu0 %616
        %618 = vrot.lane.b32.xlu0 %v542, 17
        %v619 = vpop.permute.xlu0 %618
        %620 = vrot.lane.b32.xlu0 %v546, 17
        %v621 = vpop.permute.xlu0 %620
        %622 = vrot.lane.b32.xlu0 %v552, 17
        %v623 = vpop.permute.xlu0 %622
        %624 = vrot.lane.b32.xlu0 %v556, 17
        %v625 = vpop.permute.xlu0 %624
        %626 = vrot.lane.b32.xlu0 %v562, 17
        %v627 = vpop.permute.xlu0 %626
        %628 = vrot.lane.b32.xlu0 %v566, 17
        %v629 = vpop.permute.xlu0 %628
        %630 = vrot.lane.b32.xlu0 %v572, 17
        %v631 = vpop.permute.xlu0 %630
        %632 = vrot.lane.b32.xlu0 %v576, 17
        %v633 = vpop.permute.xlu0 %632
        %634 = vrot.lane.b32.xlu0 %v582, 17
        %v635 = vpop.permute.xlu0 %634
        %636 = vrot.lane.b32.xlu0 %v586, 17
        %v637 = vpop.permute.xlu0 %636
        %638 = vrot.lane.b32.xlu0 %v514, 17
        %v639 = vpop.permute.xlu0 %638
        %640 = vrot.lane.b32.xlu0 %v518, 17
        %v641 = vpop.permute.xlu0 %640
        %642 = vrot.lane.b32.xlu0 %v524, 17
        %v643 = vpop.permute.xlu0 %642
        %644 = vrot.lane.b32.xlu0 %v528, 17
        %v645 = vpop.permute.xlu0 %644
        %646 = vrot.lane.b32.xlu0 %v534, 17
        %v647 = vpop.permute.xlu0 %646
        %648 = vrot.lane.b32.xlu0 %v538, 17
        %v649 = vpop.permute.xlu0 %648
        %650 = vrot.lane.b32.xlu0 %v544, 17
        %v651 = vpop.permute.xlu0 %650
        %652 = vrot.lane.b32.xlu0 %v548, 17
        %v653 = vpop.permute.xlu0 %652
        %654 = vrot.lane.b32.xlu0 %v554, 17
        %v655 = vpop.permute.xlu0 %654
        %656 = vrot.lane.b32.xlu0 %v558, 17
        %v657 = vpop.permute.xlu0 %656
        %658 = vrot.lane.b32.xlu0 %v564, 17
        %v659 = vpop.permute.xlu0 %658
        %660 = vrot.lane.b32.xlu0 %v568, 17
        %v661 = vpop.permute.xlu0 %660
        %662 = vrot.lane.b32.xlu0 %v574, 17
        %v663 = vpop.permute.xlu0 %662
        %664 = vrot.lane.b32.xlu0 %v578, 17
        %v665 = vpop.permute.xlu0 %664
        %666 = vrot.lane.b32.xlu0 %v584, 17
        %v667 = vpop.permute.xlu0 %666
        %668 = vrot.lane.b32.xlu0 %v588, 17
        %v669 = vpop.permute.xlu0 %668
        %v670 = vlaneseq
        %v671 = vand.u32 %v670, 127
        %vm672 = vcmp.lt.s32.totalorder %v671, 17
        %v673 = vsel %vm672, %v607, %v639
        %v674 = vsel %vm672, %v609, %v641
        %v675 = vsel %vm672, %v611, %v643
        %v676 = vsel %vm672, %v613, %v645
        %v677 = vsel %vm672, %v615, %v647
        %v678 = vsel %vm672, %v617, %v649
        %v679 = vsel %vm672, %v619, %v651
        %v680 = vsel %vm672, %v621, %v653
        %v681 = vsel %vm672, %v623, %v655
        %v682 = vsel %vm672, %v625, %v657
        %v683 = vsel %vm672, %v627, %v659
        %v684 = vsel %vm672, %v629, %v661
        %v685 = vsel %vm672, %v631, %v663
        %v686 = vsel %vm672, %v633, %v665
        %v687 = vsel %vm672, %v635, %v667
        %v688 = vsel %vm672, %v637, %v669
        %v689 = vsel %vm672, %v639, %v607
        %v690 = vsel %vm672, %v641, %v609
        %v691 = vsel %vm672, %v643, %v611
        %v692 = vsel %vm672, %v645, %v613
        %v693 = vsel %vm672, %v647, %v615
        %v694 = vsel %vm672, %v649, %v617
        %v695 = vsel %vm672, %v651, %v619
        %v696 = vsel %vm672, %v653, %v621
        %v697 = vsel %vm672, %v655, %v623
        %v698 = vsel %vm672, %v657, %v625
        %v699 = vsel %vm672, %v659, %v627
        %v700 = vsel %vm672, %v661, %v629
        %v701 = vsel %vm672, %v663, %v631
        %v702 = vsel %vm672, %v665, %v633
        %v703 = vsel %vm672, %v667, %v635
        %v704 = vsel %vm672, %v669, %v637
        %vm705 = vcmp.ge.s32.totalorder %v395, 16
        %vm706 = vcmp.ge.s32.totalorder %v395, 1
        %v707 = vsel %vm706, 1, 0
        %v708 = vrot.slane %v707, 7
        %v709 = vrot.slane %v708, 2
        %vm710 = vcmp.ne.s32.totalorder %v709, 0
        %vm711 = vmand %vm705, %vm710
        %v712 = vsel %vm711, 1, 0
        %v713 = vlaneseq
        %v714 = vshrl.u32 %v713, 7
        %v715 = vsub.s32 0, %v714
        %v716 = vrot.slane %v712, %v715
        %v717 = vlaneseq
        %v718 = vshrl.u32 %v717, 7
        %v719 = vsub.s32 2, %v718
        %v720 = vrot.slane %v712, %v719
        %v721 = vlaneseq
        %v722 = vshrl.u32 %v721, 7
        %v723 = vsub.s32 0, %v722
        %v724 = vrot.slane %v716, %v723
        %v725 = vlaneseq
        %v726 = vshrl.u32 %v725, 7
        %v727 = vsub.s32 0, %v726
        %v728 = vrot.slane %v720, %v727
        %vm729 = vcmp.eq.s32.totalorder %v724, 1
        %vm730 = vcmp.eq.s32.totalorder %v728, 1
        %v731 = vsel %vm729, %v689, 0.0
        %v732 = vsel %vm730, %v673, 0.0
        %v733 = vsel %vm729, %v690, 0.0
        %v734 = vsel %vm730, %v674, 0.0
        %v735 = vsel %vm729, %v691, 0.0
        %v736 = vsel %vm730, %v675, 0.0
        %v737 = vsel %vm729, %v692, 0.0
        %v738 = vsel %vm730, %v676, 0.0
        %v739 = vsel %vm729, %v693, 0.0
        %v740 = vsel %vm730, %v677, 0.0
        %v741 = vsel %vm729, %v694, 0.0
        %v742 = vsel %vm730, %v678, 0.0
        %v743 = vsel %vm729, %v695, 0.0
        %v744 = vsel %vm730, %v679, 0.0
        %v745 = vsel %vm729, %v696, 0.0
        %v746 = vsel %vm730, %v680, 0.0
        %v747 = vsel %vm729, %v697, 0.0
        %v748 = vsel %vm730, %v681, 0.0
        %v749 = vsel %vm729, %v698, 0.0
        %v750 = vsel %vm730, %v682, 0.0
        %v751 = vsel %vm729, %v699, 0.0
        %v752 = vsel %vm730, %v683, 0.0
        %v753 = vsel %vm729, %v700, 0.0
        %v754 = vsel %vm730, %v684, 0.0
        %v755 = vsel %vm729, %v701, 0.0
        %v756 = vsel %vm730, %v685, 0.0
        %v757 = vsel %vm729, %v702, 0.0
        %v758 = vsel %vm730, %v686, 0.0
        %v759 = vsel %vm729, %v703, 0.0
        %v760 = vsel %vm730, %v687, 0.0
        %v761 = vsel %vm729, %v704, 0.0
        %v762 = vsel %vm730, %v688, 0.0
        %764 = vset.pattern.permute.xlu0 0
        %765 = vperm.xlu0 %764, %v590
        %v766 = vpop.permute.xlu0 %765
        %769 = vset.pattern.permute.xlu0 0
        %770 = vperm.xlu0 %769, %v591
        %v771 = vpop.permute.xlu0 %770
        %774 = vset.pattern.permute.xlu0 0
        %775 = vperm.xlu0 %774, %v592
        %v776 = vpop.permute.xlu0 %775
        %779 = vset.pattern.permute.xlu0 0
        %780 = vperm.xlu0 %779, %v593
        %v781 = vpop.permute.xlu0 %780
        %784 = vset.pattern.permute.xlu0 0
        %785 = vperm.xlu0 %784, %v594
        %v786 = vpop.permute.xlu0 %785
        %789 = vset.pattern.permute.xlu0 0
        %790 = vperm.xlu0 %789, %v595
        %v791 = vpop.permute.xlu0 %790
        %794 = vset.pattern.permute.xlu0 0
        %795 = vperm.xlu0 %794, %v596
        %v796 = vpop.permute.xlu0 %795
        %799 = vset.pattern.permute.xlu0 0
        %800 = vperm.xlu0 %799, %v597
        %v801 = vpop.permute.xlu0 %800
        %804 = vset.pattern.permute.xlu0 0
        %805 = vperm.xlu0 %804, %v598
        %v806 = vpop.permute.xlu0 %805
        %809 = vset.pattern.permute.xlu0 0
        %810 = vperm.xlu0 %809, %v599
        %v811 = vpop.permute.xlu0 %810
        %814 = vset.pattern.permute.xlu0 0
        %815 = vperm.xlu0 %814, %v600
        %v816 = vpop.permute.xlu0 %815
        %819 = vset.pattern.permute.xlu0 0
        %820 = vperm.xlu0 %819, %v601
        %v821 = vpop.permute.xlu0 %820
        %824 = vset.pattern.permute.xlu0 0
        %825 = vperm.xlu0 %824, %v602
        %v826 = vpop.permute.xlu0 %825
        %829 = vset.pattern.permute.xlu0 0
        %830 = vperm.xlu0 %829, %v603
        %v831 = vpop.permute.xlu0 %830
        %834 = vset.pattern.permute.xlu0 0
        %835 = vperm.xlu0 %834, %v604
        %v836 = vpop.permute.xlu0 %835
        %839 = vset.pattern.permute.xlu0 0
        %840 = vperm.xlu0 %839, %v605
        %v841 = vpop.permute.xlu0 %840
        %v843 = vmul.f32 %v731, %v766
        %v844 = vmul.f32 %v732, %v766
        %v845 = vmul.f32 %v733, %v771
        %v846 = vmul.f32 %v734, %v771
        %v847 = vmul.f32 %v735, %v776
        %v848 = vmul.f32 %v736, %v776
        %v849 = vmul.f32 %v737, %v781
        %v850 = vmul.f32 %v738, %v781
        %v851 = vmul.f32 %v739, %v786
        %v852 = vmul.f32 %v740, %v786
        %v853 = vmul.f32 %v741, %v791
        %v854 = vmul.f32 %v742, %v791
        %v855 = vmul.f32 %v743, %v796
        %v856 = vmul.f32 %v744, %v796
        %v857 = vmul.f32 %v745, %v801
        %v858 = vmul.f32 %v746, %v801
        %v859 = vmul.f32 %v747, %v806
        %v860 = vmul.f32 %v748, %v806
        %v861 = vmul.f32 %v749, %v811
        %v862 = vmul.f32 %v750, %v811
        %v863 = vmul.f32 %v751, %v816
        %v864 = vmul.f32 %v752, %v816
        %v865 = vmul.f32 %v753, %v821
        %v866 = vmul.f32 %v754, %v821
        %v867 = vmul.f32 %v755, %v826
        %v868 = vmul.f32 %v756, %v826
        %v869 = vmul.f32 %v757, %v831
        %v870 = vmul.f32 %v758, %v831
        %v871 = vmul.f32 %v759, %v836
        %v872 = vmul.f32 %v760, %v836
        %v873 = vmul.f32 %v761, %v841
        %v874 = vmul.f32 %v762, %v841
        %875 = vrot.lane.b32.xlu0 %v512, 16
        %v876 = vpop.permute.xlu0 %875
        %877 = vrot.lane.b32.xlu0 %v516, 16
        %v878 = vpop.permute.xlu0 %877
        %879 = vrot.lane.b32.xlu0 %v522, 16
        %v880 = vpop.permute.xlu0 %879
        %881 = vrot.lane.b32.xlu0 %v526, 16
        %v882 = vpop.permute.xlu0 %881
        %883 = vrot.lane.b32.xlu0 %v532, 16
        %v884 = vpop.permute.xlu0 %883
        %885 = vrot.lane.b32.xlu0 %v536, 16
        %v886 = vpop.permute.xlu0 %885
        %887 = vrot.lane.b32.xlu0 %v542, 16
        %v888 = vpop.permute.xlu0 %887
        %889 = vrot.lane.b32.xlu0 %v546, 16
        %v890 = vpop.permute.xlu0 %889
        %891 = vrot.lane.b32.xlu0 %v552, 16
        %v892 = vpop.permute.xlu0 %891
        %893 = vrot.lane.b32.xlu0 %v556, 16
        %v894 = vpop.permute.xlu0 %893
        %895 = vrot.lane.b32.xlu0 %v562, 16
        %v896 = vpop.permute.xlu0 %895
        %897 = vrot.lane.b32.xlu0 %v566, 16
        %v898 = vpop.permute.xlu0 %897
        %899 = vrot.lane.b32.xlu0 %v572, 16
        %v900 = vpop.permute.xlu0 %899
        %901 = vrot.lane.b32.xlu0 %v576, 16
        %v902 = vpop.permute.xlu0 %901
        %903 = vrot.lane.b32.xlu0 %v582, 16
        %v904 = vpop.permute.xlu0 %903
        %905 = vrot.lane.b32.xlu0 %v586, 16
        %v906 = vpop.permute.xlu0 %905
        %907 = vrot.lane.b32.xlu0 %v514, 16
        %v908 = vpop.permute.xlu0 %907
        %909 = vrot.lane.b32.xlu0 %v518, 16
        %v910 = vpop.permute.xlu0 %909
        %911 = vrot.lane.b32.xlu0 %v524, 16
        %v912 = vpop.permute.xlu0 %911
        %913 = vrot.lane.b32.xlu0 %v528, 16
        %v914 = vpop.permute.xlu0 %913
        %915 = vrot.lane.b32.xlu0 %v534, 16
        %v916 = vpop.permute.xlu0 %915
        %917 = vrot.lane.b32.xlu0 %v538, 16
        %v918 = vpop.permute.xlu0 %917
        %919 = vrot.lane.b32.xlu0 %v544, 16
        %v920 = vpop.permute.xlu0 %919
        %921 = vrot.lane.b32.xlu0 %v548, 16
        %v922 = vpop.permute.xlu0 %921
        %923 = vrot.lane.b32.xlu0 %v554, 16
        %v924 = vpop.permute.xlu0 %923
        %925 = vrot.lane.b32.xlu0 %v558, 16
        %v926 = vpop.permute.xlu0 %925
        %927 = vrot.lane.b32.xlu0 %v564, 16
        %v928 = vpop.permute.xlu0 %927
        %929 = vrot.lane.b32.xlu0 %v568, 16
        %v930 = vpop.permute.xlu0 %929
        %931 = vrot.lane.b32.xlu0 %v574, 16
        %v932 = vpop.permute.xlu0 %931
        %933 = vrot.lane.b32.xlu0 %v578, 16
        %v934 = vpop.permute.xlu0 %933
        %935 = vrot.lane.b32.xlu0 %v584, 16
        %v936 = vpop.permute.xlu0 %935
        %937 = vrot.lane.b32.xlu0 %v588, 16
        %v938 = vpop.permute.xlu0 %937
        %vm939 = vcmp.lt.s32.totalorder %v671, 16
        %v940 = vsel %vm939, %v876, %v908
        %v941 = vsel %vm939, %v878, %v910
        %v942 = vsel %vm939, %v880, %v912
        %v943 = vsel %vm939, %v882, %v914
        %v944 = vsel %vm939, %v884, %v916
        %v945 = vsel %vm939, %v886, %v918
        %v946 = vsel %vm939, %v888, %v920
        %v947 = vsel %vm939, %v890, %v922
        %v948 = vsel %vm939, %v892, %v924
        %v949 = vsel %vm939, %v894, %v926
        %v950 = vsel %vm939, %v896, %v928
        %v951 = vsel %vm939, %v898, %v930
        %v952 = vsel %vm939, %v900, %v932
        %v953 = vsel %vm939, %v902, %v934
        %v954 = vsel %vm939, %v904, %v936
        %v955 = vsel %vm939, %v906, %v938
        %v956 = vsel %vm939, %v908, %v876
        %v957 = vsel %vm939, %v910, %v878
        %v958 = vsel %vm939, %v912, %v880
        %v959 = vsel %vm939, %v914, %v882
        %v960 = vsel %vm939, %v916, %v884
        %v961 = vsel %vm939, %v918, %v886
        %v962 = vsel %vm939, %v920, %v888
        %v963 = vsel %vm939, %v922, %v890
        %v964 = vsel %vm939, %v924, %v892
        %v965 = vsel %vm939, %v926, %v894
        %v966 = vsel %vm939, %v928, %v896
        %v967 = vsel %vm939, %v930, %v898
        %v968 = vsel %vm939, %v932, %v900
        %v969 = vsel %vm939, %v934, %v902
        %v970 = vsel %vm939, %v936, %v904
        %v971 = vsel %vm939, %v938, %v906
        %v972 = vsel %vm705, 1, 0
        %v973 = vlaneseq
        %v974 = vshrl.u32 %v973, 7
        %v975 = vsub.s32 0, %v974
        %v976 = vrot.slane %v972, %v975
        %v977 = vlaneseq
        %v978 = vshrl.u32 %v977, 7
        %v979 = vsub.s32 2, %v978
        %v980 = vrot.slane %v972, %v979
        %v981 = vlaneseq
        %v982 = vshrl.u32 %v981, 7
        %v983 = vsub.s32 0, %v982
        %v984 = vrot.slane %v976, %v983
        %v985 = vlaneseq
        %v986 = vshrl.u32 %v985, 7
        %v987 = vsub.s32 0, %v986
        %v988 = vrot.slane %v980, %v987
        %vm989 = vcmp.eq.s32.totalorder %v984, 1
        %vm990 = vcmp.eq.s32.totalorder %v988, 1
        %v991 = vsel %vm989, %v956, 0.0
        %v992 = vsel %vm990, %v940, 0.0
        %v993 = vsel %vm989, %v957, 0.0
        %v994 = vsel %vm990, %v941, 0.0
        %v995 = vsel %vm989, %v958, 0.0
        %v996 = vsel %vm990, %v942, 0.0
        %v997 = vsel %vm989, %v959, 0.0
        %v998 = vsel %vm990, %v943, 0.0
        %v999 = vsel %vm989, %v960, 0.0
        %v1000 = vsel %vm990, %v944, 0.0
        %v1001 = vsel %vm989, %v961, 0.0
        %v1002 = vsel %vm990, %v945, 0.0
        %v1003 = vsel %vm989, %v962, 0.0
        %v1004 = vsel %vm990, %v946, 0.0
        %v1005 = vsel %vm989, %v963, 0.0
        %v1006 = vsel %vm990, %v947, 0.0
        %v1007 = vsel %vm989, %v964, 0.0
        %v1008 = vsel %vm990, %v948, 0.0
        %v1009 = vsel %vm989, %v965, 0.0
        %v1010 = vsel %vm990, %v949, 0.0
        %v1011 = vsel %vm989, %v966, 0.0
        %v1012 = vsel %vm990, %v950, 0.0
        %v1013 = vsel %vm989, %v967, 0.0
        %v1014 = vsel %vm990, %v951, 0.0
        %v1015 = vsel %vm989, %v968, 0.0
        %v1016 = vsel %vm990, %v952, 0.0
        %v1017 = vsel %vm989, %v969, 0.0
        %v1018 = vsel %vm990, %v953, 0.0
        %v1019 = vsel %vm989, %v970, 0.0
        %v1020 = vsel %vm990, %v954, 0.0
        %v1021 = vsel %vm989, %v971, 0.0
        %v1022 = vsel %vm990, %v955, 0.0
        %1023 = vset.pattern.permute.xlu0 1
        %1024 = vperm.xlu0 %1023, %v590
        %v1025 = vpop.permute.xlu0 %1024
        %1027 = vset.pattern.permute.xlu0 1
        %1028 = vperm.xlu0 %1027, %v591
        %v1029 = vpop.permute.xlu0 %1028
        %1031 = vset.pattern.permute.xlu0 1
        %1032 = vperm.xlu0 %1031, %v592
        %v1033 = vpop.permute.xlu0 %1032
        %1035 = vset.pattern.permute.xlu0 1
        %1036 = vperm.xlu0 %1035, %v593
        %v1037 = vpop.permute.xlu0 %1036
        %1039 = vset.pattern.permute.xlu0 1
        %1040 = vperm.xlu0 %1039, %v594
        %v1041 = vpop.permute.xlu0 %1040
        %1043 = vset.pattern.permute.xlu0 1
        %1044 = vperm.xlu0 %1043, %v595
        %v1045 = vpop.permute.xlu0 %1044
        %1047 = vset.pattern.permute.xlu0 1
        %1048 = vperm.xlu0 %1047, %v596
        %v1049 = vpop.permute.xlu0 %1048
        %1051 = vset.pattern.permute.xlu0 1
        %1052 = vperm.xlu0 %1051, %v597
        %v1053 = vpop.permute.xlu0 %1052
        %1055 = vset.pattern.permute.xlu0 1
        %1056 = vperm.xlu0 %1055, %v598
        %v1057 = vpop.permute.xlu0 %1056
        %1059 = vset.pattern.permute.xlu0 1
        %1060 = vperm.xlu0 %1059, %v599
        %v1061 = vpop.permute.xlu0 %1060
        %1063 = vset.pattern.permute.xlu0 1
        %1064 = vperm.xlu0 %1063, %v600
        %v1065 = vpop.permute.xlu0 %1064
        %1067 = vset.pattern.permute.xlu0 1
        %1068 = vperm.xlu0 %1067, %v601
        %v1069 = vpop.permute.xlu0 %1068
        %1071 = vset.pattern.permute.xlu0 1
        %1072 = vperm.xlu0 %1071, %v602
        %v1073 = vpop.permute.xlu0 %1072
        %1075 = vset.pattern.permute.xlu0 1
        %1076 = vperm.xlu0 %1075, %v603
        %v1077 = vpop.permute.xlu0 %1076
        %1079 = vset.pattern.permute.xlu0 1
        %1080 = vperm.xlu0 %1079, %v604
        %v1081 = vpop.permute.xlu0 %1080
        %1083 = vset.pattern.permute.xlu0 1
        %1084 = vperm.xlu0 %1083, %v605
        %v1085 = vpop.permute.xlu0 %1084
        %v1087 = vmul.f32 %v991, %v1025
        %v1088 = vmul.f32 %v992, %v1025
        %v1089 = vmul.f32 %v993, %v1029
        %v1090 = vmul.f32 %v994, %v1029
        %v1091 = vmul.f32 %v995, %v1033
        %v1092 = vmul.f32 %v996, %v1033
        %v1093 = vmul.f32 %v997, %v1037
        %v1094 = vmul.f32 %v998, %v1037
        %v1095 = vmul.f32 %v999, %v1041
        %v1096 = vmul.f32 %v1000, %v1041
        %v1097 = vmul.f32 %v1001, %v1045
        %v1098 = vmul.f32 %v1002, %v1045
        %v1099 = vmul.f32 %v1003, %v1049
        %v1100 = vmul.f32 %v1004, %v1049
        %v1101 = vmul.f32 %v1005, %v1053
        %v1102 = vmul.f32 %v1006, %v1053
        %v1103 = vmul.f32 %v1007, %v1057
        %v1104 = vmul.f32 %v1008, %v1057
        %v1105 = vmul.f32 %v1009, %v1061
        %v1106 = vmul.f32 %v1010, %v1061
        %v1107 = vmul.f32 %v1011, %v1065
        %v1108 = vmul.f32 %v1012, %v1065
        %v1109 = vmul.f32 %v1013, %v1069
        %v1110 = vmul.f32 %v1014, %v1069
        %v1111 = vmul.f32 %v1015, %v1073
        %v1112 = vmul.f32 %v1016, %v1073
        %v1113 = vmul.f32 %v1017, %v1077
        %v1114 = vmul.f32 %v1018, %v1077
        %v1115 = vmul.f32 %v1019, %v1081
        %v1116 = vmul.f32 %v1020, %v1081
        %v1117 = vmul.f32 %v1021, %v1085
        %v1118 = vmul.f32 %v1022, %v1085
        %v1119 = vadd.f32 %v843, %v1087
        %v1120 = vadd.f32 %v844, %v1088
        %v1121 = vadd.f32 %v845, %v1089
        %v1122 = vadd.f32 %v846, %v1090
        %v1123 = vadd.f32 %v847, %v1091
        %v1124 = vadd.f32 %v848, %v1092
        %v1125 = vadd.f32 %v849, %v1093
        %v1126 = vadd.f32 %v850, %v1094
        %v1127 = vadd.f32 %v851, %v1095
        %v1128 = vadd.f32 %v852, %v1096
        %v1129 = vadd.f32 %v853, %v1097
        %v1130 = vadd.f32 %v854, %v1098
        %v1131 = vadd.f32 %v855, %v1099
        %v1132 = vadd.f32 %v856, %v1100
        %v1133 = vadd.f32 %v857, %v1101
        %v1134 = vadd.f32 %v858, %v1102
        %v1135 = vadd.f32 %v859, %v1103
        %v1136 = vadd.f32 %v860, %v1104
        %v1137 = vadd.f32 %v861, %v1105
        %v1138 = vadd.f32 %v862, %v1106
        %v1139 = vadd.f32 %v863, %v1107
        %v1140 = vadd.f32 %v864, %v1108
        %v1141 = vadd.f32 %v865, %v1109
        %v1142 = vadd.f32 %v866, %v1110
        %v1143 = vadd.f32 %v867, %v1111
        %v1144 = vadd.f32 %v868, %v1112
        %v1145 = vadd.f32 %v869, %v1113
        %v1146 = vadd.f32 %v870, %v1114
        %v1147 = vadd.f32 %v871, %v1115
        %v1148 = vadd.f32 %v872, %v1116
        %v1149 = vadd.f32 %v873, %v1117
        %v1150 = vadd.f32 %v874, %v1118
        %1151 = vrot.lane.b32.xlu0 %v512, 15
        %v1152 = vpop.permute.xlu0 %1151
        %1153 = vrot.lane.b32.xlu0 %v516, 15
        %v1154 = vpop.permute.xlu0 %1153
        %1155 = vrot.lane.b32.xlu0 %v522, 15
        %v1156 = vpop.permute.xlu0 %1155
        %1157 = vrot.lane.b32.xlu0 %v526, 15
        %v1158 = vpop.permute.xlu0 %1157
        %1159 = vrot.lane.b32.xlu0 %v532, 15
        %v1160 = vpop.permute.xlu0 %1159
        %1161 = vrot.lane.b32.xlu0 %v536, 15
        %v1162 = vpop.permute.xlu0 %1161
        %1163 = vrot.lane.b32.xlu0 %v542, 15
        %v1164 = vpop.permute.xlu0 %1163
        %1165 = vrot.lane.b32.xlu0 %v546, 15
        %v1166 = vpop.permute.xlu0 %1165
        %1167 = vrot.lane.b32.xlu0 %v552, 15
        %v1168 = vpop.permute.xlu0 %1167
        %1169 = vrot.lane.b32.xlu0 %v556, 15
        %v1170 = vpop.permute.xlu0 %1169
        %1171 = vrot.lane.b32.xlu0 %v562, 15
        %v1172 = vpop.permute.xlu0 %1171
        %1173 = vrot.lane.b32.xlu0 %v566, 15
        %v1174 = vpop.permute.xlu0 %1173
        %1175 = vrot.lane.b32.xlu0 %v572, 15
        %v1176 = vpop.permute.xlu0 %1175
        %1177 = vrot.lane.b32.xlu0 %v576, 15
        %v1178 = vpop.permute.xlu0 %1177
        %1179 = vrot.lane.b32.xlu0 %v582, 15
        %v1180 = vpop.permute.xlu0 %1179
        %1181 = vrot.lane.b32.xlu0 %v586, 15
        %v1182 = vpop.permute.xlu0 %1181
        %1183 = vrot.lane.b32.xlu0 %v514, 15
        %v1184 = vpop.permute.xlu0 %1183
        %1185 = vrot.lane.b32.xlu0 %v518, 15
        %v1186 = vpop.permute.xlu0 %1185
        %1187 = vrot.lane.b32.xlu0 %v524, 15
        %v1188 = vpop.permute.xlu0 %1187
        %1189 = vrot.lane.b32.xlu0 %v528, 15
        %v1190 = vpop.permute.xlu0 %1189
        %1191 = vrot.lane.b32.xlu0 %v534, 15
        %v1192 = vpop.permute.xlu0 %1191
        %1193 = vrot.lane.b32.xlu0 %v538, 15
        %v1194 = vpop.permute.xlu0 %1193
        %1195 = vrot.lane.b32.xlu0 %v544, 15
        %v1196 = vpop.permute.xlu0 %1195
        %1197 = vrot.lane.b32.xlu0 %v548, 15
        %v1198 = vpop.permute.xlu0 %1197
        %1199 = vrot.lane.b32.xlu0 %v554, 15
        %v1200 = vpop.permute.xlu0 %1199
        %1201 = vrot.lane.b32.xlu0 %v558, 15
        %v1202 = vpop.permute.xlu0 %1201
        %1203 = vrot.lane.b32.xlu0 %v564, 15
        %v1204 = vpop.permute.xlu0 %1203
        %1205 = vrot.lane.b32.xlu0 %v568, 15
        %v1206 = vpop.permute.xlu0 %1205
        %1207 = vrot.lane.b32.xlu0 %v574, 15
        %v1208 = vpop.permute.xlu0 %1207
        %1209 = vrot.lane.b32.xlu0 %v578, 15
        %v1210 = vpop.permute.xlu0 %1209
        %1211 = vrot.lane.b32.xlu0 %v584, 15
        %v1212 = vpop.permute.xlu0 %1211
        %1213 = vrot.lane.b32.xlu0 %v588, 15
        %v1214 = vpop.permute.xlu0 %1213
        %vm1215 = vcmp.lt.s32.totalorder %v671, 15
        %v1216 = vsel %vm1215, %v1152, %v1184
        %v1217 = vsel %vm1215, %v1154, %v1186
        %v1218 = vsel %vm1215, %v1156, %v1188
        %v1219 = vsel %vm1215, %v1158, %v1190
        %v1220 = vsel %vm1215, %v1160, %v1192
        %v1221 = vsel %vm1215, %v1162, %v1194
        %v1222 = vsel %vm1215, %v1164, %v1196
        %v1223 = vsel %vm1215, %v1166, %v1198
        %v1224 = vsel %vm1215, %v1168, %v1200
        %v1225 = vsel %vm1215, %v1170, %v1202
        %v1226 = vsel %vm1215, %v1172, %v1204
        %v1227 = vsel %vm1215, %v1174, %v1206
        %v1228 = vsel %vm1215, %v1176, %v1208
        %v1229 = vsel %vm1215, %v1178, %v1210
        %v1230 = vsel %vm1215, %v1180, %v1212
        %v1231 = vsel %vm1215, %v1182, %v1214
        %v1232 = vsel %vm1215, %v1184, %v1152
        %v1233 = vsel %vm1215, %v1186, %v1154
        %v1234 = vsel %vm1215, %v1188, %v1156
        %v1235 = vsel %vm1215, %v1190, %v1158
        %v1236 = vsel %vm1215, %v1192, %v1160
        %v1237 = vsel %vm1215, %v1194, %v1162
        %v1238 = vsel %vm1215, %v1196, %v1164
        %v1239 = vsel %vm1215, %v1198, %v1166
        %v1240 = vsel %vm1215, %v1200, %v1168
        %v1241 = vsel %vm1215, %v1202, %v1170
        %v1242 = vsel %vm1215, %v1204, %v1172
        %v1243 = vsel %vm1215, %v1206, %v1174
        %v1244 = vsel %vm1215, %v1208, %v1176
        %v1245 = vsel %vm1215, %v1210, %v1178
        %v1246 = vsel %vm1215, %v1212, %v1180
        %v1247 = vsel %vm1215, %v1214, %v1182
        %vm1248 = vcmp.lt.s32.totalorder %v395, 15
        %v1249 = vsel %vm1248, 1, 0
        %v1250 = vrot.slane %v1249, 7
        %v1251 = vrot.slane %v1250, 2
        %vm1252 = vcmp.ne.s32.totalorder %v1251, 0
        %vm1253 = vmand %vm705, %vm1252
        %v1254 = vsel %vm1253, 1, 0
        %v1255 = vlaneseq
        %v1256 = vshrl.u32 %v1255, 7
        %v1257 = vsub.s32 0, %v1256
        %v1258 = vrot.slane %v1254, %v1257
        %v1259 = vlaneseq
        %v1260 = vshrl.u32 %v1259, 7
        %v1261 = vsub.s32 2, %v1260
        %v1262 = vrot.slane %v1254, %v1261
        %v1263 = vlaneseq
        %v1264 = vshrl.u32 %v1263, 7
        %v1265 = vsub.s32 0, %v1264
        %v1266 = vrot.slane %v1258, %v1265
        %v1267 = vlaneseq
        %v1268 = vshrl.u32 %v1267, 7
        %v1269 = vsub.s32 0, %v1268
        %v1270 = vrot.slane %v1262, %v1269
        %vm1271 = vcmp.eq.s32.totalorder %v1266, 1
        %vm1272 = vcmp.eq.s32.totalorder %v1270, 1
        %v1273 = vsel %vm1271, %v1232, 0.0
        %v1274 = vsel %vm1272, %v1216, 0.0
        %v1275 = vsel %vm1271, %v1233, 0.0
        %v1276 = vsel %vm1272, %v1217, 0.0
        %v1277 = vsel %vm1271, %v1234, 0.0
        %v1278 = vsel %vm1272, %v1218, 0.0
        %v1279 = vsel %vm1271, %v1235, 0.0
        %v1280 = vsel %vm1272, %v1219, 0.0
        %v1281 = vsel %vm1271, %v1236, 0.0
        %v1282 = vsel %vm1272, %v1220, 0.0
        %v1283 = vsel %vm1271, %v1237, 0.0
        %v1284 = vsel %vm1272, %v1221, 0.0
        %v1285 = vsel %vm1271, %v1238, 0.0
        %v1286 = vsel %vm1272, %v1222, 0.0
        %v1287 = vsel %vm1271, %v1239, 0.0
        %v1288 = vsel %vm1272, %v1223, 0.0
        %v1289 = vsel %vm1271, %v1240, 0.0
        %v1290 = vsel %vm1272, %v1224, 0.0
        %v1291 = vsel %vm1271, %v1241, 0.0
        %v1292 = vsel %vm1272, %v1225, 0.0
        %v1293 = vsel %vm1271, %v1242, 0.0
        %v1294 = vsel %vm1272, %v1226, 0.0
        %v1295 = vsel %vm1271, %v1243, 0.0
        %v1296 = vsel %vm1272, %v1227, 0.0
        %v1297 = vsel %vm1271, %v1244, 0.0
        %v1298 = vsel %vm1272, %v1228, 0.0
        %v1299 = vsel %vm1271, %v1245, 0.0
        %v1300 = vsel %vm1272, %v1229, 0.0
        %v1301 = vsel %vm1271, %v1246, 0.0
        %v1302 = vsel %vm1272, %v1230, 0.0
        %v1303 = vsel %vm1271, %v1247, 0.0
        %v1304 = vsel %vm1272, %v1231, 0.0
        %1305 = vset.pattern.permute.xlu0 2
        %1306 = vperm.xlu0 %1305, %v590
        %v1307 = vpop.permute.xlu0 %1306
        %1309 = vset.pattern.permute.xlu0 2
        %1310 = vperm.xlu0 %1309, %v591
        %v1311 = vpop.permute.xlu0 %1310
        %1313 = vset.pattern.permute.xlu0 2
        %1314 = vperm.xlu0 %1313, %v592
        %v1315 = vpop.permute.xlu0 %1314
        %1317 = vset.pattern.permute.xlu0 2
        %1318 = vperm.xlu0 %1317, %v593
        %v1319 = vpop.permute.xlu0 %1318
        %1321 = vset.pattern.permute.xlu0 2
        %1322 = vperm.xlu0 %1321, %v594
        %v1323 = vpop.permute.xlu0 %1322
        %1325 = vset.pattern.permute.xlu0 2
        %1326 = vperm.xlu0 %1325, %v595
        %v1327 = vpop.permute.xlu0 %1326
        %1329 = vset.pattern.permute.xlu0 2
        %1330 = vperm.xlu0 %1329, %v596
        %v1331 = vpop.permute.xlu0 %1330
        %1333 = vset.pattern.permute.xlu0 2
        %1334 = vperm.xlu0 %1333, %v597
        %v1335 = vpop.permute.xlu0 %1334
        %1337 = vset.pattern.permute.xlu0 2
        %1338 = vperm.xlu0 %1337, %v598
        %v1339 = vpop.permute.xlu0 %1338
        %1341 = vset.pattern.permute.xlu0 2
        %1342 = vperm.xlu0 %1341, %v599
        %v1343 = vpop.permute.xlu0 %1342
        %1345 = vset.pattern.permute.xlu0 2
        %1346 = vperm.xlu0 %1345, %v600
        %v1347 = vpop.permute.xlu0 %1346
        %1349 = vset.pattern.permute.xlu0 2
        %1350 = vperm.xlu0 %1349, %v601
        %v1351 = vpop.permute.xlu0 %1350
        %1353 = vset.pattern.permute.xlu0 2
        %1354 = vperm.xlu0 %1353, %v602
        %v1355 = vpop.permute.xlu0 %1354
        %1357 = vset.pattern.permute.xlu0 2
        %1358 = vperm.xlu0 %1357, %v603
        %v1359 = vpop.permute.xlu0 %1358
        %1361 = vset.pattern.permute.xlu0 2
        %1362 = vperm.xlu0 %1361, %v604
        %v1363 = vpop.permute.xlu0 %1362
        %1365 = vset.pattern.permute.xlu0 2
        %1366 = vperm.xlu0 %1365, %v605
        %v1367 = vpop.permute.xlu0 %1366
        %v1369 = vmul.f32 %v1273, %v1307
        %v1370 = vmul.f32 %v1274, %v1307
        %v1371 = vmul.f32 %v1275, %v1311
        %v1372 = vmul.f32 %v1276, %v1311
        %v1373 = vmul.f32 %v1277, %v1315
        %v1374 = vmul.f32 %v1278, %v1315
        %v1375 = vmul.f32 %v1279, %v1319
        %v1376 = vmul.f32 %v1280, %v1319
        %v1377 = vmul.f32 %v1281, %v1323
        %v1378 = vmul.f32 %v1282, %v1323
        %v1379 = vmul.f32 %v1283, %v1327
        %v1380 = vmul.f32 %v1284, %v1327
        %v1381 = vmul.f32 %v1285, %v1331
        %v1382 = vmul.f32 %v1286, %v1331
        %v1383 = vmul.f32 %v1287, %v1335
        %v1384 = vmul.f32 %v1288, %v1335
        %v1385 = vmul.f32 %v1289, %v1339
        %v1386 = vmul.f32 %v1290, %v1339
        %v1387 = vmul.f32 %v1291, %v1343
        %v1388 = vmul.f32 %v1292, %v1343
        %v1389 = vmul.f32 %v1293, %v1347
        %v1390 = vmul.f32 %v1294, %v1347
        %v1391 = vmul.f32 %v1295, %v1351
        %v1392 = vmul.f32 %v1296, %v1351
        %v1393 = vmul.f32 %v1297, %v1355
        %v1394 = vmul.f32 %v1298, %v1355
        %v1395 = vmul.f32 %v1299, %v1359
        %v1396 = vmul.f32 %v1300, %v1359
        %v1397 = vmul.f32 %v1301, %v1363
        %v1398 = vmul.f32 %v1302, %v1363
        %v1399 = vmul.f32 %v1303, %v1367
        %v1400 = vmul.f32 %v1304, %v1367
        %v1401 = vadd.f32 %v1119, %v1369
        %v1402 = vadd.f32 %v1120, %v1370
        %v1403 = vadd.f32 %v1121, %v1371
        %v1404 = vadd.f32 %v1122, %v1372
        %v1405 = vadd.f32 %v1123, %v1373
        %v1406 = vadd.f32 %v1124, %v1374
        %v1407 = vadd.f32 %v1125, %v1375
        %v1408 = vadd.f32 %v1126, %v1376
        %v1409 = vadd.f32 %v1127, %v1377
        %v1410 = vadd.f32 %v1128, %v1378
        %v1411 = vadd.f32 %v1129, %v1379
        %v1412 = vadd.f32 %v1130, %v1380
        %v1413 = vadd.f32 %v1131, %v1381
        %v1414 = vadd.f32 %v1132, %v1382
        %v1415 = vadd.f32 %v1133, %v1383
        %v1416 = vadd.f32 %v1134, %v1384
        %v1417 = vadd.f32 %v1135, %v1385
        %v1418 = vadd.f32 %v1136, %v1386
        %v1419 = vadd.f32 %v1137, %v1387
        %v1420 = vadd.f32 %v1138, %v1388
        %v1421 = vadd.f32 %v1139, %v1389
        %v1422 = vadd.f32 %v1140, %v1390
        %v1423 = vadd.f32 %v1141, %v1391
        %v1424 = vadd.f32 %v1142, %v1392
        %v1425 = vadd.f32 %v1143, %v1393
        %v1426 = vadd.f32 %v1144, %v1394
        %v1427 = vadd.f32 %v1145, %v1395
        %v1428 = vadd.f32 %v1146, %v1396
        %v1429 = vadd.f32 %v1147, %v1397
        %v1430 = vadd.f32 %v1148, %v1398
        %v1431 = vadd.f32 %v1149, %v1399
        %v1432 = vadd.f32 %v1150, %v1400
        %1433 = vrot.lane.b32.xlu0 %v512, 1
        %v1434 = vpop.permute.xlu0 %1433
        %1435 = vrot.lane.b32.xlu0 %v516, 1
        %v1436 = vpop.permute.xlu0 %1435
        %1437 = vrot.lane.b32.xlu0 %v522, 1
        %v1438 = vpop.permute.xlu0 %1437
        %1439 = vrot.lane.b32.xlu0 %v526, 1
        %v1440 = vpop.permute.xlu0 %1439
        %1441 = vrot.lane.b32.xlu0 %v532, 1
        %v1442 = vpop.permute.xlu0 %1441
        %1443 = vrot.lane.b32.xlu0 %v536, 1
        %v1444 = vpop.permute.xlu0 %1443
        %1445 = vrot.lane.b32.xlu0 %v542, 1
        %v1446 = vpop.permute.xlu0 %1445
        %1447 = vrot.lane.b32.xlu0 %v546, 1
        %v1448 = vpop.permute.xlu0 %1447
        %1449 = vrot.lane.b32.xlu0 %v552, 1
        %v1450 = vpop.permute.xlu0 %1449
        %1451 = vrot.lane.b32.xlu0 %v556, 1
        %v1452 = vpop.permute.xlu0 %1451
        %1453 = vrot.lane.b32.xlu0 %v562, 1
        %v1454 = vpop.permute.xlu0 %1453
        %1455 = vrot.lane.b32.xlu0 %v566, 1
        %v1456 = vpop.permute.xlu0 %1455
        %1457 = vrot.lane.b32.xlu0 %v572, 1
        %v1458 = vpop.permute.xlu0 %1457
        %1459 = vrot.lane.b32.xlu0 %v576, 1
        %v1460 = vpop.permute.xlu0 %1459
        %1461 = vrot.lane.b32.xlu0 %v582, 1
        %v1462 = vpop.permute.xlu0 %1461
        %1463 = vrot.lane.b32.xlu0 %v586, 1
        %v1464 = vpop.permute.xlu0 %1463
        %1465 = vrot.lane.b32.xlu0 %v514, 1
        %v1466 = vpop.permute.xlu0 %1465
        %1467 = vrot.lane.b32.xlu0 %v518, 1
        %v1468 = vpop.permute.xlu0 %1467
        %1469 = vrot.lane.b32.xlu0 %v524, 1
        %v1470 = vpop.permute.xlu0 %1469
        %1471 = vrot.lane.b32.xlu0 %v528, 1
        %v1472 = vpop.permute.xlu0 %1471
        %1473 = vrot.lane.b32.xlu0 %v534, 1
        %v1474 = vpop.permute.xlu0 %1473
        %1475 = vrot.lane.b32.xlu0 %v538, 1
        %v1476 = vpop.permute.xlu0 %1475
        %1477 = vrot.lane.b32.xlu0 %v544, 1
        %v1478 = vpop.permute.xlu0 %1477
        %1479 = vrot.lane.b32.xlu0 %v548, 1
        %v1480 = vpop.permute.xlu0 %1479
        %1481 = vrot.lane.b32.xlu0 %v554, 1
        %v1482 = vpop.permute.xlu0 %1481
        %1483 = vrot.lane.b32.xlu0 %v558, 1
        %v1484 = vpop.permute.xlu0 %1483
        %1485 = vrot.lane.b32.xlu0 %v564, 1
        %v1486 = vpop.permute.xlu0 %1485
        %1487 = vrot.lane.b32.xlu0 %v568, 1
        %v1488 = vpop.permute.xlu0 %1487
        %1489 = vrot.lane.b32.xlu0 %v574, 1
        %v1490 = vpop.permute.xlu0 %1489
        %1491 = vrot.lane.b32.xlu0 %v578, 1
        %v1492 = vpop.permute.xlu0 %1491
        %1493 = vrot.lane.b32.xlu0 %v584, 1
        %v1494 = vpop.permute.xlu0 %1493
        %1495 = vrot.lane.b32.xlu0 %v588, 1
        %v1496 = vpop.permute.xlu0 %1495
        %vm1497 = vcmp.lt.s32.totalorder %v671, 1
        %v1498 = vsel %vm1497, %v1434, %v1466
        %v1499 = vsel %vm1497, %v1436, %v1468
        %v1500 = vsel %vm1497, %v1438, %v1470
        %v1501 = vsel %vm1497, %v1440, %v1472
        %v1502 = vsel %vm1497, %v1442, %v1474
        %v1503 = vsel %vm1497, %v1444, %v1476
        %v1504 = vsel %vm1497, %v1446, %v1478
        %v1505 = vsel %vm1497, %v1448, %v1480
        %v1506 = vsel %vm1497, %v1450, %v1482
        %v1507 = vsel %vm1497, %v1452, %v1484
        %v1508 = vsel %vm1497, %v1454, %v1486
        %v1509 = vsel %vm1497, %v1456, %v1488
        %v1510 = vsel %vm1497, %v1458, %v1490
        %v1511 = vsel %vm1497, %v1460, %v1492
        %v1512 = vsel %vm1497, %v1462, %v1494
        %v1513 = vsel %vm1497, %v1464, %v1496
        %v1514 = vsel %vm1497, %v1466, %v1434
        %v1515 = vsel %vm1497, %v1468, %v1436
        %v1516 = vsel %vm1497, %v1470, %v1438
        %v1517 = vsel %vm1497, %v1472, %v1440
        %v1518 = vsel %vm1497, %v1474, %v1442
        %v1519 = vsel %vm1497, %v1476, %v1444
        %v1520 = vsel %vm1497, %v1478, %v1446
        %v1521 = vsel %vm1497, %v1480, %v1448
        %v1522 = vsel %vm1497, %v1482, %v1450
        %v1523 = vsel %vm1497, %v1484, %v1452
        %v1524 = vsel %vm1497, %v1486, %v1454
        %v1525 = vsel %vm1497, %v1488, %v1456
        %v1526 = vsel %vm1497, %v1490, %v1458
        %v1527 = vsel %vm1497, %v1492, %v1460
        %v1528 = vsel %vm1497, %v1494, %v1462
        %v1529 = vsel %vm1497, %v1496, %v1464
        %v1530 = vlaneseq
        %v1531 = vshrl.u32 %v1530, 7
        %v1532 = vsub.s32 1, %v1531
        %v1533 = vrot.slane %v707, %v1532
        %v1534 = vlaneseq
        %v1535 = vshrl.u32 %v1534, 7
        %v1536 = vsub.s32 3, %v1535
        %v1537 = vrot.slane %v707, %v1536
        %v1538 = vlaneseq
        %v1539 = vshrl.u32 %v1538, 7
        %v1540 = vsub.s32 1, %v1539
        %v1541 = vrot.slane %v1533, %v1540
        %v1542 = vlaneseq
        %v1543 = vshrl.u32 %v1542, 7
        %v1544 = vsub.s32 1, %v1543
        %v1545 = vrot.slane %v1537, %v1544
        %vm1546 = vcmp.eq.s32.totalorder %v1541, 1
        %vm1547 = vcmp.eq.s32.totalorder %v1545, 1
        %v1548 = vsel %vm1546, %v1514, 0.0
        %v1549 = vsel %vm1547, %v1498, 0.0
        %v1550 = vsel %vm1546, %v1515, 0.0
        %v1551 = vsel %vm1547, %v1499, 0.0
        %v1552 = vsel %vm1546, %v1516, 0.0
        %v1553 = vsel %vm1547, %v1500, 0.0
        %v1554 = vsel %vm1546, %v1517, 0.0
        %v1555 = vsel %vm1547, %v1501, 0.0
        %v1556 = vsel %vm1546, %v1518, 0.0
        %v1557 = vsel %vm1547, %v1502, 0.0
        %v1558 = vsel %vm1546, %v1519, 0.0
        %v1559 = vsel %vm1547, %v1503, 0.0
        %v1560 = vsel %vm1546, %v1520, 0.0
        %v1561 = vsel %vm1547, %v1504, 0.0
        %v1562 = vsel %vm1546, %v1521, 0.0
        %v1563 = vsel %vm1547, %v1505, 0.0
        %v1564 = vsel %vm1546, %v1522, 0.0
        %v1565 = vsel %vm1547, %v1506, 0.0
        %v1566 = vsel %vm1546, %v1523, 0.0
        %v1567 = vsel %vm1547, %v1507, 0.0
        %v1568 = vsel %vm1546, %v1524, 0.0
        %v1569 = vsel %vm1547, %v1508, 0.0
        %v1570 = vsel %vm1546, %v1525, 0.0
        %v1571 = vsel %vm1547, %v1509, 0.0
        %v1572 = vsel %vm1546, %v1526, 0.0
        %v1573 = vsel %vm1547, %v1510, 0.0
        %v1574 = vsel %vm1546, %v1527, 0.0
        %v1575 = vsel %vm1547, %v1511, 0.0
        %v1576 = vsel %vm1546, %v1528, 0.0
        %v1577 = vsel %vm1547, %v1512, 0.0
        %v1578 = vsel %vm1546, %v1529, 0.0
        %v1579 = vsel %vm1547, %v1513, 0.0
        %1580 = vset.pattern.permute.xlu0 3
        %1581 = vperm.xlu0 %1580, %v590
        %v1582 = vpop.permute.xlu0 %1581
        %1584 = vset.pattern.permute.xlu0 3
        %1585 = vperm.xlu0 %1584, %v591
        %v1586 = vpop.permute.xlu0 %1585
        %1588 = vset.pattern.permute.xlu0 3
        %1589 = vperm.xlu0 %1588, %v592
        %v1590 = vpop.permute.xlu0 %1589
        %1592 = vset.pattern.permute.xlu0 3
        %1593 = vperm.xlu0 %1592, %v593
        %v1594 = vpop.permute.xlu0 %1593
        %1596 = vset.pattern.permute.xlu0 3
        %1597 = vperm.xlu0 %1596, %v594
        %v1598 = vpop.permute.xlu0 %1597
        %1600 = vset.pattern.permute.xlu0 3
        %1601 = vperm.xlu0 %1600, %v595
        %v1602 = vpop.permute.xlu0 %1601
        %1604 = vset.pattern.permute.xlu0 3
        %1605 = vperm.xlu0 %1604, %v596
        %v1606 = vpop.permute.xlu0 %1605
        %1608 = vset.pattern.permute.xlu0 3
        %1609 = vperm.xlu0 %1608, %v597
        %v1610 = vpop.permute.xlu0 %1609
        %1612 = vset.pattern.permute.xlu0 3
        %1613 = vperm.xlu0 %1612, %v598
        %v1614 = vpop.permute.xlu0 %1613
        %1616 = vset.pattern.permute.xlu0 3
        %1617 = vperm.xlu0 %1616, %v599
        %v1618 = vpop.permute.xlu0 %1617
        %1620 = vset.pattern.permute.xlu0 3
        %1621 = vperm.xlu0 %1620, %v600
        %v1622 = vpop.permute.xlu0 %1621
        %1624 = vset.pattern.permute.xlu0 3
        %1625 = vperm.xlu0 %1624, %v601
        %v1626 = vpop.permute.xlu0 %1625
        %1628 = vset.pattern.permute.xlu0 3
        %1629 = vperm.xlu0 %1628, %v602
        %v1630 = vpop.permute.xlu0 %1629
        %1632 = vset.pattern.permute.xlu0 3
        %1633 = vperm.xlu0 %1632, %v603
        %v1634 = vpop.permute.xlu0 %1633
        %1636 = vset.pattern.permute.xlu0 3
        %1637 = vperm.xlu0 %1636, %v604
        %v1638 = vpop.permute.xlu0 %1637
        %1640 = vset.pattern.permute.xlu0 3
        %1641 = vperm.xlu0 %1640, %v605
        %v1642 = vpop.permute.xlu0 %1641
        %v1644 = vmul.f32 %v1548, %v1582
        %v1645 = vmul.f32 %v1549, %v1582
        %v1646 = vmul.f32 %v1550, %v1586
        %v1647 = vmul.f32 %v1551, %v1586
        %v1648 = vmul.f32 %v1552, %v1590
        %v1649 = vmul.f32 %v1553, %v1590
        %v1650 = vmul.f32 %v1554, %v1594
        %v1651 = vmul.f32 %v1555, %v1594
        %v1652 = vmul.f32 %v1556, %v1598
        %v1653 = vmul.f32 %v1557, %v1598
        %v1654 = vmul.f32 %v1558, %v1602
        %v1655 = vmul.f32 %v1559, %v1602
        %v1656 = vmul.f32 %v1560, %v1606
        %v1657 = vmul.f32 %v1561, %v1606
        %v1658 = vmul.f32 %v1562, %v1610
        %v1659 = vmul.f32 %v1563, %v1610
        %v1660 = vmul.f32 %v1564, %v1614
        %v1661 = vmul.f32 %v1565, %v1614
        %v1662 = vmul.f32 %v1566, %v1618
        %v1663 = vmul.f32 %v1567, %v1618
        %v1664 = vmul.f32 %v1568, %v1622
        %v1665 = vmul.f32 %v1569, %v1622
        %v1666 = vmul.f32 %v1570, %v1626
        %v1667 = vmul.f32 %v1571, %v1626
        %v1668 = vmul.f32 %v1572, %v1630
        %v1669 = vmul.f32 %v1573, %v1630
        %v1670 = vmul.f32 %v1574, %v1634
        %v1671 = vmul.f32 %v1575, %v1634
        %v1672 = vmul.f32 %v1576, %v1638
        %v1673 = vmul.f32 %v1577, %v1638
        %v1674 = vmul.f32 %v1578, %v1642
        %v1675 = vmul.f32 %v1579, %v1642
        %v1676 = vadd.f32 %v1401, %v1644
        %v1677 = vadd.f32 %v1402, %v1645
        %v1678 = vadd.f32 %v1403, %v1646
        %v1679 = vadd.f32 %v1404, %v1647
        %v1680 = vadd.f32 %v1405, %v1648
        %v1681 = vadd.f32 %v1406, %v1649
        %v1682 = vadd.f32 %v1407, %v1650
        %v1683 = vadd.f32 %v1408, %v1651
        %v1684 = vadd.f32 %v1409, %v1652
        %v1685 = vadd.f32 %v1410, %v1653
        %v1686 = vadd.f32 %v1411, %v1654
        %v1687 = vadd.f32 %v1412, %v1655
        %v1688 = vadd.f32 %v1413, %v1656
        %v1689 = vadd.f32 %v1414, %v1657
        %v1690 = vadd.f32 %v1415, %v1658
        %v1691 = vadd.f32 %v1416, %v1659
        %v1692 = vadd.f32 %v1417, %v1660
        %v1693 = vadd.f32 %v1418, %v1661
        %v1694 = vadd.f32 %v1419, %v1662
        %v1695 = vadd.f32 %v1420, %v1663
        %v1696 = vadd.f32 %v1421, %v1664
        %v1697 = vadd.f32 %v1422, %v1665
        %v1698 = vadd.f32 %v1423, %v1666
        %v1699 = vadd.f32 %v1424, %v1667
        %v1700 = vadd.f32 %v1425, %v1668
        %v1701 = vadd.f32 %v1426, %v1669
        %v1702 = vadd.f32 %v1427, %v1670
        %v1703 = vadd.f32 %v1428, %v1671
        %v1704 = vadd.f32 %v1429, %v1672
        %v1705 = vadd.f32 %v1430, %v1673
        %v1706 = vadd.f32 %v1431, %v1674
        %v1707 = vadd.f32 %v1432, %v1675
        %1708 = vset.pattern.permute.xlu0 4
        %1709 = vperm.xlu0 %1708, %v590
        %v1710 = vpop.permute.xlu0 %1709
        %1712 = vset.pattern.permute.xlu0 4
        %1713 = vperm.xlu0 %1712, %v591
        %v1714 = vpop.permute.xlu0 %1713
        %1716 = vset.pattern.permute.xlu0 4
        %1717 = vperm.xlu0 %1716, %v592
        %v1718 = vpop.permute.xlu0 %1717
        %1720 = vset.pattern.permute.xlu0 4
        %1721 = vperm.xlu0 %1720, %v593
        %v1722 = vpop.permute.xlu0 %1721
        %1724 = vset.pattern.permute.xlu0 4
        %1725 = vperm.xlu0 %1724, %v594
        %v1726 = vpop.permute.xlu0 %1725
        %1728 = vset.pattern.permute.xlu0 4
        %1729 = vperm.xlu0 %1728, %v595
        %v1730 = vpop.permute.xlu0 %1729
        %1732 = vset.pattern.permute.xlu0 4
        %1733 = vperm.xlu0 %1732, %v596
        %v1734 = vpop.permute.xlu0 %1733
        %1736 = vset.pattern.permute.xlu0 4
        %1737 = vperm.xlu0 %1736, %v597
        %v1738 = vpop.permute.xlu0 %1737
        %1740 = vset.pattern.permute.xlu0 4
        %1741 = vperm.xlu0 %1740, %v598
        %v1742 = vpop.permute.xlu0 %1741
        %1744 = vset.pattern.permute.xlu0 4
        %1745 = vperm.xlu0 %1744, %v599
        %v1746 = vpop.permute.xlu0 %1745
        %1748 = vset.pattern.permute.xlu0 4
        %1749 = vperm.xlu0 %1748, %v600
        %v1750 = vpop.permute.xlu0 %1749
        %1752 = vset.pattern.permute.xlu0 4
        %1753 = vperm.xlu0 %1752, %v601
        %v1754 = vpop.permute.xlu0 %1753
        %1756 = vset.pattern.permute.xlu0 4
        %1757 = vperm.xlu0 %1756, %v602
        %v1758 = vpop.permute.xlu0 %1757
        %1760 = vset.pattern.permute.xlu0 4
        %1761 = vperm.xlu0 %1760, %v603
        %v1762 = vpop.permute.xlu0 %1761
        %1764 = vset.pattern.permute.xlu0 4
        %1765 = vperm.xlu0 %1764, %v604
        %v1766 = vpop.permute.xlu0 %1765
        %1768 = vset.pattern.permute.xlu0 4
        %1769 = vperm.xlu0 %1768, %v605
        %v1770 = vpop.permute.xlu0 %1769
        %v1772 = vmul.f32 %v512, %v1710
        %v1773 = vmul.f32 %v514, %v1710
        %v1774 = vmul.f32 %v516, %v1714
        %v1775 = vmul.f32 %v518, %v1714
        %v1776 = vmul.f32 %v522, %v1718
        %v1777 = vmul.f32 %v524, %v1718
        %v1778 = vmul.f32 %v526, %v1722
        %v1779 = vmul.f32 %v528, %v1722
        %v1780 = vmul.f32 %v532, %v1726
        %v1781 = vmul.f32 %v534, %v1726
        %v1782 = vmul.f32 %v536, %v1730
        %v1783 = vmul.f32 %v538, %v1730
        %v1784 = vmul.f32 %v542, %v1734
        %v1785 = vmul.f32 %v544, %v1734
        %v1786 = vmul.f32 %v546, %v1738
        %v1787 = vmul.f32 %v548, %v1738
        %v1788 = vmul.f32 %v552, %v1742
        %v1789 = vmul.f32 %v554, %v1742
        %v1790 = vmul.f32 %v556, %v1746
        %v1791 = vmul.f32 %v558, %v1746
        %v1792 = vmul.f32 %v562, %v1750
        %v1793 = vmul.f32 %v564, %v1750
        %v1794 = vmul.f32 %v566, %v1754
        %v1795 = vmul.f32 %v568, %v1754
        %v1796 = vmul.f32 %v572, %v1758
        %v1797 = vmul.f32 %v574, %v1758
        %v1798 = vmul.f32 %v576, %v1762
        %v1799 = vmul.f32 %v578, %v1762
        %v1800 = vmul.f32 %v582, %v1766
        %v1801 = vmul.f32 %v584, %v1766
        %v1802 = vmul.f32 %v586, %v1770
        %v1803 = vmul.f32 %v588, %v1770
        %v1804 = vadd.f32 %v1676, %v1772
        %v1805 = vadd.f32 %v1677, %v1773
        %v1806 = vadd.f32 %v1678, %v1774
        %v1807 = vadd.f32 %v1679, %v1775
        %v1808 = vadd.f32 %v1680, %v1776
        %v1809 = vadd.f32 %v1681, %v1777
        %v1810 = vadd.f32 %v1682, %v1778
        %v1811 = vadd.f32 %v1683, %v1779
        %v1812 = vadd.f32 %v1684, %v1780
        %v1813 = vadd.f32 %v1685, %v1781
        %v1814 = vadd.f32 %v1686, %v1782
        %v1815 = vadd.f32 %v1687, %v1783
        %v1816 = vadd.f32 %v1688, %v1784
        %v1817 = vadd.f32 %v1689, %v1785
        %v1818 = vadd.f32 %v1690, %v1786
        %v1819 = vadd.f32 %v1691, %v1787
        %v1820 = vadd.f32 %v1692, %v1788
        %v1821 = vadd.f32 %v1693, %v1789
        %v1822 = vadd.f32 %v1694, %v1790
        %v1823 = vadd.f32 %v1695, %v1791
        %v1824 = vadd.f32 %v1696, %v1792
        %v1825 = vadd.f32 %v1697, %v1793
        %v1826 = vadd.f32 %v1698, %v1794
        %v1827 = vadd.f32 %v1699, %v1795
        %v1828 = vadd.f32 %v1700, %v1796
        %v1829 = vadd.f32 %v1701, %v1797
        %v1830 = vadd.f32 %v1702, %v1798
        %v1831 = vadd.f32 %v1703, %v1799
        %v1832 = vadd.f32 %v1704, %v1800
        %v1833 = vadd.f32 %v1705, %v1801
        %v1834 = vadd.f32 %v1706, %v1802
        %v1835 = vadd.f32 %v1707, %v1803
        %1836 = vrot.lane.b32.xlu0 %v512, 127
        %v1837 = vpop.permute.xlu0 %1836
        %1838 = vrot.lane.b32.xlu0 %v516, 127
        %v1839 = vpop.permute.xlu0 %1838
        %1840 = vrot.lane.b32.xlu0 %v522, 127
        %v1841 = vpop.permute.xlu0 %1840
        %1842 = vrot.lane.b32.xlu0 %v526, 127
        %v1843 = vpop.permute.xlu0 %1842
        %1844 = vrot.lane.b32.xlu0 %v532, 127
        %v1845 = vpop.permute.xlu0 %1844
        %1846 = vrot.lane.b32.xlu0 %v536, 127
        %v1847 = vpop.permute.xlu0 %1846
        %1848 = vrot.lane.b32.xlu0 %v542, 127
        %v1849 = vpop.permute.xlu0 %1848
        %1850 = vrot.lane.b32.xlu0 %v546, 127
        %v1851 = vpop.permute.xlu0 %1850
        %1852 = vrot.lane.b32.xlu0 %v552, 127
        %v1853 = vpop.permute.xlu0 %1852
        %1854 = vrot.lane.b32.xlu0 %v556, 127
        %v1855 = vpop.permute.xlu0 %1854
        %1856 = vrot.lane.b32.xlu0 %v562, 127
        %v1857 = vpop.permute.xlu0 %1856
        %1858 = vrot.lane.b32.xlu0 %v566, 127
        %v1859 = vpop.permute.xlu0 %1858
        %1860 = vrot.lane.b32.xlu0 %v572, 127
        %v1861 = vpop.permute.xlu0 %1860
        %1862 = vrot.lane.b32.xlu0 %v576, 127
        %v1863 = vpop.permute.xlu0 %1862
        %1864 = vrot.lane.b32.xlu0 %v582, 127
        %v1865 = vpop.permute.xlu0 %1864
        %1866 = vrot.lane.b32.xlu0 %v586, 127
        %v1867 = vpop.permute.xlu0 %1866
        %1868 = vrot.lane.b32.xlu0 %v514, 127
        %v1869 = vpop.permute.xlu0 %1868
        %1870 = vrot.lane.b32.xlu0 %v518, 127
        %v1871 = vpop.permute.xlu0 %1870
        %1872 = vrot.lane.b32.xlu0 %v524, 127
        %v1873 = vpop.permute.xlu0 %1872
        %1874 = vrot.lane.b32.xlu0 %v528, 127
        %v1875 = vpop.permute.xlu0 %1874
        %1876 = vrot.lane.b32.xlu0 %v534, 127
        %v1877 = vpop.permute.xlu0 %1876
        %1878 = vrot.lane.b32.xlu0 %v538, 127
        %v1879 = vpop.permute.xlu0 %1878
        %1880 = vrot.lane.b32.xlu0 %v544, 127
        %v1881 = vpop.permute.xlu0 %1880
        %1882 = vrot.lane.b32.xlu0 %v548, 127
        %v1883 = vpop.permute.xlu0 %1882
        %1884 = vrot.lane.b32.xlu0 %v554, 127
        %v1885 = vpop.permute.xlu0 %1884
        %1886 = vrot.lane.b32.xlu0 %v558, 127
        %v1887 = vpop.permute.xlu0 %1886
        %1888 = vrot.lane.b32.xlu0 %v564, 127
        %v1889 = vpop.permute.xlu0 %1888
        %1890 = vrot.lane.b32.xlu0 %v568, 127
        %v1891 = vpop.permute.xlu0 %1890
        %1892 = vrot.lane.b32.xlu0 %v574, 127
        %v1893 = vpop.permute.xlu0 %1892
        %1894 = vrot.lane.b32.xlu0 %v578, 127
        %v1895 = vpop.permute.xlu0 %1894
        %1896 = vrot.lane.b32.xlu0 %v584, 127
        %v1897 = vpop.permute.xlu0 %1896
        %1898 = vrot.lane.b32.xlu0 %v588, 127
        %v1899 = vpop.permute.xlu0 %1898
        %vm1900 = vcmp.lt.s32.totalorder %v671, 127
        %v1901 = vsel %vm1900, %v1837, %v1869
        %v1902 = vsel %vm1900, %v1839, %v1871
        %v1903 = vsel %vm1900, %v1841, %v1873
        %v1904 = vsel %vm1900, %v1843, %v1875
        %v1905 = vsel %vm1900, %v1845, %v1877
        %v1906 = vsel %vm1900, %v1847, %v1879
        %v1907 = vsel %vm1900, %v1849, %v1881
        %v1908 = vsel %vm1900, %v1851, %v1883
        %v1909 = vsel %vm1900, %v1853, %v1885
        %v1910 = vsel %vm1900, %v1855, %v1887
        %v1911 = vsel %vm1900, %v1857, %v1889
        %v1912 = vsel %vm1900, %v1859, %v1891
        %v1913 = vsel %vm1900, %v1861, %v1893
        %v1914 = vsel %vm1900, %v1863, %v1895
        %v1915 = vsel %vm1900, %v1865, %v1897
        %v1916 = vsel %vm1900, %v1867, %v1899
        %v1917 = vsel %vm1900, %v1869, %v1837
        %v1918 = vsel %vm1900, %v1871, %v1839
        %v1919 = vsel %vm1900, %v1873, %v1841
        %v1920 = vsel %vm1900, %v1875, %v1843
        %v1921 = vsel %vm1900, %v1877, %v1845
        %v1922 = vsel %vm1900, %v1879, %v1847
        %v1923 = vsel %vm1900, %v1881, %v1849
        %v1924 = vsel %vm1900, %v1883, %v1851
        %v1925 = vsel %vm1900, %v1885, %v1853
        %v1926 = vsel %vm1900, %v1887, %v1855
        %v1927 = vsel %vm1900, %v1889, %v1857
        %v1928 = vsel %vm1900, %v1891, %v1859
        %v1929 = vsel %vm1900, %v1893, %v1861
        %v1930 = vsel %vm1900, %v1895, %v1863
        %v1931 = vsel %vm1900, %v1897, %v1865
        %v1932 = vsel %vm1900, %v1899, %v1867
        %v1933 = vlaneseq
        %v1934 = vshrl.u32 %v1933, 7
        %v1935 = vsub.s32 1, %v1934
        %v1936 = vrot.slane %v1249, %v1935
        %v1937 = vlaneseq
        %v1938 = vshrl.u32 %v1937, 7
        %v1939 = vsub.s32 3, %v1938
        %v1940 = vrot.slane %v1249, %v1939
        %v1941 = vlaneseq
        %v1942 = vshrl.u32 %v1941, 7
        %v1943 = vsub.s32 1, %v1942
        %v1944 = vrot.slane %v1936, %v1943
        %v1945 = vlaneseq
        %v1946 = vshrl.u32 %v1945, 7
        %v1947 = vsub.s32 1, %v1946
        %v1948 = vrot.slane %v1940, %v1947
        %vm1949 = vcmp.eq.s32.totalorder %v1944, 1
        %vm1950 = vcmp.eq.s32.totalorder %v1948, 1
        %v1951 = vsel %vm1949, %v1901, 0.0
        %v1952 = vsel %vm1950, %v1917, 0.0
        %v1953 = vsel %vm1949, %v1902, 0.0
        %v1954 = vsel %vm1950, %v1918, 0.0
        %v1955 = vsel %vm1949, %v1903, 0.0
        %v1956 = vsel %vm1950, %v1919, 0.0
        %v1957 = vsel %vm1949, %v1904, 0.0
        %v1958 = vsel %vm1950, %v1920, 0.0
        %v1959 = vsel %vm1949, %v1905, 0.0
        %v1960 = vsel %vm1950, %v1921, 0.0
        %v1961 = vsel %vm1949, %v1906, 0.0
        %v1962 = vsel %vm1950, %v1922, 0.0
        %v1963 = vsel %vm1949, %v1907, 0.0
        %v1964 = vsel %vm1950, %v1923, 0.0
        %v1965 = vsel %vm1949, %v1908, 0.0
        %v1966 = vsel %vm1950, %v1924, 0.0
        %v1967 = vsel %vm1949, %v1909, 0.0
        %v1968 = vsel %vm1950, %v1925, 0.0
        %v1969 = vsel %vm1949, %v1910, 0.0
        %v1970 = vsel %vm1950, %v1926, 0.0
        %v1971 = vsel %vm1949, %v1911, 0.0
        %v1972 = vsel %vm1950, %v1927, 0.0
        %v1973 = vsel %vm1949, %v1912, 0.0
        %v1974 = vsel %vm1950, %v1928, 0.0
        %v1975 = vsel %vm1949, %v1913, 0.0
        %v1976 = vsel %vm1950, %v1929, 0.0
        %v1977 = vsel %vm1949, %v1914, 0.0
        %v1978 = vsel %vm1950, %v1930, 0.0
        %v1979 = vsel %vm1949, %v1915, 0.0
        %v1980 = vsel %vm1950, %v1931, 0.0
        %v1981 = vsel %vm1949, %v1916, 0.0
        %v1982 = vsel %vm1950, %v1932, 0.0
        %1983 = vset.pattern.permute.xlu0 5
        %1984 = vperm.xlu0 %1983, %v590
        %v1985 = vpop.permute.xlu0 %1984
        %1987 = vset.pattern.permute.xlu0 5
        %1988 = vperm.xlu0 %1987, %v591
        %v1989 = vpop.permute.xlu0 %1988
        %1991 = vset.pattern.permute.xlu0 5
        %1992 = vperm.xlu0 %1991, %v592
        %v1993 = vpop.permute.xlu0 %1992
        %1995 = vset.pattern.permute.xlu0 5
        %1996 = vperm.xlu0 %1995, %v593
        %v1997 = vpop.permute.xlu0 %1996
        %1999 = vset.pattern.permute.xlu0 5
        %2000 = vperm.xlu0 %1999, %v594
        %v2001 = vpop.permute.xlu0 %2000
        %2003 = vset.pattern.permute.xlu0 5
        %2004 = vperm.xlu0 %2003, %v595
        %v2005 = vpop.permute.xlu0 %2004
        %2007 = vset.pattern.permute.xlu0 5
        %2008 = vperm.xlu0 %2007, %v596
        %v2009 = vpop.permute.xlu0 %2008
        %2011 = vset.pattern.permute.xlu0 5
        %2012 = vperm.xlu0 %2011, %v597
        %v2013 = vpop.permute.xlu0 %2012
        %2015 = vset.pattern.permute.xlu0 5
        %2016 = vperm.xlu0 %2015, %v598
        %v2017 = vpop.permute.xlu0 %2016
        %2019 = vset.pattern.permute.xlu0 5
        %2020 = vperm.xlu0 %2019, %v599
        %v2021 = vpop.permute.xlu0 %2020
        %2023 = vset.pattern.permute.xlu0 5
        %2024 = vperm.xlu0 %2023, %v600
        %v2025 = vpop.permute.xlu0 %2024
        %2027 = vset.pattern.permute.xlu0 5
        %2028 = vperm.xlu0 %2027, %v601
        %v2029 = vpop.permute.xlu0 %2028
        %2031 = vset.pattern.permute.xlu0 5
        %2032 = vperm.xlu0 %2031, %v602
        %v2033 = vpop.permute.xlu0 %2032
        %2035 = vset.pattern.permute.xlu0 5
        %2036 = vperm.xlu0 %2035, %v603
        %v2037 = vpop.permute.xlu0 %2036
        %2039 = vset.pattern.permute.xlu0 5
        %2040 = vperm.xlu0 %2039, %v604
        %v2041 = vpop.permute.xlu0 %2040
        %2043 = vset.pattern.permute.xlu0 5
        %2044 = vperm.xlu0 %2043, %v605
        %v2045 = vpop.permute.xlu0 %2044
        %v2047 = vmul.f32 %v1951, %v1985
        %v2048 = vmul.f32 %v1952, %v1985
        %v2049 = vmul.f32 %v1953, %v1989
        %v2050 = vmul.f32 %v1954, %v1989
        %v2051 = vmul.f32 %v1955, %v1993
        %v2052 = vmul.f32 %v1956, %v1993
        %v2053 = vmul.f32 %v1957, %v1997
        %v2054 = vmul.f32 %v1958, %v1997
        %v2055 = vmul.f32 %v1959, %v2001
        %v2056 = vmul.f32 %v1960, %v2001
        %v2057 = vmul.f32 %v1961, %v2005
        %v2058 = vmul.f32 %v1962, %v2005
        %v2059 = vmul.f32 %v1963, %v2009
        %v2060 = vmul.f32 %v1964, %v2009
        %v2061 = vmul.f32 %v1965, %v2013
        %v2062 = vmul.f32 %v1966, %v2013
        %v2063 = vmul.f32 %v1967, %v2017
        %v2064 = vmul.f32 %v1968, %v2017
        %v2065 = vmul.f32 %v1969, %v2021
        %v2066 = vmul.f32 %v1970, %v2021
        %v2067 = vmul.f32 %v1971, %v2025
        %v2068 = vmul.f32 %v1972, %v2025
        %v2069 = vmul.f32 %v1973, %v2029
        %v2070 = vmul.f32 %v1974, %v2029
        %v2071 = vmul.f32 %v1975, %v2033
        %v2072 = vmul.f32 %v1976, %v2033
        %v2073 = vmul.f32 %v1977, %v2037
        %v2074 = vmul.f32 %v1978, %v2037
        %v2075 = vmul.f32 %v1979, %v2041
        %v2076 = vmul.f32 %v1980, %v2041
        %v2077 = vmul.f32 %v1981, %v2045
        %v2078 = vmul.f32 %v1982, %v2045
        %v2079 = vadd.f32 %v1804, %v2047
        %v2080 = vadd.f32 %v1805, %v2048
        %v2081 = vadd.f32 %v1806, %v2049
        %v2082 = vadd.f32 %v1807, %v2050
        %v2083 = vadd.f32 %v1808, %v2051
        %v2084 = vadd.f32 %v1809, %v2052
        %v2085 = vadd.f32 %v1810, %v2053
        %v2086 = vadd.f32 %v1811, %v2054
        %v2087 = vadd.f32 %v1812, %v2055
        %v2088 = vadd.f32 %v1813, %v2056
        %v2089 = vadd.f32 %v1814, %v2057
        %v2090 = vadd.f32 %v1815, %v2058
        %v2091 = vadd.f32 %v1816, %v2059
        %v2092 = vadd.f32 %v1817, %v2060
        %v2093 = vadd.f32 %v1818, %v2061
        %v2094 = vadd.f32 %v1819, %v2062
        %v2095 = vadd.f32 %v1820, %v2063
        %v2096 = vadd.f32 %v1821, %v2064
        %v2097 = vadd.f32 %v1822, %v2065
        %v2098 = vadd.f32 %v1823, %v2066
        %v2099 = vadd.f32 %v1824, %v2067
        %v2100 = vadd.f32 %v1825, %v2068
        %v2101 = vadd.f32 %v1826, %v2069
        %v2102 = vadd.f32 %v1827, %v2070
        %v2103 = vadd.f32 %v1828, %v2071
        %v2104 = vadd.f32 %v1829, %v2072
        %v2105 = vadd.f32 %v1830, %v2073
        %v2106 = vadd.f32 %v1831, %v2074
        %v2107 = vadd.f32 %v1832, %v2075
        %v2108 = vadd.f32 %v1833, %v2076
        %v2109 = vadd.f32 %v1834, %v2077
        %v2110 = vadd.f32 %v1835, %v2078
        %2111 = vrot.lane.b32.xlu0 %v512, 113
        %v2112 = vpop.permute.xlu0 %2111
        %2113 = vrot.lane.b32.xlu0 %v516, 113
        %v2114 = vpop.permute.xlu0 %2113
        %2115 = vrot.lane.b32.xlu0 %v522, 113
        %v2116 = vpop.permute.xlu0 %2115
        %2117 = vrot.lane.b32.xlu0 %v526, 113
        %v2118 = vpop.permute.xlu0 %2117
        %2119 = vrot.lane.b32.xlu0 %v532, 113
        %v2120 = vpop.permute.xlu0 %2119
        %2121 = vrot.lane.b32.xlu0 %v536, 113
        %v2122 = vpop.permute.xlu0 %2121
        %2123 = vrot.lane.b32.xlu0 %v542, 113
        %v2124 = vpop.permute.xlu0 %2123
        %2125 = vrot.lane.b32.xlu0 %v546, 113
        %v2126 = vpop.permute.xlu0 %2125
        %2127 = vrot.lane.b32.xlu0 %v552, 113
        %v2128 = vpop.permute.xlu0 %2127
        %2129 = vrot.lane.b32.xlu0 %v556, 113
        %v2130 = vpop.permute.xlu0 %2129
        %2131 = vrot.lane.b32.xlu0 %v562, 113
        %v2132 = vpop.permute.xlu0 %2131
        %2133 = vrot.lane.b32.xlu0 %v566, 113
        %v2134 = vpop.permute.xlu0 %2133
        %2135 = vrot.lane.b32.xlu0 %v572, 113
        %v2136 = vpop.permute.xlu0 %2135
        %2137 = vrot.lane.b32.xlu0 %v576, 113
        %v2138 = vpop.permute.xlu0 %2137
        %2139 = vrot.lane.b32.xlu0 %v582, 113
        %v2140 = vpop.permute.xlu0 %2139
        %2141 = vrot.lane.b32.xlu0 %v586, 113
        %v2142 = vpop.permute.xlu0 %2141
        %2143 = vrot.lane.b32.xlu0 %v514, 113
        %v2144 = vpop.permute.xlu0 %2143
        %2145 = vrot.lane.b32.xlu0 %v518, 113
        %v2146 = vpop.permute.xlu0 %2145
        %2147 = vrot.lane.b32.xlu0 %v524, 113
        %v2148 = vpop.permute.xlu0 %2147
        %2149 = vrot.lane.b32.xlu0 %v528, 113
        %v2150 = vpop.permute.xlu0 %2149
        %2151 = vrot.lane.b32.xlu0 %v534, 113
        %v2152 = vpop.permute.xlu0 %2151
        %2153 = vrot.lane.b32.xlu0 %v538, 113
        %v2154 = vpop.permute.xlu0 %2153
        %2155 = vrot.lane.b32.xlu0 %v544, 113
        %v2156 = vpop.permute.xlu0 %2155
        %2157 = vrot.lane.b32.xlu0 %v548, 113
        %v2158 = vpop.permute.xlu0 %2157
        %2159 = vrot.lane.b32.xlu0 %v554, 113
        %v2160 = vpop.permute.xlu0 %2159
        %2161 = vrot.lane.b32.xlu0 %v558, 113
        %v2162 = vpop.permute.xlu0 %2161
        %2163 = vrot.lane.b32.xlu0 %v564, 113
        %v2164 = vpop.permute.xlu0 %2163
        %2165 = vrot.lane.b32.xlu0 %v568, 113
        %v2166 = vpop.permute.xlu0 %2165
        %2167 = vrot.lane.b32.xlu0 %v574, 113
        %v2168 = vpop.permute.xlu0 %2167
        %2169 = vrot.lane.b32.xlu0 %v578, 113
        %v2170 = vpop.permute.xlu0 %2169
        %2171 = vrot.lane.b32.xlu0 %v584, 113
        %v2172 = vpop.permute.xlu0 %2171
        %2173 = vrot.lane.b32.xlu0 %v588, 113
        %v2174 = vpop.permute.xlu0 %2173
        %vm2175 = vcmp.lt.s32.totalorder %v671, 113
        %v2176 = vsel %vm2175, %v2112, %v2144
        %v2177 = vsel %vm2175, %v2114, %v2146
        %v2178 = vsel %vm2175, %v2116, %v2148
        %v2179 = vsel %vm2175, %v2118, %v2150
        %v2180 = vsel %vm2175, %v2120, %v2152
        %v2181 = vsel %vm2175, %v2122, %v2154
        %v2182 = vsel %vm2175, %v2124, %v2156
        %v2183 = vsel %vm2175, %v2126, %v2158
        %v2184 = vsel %vm2175, %v2128, %v2160
        %v2185 = vsel %vm2175, %v2130, %v2162
        %v2186 = vsel %vm2175, %v2132, %v2164
        %v2187 = vsel %vm2175, %v2134, %v2166
        %v2188 = vsel %vm2175, %v2136, %v2168
        %v2189 = vsel %vm2175, %v2138, %v2170
        %v2190 = vsel %vm2175, %v2140, %v2172
        %v2191 = vsel %vm2175, %v2142, %v2174
        %v2192 = vsel %vm2175, %v2144, %v2112
        %v2193 = vsel %vm2175, %v2146, %v2114
        %v2194 = vsel %vm2175, %v2148, %v2116
        %v2195 = vsel %vm2175, %v2150, %v2118
        %v2196 = vsel %vm2175, %v2152, %v2120
        %v2197 = vsel %vm2175, %v2154, %v2122
        %v2198 = vsel %vm2175, %v2156, %v2124
        %v2199 = vsel %vm2175, %v2158, %v2126
        %v2200 = vsel %vm2175, %v2160, %v2128
        %v2201 = vsel %vm2175, %v2162, %v2130
        %v2202 = vsel %vm2175, %v2164, %v2132
        %v2203 = vsel %vm2175, %v2166, %v2134
        %v2204 = vsel %vm2175, %v2168, %v2136
        %v2205 = vsel %vm2175, %v2170, %v2138
        %v2206 = vsel %vm2175, %v2172, %v2140
        %v2207 = vsel %vm2175, %v2174, %v2142
        %vm2208 = vcmp.lt.s32.totalorder %v395, 240
        %vm2209 = vmand %vm2208, %vm710
        %v2210 = vsel %vm2209, 1, 0
        %v2211 = vlaneseq
        %v2212 = vshrl.u32 %v2211, 7
        %v2213 = vsub.s32 0, %v2212
        %v2214 = vrot.slane %v2210, %v2213
        %v2215 = vlaneseq
        %v2216 = vshrl.u32 %v2215, 7
        %v2217 = vsub.s32 2, %v2216
        %v2218 = vrot.slane %v2210, %v2217
        %v2219 = vlaneseq
        %v2220 = vshrl.u32 %v2219, 7
        %v2221 = vsub.s32 0, %v2220
        %v2222 = vrot.slane %v2214, %v2221
        %v2223 = vlaneseq
        %v2224 = vshrl.u32 %v2223, 7
        %v2225 = vsub.s32 0, %v2224
        %v2226 = vrot.slane %v2218, %v2225
        %vm2227 = vcmp.eq.s32.totalorder %v2222, 1
        %vm2228 = vcmp.eq.s32.totalorder %v2226, 1
        %v2229 = vsel %vm2227, %v2176, 0.0
        %v2230 = vsel %vm2228, %v2192, 0.0
        %v2231 = vsel %vm2227, %v2177, 0.0
        %v2232 = vsel %vm2228, %v2193, 0.0
        %v2233 = vsel %vm2227, %v2178, 0.0
        %v2234 = vsel %vm2228, %v2194, 0.0
        %v2235 = vsel %vm2227, %v2179, 0.0
        %v2236 = vsel %vm2228, %v2195, 0.0
        %v2237 = vsel %vm2227, %v2180, 0.0
        %v2238 = vsel %vm2228, %v2196, 0.0
        %v2239 = vsel %vm2227, %v2181, 0.0
        %v2240 = vsel %vm2228, %v2197, 0.0
        %v2241 = vsel %vm2227, %v2182, 0.0
        %v2242 = vsel %vm2228, %v2198, 0.0
        %v2243 = vsel %vm2227, %v2183, 0.0
        %v2244 = vsel %vm2228, %v2199, 0.0
        %v2245 = vsel %vm2227, %v2184, 0.0
        %v2246 = vsel %vm2228, %v2200, 0.0
        %v2247 = vsel %vm2227, %v2185, 0.0
        %v2248 = vsel %vm2228, %v2201, 0.0
        %v2249 = vsel %vm2227, %v2186, 0.0
        %v2250 = vsel %vm2228, %v2202, 0.0
        %v2251 = vsel %vm2227, %v2187, 0.0
        %v2252 = vsel %vm2228, %v2203, 0.0
        %v2253 = vsel %vm2227, %v2188, 0.0
        %v2254 = vsel %vm2228, %v2204, 0.0
        %v2255 = vsel %vm2227, %v2189, 0.0
        %v2256 = vsel %vm2228, %v2205, 0.0
        %v2257 = vsel %vm2227, %v2190, 0.0
        %v2258 = vsel %vm2228, %v2206, 0.0
        %v2259 = vsel %vm2227, %v2191, 0.0
        %v2260 = vsel %vm2228, %v2207, 0.0
        %2261 = vset.pattern.permute.xlu0 6
        %2262 = vperm.xlu0 %2261, %v590
        %v2263 = vpop.permute.xlu0 %2262
        %2265 = vset.pattern.permute.xlu0 6
        %2266 = vperm.xlu0 %2265, %v591
        %v2267 = vpop.permute.xlu0 %2266
        %2269 = vset.pattern.permute.xlu0 6
        %2270 = vperm.xlu0 %2269, %v592
        %v2271 = vpop.permute.xlu0 %2270
        %2273 = vset.pattern.permute.xlu0 6
        %2274 = vperm.xlu0 %2273, %v593
        %v2275 = vpop.permute.xlu0 %2274
        %2277 = vset.pattern.permute.xlu0 6
        %2278 = vperm.xlu0 %2277, %v594
        %v2279 = vpop.permute.xlu0 %2278
        %2281 = vset.pattern.permute.xlu0 6
        %2282 = vperm.xlu0 %2281, %v595
        %v2283 = vpop.permute.xlu0 %2282
        %2285 = vset.pattern.permute.xlu0 6
        %2286 = vperm.xlu0 %2285, %v596
        %v2287 = vpop.permute.xlu0 %2286
        %2289 = vset.pattern.permute.xlu0 6
        %2290 = vperm.xlu0 %2289, %v597
        %v2291 = vpop.permute.xlu0 %2290
        %2293 = vset.pattern.permute.xlu0 6
        %2294 = vperm.xlu0 %2293, %v598
        %v2295 = vpop.permute.xlu0 %2294
        %2297 = vset.pattern.permute.xlu0 6
        %2298 = vperm.xlu0 %2297, %v599
        %v2299 = vpop.permute.xlu0 %2298
        %2301 = vset.pattern.permute.xlu0 6
        %2302 = vperm.xlu0 %2301, %v600
        %v2303 = vpop.permute.xlu0 %2302
        %2305 = vset.pattern.permute.xlu0 6
        %2306 = vperm.xlu0 %2305, %v601
        %v2307 = vpop.permute.xlu0 %2306
        %2309 = vset.pattern.permute.xlu0 6
        %2310 = vperm.xlu0 %2309, %v602
        %v2311 = vpop.permute.xlu0 %2310
        %2313 = vset.pattern.permute.xlu0 6
        %2314 = vperm.xlu0 %2313, %v603
        %v2315 = vpop.permute.xlu0 %2314
        %2317 = vset.pattern.permute.xlu0 6
        %2318 = vperm.xlu0 %2317, %v604
        %v2319 = vpop.permute.xlu0 %2318
        %2321 = vset.pattern.permute.xlu0 6
        %2322 = vperm.xlu0 %2321, %v605
        %v2323 = vpop.permute.xlu0 %2322
        %v2325 = vmul.f32 %v2229, %v2263
        %v2326 = vmul.f32 %v2230, %v2263
        %v2327 = vmul.f32 %v2231, %v2267
        %v2328 = vmul.f32 %v2232, %v2267
        %v2329 = vmul.f32 %v2233, %v2271
        %v2330 = vmul.f32 %v2234, %v2271
        %v2331 = vmul.f32 %v2235, %v2275
        %v2332 = vmul.f32 %v2236, %v2275
        %v2333 = vmul.f32 %v2237, %v2279
        %v2334 = vmul.f32 %v2238, %v2279
        %v2335 = vmul.f32 %v2239, %v2283
        %v2336 = vmul.f32 %v2240, %v2283
        %v2337 = vmul.f32 %v2241, %v2287
        %v2338 = vmul.f32 %v2242, %v2287
        %v2339 = vmul.f32 %v2243, %v2291
        %v2340 = vmul.f32 %v2244, %v2291
        %v2341 = vmul.f32 %v2245, %v2295
        %v2342 = vmul.f32 %v2246, %v2295
        %v2343 = vmul.f32 %v2247, %v2299
        %v2344 = vmul.f32 %v2248, %v2299
        %v2345 = vmul.f32 %v2249, %v2303
        %v2346 = vmul.f32 %v2250, %v2303
        %v2347 = vmul.f32 %v2251, %v2307
        %v2348 = vmul.f32 %v2252, %v2307
        %v2349 = vmul.f32 %v2253, %v2311
        %v2350 = vmul.f32 %v2254, %v2311
        %v2351 = vmul.f32 %v2255, %v2315
        %v2352 = vmul.f32 %v2256, %v2315
        %v2353 = vmul.f32 %v2257, %v2319
        %v2354 = vmul.f32 %v2258, %v2319
        %v2355 = vmul.f32 %v2259, %v2323
        %v2356 = vmul.f32 %v2260, %v2323
        %v2357 = vadd.f32 %v2079, %v2325
        %v2358 = vadd.f32 %v2080, %v2326
        %v2359 = vadd.f32 %v2081, %v2327
        %v2360 = vadd.f32 %v2082, %v2328
        %v2361 = vadd.f32 %v2083, %v2329
        %v2362 = vadd.f32 %v2084, %v2330
        %v2363 = vadd.f32 %v2085, %v2331
        %v2364 = vadd.f32 %v2086, %v2332
        %v2365 = vadd.f32 %v2087, %v2333
        %v2366 = vadd.f32 %v2088, %v2334
        %v2367 = vadd.f32 %v2089, %v2335
        %v2368 = vadd.f32 %v2090, %v2336
        %v2369 = vadd.f32 %v2091, %v2337
        %v2370 = vadd.f32 %v2092, %v2338
        %v2371 = vadd.f32 %v2093, %v2339
        %v2372 = vadd.f32 %v2094, %v2340
        %v2373 = vadd.f32 %v2095, %v2341
        %v2374 = vadd.f32 %v2096, %v2342
        %v2375 = vadd.f32 %v2097, %v2343
        %v2376 = vadd.f32 %v2098, %v2344
        %v2377 = vadd.f32 %v2099, %v2345
        %v2378 = vadd.f32 %v2100, %v2346
        %v2379 = vadd.f32 %v2101, %v2347
        %v2380 = vadd.f32 %v2102, %v2348
        %v2381 = vadd.f32 %v2103, %v2349
        %v2382 = vadd.f32 %v2104, %v2350
        %v2383 = vadd.f32 %v2105, %v2351
        %v2384 = vadd.f32 %v2106, %v2352
        %v2385 = vadd.f32 %v2107, %v2353
        %v2386 = vadd.f32 %v2108, %v2354
        %v2387 = vadd.f32 %v2109, %v2355
        %v2388 = vadd.f32 %v2110, %v2356
        %2389 = vrot.lane.b32.xlu0 %v512, 112
        %v2390 = vpop.permute.xlu0 %2389
        %2391 = vrot.lane.b32.xlu0 %v516, 112
        %v2392 = vpop.permute.xlu0 %2391
        %2393 = vrot.lane.b32.xlu0 %v522, 112
        %v2394 = vpop.permute.xlu0 %2393
        %2395 = vrot.lane.b32.xlu0 %v526, 112
        %v2396 = vpop.permute.xlu0 %2395
        %2397 = vrot.lane.b32.xlu0 %v532, 112
        %v2398 = vpop.permute.xlu0 %2397
        %2399 = vrot.lane.b32.xlu0 %v536, 112
        %v2400 = vpop.permute.xlu0 %2399
        %2401 = vrot.lane.b32.xlu0 %v542, 112
        %v2402 = vpop.permute.xlu0 %2401
        %2403 = vrot.lane.b32.xlu0 %v546, 112
        %v2404 = vpop.permute.xlu0 %2403
        %2405 = vrot.lane.b32.xlu0 %v552, 112
        %v2406 = vpop.permute.xlu0 %2405
        %2407 = vrot.lane.b32.xlu0 %v556, 112
        %v2408 = vpop.permute.xlu0 %2407
        %2409 = vrot.lane.b32.xlu0 %v562, 112
        %v2410 = vpop.permute.xlu0 %2409
        %2411 = vrot.lane.b32.xlu0 %v566, 112
        %v2412 = vpop.permute.xlu0 %2411
        %2413 = vrot.lane.b32.xlu0 %v572, 112
        %v2414 = vpop.permute.xlu0 %2413
        %2415 = vrot.lane.b32.xlu0 %v576, 112
        %v2416 = vpop.permute.xlu0 %2415
        %2417 = vrot.lane.b32.xlu0 %v582, 112
        %v2418 = vpop.permute.xlu0 %2417
        %2419 = vrot.lane.b32.xlu0 %v586, 112
        %v2420 = vpop.permute.xlu0 %2419
        %2421 = vrot.lane.b32.xlu0 %v514, 112
        %v2422 = vpop.permute.xlu0 %2421
        %2423 = vrot.lane.b32.xlu0 %v518, 112
        %v2424 = vpop.permute.xlu0 %2423
        %2425 = vrot.lane.b32.xlu0 %v524, 112
        %v2426 = vpop.permute.xlu0 %2425
        %2427 = vrot.lane.b32.xlu0 %v528, 112
        %v2428 = vpop.permute.xlu0 %2427
        %2429 = vrot.lane.b32.xlu0 %v534, 112
        %v2430 = vpop.permute.xlu0 %2429
        %2431 = vrot.lane.b32.xlu0 %v538, 112
        %v2432 = vpop.permute.xlu0 %2431
        %2433 = vrot.lane.b32.xlu0 %v544, 112
        %v2434 = vpop.permute.xlu0 %2433
        %2435 = vrot.lane.b32.xlu0 %v548, 112
        %v2436 = vpop.permute.xlu0 %2435
        %2437 = vrot.lane.b32.xlu0 %v554, 112
        %v2438 = vpop.permute.xlu0 %2437
        %2439 = vrot.lane.b32.xlu0 %v558, 112
        %v2440 = vpop.permute.xlu0 %2439
        %2441 = vrot.lane.b32.xlu0 %v564, 112
        %v2442 = vpop.permute.xlu0 %2441
        %2443 = vrot.lane.b32.xlu0 %v568, 112
        %v2444 = vpop.permute.xlu0 %2443
        %2445 = vrot.lane.b32.xlu0 %v574, 112
        %v2446 = vpop.permute.xlu0 %2445
        %2447 = vrot.lane.b32.xlu0 %v578, 112
        %v2448 = vpop.permute.xlu0 %2447
        %2449 = vrot.lane.b32.xlu0 %v584, 112
        %v2450 = vpop.permute.xlu0 %2449
        %2451 = vrot.lane.b32.xlu0 %v588, 112
        %v2452 = vpop.permute.xlu0 %2451
        %vm2453 = vcmp.lt.s32.totalorder %v671, 112
        %v2454 = vsel %vm2453, %v2390, %v2422
        %v2455 = vsel %vm2453, %v2392, %v2424
        %v2456 = vsel %vm2453, %v2394, %v2426
        %v2457 = vsel %vm2453, %v2396, %v2428
        %v2458 = vsel %vm2453, %v2398, %v2430
        %v2459 = vsel %vm2453, %v2400, %v2432
        %v2460 = vsel %vm2453, %v2402, %v2434
        %v2461 = vsel %vm2453, %v2404, %v2436
        %v2462 = vsel %vm2453, %v2406, %v2438
        %v2463 = vsel %vm2453, %v2408, %v2440
        %v2464 = vsel %vm2453, %v2410, %v2442
        %v2465 = vsel %vm2453, %v2412, %v2444
        %v2466 = vsel %vm2453, %v2414, %v2446
        %v2467 = vsel %vm2453, %v2416, %v2448
        %v2468 = vsel %vm2453, %v2418, %v2450
        %v2469 = vsel %vm2453, %v2420, %v2452
        %v2470 = vsel %vm2453, %v2422, %v2390
        %v2471 = vsel %vm2453, %v2424, %v2392
        %v2472 = vsel %vm2453, %v2426, %v2394
        %v2473 = vsel %vm2453, %v2428, %v2396
        %v2474 = vsel %vm2453, %v2430, %v2398
        %v2475 = vsel %vm2453, %v2432, %v2400
        %v2476 = vsel %vm2453, %v2434, %v2402
        %v2477 = vsel %vm2453, %v2436, %v2404
        %v2478 = vsel %vm2453, %v2438, %v2406
        %v2479 = vsel %vm2453, %v2440, %v2408
        %v2480 = vsel %vm2453, %v2442, %v2410
        %v2481 = vsel %vm2453, %v2444, %v2412
        %v2482 = vsel %vm2453, %v2446, %v2414
        %v2483 = vsel %vm2453, %v2448, %v2416
        %v2484 = vsel %vm2453, %v2450, %v2418
        %v2485 = vsel %vm2453, %v2452, %v2420
        %v2486 = vsel %vm2208, 1, 0
        %v2487 = vlaneseq
        %v2488 = vshrl.u32 %v2487, 7
        %v2489 = vsub.s32 0, %v2488
        %v2490 = vrot.slane %v2486, %v2489
        %v2491 = vlaneseq
        %v2492 = vshrl.u32 %v2491, 7
        %v2493 = vsub.s32 2, %v2492
        %v2494 = vrot.slane %v2486, %v2493
        %v2495 = vlaneseq
        %v2496 = vshrl.u32 %v2495, 7
        %v2497 = vsub.s32 0, %v2496
        %v2498 = vrot.slane %v2490, %v2497
        %v2499 = vlaneseq
        %v2500 = vshrl.u32 %v2499, 7
        %v2501 = vsub.s32 0, %v2500
        %v2502 = vrot.slane %v2494, %v2501
        %vm2503 = vcmp.eq.s32.totalorder %v2498, 1
        %vm2504 = vcmp.eq.s32.totalorder %v2502, 1
        %v2505 = vsel %vm2503, %v2454, 0.0
        %v2506 = vsel %vm2504, %v2470, 0.0
        %v2507 = vsel %vm2503, %v2455, 0.0
        %v2508 = vsel %vm2504, %v2471, 0.0
        %v2509 = vsel %vm2503, %v2456, 0.0
        %v2510 = vsel %vm2504, %v2472, 0.0
        %v2511 = vsel %vm2503, %v2457, 0.0
        %v2512 = vsel %vm2504, %v2473, 0.0
        %v2513 = vsel %vm2503, %v2458, 0.0
        %v2514 = vsel %vm2504, %v2474, 0.0
        %v2515 = vsel %vm2503, %v2459, 0.0
        %v2516 = vsel %vm2504, %v2475, 0.0
        %v2517 = vsel %vm2503, %v2460, 0.0
        %v2518 = vsel %vm2504, %v2476, 0.0
        %v2519 = vsel %vm2503, %v2461, 0.0
        %v2520 = vsel %vm2504, %v2477, 0.0
        %v2521 = vsel %vm2503, %v2462, 0.0
        %v2522 = vsel %vm2504, %v2478, 0.0
        %v2523 = vsel %vm2503, %v2463, 0.0
        %v2524 = vsel %vm2504, %v2479, 0.0
        %v2525 = vsel %vm2503, %v2464, 0.0
        %v2526 = vsel %vm2504, %v2480, 0.0
        %v2527 = vsel %vm2503, %v2465, 0.0
        %v2528 = vsel %vm2504, %v2481, 0.0
        %v2529 = vsel %vm2503, %v2466, 0.0
        %v2530 = vsel %vm2504, %v2482, 0.0
        %v2531 = vsel %vm2503, %v2467, 0.0
        %v2532 = vsel %vm2504, %v2483, 0.0
        %v2533 = vsel %vm2503, %v2468, 0.0
        %v2534 = vsel %vm2504, %v2484, 0.0
        %v2535 = vsel %vm2503, %v2469, 0.0
        %v2536 = vsel %vm2504, %v2485, 0.0
        %2537 = vset.pattern.permute.xlu0 7
        %2538 = vperm.xlu0 %2537, %v590
        %v2539 = vpop.permute.xlu0 %2538
        %2541 = vset.pattern.permute.xlu0 7
        %2542 = vperm.xlu0 %2541, %v591
        %v2543 = vpop.permute.xlu0 %2542
        %2545 = vset.pattern.permute.xlu0 7
        %2546 = vperm.xlu0 %2545, %v592
        %v2547 = vpop.permute.xlu0 %2546
        %2549 = vset.pattern.permute.xlu0 7
        %2550 = vperm.xlu0 %2549, %v593
        %v2551 = vpop.permute.xlu0 %2550
        %2553 = vset.pattern.permute.xlu0 7
        %2554 = vperm.xlu0 %2553, %v594
        %v2555 = vpop.permute.xlu0 %2554
        %2557 = vset.pattern.permute.xlu0 7
        %2558 = vperm.xlu0 %2557, %v595
        %v2559 = vpop.permute.xlu0 %2558
        %2561 = vset.pattern.permute.xlu0 7
        %2562 = vperm.xlu0 %2561, %v596
        %v2563 = vpop.permute.xlu0 %2562
        %2565 = vset.pattern.permute.xlu0 7
        %2566 = vperm.xlu0 %2565, %v597
        %v2567 = vpop.permute.xlu0 %2566
        %2569 = vset.pattern.permute.xlu0 7
        %2570 = vperm.xlu0 %2569, %v598
        %v2571 = vpop.permute.xlu0 %2570
        %2573 = vset.pattern.permute.xlu0 7
        %2574 = vperm.xlu0 %2573, %v599
        %v2575 = vpop.permute.xlu0 %2574
        %2577 = vset.pattern.permute.xlu0 7
        %2578 = vperm.xlu0 %2577, %v600
        %v2579 = vpop.permute.xlu0 %2578
        %2581 = vset.pattern.permute.xlu0 7
        %2582 = vperm.xlu0 %2581, %v601
        %v2583 = vpop.permute.xlu0 %2582
        %2585 = vset.pattern.permute.xlu0 7
        %2586 = vperm.xlu0 %2585, %v602
        %v2587 = vpop.permute.xlu0 %2586
        %2589 = vset.pattern.permute.xlu0 7
        %2590 = vperm.xlu0 %2589, %v603
        %v2591 = vpop.permute.xlu0 %2590
        %2593 = vset.pattern.permute.xlu0 7
        %2594 = vperm.xlu0 %2593, %v604
        %v2595 = vpop.permute.xlu0 %2594
        %2597 = vset.pattern.permute.xlu0 7
        %2598 = vperm.xlu0 %2597, %v605
        %v2599 = vpop.permute.xlu0 %2598
        %v2601 = vmul.f32 %v2505, %v2539
        %v2602 = vmul.f32 %v2506, %v2539
        %v2603 = vmul.f32 %v2507, %v2543
        %v2604 = vmul.f32 %v2508, %v2543
        %v2605 = vmul.f32 %v2509, %v2547
        %v2606 = vmul.f32 %v2510, %v2547
        %v2607 = vmul.f32 %v2511, %v2551
        %v2608 = vmul.f32 %v2512, %v2551
        %v2609 = vmul.f32 %v2513, %v2555
        %v2610 = vmul.f32 %v2514, %v2555
        %v2611 = vmul.f32 %v2515, %v2559
        %v2612 = vmul.f32 %v2516, %v2559
        %v2613 = vmul.f32 %v2517, %v2563
        %v2614 = vmul.f32 %v2518, %v2563
        %v2615 = vmul.f32 %v2519, %v2567
        %v2616 = vmul.f32 %v2520, %v2567
        %v2617 = vmul.f32 %v2521, %v2571
        %v2618 = vmul.f32 %v2522, %v2571
        %v2619 = vmul.f32 %v2523, %v2575
        %v2620 = vmul.f32 %v2524, %v2575
        %v2621 = vmul.f32 %v2525, %v2579
        %v2622 = vmul.f32 %v2526, %v2579
        %v2623 = vmul.f32 %v2527, %v2583
        %v2624 = vmul.f32 %v2528, %v2583
        %v2625 = vmul.f32 %v2529, %v2587
        %v2626 = vmul.f32 %v2530, %v2587
        %v2627 = vmul.f32 %v2531, %v2591
        %v2628 = vmul.f32 %v2532, %v2591
        %v2629 = vmul.f32 %v2533, %v2595
        %v2630 = vmul.f32 %v2534, %v2595
        %v2631 = vmul.f32 %v2535, %v2599
        %v2632 = vmul.f32 %v2536, %v2599
        %v2633 = vadd.f32 %v2357, %v2601
        %v2634 = vadd.f32 %v2358, %v2602
        %v2635 = vadd.f32 %v2359, %v2603
        %v2636 = vadd.f32 %v2360, %v2604
        %v2637 = vadd.f32 %v2361, %v2605
        %v2638 = vadd.f32 %v2362, %v2606
        %v2639 = vadd.f32 %v2363, %v2607
        %v2640 = vadd.f32 %v2364, %v2608
        %v2641 = vadd.f32 %v2365, %v2609
        %v2642 = vadd.f32 %v2366, %v2610
        %v2643 = vadd.f32 %v2367, %v2611
        %v2644 = vadd.f32 %v2368, %v2612
        %v2645 = vadd.f32 %v2369, %v2613
        %v2646 = vadd.f32 %v2370, %v2614
        %v2647 = vadd.f32 %v2371, %v2615
        %v2648 = vadd.f32 %v2372, %v2616
        %v2649 = vadd.f32 %v2373, %v2617
        %v2650 = vadd.f32 %v2374, %v2618
        %v2651 = vadd.f32 %v2375, %v2619
        %v2652 = vadd.f32 %v2376, %v2620
        %v2653 = vadd.f32 %v2377, %v2621
        %v2654 = vadd.f32 %v2378, %v2622
        %v2655 = vadd.f32 %v2379, %v2623
        %v2656 = vadd.f32 %v2380, %v2624
        %v2657 = vadd.f32 %v2381, %v2625
        %v2658 = vadd.f32 %v2382, %v2626
        %v2659 = vadd.f32 %v2383, %v2627
        %v2660 = vadd.f32 %v2384, %v2628
        %v2661 = vadd.f32 %v2385, %v2629
        %v2662 = vadd.f32 %v2386, %v2630
        %v2663 = vadd.f32 %v2387, %v2631
        %v2664 = vadd.f32 %v2388, %v2632
        %2665 = vrot.lane.b32.xlu0 %v512, 111
        %v2666 = vpop.permute.xlu0 %2665
        %2667 = vrot.lane.b32.xlu0 %v516, 111
        %v2668 = vpop.permute.xlu0 %2667
        %2669 = vrot.lane.b32.xlu0 %v522, 111
        %v2670 = vpop.permute.xlu0 %2669
        %2671 = vrot.lane.b32.xlu0 %v526, 111
        %v2672 = vpop.permute.xlu0 %2671
        %2673 = vrot.lane.b32.xlu0 %v532, 111
        %v2674 = vpop.permute.xlu0 %2673
        %2675 = vrot.lane.b32.xlu0 %v536, 111
        %v2676 = vpop.permute.xlu0 %2675
        %2677 = vrot.lane.b32.xlu0 %v542, 111
        %v2678 = vpop.permute.xlu0 %2677
        %2679 = vrot.lane.b32.xlu0 %v546, 111
        %v2680 = vpop.permute.xlu0 %2679
        %2681 = vrot.lane.b32.xlu0 %v552, 111
        %v2682 = vpop.permute.xlu0 %2681
        %2683 = vrot.lane.b32.xlu0 %v556, 111
        %v2684 = vpop.permute.xlu0 %2683
        %2685 = vrot.lane.b32.xlu0 %v562, 111
        %v2686 = vpop.permute.xlu0 %2685
        %2687 = vrot.lane.b32.xlu0 %v566, 111
        %v2688 = vpop.permute.xlu0 %2687
        %2689 = vrot.lane.b32.xlu0 %v572, 111
        %v2690 = vpop.permute.xlu0 %2689
        %2691 = vrot.lane.b32.xlu0 %v576, 111
        %v2692 = vpop.permute.xlu0 %2691
        %2693 = vrot.lane.b32.xlu0 %v582, 111
        %v2694 = vpop.permute.xlu0 %2693
        %2695 = vrot.lane.b32.xlu0 %v586, 111
        %v2696 = vpop.permute.xlu0 %2695
        %2697 = vrot.lane.b32.xlu0 %v514, 111
        %v2698 = vpop.permute.xlu0 %2697
        %2699 = vrot.lane.b32.xlu0 %v518, 111
        %v2700 = vpop.permute.xlu0 %2699
        %2701 = vrot.lane.b32.xlu0 %v524, 111
        %v2702 = vpop.permute.xlu0 %2701
        %2703 = vrot.lane.b32.xlu0 %v528, 111
        %v2704 = vpop.permute.xlu0 %2703
        %2705 = vrot.lane.b32.xlu0 %v534, 111
        %v2706 = vpop.permute.xlu0 %2705
        %2707 = vrot.lane.b32.xlu0 %v538, 111
        %v2708 = vpop.permute.xlu0 %2707
        %2709 = vrot.lane.b32.xlu0 %v544, 111
        %v2710 = vpop.permute.xlu0 %2709
        %2711 = vrot.lane.b32.xlu0 %v548, 111
        %v2712 = vpop.permute.xlu0 %2711
        %2713 = vrot.lane.b32.xlu0 %v554, 111
        %v2714 = vpop.permute.xlu0 %2713
        %2715 = vrot.lane.b32.xlu0 %v558, 111
        %v2716 = vpop.permute.xlu0 %2715
        %2717 = vrot.lane.b32.xlu0 %v564, 111
        %v2718 = vpop.permute.xlu0 %2717
        %2719 = vrot.lane.b32.xlu0 %v568, 111
        %v2720 = vpop.permute.xlu0 %2719
        %2721 = vrot.lane.b32.xlu0 %v574, 111
        %v2722 = vpop.permute.xlu0 %2721
        %2723 = vrot.lane.b32.xlu0 %v578, 111
        %v2724 = vpop.permute.xlu0 %2723
        %2725 = vrot.lane.b32.xlu0 %v584, 111
        %v2726 = vpop.permute.xlu0 %2725
        %2727 = vrot.lane.b32.xlu0 %v588, 111
        %v2728 = vpop.permute.xlu0 %2727
        %vm2729 = vcmp.lt.s32.totalorder %v671, 111
        %v2730 = vsel %vm2729, %v2666, %v2698
        %v2731 = vsel %vm2729, %v2668, %v2700
        %v2732 = vsel %vm2729, %v2670, %v2702
        %v2733 = vsel %vm2729, %v2672, %v2704
        %v2734 = vsel %vm2729, %v2674, %v2706
        %v2735 = vsel %vm2729, %v2676, %v2708
        %v2736 = vsel %vm2729, %v2678, %v2710
        %v2737 = vsel %vm2729, %v2680, %v2712
        %v2738 = vsel %vm2729, %v2682, %v2714
        %v2739 = vsel %vm2729, %v2684, %v2716
        %v2740 = vsel %vm2729, %v2686, %v2718
        %v2741 = vsel %vm2729, %v2688, %v2720
        %v2742 = vsel %vm2729, %v2690, %v2722
        %v2743 = vsel %vm2729, %v2692, %v2724
        %v2744 = vsel %vm2729, %v2694, %v2726
        %v2745 = vsel %vm2729, %v2696, %v2728
        %v2746 = vsel %vm2729, %v2698, %v2666
        %v2747 = vsel %vm2729, %v2700, %v2668
        %v2748 = vsel %vm2729, %v2702, %v2670
        %v2749 = vsel %vm2729, %v2704, %v2672
        %v2750 = vsel %vm2729, %v2706, %v2674
        %v2751 = vsel %vm2729, %v2708, %v2676
        %v2752 = vsel %vm2729, %v2710, %v2678
        %v2753 = vsel %vm2729, %v2712, %v2680
        %v2754 = vsel %vm2729, %v2714, %v2682
        %v2755 = vsel %vm2729, %v2716, %v2684
        %v2756 = vsel %vm2729, %v2718, %v2686
        %v2757 = vsel %vm2729, %v2720, %v2688
        %v2758 = vsel %vm2729, %v2722, %v2690
        %v2759 = vsel %vm2729, %v2724, %v2692
        %v2760 = vsel %vm2729, %v2726, %v2694
        %v2761 = vsel %vm2729, %v2728, %v2696
        %vm2762 = vmand %vm2208, %vm1252
        %v2763 = vsel %vm2762, 1, 0
        %v2764 = vlaneseq
        %v2765 = vshrl.u32 %v2764, 7
        %v2766 = vsub.s32 0, %v2765
        %v2767 = vrot.slane %v2763, %v2766
        %v2768 = vlaneseq
        %v2769 = vshrl.u32 %v2768, 7
        %v2770 = vsub.s32 2, %v2769
        %v2771 = vrot.slane %v2763, %v2770
        %v2772 = vlaneseq
        %v2773 = vshrl.u32 %v2772, 7
        %v2774 = vsub.s32 0, %v2773
        %v2775 = vrot.slane %v2767, %v2774
        %v2776 = vlaneseq
        %v2777 = vshrl.u32 %v2776, 7
        %v2778 = vsub.s32 0, %v2777
        %v2779 = vrot.slane %v2771, %v2778
        %vm2780 = vcmp.eq.s32.totalorder %v2775, 1
        %vm2781 = vcmp.eq.s32.totalorder %v2779, 1
        %v2782 = vsel %vm2780, %v2730, 0.0
        %v2783 = vsel %vm2781, %v2746, 0.0
        %v2784 = vsel %vm2780, %v2731, 0.0
        %v2785 = vsel %vm2781, %v2747, 0.0
        %v2786 = vsel %vm2780, %v2732, 0.0
        %v2787 = vsel %vm2781, %v2748, 0.0
        %v2788 = vsel %vm2780, %v2733, 0.0
        %v2789 = vsel %vm2781, %v2749, 0.0
        %v2790 = vsel %vm2780, %v2734, 0.0
        %v2791 = vsel %vm2781, %v2750, 0.0
        %v2792 = vsel %vm2780, %v2735, 0.0
        %v2793 = vsel %vm2781, %v2751, 0.0
        %v2794 = vsel %vm2780, %v2736, 0.0
        %v2795 = vsel %vm2781, %v2752, 0.0
        %v2796 = vsel %vm2780, %v2737, 0.0
        %v2797 = vsel %vm2781, %v2753, 0.0
        %v2798 = vsel %vm2780, %v2738, 0.0
        %v2799 = vsel %vm2781, %v2754, 0.0
        %v2800 = vsel %vm2780, %v2739, 0.0
        %v2801 = vsel %vm2781, %v2755, 0.0
        %v2802 = vsel %vm2780, %v2740, 0.0
        %v2803 = vsel %vm2781, %v2756, 0.0
        %v2804 = vsel %vm2780, %v2741, 0.0
        %v2805 = vsel %vm2781, %v2757, 0.0
        %v2806 = vsel %vm2780, %v2742, 0.0
        %v2807 = vsel %vm2781, %v2758, 0.0
        %v2808 = vsel %vm2780, %v2743, 0.0
        %v2809 = vsel %vm2781, %v2759, 0.0
        %v2810 = vsel %vm2780, %v2744, 0.0
        %v2811 = vsel %vm2781, %v2760, 0.0
        %v2812 = vsel %vm2780, %v2745, 0.0
        %v2813 = vsel %vm2781, %v2761, 0.0
        %2814 = vset.pattern.permute.xlu0 8
        %2815 = vperm.xlu0 %2814, %v590
        %v2816 = vpop.permute.xlu0 %2815
        %2818 = vset.pattern.permute.xlu0 8
        %2819 = vperm.xlu0 %2818, %v591
        %v2820 = vpop.permute.xlu0 %2819
        %2822 = vset.pattern.permute.xlu0 8
        %2823 = vperm.xlu0 %2822, %v592
        %v2824 = vpop.permute.xlu0 %2823
        %2826 = vset.pattern.permute.xlu0 8
        %2827 = vperm.xlu0 %2826, %v593
        %v2828 = vpop.permute.xlu0 %2827
        %2830 = vset.pattern.permute.xlu0 8
        %2831 = vperm.xlu0 %2830, %v594
        %v2832 = vpop.permute.xlu0 %2831
        %2834 = vset.pattern.permute.xlu0 8
        %2835 = vperm.xlu0 %2834, %v595
        %v2836 = vpop.permute.xlu0 %2835
        %2838 = vset.pattern.permute.xlu0 8
        %2839 = vperm.xlu0 %2838, %v596
        %v2840 = vpop.permute.xlu0 %2839
        %2842 = vset.pattern.permute.xlu0 8
        %2843 = vperm.xlu0 %2842, %v597
        %v2844 = vpop.permute.xlu0 %2843
        %2846 = vset.pattern.permute.xlu0 8
        %2847 = vperm.xlu0 %2846, %v598
        %v2848 = vpop.permute.xlu0 %2847
        %2850 = vset.pattern.permute.xlu0 8
        %2851 = vperm.xlu0 %2850, %v599
        %v2852 = vpop.permute.xlu0 %2851
        %2854 = vset.pattern.permute.xlu0 8
        %2855 = vperm.xlu0 %2854, %v600
        %v2856 = vpop.permute.xlu0 %2855
        %2858 = vset.pattern.permute.xlu0 8
        %2859 = vperm.xlu0 %2858, %v601
        %v2860 = vpop.permute.xlu0 %2859
        %2862 = vset.pattern.permute.xlu0 8
        %2863 = vperm.xlu0 %2862, %v602
        %v2864 = vpop.permute.xlu0 %2863
        %2866 = vset.pattern.permute.xlu0 8
        %2867 = vperm.xlu0 %2866, %v603
        %v2868 = vpop.permute.xlu0 %2867
        %2870 = vset.pattern.permute.xlu0 8
        %2871 = vperm.xlu0 %2870, %v604
        %v2872 = vpop.permute.xlu0 %2871
        %2874 = vset.pattern.permute.xlu0 8
        %2875 = vperm.xlu0 %2874, %v605
        %v2876 = vpop.permute.xlu0 %2875
        %v2878 = vmul.f32 %v2782, %v2816
        %v2879 = vmul.f32 %v2783, %v2816
        %v2880 = vmul.f32 %v2784, %v2820
        %v2881 = vmul.f32 %v2785, %v2820
        %v2882 = vmul.f32 %v2786, %v2824
        %v2883 = vmul.f32 %v2787, %v2824
        %v2884 = vmul.f32 %v2788, %v2828
        %v2885 = vmul.f32 %v2789, %v2828
        %v2886 = vmul.f32 %v2790, %v2832
        %v2887 = vmul.f32 %v2791, %v2832
        %v2888 = vmul.f32 %v2792, %v2836
        %v2889 = vmul.f32 %v2793, %v2836
        %v2890 = vmul.f32 %v2794, %v2840
        %v2891 = vmul.f32 %v2795, %v2840
        %v2892 = vmul.f32 %v2796, %v2844
        %v2893 = vmul.f32 %v2797, %v2844
        %v2894 = vmul.f32 %v2798, %v2848
        %v2895 = vmul.f32 %v2799, %v2848
        %v2896 = vmul.f32 %v2800, %v2852
        %v2897 = vmul.f32 %v2801, %v2852
        %v2898 = vmul.f32 %v2802, %v2856
        %v2899 = vmul.f32 %v2803, %v2856
        %v2900 = vmul.f32 %v2804, %v2860
        %v2901 = vmul.f32 %v2805, %v2860
        %v2902 = vmul.f32 %v2806, %v2864
        %v2903 = vmul.f32 %v2807, %v2864
        %v2904 = vmul.f32 %v2808, %v2868
        %v2905 = vmul.f32 %v2809, %v2868
        %v2906 = vmul.f32 %v2810, %v2872
        %v2907 = vmul.f32 %v2811, %v2872
        %v2908 = vmul.f32 %v2812, %v2876
        %v2909 = vmul.f32 %v2813, %v2876
        %v2910 = vadd.f32 %v2633, %v2878
        %v2911 = vadd.f32 %v2634, %v2879
        %v2912 = vadd.f32 %v2635, %v2880
        %v2913 = vadd.f32 %v2636, %v2881
        %v2914 = vadd.f32 %v2637, %v2882
        %v2915 = vadd.f32 %v2638, %v2883
        %v2916 = vadd.f32 %v2639, %v2884
        %v2917 = vadd.f32 %v2640, %v2885
        %v2918 = vadd.f32 %v2641, %v2886
        %v2919 = vadd.f32 %v2642, %v2887
        %v2920 = vadd.f32 %v2643, %v2888
        %v2921 = vadd.f32 %v2644, %v2889
        %v2922 = vadd.f32 %v2645, %v2890
        %v2923 = vadd.f32 %v2646, %v2891
        %v2924 = vadd.f32 %v2647, %v2892
        %v2925 = vadd.f32 %v2648, %v2893
        %v2926 = vadd.f32 %v2649, %v2894
        %v2927 = vadd.f32 %v2650, %v2895
        %v2928 = vadd.f32 %v2651, %v2896
        %v2929 = vadd.f32 %v2652, %v2897
        %v2930 = vadd.f32 %v2653, %v2898
        %v2931 = vadd.f32 %v2654, %v2899
        %v2932 = vadd.f32 %v2655, %v2900
        %v2933 = vadd.f32 %v2656, %v2901
        %v2934 = vadd.f32 %v2657, %v2902
        %v2935 = vadd.f32 %v2658, %v2903
        %v2936 = vadd.f32 %v2659, %v2904
        %v2937 = vadd.f32 %v2660, %v2905
        %v2938 = vadd.f32 %v2661, %v2906
        %v2939 = vadd.f32 %v2662, %v2907
        %v2940 = vadd.f32 %v2663, %v2908
        %v2941 = vadd.f32 %v2664, %v2909
        %v2942 = vmul.f32 %v2910, 0.5
        %v2943 = vmul.f32 %v2911, 0.5
        %v2944 = vmul.f32 %v2912, 0.5
        %v2945 = vmul.f32 %v2913, 0.5
        %v2946 = vmul.f32 %v2914, 0.5
        %v2947 = vmul.f32 %v2915, 0.5
        %v2948 = vmul.f32 %v2916, 0.5
        %v2949 = vmul.f32 %v2917, 0.5
        %v2950 = vmul.f32 %v2918, 0.5
        %v2951 = vmul.f32 %v2919, 0.5
        %v2952 = vmul.f32 %v2920, 0.5
        %v2953 = vmul.f32 %v2921, 0.5
        %v2954 = vmul.f32 %v2922, 0.5
        %v2955 = vmul.f32 %v2923, 0.5
        %v2956 = vmul.f32 %v2924, 0.5
        %v2957 = vmul.f32 %v2925, 0.5
        %v2958 = vmul.f32 %v2926, 0.5
        %v2959 = vmul.f32 %v2927, 0.5
        %v2960 = vmul.f32 %v2928, 0.5
        %v2961 = vmul.f32 %v2929, 0.5
        %v2962 = vmul.f32 %v2930, 0.5
        %v2963 = vmul.f32 %v2931, 0.5
        %v2964 = vmul.f32 %v2932, 0.5
        %v2965 = vmul.f32 %v2933, 0.5
        %v2966 = vmul.f32 %v2934, 0.5
        %v2967 = vmul.f32 %v2935, 0.5
        %v2968 = vmul.f32 %v2936, 0.5
        %v2969 = vmul.f32 %v2937, 0.5
        %v2970 = vmul.f32 %v2938, 0.5
        %v2971 = vmul.f32 %v2939, 0.5
        %v2972 = vmul.f32 %v2940, 0.5
        %v2973 = vmul.f32 %v2941, 0.5
        %v2974 = vmul.f32 %v2910, 0.70710677
        %v2975 = vmul.f32 %v2911, 0.70710677
        %v2976 = vmul.f32 %v2912, 0.70710677
        %v2977 = vmul.f32 %v2913, 0.70710677
        %v2978 = vmul.f32 %v2914, 0.70710677
        %v2979 = vmul.f32 %v2915, 0.70710677
        %v2980 = vmul.f32 %v2916, 0.70710677
        %v2981 = vmul.f32 %v2917, 0.70710677
        %v2982 = vmul.f32 %v2918, 0.70710677
        %v2983 = vmul.f32 %v2919, 0.70710677
        %v2984 = vmul.f32 %v2920, 0.70710677
        %v2985 = vmul.f32 %v2921, 0.70710677
        %v2986 = vmul.f32 %v2922, 0.70710677
        %v2987 = vmul.f32 %v2923, 0.70710677
        %v2988 = vmul.f32 %v2924, 0.70710677
        %v2989 = vmul.f32 %v2925, 0.70710677
        %v2990 = vmul.f32 %v2926, 0.70710677
        %v2991 = vmul.f32 %v2927, 0.70710677
        %v2992 = vmul.f32 %v2928, 0.70710677
        %v2993 = vmul.f32 %v2929, 0.70710677
        %v2994 = vmul.f32 %v2930, 0.70710677
        %v2995 = vmul.f32 %v2931, 0.70710677
        %v2996 = vmul.f32 %v2932, 0.70710677
        %v2997 = vmul.f32 %v2933, 0.70710677
        %v2998 = vmul.f32 %v2934, 0.70710677
        %v2999 = vmul.f32 %v2935, 0.70710677
        %v3000 = vmul.f32 %v2936, 0.70710677
        %v3001 = vmul.f32 %v2937, 0.70710677
        %v3002 = vmul.f32 %v2938, 0.70710677
        %v3003 = vmul.f32 %v2939, 0.70710677
        %v3004 = vmul.f32 %v2940, 0.70710677
        %v3005 = vmul.f32 %v2941, 0.70710677
        %v3006 = vand.u32 2147483647, %v2974
        %v3007 = vand.u32 2147483647, %v2975
        %v3008 = vand.u32 2147483647, %v2976
        %v3009 = vand.u32 2147483647, %v2977
        %v3010 = vand.u32 2147483647, %v2978
        %v3011 = vand.u32 2147483647, %v2979
        %v3012 = vand.u32 2147483647, %v2980
        %v3013 = vand.u32 2147483647, %v2981
        %v3014 = vand.u32 2147483647, %v2982
        %v3015 = vand.u32 2147483647, %v2983
        %v3016 = vand.u32 2147483647, %v2984
        %v3017 = vand.u32 2147483647, %v2985
        %v3018 = vand.u32 2147483647, %v2986
        %v3019 = vand.u32 2147483647, %v2987
        %v3020 = vand.u32 2147483647, %v2988
        %v3021 = vand.u32 2147483647, %v2989
        %v3022 = vand.u32 2147483647, %v2990
        %v3023 = vand.u32 2147483647, %v2991
        %v3024 = vand.u32 2147483647, %v2992
        %v3025 = vand.u32 2147483647, %v2993
        %v3026 = vand.u32 2147483647, %v2994
        %v3027 = vand.u32 2147483647, %v2995
        %v3028 = vand.u32 2147483647, %v2996
        %v3029 = vand.u32 2147483647, %v2997
        %v3030 = vand.u32 2147483647, %v2998
        %v3031 = vand.u32 2147483647, %v2999
        %v3032 = vand.u32 2147483647, %v3000
        %v3033 = vand.u32 2147483647, %v3001
        %v3034 = vand.u32 2147483647, %v3002
        %v3035 = vand.u32 2147483647, %v3003
        %v3036 = vand.u32 2147483647, %v3004
        %v3037 = vand.u32 2147483647, %v3005
        %v3038 = vmul.f32 %v3006, 0.3275911
        %v3039 = vmul.f32 %v3007, 0.3275911
        %v3040 = vmul.f32 %v3008, 0.3275911
        %v3041 = vmul.f32 %v3009, 0.3275911
        %v3042 = vmul.f32 %v3010, 0.3275911
        %v3043 = vmul.f32 %v3011, 0.3275911
        %v3044 = vmul.f32 %v3012, 0.3275911
        %v3045 = vmul.f32 %v3013, 0.3275911
        %v3046 = vmul.f32 %v3014, 0.3275911
        %v3047 = vmul.f32 %v3015, 0.3275911
        %v3048 = vmul.f32 %v3016, 0.3275911
        %v3049 = vmul.f32 %v3017, 0.3275911
        %v3050 = vmul.f32 %v3018, 0.3275911
        %v3051 = vmul.f32 %v3019, 0.3275911
        %v3052 = vmul.f32 %v3020, 0.3275911
        %v3053 = vmul.f32 %v3021, 0.3275911
        %v3054 = vmul.f32 %v3022, 0.3275911
        %v3055 = vmul.f32 %v3023, 0.3275911
        %v3056 = vmul.f32 %v3024, 0.3275911
        %v3057 = vmul.f32 %v3025, 0.3275911
        %v3058 = vmul.f32 %v3026, 0.3275911
        %v3059 = vmul.f32 %v3027, 0.3275911
        %v3060 = vmul.f32 %v3028, 0.3275911
        %v3061 = vmul.f32 %v3029, 0.3275911
        %v3062 = vmul.f32 %v3030, 0.3275911
        %v3063 = vmul.f32 %v3031, 0.3275911
        %v3064 = vmul.f32 %v3032, 0.3275911
        %v3065 = vmul.f32 %v3033, 0.3275911
        %v3066 = vmul.f32 %v3034, 0.3275911
        %v3067 = vmul.f32 %v3035, 0.3275911
        %v3068 = vmul.f32 %v3036, 0.3275911
        %v3069 = vmul.f32 %v3037, 0.3275911
        %v3070 = vadd.f32 %v3038, 1.0
        %v3071 = vadd.f32 %v3039, 1.0
        %v3072 = vadd.f32 %v3040, 1.0
        %v3073 = vadd.f32 %v3041, 1.0
        %v3074 = vadd.f32 %v3042, 1.0
        %v3075 = vadd.f32 %v3043, 1.0
        %v3076 = vadd.f32 %v3044, 1.0
        %v3077 = vadd.f32 %v3045, 1.0
        %v3078 = vadd.f32 %v3046, 1.0
        %v3079 = vadd.f32 %v3047, 1.0
        %v3080 = vadd.f32 %v3048, 1.0
        %v3081 = vadd.f32 %v3049, 1.0
        %v3082 = vadd.f32 %v3050, 1.0
        %v3083 = vadd.f32 %v3051, 1.0
        %v3084 = vadd.f32 %v3052, 1.0
        %v3085 = vadd.f32 %v3053, 1.0
        %v3086 = vadd.f32 %v3054, 1.0
        %v3087 = vadd.f32 %v3055, 1.0
        %v3088 = vadd.f32 %v3056, 1.0
        %v3089 = vadd.f32 %v3057, 1.0
        %v3090 = vadd.f32 %v3058, 1.0
        %v3091 = vadd.f32 %v3059, 1.0
        %v3092 = vadd.f32 %v3060, 1.0
        %v3093 = vadd.f32 %v3061, 1.0
        %v3094 = vadd.f32 %v3062, 1.0
        %v3095 = vadd.f32 %v3063, 1.0
        %v3096 = vadd.f32 %v3064, 1.0
        %v3097 = vadd.f32 %v3065, 1.0
        %v3098 = vadd.f32 %v3066, 1.0
        %v3099 = vadd.f32 %v3067, 1.0
        %v3100 = vadd.f32 %v3068, 1.0
        %v3101 = vadd.f32 %v3069, 1.0
        %v3102 = vrcp.pop %v3070
        %v3103 = vrcp.pop %v3071
        %v3104 = vrcp.pop %v3072
        %v3105 = vrcp.pop %v3073
        %v3106 = vrcp.pop %v3074
        %v3107 = vrcp.pop %v3075
        %v3108 = vrcp.pop %v3076
        %v3109 = vrcp.pop %v3077
        %v3110 = vrcp.pop %v3078
        %v3111 = vrcp.pop %v3079
        %v3112 = vrcp.pop %v3080
        %v3113 = vrcp.pop %v3081
        %v3114 = vrcp.pop %v3082
        %v3115 = vrcp.pop %v3083
        %v3116 = vrcp.pop %v3084
        %v3117 = vrcp.pop %v3085
        %v3118 = vrcp.pop %v3086
        %v3119 = vrcp.pop %v3087
        %v3120 = vrcp.pop %v3088
        %v3121 = vrcp.pop %v3089
        %v3122 = vrcp.pop %v3090
        %v3123 = vrcp.pop %v3091
        %v3124 = vrcp.pop %v3092
        %v3125 = vrcp.pop %v3093
        %v3126 = vrcp.pop %v3094
        %v3127 = vrcp.pop %v3095
        %v3128 = vrcp.pop %v3096
        %v3129 = vrcp.pop %v3097
        %v3130 = vrcp.pop %v3098
        %v3131 = vrcp.pop %v3099
        %v3132 = vrcp.pop %v3100
        %v3133 = vrcp.pop %v3101
        %v3134 = vmul.f32 %v3102, 1.0614054
        %v3135 = vmul.f32 %v3103, 1.0614054
        %v3136 = vmul.f32 %v3104, 1.0614054
        %v3137 = vmul.f32 %v3105, 1.0614054
        %v3138 = vmul.f32 %v3106, 1.0614054
        %v3139 = vmul.f32 %v3107, 1.0614054
        %v3140 = vmul.f32 %v3108, 1.0614054
        %v3141 = vmul.f32 %v3109, 1.0614054
        %v3142 = vmul.f32 %v3110, 1.0614054
        %v3143 = vmul.f32 %v3111, 1.0614054
        %v3144 = vmul.f32 %v3112, 1.0614054
        %v3145 = vmul.f32 %v3113, 1.0614054
        %v3146 = vmul.f32 %v3114, 1.0614054
        %v3147 = vmul.f32 %v3115, 1.0614054
        %v3148 = vmul.f32 %v3116, 1.0614054
        %v3149 = vmul.f32 %v3117, 1.0614054
        %v3150 = vmul.f32 %v3118, 1.0614054
        %v3151 = vmul.f32 %v3119, 1.0614054
        %v3152 = vmul.f32 %v3120, 1.0614054
        %v3153 = vmul.f32 %v3121, 1.0614054
        %v3154 = vmul.f32 %v3122, 1.0614054
        %v3155 = vmul.f32 %v3123, 1.0614054
        %v3156 = vmul.f32 %v3124, 1.0614054
        %v3157 = vmul.f32 %v3125, 1.0614054
        %v3158 = vmul.f32 %v3126, 1.0614054
        %v3159 = vmul.f32 %v3127, 1.0614054
        %v3160 = vmul.f32 %v3128, 1.0614054
        %v3161 = vmul.f32 %v3129, 1.0614054
        %v3162 = vmul.f32 %v3130, 1.0614054
        %v3163 = vmul.f32 %v3131, 1.0614054
        %v3164 = vmul.f32 %v3132, 1.0614054
        %v3165 = vmul.f32 %v3133, 1.0614054
        %v3166 = vadd.f32 %v3134, -1.4531521
        %v3167 = vadd.f32 %v3135, -1.4531521
        %v3168 = vadd.f32 %v3136, -1.4531521
        %v3169 = vadd.f32 %v3137, -1.4531521
        %v3170 = vadd.f32 %v3138, -1.4531521
        %v3171 = vadd.f32 %v3139, -1.4531521
        %v3172 = vadd.f32 %v3140, -1.4531521
        %v3173 = vadd.f32 %v3141, -1.4531521
        %v3174 = vadd.f32 %v3142, -1.4531521
        %v3175 = vadd.f32 %v3143, -1.4531521
        %v3176 = vadd.f32 %v3144, -1.4531521
        %v3177 = vadd.f32 %v3145, -1.4531521
        %v3178 = vadd.f32 %v3146, -1.4531521
        %v3179 = vadd.f32 %v3147, -1.4531521
        %v3180 = vadd.f32 %v3148, -1.4531521
        %v3181 = vadd.f32 %v3149, -1.4531521
        %v3182 = vadd.f32 %v3150, -1.4531521
        %v3183 = vadd.f32 %v3151, -1.4531521
        %v3184 = vadd.f32 %v3152, -1.4531521
        %v3185 = vadd.f32 %v3153, -1.4531521
        %v3186 = vadd.f32 %v3154, -1.4531521
        %v3187 = vadd.f32 %v3155, -1.4531521
        %v3188 = vadd.f32 %v3156, -1.4531521
        %v3189 = vadd.f32 %v3157, -1.4531521
        %v3190 = vadd.f32 %v3158, -1.4531521
        %v3191 = vadd.f32 %v3159, -1.4531521
        %v3192 = vadd.f32 %v3160, -1.4531521
        %v3193 = vadd.f32 %v3161, -1.4531521
        %v3194 = vadd.f32 %v3162, -1.4531521
        %v3195 = vadd.f32 %v3163, -1.4531521
        %v3196 = vadd.f32 %v3164, -1.4531521
        %v3197 = vadd.f32 %v3165, -1.4531521
        %v3198 = vmul.f32 %v3166, %v3102
        %v3199 = vmul.f32 %v3167, %v3103
        %v3200 = vmul.f32 %v3168, %v3104
        %v3201 = vmul.f32 %v3169, %v3105
        %v3202 = vmul.f32 %v3170, %v3106
        %v3203 = vmul.f32 %v3171, %v3107
        %v3204 = vmul.f32 %v3172, %v3108
        %v3205 = vmul.f32 %v3173, %v3109
        %v3206 = vmul.f32 %v3174, %v3110
        %v3207 = vmul.f32 %v3175, %v3111
        %v3208 = vmul.f32 %v3176, %v3112
        %v3209 = vmul.f32 %v3177, %v3113
        %v3210 = vmul.f32 %v3178, %v3114
        %v3211 = vmul.f32 %v3179, %v3115
        %v3212 = vmul.f32 %v3180, %v3116
        %v3213 = vmul.f32 %v3181, %v3117
        %v3214 = vmul.f32 %v3182, %v3118
        %v3215 = vmul.f32 %v3183, %v3119
        %v3216 = vmul.f32 %v3184, %v3120
        %v3217 = vmul.f32 %v3185, %v3121
        %v3218 = vmul.f32 %v3186, %v3122
        %v3219 = vmul.f32 %v3187, %v3123
        %v3220 = vmul.f32 %v3188, %v3124
        %v3221 = vmul.f32 %v3189, %v3125
        %v3222 = vmul.f32 %v3190, %v3126
        %v3223 = vmul.f32 %v3191, %v3127
        %v3224 = vmul.f32 %v3192, %v3128
        %v3225 = vmul.f32 %v3193, %v3129
        %v3226 = vmul.f32 %v3194, %v3130
        %v3227 = vmul.f32 %v3195, %v3131
        %v3228 = vmul.f32 %v3196, %v3132
        %v3229 = vmul.f32 %v3197, %v3133
        %v3230 = vadd.f32 %v3198, 1.4214138
        %v3231 = vadd.f32 %v3199, 1.4214138
        %v3232 = vadd.f32 %v3200, 1.4214138
        %v3233 = vadd.f32 %v3201, 1.4214138
        %v3234 = vadd.f32 %v3202, 1.4214138
        %v3235 = vadd.f32 %v3203, 1.4214138
        %v3236 = vadd.f32 %v3204, 1.4214138
        %v3237 = vadd.f32 %v3205, 1.4214138
        %v3238 = vadd.f32 %v3206, 1.4214138
        %v3239 = vadd.f32 %v3207, 1.4214138
        %v3240 = vadd.f32 %v3208, 1.4214138
        %v3241 = vadd.f32 %v3209, 1.4214138
        %v3242 = vadd.f32 %v3210, 1.4214138
        %v3243 = vadd.f32 %v3211, 1.4214138
        %v3244 = vadd.f32 %v3212, 1.4214138
        %v3245 = vadd.f32 %v3213, 1.4214138
        %v3246 = vadd.f32 %v3214, 1.4214138
        %v3247 = vadd.f32 %v3215, 1.4214138
        %v3248 = vadd.f32 %v3216, 1.4214138
        %v3249 = vadd.f32 %v3217, 1.4214138
        %v3250 = vadd.f32 %v3218, 1.4214138
        %v3251 = vadd.f32 %v3219, 1.4214138
        %v3252 = vadd.f32 %v3220, 1.4214138
        %v3253 = vadd.f32 %v3221, 1.4214138
        %v3254 = vadd.f32 %v3222, 1.4214138
        %v3255 = vadd.f32 %v3223, 1.4214138
        %v3256 = vadd.f32 %v3224, 1.4214138
        %v3257 = vadd.f32 %v3225, 1.4214138
        %v3258 = vadd.f32 %v3226, 1.4214138
        %v3259 = vadd.f32 %v3227, 1.4214138
        %v3260 = vadd.f32 %v3228, 1.4214138
        %v3261 = vadd.f32 %v3229, 1.4214138
        %v3262 = vmul.f32 %v3230, %v3102
        %v3263 = vmul.f32 %v3231, %v3103
        %v3264 = vmul.f32 %v3232, %v3104
        %v3265 = vmul.f32 %v3233, %v3105
        %v3266 = vmul.f32 %v3234, %v3106
        %v3267 = vmul.f32 %v3235, %v3107
        %v3268 = vmul.f32 %v3236, %v3108
        %v3269 = vmul.f32 %v3237, %v3109
        %v3270 = vmul.f32 %v3238, %v3110
        %v3271 = vmul.f32 %v3239, %v3111
        %v3272 = vmul.f32 %v3240, %v3112
        %v3273 = vmul.f32 %v3241, %v3113
        %v3274 = vmul.f32 %v3242, %v3114
        %v3275 = vmul.f32 %v3243, %v3115
        %v3276 = vmul.f32 %v3244, %v3116
        %v3277 = vmul.f32 %v3245, %v3117
        %v3278 = vmul.f32 %v3246, %v3118
        %v3279 = vmul.f32 %v3247, %v3119
        %v3280 = vmul.f32 %v3248, %v3120
        %v3281 = vmul.f32 %v3249, %v3121
        %v3282 = vmul.f32 %v3250, %v3122
        %v3283 = vmul.f32 %v3251, %v3123
        %v3284 = vmul.f32 %v3252, %v3124
        %v3285 = vmul.f32 %v3253, %v3125
        %v3286 = vmul.f32 %v3254, %v3126
        %v3287 = vmul.f32 %v3255, %v3127
        %v3288 = vmul.f32 %v3256, %v3128
        %v3289 = vmul.f32 %v3257, %v3129
        %v3290 = vmul.f32 %v3258, %v3130
        %v3291 = vmul.f32 %v3259, %v3131
        %v3292 = vmul.f32 %v3260, %v3132
        %v3293 = vmul.f32 %v3261, %v3133
        %v3294 = vadd.f32 %v3262, -0.28449672
        %v3295 = vadd.f32 %v3263, -0.28449672
        %v3296 = vadd.f32 %v3264, -0.28449672
        %v3297 = vadd.f32 %v3265, -0.28449672
        %v3298 = vadd.f32 %v3266, -0.28449672
        %v3299 = vadd.f32 %v3267, -0.28449672
        %v3300 = vadd.f32 %v3268, -0.28449672
        %v3301 = vadd.f32 %v3269, -0.28449672
        %v3302 = vadd.f32 %v3270, -0.28449672
        %v3303 = vadd.f32 %v3271, -0.28449672
        %v3304 = vadd.f32 %v3272, -0.28449672
        %v3305 = vadd.f32 %v3273, -0.28449672
        %v3306 = vadd.f32 %v3274, -0.28449672
        %v3307 = vadd.f32 %v3275, -0.28449672
        %v3308 = vadd.f32 %v3276, -0.28449672
        %v3309 = vadd.f32 %v3277, -0.28449672
        %v3310 = vadd.f32 %v3278, -0.28449672
        %v3311 = vadd.f32 %v3279, -0.28449672
        %v3312 = vadd.f32 %v3280, -0.28449672
        %v3313 = vadd.f32 %v3281, -0.28449672
        %v3314 = vadd.f32 %v3282, -0.28449672
        %v3315 = vadd.f32 %v3283, -0.28449672
        %v3316 = vadd.f32 %v3284, -0.28449672
        %v3317 = vadd.f32 %v3285, -0.28449672
        %v3318 = vadd.f32 %v3286, -0.28449672
        %v3319 = vadd.f32 %v3287, -0.28449672
        %v3320 = vadd.f32 %v3288, -0.28449672
        %v3321 = vadd.f32 %v3289, -0.28449672
        %v3322 = vadd.f32 %v3290, -0.28449672
        %v3323 = vadd.f32 %v3291, -0.28449672
        %v3324 = vadd.f32 %v3292, -0.28449672
        %v3325 = vadd.f32 %v3293, -0.28449672
        %v3326 = vmul.f32 %v3294, %v3102
        %v3327 = vmul.f32 %v3295, %v3103
        %v3328 = vmul.f32 %v3296, %v3104
        %v3329 = vmul.f32 %v3297, %v3105
        %v3330 = vmul.f32 %v3298, %v3106
        %v3331 = vmul.f32 %v3299, %v3107
        %v3332 = vmul.f32 %v3300, %v3108
        %v3333 = vmul.f32 %v3301, %v3109
        %v3334 = vmul.f32 %v3302, %v3110
        %v3335 = vmul.f32 %v3303, %v3111
        %v3336 = vmul.f32 %v3304, %v3112
        %v3337 = vmul.f32 %v3305, %v3113
        %v3338 = vmul.f32 %v3306, %v3114
        %v3339 = vmul.f32 %v3307, %v3115
        %v3340 = vmul.f32 %v3308, %v3116
        %v3341 = vmul.f32 %v3309, %v3117
        %v3342 = vmul.f32 %v3310, %v3118
        %v3343 = vmul.f32 %v3311, %v3119
        %v3344 = vmul.f32 %v3312, %v3120
        %v3345 = vmul.f32 %v3313, %v3121
        %v3346 = vmul.f32 %v3314, %v3122
        %v3347 = vmul.f32 %v3315, %v3123
        %v3348 = vmul.f32 %v3316, %v3124
        %v3349 = vmul.f32 %v3317, %v3125
        %v3350 = vmul.f32 %v3318, %v3126
        %v3351 = vmul.f32 %v3319, %v3127
        %v3352 = vmul.f32 %v3320, %v3128
        %v3353 = vmul.f32 %v3321, %v3129
        %v3354 = vmul.f32 %v3322, %v3130
        %v3355 = vmul.f32 %v3323, %v3131
        %v3356 = vmul.f32 %v3324, %v3132
        %v3357 = vmul.f32 %v3325, %v3133
        %v3358 = vadd.f32 %v3326, 0.2548296
        %v3359 = vadd.f32 %v3327, 0.2548296
        %v3360 = vadd.f32 %v3328, 0.2548296
        %v3361 = vadd.f32 %v3329, 0.2548296
        %v3362 = vadd.f32 %v3330, 0.2548296
        %v3363 = vadd.f32 %v3331, 0.2548296
        %v3364 = vadd.f32 %v3332, 0.2548296
        %v3365 = vadd.f32 %v3333, 0.2548296
        %v3366 = vadd.f32 %v3334, 0.2548296
        %v3367 = vadd.f32 %v3335, 0.2548296
        %v3368 = vadd.f32 %v3336, 0.2548296
        %v3369 = vadd.f32 %v3337, 0.2548296
        %v3370 = vadd.f32 %v3338, 0.2548296
        %v3371 = vadd.f32 %v3339, 0.2548296
        %v3372 = vadd.f32 %v3340, 0.2548296
        %v3373 = vadd.f32 %v3341, 0.2548296
        %v3374 = vadd.f32 %v3342, 0.2548296
        %v3375 = vadd.f32 %v3343, 0.2548296
        %v3376 = vadd.f32 %v3344, 0.2548296
        %v3377 = vadd.f32 %v3345, 0.2548296
        %v3378 = vadd.f32 %v3346, 0.2548296
        %v3379 = vadd.f32 %v3347, 0.2548296
        %v3380 = vadd.f32 %v3348, 0.2548296
        %v3381 = vadd.f32 %v3349, 0.2548296
        %v3382 = vadd.f32 %v3350, 0.2548296
        %v3383 = vadd.f32 %v3351, 0.2548296
        %v3384 = vadd.f32 %v3352, 0.2548296
        %v3385 = vadd.f32 %v3353, 0.2548296
        %v3386 = vadd.f32 %v3354, 0.2548296
        %v3387 = vadd.f32 %v3355, 0.2548296
        %v3388 = vadd.f32 %v3356, 0.2548296
        %v3389 = vadd.f32 %v3357, 0.2548296
        %v3390 = vmul.f32 %v3358, %v3102
        %v3391 = vmul.f32 %v3359, %v3103
        %v3392 = vmul.f32 %v3360, %v3104
        %v3393 = vmul.f32 %v3361, %v3105
        %v3394 = vmul.f32 %v3362, %v3106
        %v3395 = vmul.f32 %v3363, %v3107
        %v3396 = vmul.f32 %v3364, %v3108
        %v3397 = vmul.f32 %v3365, %v3109
        %v3398 = vmul.f32 %v3366, %v3110
        %v3399 = vmul.f32 %v3367, %v3111
        %v3400 = vmul.f32 %v3368, %v3112
        %v3401 = vmul.f32 %v3369, %v3113
        %v3402 = vmul.f32 %v3370, %v3114
        %v3403 = vmul.f32 %v3371, %v3115
        %v3404 = vmul.f32 %v3372, %v3116
        %v3405 = vmul.f32 %v3373, %v3117
        %v3406 = vmul.f32 %v3374, %v3118
        %v3407 = vmul.f32 %v3375, %v3119
        %v3408 = vmul.f32 %v3376, %v3120
        %v3409 = vmul.f32 %v3377, %v3121
        %v3410 = vmul.f32 %v3378, %v3122
        %v3411 = vmul.f32 %v3379, %v3123
        %v3412 = vmul.f32 %v3380, %v3124
        %v3413 = vmul.f32 %v3381, %v3125
        %v3414 = vmul.f32 %v3382, %v3126
        %v3415 = vmul.f32 %v3383, %v3127
        %v3416 = vmul.f32 %v3384, %v3128
        %v3417 = vmul.f32 %v3385, %v3129
        %v3418 = vmul.f32 %v3386, %v3130
        %v3419 = vmul.f32 %v3387, %v3131
        %v3420 = vmul.f32 %v3388, %v3132
        %v3421 = vmul.f32 %v3389, %v3133
        %v3422 = vsub.f32 0.0, %v3006
        %v3423 = vsub.f32 0.0, %v3007
        %v3424 = vsub.f32 0.0, %v3008
        %v3425 = vsub.f32 0.0, %v3009
        %v3426 = vsub.f32 0.0, %v3010
        %v3427 = vsub.f32 0.0, %v3011
        %v3428 = vsub.f32 0.0, %v3012
        %v3429 = vsub.f32 0.0, %v3013
        %v3430 = vsub.f32 0.0, %v3014
        %v3431 = vsub.f32 0.0, %v3015
        %v3432 = vsub.f32 0.0, %v3016
        %v3433 = vsub.f32 0.0, %v3017
        %v3434 = vsub.f32 0.0, %v3018
        %v3435 = vsub.f32 0.0, %v3019
        %v3436 = vsub.f32 0.0, %v3020
        %v3437 = vsub.f32 0.0, %v3021
        %v3438 = vsub.f32 0.0, %v3022
        %v3439 = vsub.f32 0.0, %v3023
        %v3440 = vsub.f32 0.0, %v3024
        %v3441 = vsub.f32 0.0, %v3025
        %v3442 = vsub.f32 0.0, %v3026
        %v3443 = vsub.f32 0.0, %v3027
        %v3444 = vsub.f32 0.0, %v3028
        %v3445 = vsub.f32 0.0, %v3029
        %v3446 = vsub.f32 0.0, %v3030
        %v3447 = vsub.f32 0.0, %v3031
        %v3448 = vsub.f32 0.0, %v3032
        %v3449 = vsub.f32 0.0, %v3033
        %v3450 = vsub.f32 0.0, %v3034
        %v3451 = vsub.f32 0.0, %v3035
        %v3452 = vsub.f32 0.0, %v3036
        %v3453 = vsub.f32 0.0, %v3037
        %v3454 = vmul.f32 %v3422, %v3006
        %v3455 = vmul.f32 %v3423, %v3007
        %v3456 = vmul.f32 %v3424, %v3008
        %v3457 = vmul.f32 %v3425, %v3009
        %v3458 = vmul.f32 %v3426, %v3010
        %v3459 = vmul.f32 %v3427, %v3011
        %v3460 = vmul.f32 %v3428, %v3012
        %v3461 = vmul.f32 %v3429, %v3013
        %v3462 = vmul.f32 %v3430, %v3014
        %v3463 = vmul.f32 %v3431, %v3015
        %v3464 = vmul.f32 %v3432, %v3016
        %v3465 = vmul.f32 %v3433, %v3017
        %v3466 = vmul.f32 %v3434, %v3018
        %v3467 = vmul.f32 %v3435, %v3019
        %v3468 = vmul.f32 %v3436, %v3020
        %v3469 = vmul.f32 %v3437, %v3021
        %v3470 = vmul.f32 %v3438, %v3022
        %v3471 = vmul.f32 %v3439, %v3023
        %v3472 = vmul.f32 %v3440, %v3024
        %v3473 = vmul.f32 %v3441, %v3025
        %v3474 = vmul.f32 %v3442, %v3026
        %v3475 = vmul.f32 %v3443, %v3027
        %v3476 = vmul.f32 %v3444, %v3028
        %v3477 = vmul.f32 %v3445, %v3029
        %v3478 = vmul.f32 %v3446, %v3030
        %v3479 = vmul.f32 %v3447, %v3031
        %v3480 = vmul.f32 %v3448, %v3032
        %v3481 = vmul.f32 %v3449, %v3033
        %v3482 = vmul.f32 %v3450, %v3034
        %v3483 = vmul.f32 %v3451, %v3035
        %v3484 = vmul.f32 %v3452, %v3036
        %v3485 = vmul.f32 %v3453, %v3037
        %v3486 = vmul.f32 %v3454, 1.442695
        %v3487 = vpow.pop %v3486
        %v3488 = vmul.f32 %v3455, 1.442695
        %v3489 = vpow.pop %v3488
        %v3490 = vmul.f32 %v3456, 1.442695
        %v3491 = vpow.pop %v3490
        %v3492 = vmul.f32 %v3457, 1.442695
        %v3493 = vpow.pop %v3492
        %v3494 = vmul.f32 %v3458, 1.442695
        %v3495 = vpow.pop %v3494
        %v3496 = vmul.f32 %v3459, 1.442695
        %v3497 = vpow.pop %v3496
        %v3498 = vmul.f32 %v3460, 1.442695
        %v3499 = vpow.pop %v3498
        %v3500 = vmul.f32 %v3461, 1.442695
        %v3501 = vpow.pop %v3500
        %v3502 = vmul.f32 %v3462, 1.442695
        %v3503 = vpow.pop %v3502
        %v3504 = vmul.f32 %v3463, 1.442695
        %v3505 = vpow.pop %v3504
        %v3506 = vmul.f32 %v3464, 1.442695
        %v3507 = vpow.pop %v3506
        %v3508 = vmul.f32 %v3465, 1.442695
        %v3509 = vpow.pop %v3508
        %v3510 = vmul.f32 %v3466, 1.442695
        %v3511 = vpow.pop %v3510
        %v3512 = vmul.f32 %v3467, 1.442695
        %v3513 = vpow.pop %v3512
        %v3514 = vmul.f32 %v3468, 1.442695
        %v3515 = vpow.pop %v3514
        %v3516 = vmul.f32 %v3469, 1.442695
        %v3517 = vpow.pop %v3516
        %v3518 = vmul.f32 %v3470, 1.442695
        %v3519 = vpow.pop %v3518
        %v3520 = vmul.f32 %v3471, 1.442695
        %v3521 = vpow.pop %v3520
        %v3522 = vmul.f32 %v3472, 1.442695
        %v3523 = vpow.pop %v3522
        %v3524 = vmul.f32 %v3473, 1.442695
        %v3525 = vpow.pop %v3524
        %v3526 = vmul.f32 %v3474, 1.442695
        %v3527 = vpow.pop %v3526
        %v3528 = vmul.f32 %v3475, 1.442695
        %v3529 = vpow.pop %v3528
        %v3530 = vmul.f32 %v3476, 1.442695
        %v3531 = vpow.pop %v3530
        %v3532 = vmul.f32 %v3477, 1.442695
        %v3533 = vpow.pop %v3532
        %v3534 = vmul.f32 %v3478, 1.442695
        %v3535 = vpow.pop %v3534
        %v3536 = vmul.f32 %v3479, 1.442695
        %v3537 = vpow.pop %v3536
        %v3538 = vmul.f32 %v3480, 1.442695
        %v3539 = vpow.pop %v3538
        %v3540 = vmul.f32 %v3481, 1.442695
        %v3541 = vpow.pop %v3540
        %v3542 = vmul.f32 %v3482, 1.442695
        %v3543 = vpow.pop %v3542
        %v3544 = vmul.f32 %v3483, 1.442695
        %v3545 = vpow.pop %v3544
        %v3546 = vmul.f32 %v3484, 1.442695
        %v3547 = vpow.pop %v3546
        %v3548 = vmul.f32 %v3485, 1.442695
        %v3549 = vpow.pop %v3548
        %v3550 = vmul.f32 %v3390, %v3487
        %v3551 = vmul.f32 %v3391, %v3489
        %v3552 = vmul.f32 %v3392, %v3491
        %v3553 = vmul.f32 %v3393, %v3493
        %v3554 = vmul.f32 %v3394, %v3495
        %v3555 = vmul.f32 %v3395, %v3497
        %v3556 = vmul.f32 %v3396, %v3499
        %v3557 = vmul.f32 %v3397, %v3501
        %v3558 = vmul.f32 %v3398, %v3503
        %v3559 = vmul.f32 %v3399, %v3505
        %v3560 = vmul.f32 %v3400, %v3507
        %v3561 = vmul.f32 %v3401, %v3509
        %v3562 = vmul.f32 %v3402, %v3511
        %v3563 = vmul.f32 %v3403, %v3513
        %v3564 = vmul.f32 %v3404, %v3515
        %v3565 = vmul.f32 %v3405, %v3517
        %v3566 = vmul.f32 %v3406, %v3519
        %v3567 = vmul.f32 %v3407, %v3521
        %v3568 = vmul.f32 %v3408, %v3523
        %v3569 = vmul.f32 %v3409, %v3525
        %v3570 = vmul.f32 %v3410, %v3527
        %v3571 = vmul.f32 %v3411, %v3529
        %v3572 = vmul.f32 %v3412, %v3531
        %v3573 = vmul.f32 %v3413, %v3533
        %v3574 = vmul.f32 %v3414, %v3535
        %v3575 = vmul.f32 %v3415, %v3537
        %v3576 = vmul.f32 %v3416, %v3539
        %v3577 = vmul.f32 %v3417, %v3541
        %v3578 = vmul.f32 %v3418, %v3543
        %v3579 = vmul.f32 %v3419, %v3545
        %v3580 = vmul.f32 %v3420, %v3547
        %v3581 = vmul.f32 %v3421, %v3549
        %v3582 = vsub.f32 1.0, %v3550
        %v3583 = vsub.f32 1.0, %v3551
        %v3584 = vsub.f32 1.0, %v3552
        %v3585 = vsub.f32 1.0, %v3553
        %v3586 = vsub.f32 1.0, %v3554
        %v3587 = vsub.f32 1.0, %v3555
        %v3588 = vsub.f32 1.0, %v3556
        %v3589 = vsub.f32 1.0, %v3557
        %v3590 = vsub.f32 1.0, %v3558
        %v3591 = vsub.f32 1.0, %v3559
        %v3592 = vsub.f32 1.0, %v3560
        %v3593 = vsub.f32 1.0, %v3561
        %v3594 = vsub.f32 1.0, %v3562
        %v3595 = vsub.f32 1.0, %v3563
        %v3596 = vsub.f32 1.0, %v3564
        %v3597 = vsub.f32 1.0, %v3565
        %v3598 = vsub.f32 1.0, %v3566
        %v3599 = vsub.f32 1.0, %v3567
        %v3600 = vsub.f32 1.0, %v3568
        %v3601 = vsub.f32 1.0, %v3569
        %v3602 = vsub.f32 1.0, %v3570
        %v3603 = vsub.f32 1.0, %v3571
        %v3604 = vsub.f32 1.0, %v3572
        %v3605 = vsub.f32 1.0, %v3573
        %v3606 = vsub.f32 1.0, %v3574
        %v3607 = vsub.f32 1.0, %v3575
        %v3608 = vsub.f32 1.0, %v3576
        %v3609 = vsub.f32 1.0, %v3577
        %v3610 = vsub.f32 1.0, %v3578
        %v3611 = vsub.f32 1.0, %v3579
        %v3612 = vsub.f32 1.0, %v3580
        %v3613 = vsub.f32 1.0, %v3581
        %vm3614 = vcmp.lt.f32.partialorder %v2974, 0.0
        %vm3615 = vcmp.lt.f32.partialorder %v2975, 0.0
        %vm3616 = vcmp.lt.f32.partialorder %v2976, 0.0
        %vm3617 = vcmp.lt.f32.partialorder %v2977, 0.0
        %vm3618 = vcmp.lt.f32.partialorder %v2978, 0.0
        %vm3619 = vcmp.lt.f32.partialorder %v2979, 0.0
        %vm3620 = vcmp.lt.f32.partialorder %v2980, 0.0
        %vm3621 = vcmp.lt.f32.partialorder %v2981, 0.0
        %vm3622 = vcmp.lt.f32.partialorder %v2982, 0.0
        %vm3623 = vcmp.lt.f32.partialorder %v2983, 0.0
        %vm3624 = vcmp.lt.f32.partialorder %v2984, 0.0
        %vm3625 = vcmp.lt.f32.partialorder %v2985, 0.0
        %vm3626 = vcmp.lt.f32.partialorder %v2986, 0.0
        %vm3627 = vcmp.lt.f32.partialorder %v2987, 0.0
        %vm3628 = vcmp.lt.f32.partialorder %v2988, 0.0
        %vm3629 = vcmp.lt.f32.partialorder %v2989, 0.0
        %vm3630 = vcmp.lt.f32.partialorder %v2990, 0.0
        %vm3631 = vcmp.lt.f32.partialorder %v2991, 0.0
        %vm3632 = vcmp.lt.f32.partialorder %v2992, 0.0
        %vm3633 = vcmp.lt.f32.partialorder %v2993, 0.0
        %vm3634 = vcmp.lt.f32.partialorder %v2994, 0.0
        %vm3635 = vcmp.lt.f32.partialorder %v2995, 0.0
        %vm3636 = vcmp.lt.f32.partialorder %v2996, 0.0
        %vm3637 = vcmp.lt.f32.partialorder %v2997, 0.0
        %vm3638 = vcmp.lt.f32.partialorder %v2998, 0.0
        %vm3639 = vcmp.lt.f32.partialorder %v2999, 0.0
        %vm3640 = vcmp.lt.f32.partialorder %v3000, 0.0
        %vm3641 = vcmp.lt.f32.partialorder %v3001, 0.0
        %vm3642 = vcmp.lt.f32.partialorder %v3002, 0.0
        %vm3643 = vcmp.lt.f32.partialorder %v3003, 0.0
        %vm3644 = vcmp.lt.f32.partialorder %v3004, 0.0
        %vm3645 = vcmp.lt.f32.partialorder %v3005, 0.0
        %v3646 = vsub.f32 0.0, %v3582
        %v3647 = vsub.f32 0.0, %v3583
        %v3648 = vsub.f32 0.0, %v3584
        %v3649 = vsub.f32 0.0, %v3585
        %v3650 = vsub.f32 0.0, %v3586
        %v3651 = vsub.f32 0.0, %v3587
        %v3652 = vsub.f32 0.0, %v3588
        %v3653 = vsub.f32 0.0, %v3589
        %v3654 = vsub.f32 0.0, %v3590
        %v3655 = vsub.f32 0.0, %v3591
        %v3656 = vsub.f32 0.0, %v3592
        %v3657 = vsub.f32 0.0, %v3593
        %v3658 = vsub.f32 0.0, %v3594
        %v3659 = vsub.f32 0.0, %v3595
        %v3660 = vsub.f32 0.0, %v3596
        %v3661 = vsub.f32 0.0, %v3597
        %v3662 = vsub.f32 0.0, %v3598
        %v3663 = vsub.f32 0.0, %v3599
        %v3664 = vsub.f32 0.0, %v3600
        %v3665 = vsub.f32 0.0, %v3601
        %v3666 = vsub.f32 0.0, %v3602
        %v3667 = vsub.f32 0.0, %v3603
        %v3668 = vsub.f32 0.0, %v3604
        %v3669 = vsub.f32 0.0, %v3605
        %v3670 = vsub.f32 0.0, %v3606
        %v3671 = vsub.f32 0.0, %v3607
        %v3672 = vsub.f32 0.0, %v3608
        %v3673 = vsub.f32 0.0, %v3609
        %v3674 = vsub.f32 0.0, %v3610
        %v3675 = vsub.f32 0.0, %v3611
        %v3676 = vsub.f32 0.0, %v3612
        %v3677 = vsub.f32 0.0, %v3613
        %v3678 = vsel %vm3614, %v3646, %v3582
        %v3679 = vsel %vm3615, %v3647, %v3583
        %v3680 = vsel %vm3616, %v3648, %v3584
        %v3681 = vsel %vm3617, %v3649, %v3585
        %v3682 = vsel %vm3618, %v3650, %v3586
        %v3683 = vsel %vm3619, %v3651, %v3587
        %v3684 = vsel %vm3620, %v3652, %v3588
        %v3685 = vsel %vm3621, %v3653, %v3589
        %v3686 = vsel %vm3622, %v3654, %v3590
        %v3687 = vsel %vm3623, %v3655, %v3591
        %v3688 = vsel %vm3624, %v3656, %v3592
        %v3689 = vsel %vm3625, %v3657, %v3593
        %v3690 = vsel %vm3626, %v3658, %v3594
        %v3691 = vsel %vm3627, %v3659, %v3595
        %v3692 = vsel %vm3628, %v3660, %v3596
        %v3693 = vsel %vm3629, %v3661, %v3597
        %v3694 = vsel %vm3630, %v3662, %v3598
        %v3695 = vsel %vm3631, %v3663, %v3599
        %v3696 = vsel %vm3632, %v3664, %v3600
        %v3697 = vsel %vm3633, %v3665, %v3601
        %v3698 = vsel %vm3634, %v3666, %v3602
        %v3699 = vsel %vm3635, %v3667, %v3603
        %v3700 = vsel %vm3636, %v3668, %v3604
        %v3701 = vsel %vm3637, %v3669, %v3605
        %v3702 = vsel %vm3638, %v3670, %v3606
        %v3703 = vsel %vm3639, %v3671, %v3607
        %v3704 = vsel %vm3640, %v3672, %v3608
        %v3705 = vsel %vm3641, %v3673, %v3609
        %v3706 = vsel %vm3642, %v3674, %v3610
        %v3707 = vsel %vm3643, %v3675, %v3611
        %v3708 = vsel %vm3644, %v3676, %v3612
        %v3709 = vsel %vm3645, %v3677, %v3613
        %v3710 = vadd.f32 %v3678, 1.0
        %v3711 = vadd.f32 %v3679, 1.0
        %v3712 = vadd.f32 %v3680, 1.0
        %v3713 = vadd.f32 %v3681, 1.0
        %v3714 = vadd.f32 %v3682, 1.0
        %v3715 = vadd.f32 %v3683, 1.0
        %v3716 = vadd.f32 %v3684, 1.0
        %v3717 = vadd.f32 %v3685, 1.0
        %v3718 = vadd.f32 %v3686, 1.0
        %v3719 = vadd.f32 %v3687, 1.0
        %v3720 = vadd.f32 %v3688, 1.0
        %v3721 = vadd.f32 %v3689, 1.0
        %v3722 = vadd.f32 %v3690, 1.0
        %v3723 = vadd.f32 %v3691, 1.0
        %v3724 = vadd.f32 %v3692, 1.0
        %v3725 = vadd.f32 %v3693, 1.0
        %v3726 = vadd.f32 %v3694, 1.0
        %v3727 = vadd.f32 %v3695, 1.0
        %v3728 = vadd.f32 %v3696, 1.0
        %v3729 = vadd.f32 %v3697, 1.0
        %v3730 = vadd.f32 %v3698, 1.0
        %v3731 = vadd.f32 %v3699, 1.0
        %v3732 = vadd.f32 %v3700, 1.0
        %v3733 = vadd.f32 %v3701, 1.0
        %v3734 = vadd.f32 %v3702, 1.0
        %v3735 = vadd.f32 %v3703, 1.0
        %v3736 = vadd.f32 %v3704, 1.0
        %v3737 = vadd.f32 %v3705, 1.0
        %v3738 = vadd.f32 %v3706, 1.0
        %v3739 = vadd.f32 %v3707, 1.0
        %v3740 = vadd.f32 %v3708, 1.0
        %v3741 = vadd.f32 %v3709, 1.0
        %v3742 = vmul.f32 %v2942, %v3710
        %v3743 = vmul.f32 %v2943, %v3711
        %v3744 = vmul.f32 %v2944, %v3712
        %v3745 = vmul.f32 %v2945, %v3713
        %v3746 = vmul.f32 %v2946, %v3714
        %v3747 = vmul.f32 %v2947, %v3715
        %v3748 = vmul.f32 %v2948, %v3716
        %v3749 = vmul.f32 %v2949, %v3717
        %v3750 = vmul.f32 %v2950, %v3718
        %v3751 = vmul.f32 %v2951, %v3719
        %v3752 = vmul.f32 %v2952, %v3720
        %v3753 = vmul.f32 %v2953, %v3721
        %v3754 = vmul.f32 %v2954, %v3722
        %v3755 = vmul.f32 %v2955, %v3723
        %v3756 = vmul.f32 %v2956, %v3724
        %v3757 = vmul.f32 %v2957, %v3725
        %v3758 = vmul.f32 %v2958, %v3726
        %v3759 = vmul.f32 %v2959, %v3727
        %v3760 = vmul.f32 %v2960, %v3728
        %v3761 = vmul.f32 %v2961, %v3729
        %v3762 = vmul.f32 %v2962, %v3730
        %v3763 = vmul.f32 %v2963, %v3731
        %v3764 = vmul.f32 %v2964, %v3732
        %v3765 = vmul.f32 %v2965, %v3733
        %v3766 = vmul.f32 %v2966, %v3734
        %v3767 = vmul.f32 %v2967, %v3735
        %v3768 = vmul.f32 %v2968, %v3736
        %v3769 = vmul.f32 %v2969, %v3737
        %v3770 = vmul.f32 %v2970, %v3738
        %v3771 = vmul.f32 %v2971, %v3739
        %v3772 = vmul.f32 %v2972, %v3740
        %v3773 = vmul.f32 %v2973, %v3741
        %s3774 = scalar_lea.vmem [#allocation7], 64
        %v3775 = vld [vmem:[%s3774] sm:$0xf]
        %v3776 = vld [vmem:[%s3774 + $0x4] sm:$0xf]
        %v3777 = vld [vmem:[%s3774 + $0x8] sm:$0xf]
        %v3778 = vld [vmem:[%s3774 + $0xc] sm:$0xf]
        %v3779 = vld [vmem:[%s3774 + $0x10] sm:$0xf]
        %v3780 = vld [vmem:[%s3774 + $0x14] sm:$0xf]
        %v3781 = vld [vmem:[%s3774 + $0x18] sm:$0xf]
        %v3782 = vld [vmem:[%s3774 + $0x1c] sm:$0xf]
        %v3783 = vld [vmem:[%s3774 + $0x20] sm:$0xf]
        %v3784 = vld [vmem:[%s3774 + $0x24] sm:$0xf]
        %v3785 = vld [vmem:[%s3774 + $0x28] sm:$0xf]
        %v3786 = vld [vmem:[%s3774 + $0x2c] sm:$0xf]
        %v3787 = vld [vmem:[%s3774 + $0x30] sm:$0xf]
        %v3788 = vld [vmem:[%s3774 + $0x34] sm:$0xf]
        %v3789 = vld [vmem:[%s3774 + $0x38] sm:$0xf]
        %v3790 = vld [vmem:[%s3774 + $0x3c] sm:$0xf]
        %v3807 = vunpack.c.l.b16 %v3775
        %v3808 = vunpack.c.l.b16 %v3776
        %v3809 = vunpack.c.l.b16 %v3777
        %v3810 = vunpack.c.l.b16 %v3778
        %v3811 = vunpack.c.l.b16 %v3779
        %v3812 = vunpack.c.l.b16 %v3780
        %v3813 = vunpack.c.l.b16 %v3781
        %v3814 = vunpack.c.l.b16 %v3782
        %v3815 = vunpack.c.l.b16 %v3783
        %v3816 = vunpack.c.l.b16 %v3784
        %v3817 = vunpack.c.l.b16 %v3785
        %v3818 = vunpack.c.l.b16 %v3786
        %v3819 = vunpack.c.l.b16 %v3787
        %v3820 = vunpack.c.l.b16 %v3788
        %v3821 = vunpack.c.l.b16 %v3789
        %v3822 = vunpack.c.l.b16 %v3790
        %v3823 = vpack.c.b16 %v3808, %v3807
        %v3824 = vpack.c.b16 %v3810, %v3809
        %v3825 = vpack.c.b16 %v3812, %v3811
        %v3826 = vpack.c.b16 %v3814, %v3813
        %v3827 = vpack.c.b16 %v3816, %v3815
        %v3828 = vpack.c.b16 %v3818, %v3817
        %v3829 = vpack.c.b16 %v3820, %v3819
        %v3830 = vpack.c.b16 %v3822, %v3821
        %v3832 = vsel %vm452, %v3823, 0
        %v3835 = vsel %vm452, %v3824, 0
        %v3838 = vsel %vm452, %v3825, 0
        %v3841 = vsel %vm452, %v3826, 0
        %v3844 = vsel %vm452, %v3827, 0
        %v3847 = vsel %vm452, %v3828, 0
        %v3850 = vsel %vm452, %v3829, 0
        %v3853 = vsel %vm452, %v3830, 0
        %3855 = vmatprep.subr.bf16.mxu0 %v392
        %3856 = vmatpush1.bf16.msra.mxu0 %v391
        %3857 = vmatprep.subr.bf16.mxu0 %v394
        %3858 = vmatpush1.bf16.msra.mxu0 %v393
        %3859 = vmatprep.subr.bf16.mxu0 0
        %3860 = vmatpush1.bf16.msra.mxu0 0
        %3861 = vmatprep.subr.bf16.mxu0 0
        %3862 = vmatpush1.bf16.msra.mxu0 0
        %3863 = vmatprep.subr.bf16.mxu0 0
        %3864 = vmatpush1.bf16.msra.mxu0 0
        %3865 = vmatprep.subr.bf16.mxu0 0
        %3866 = vmatpush1.bf16.msra.mxu0 0
        %3867 = vmatprep.subr.bf16.mxu0 0
        %3868 = vmatpush1.bf16.msra.mxu0 0
        %3869 = vmatprep.subr.bf16.mxu0 0
        %3870 = vmatpush1.bf16.msra.mxu0 0
        %3871 = vmatprep.subr.bf16.mxu0 0
        %3872 = vmatpush1.bf16.msra.mxu0 0
        %3873 = vmatprep.subr.bf16.mxu0 0
        %3874 = vmatpush1.bf16.msra.mxu0 0
        %3875 = vmatprep.subr.bf16.mxu0 0
        %3876 = vmatpush1.bf16.msra.mxu0 0
        %3877 = vmatprep.subr.bf16.mxu0 0
        %3878 = vmatpush1.bf16.msra.mxu0 0
        %3879 = vmatprep.subr.bf16.mxu0 0
        %3880 = vmatpush1.bf16.msra.mxu0 0
        %3881 = vmatprep.subr.bf16.mxu0 0
        %3882 = vmatpush1.bf16.msra.mxu0 0
        %3883 = vmatprep.subr.bf16.mxu0 0
        %3884 = vmatpush1.bf16.msra.mxu0 0
        %3885 = vmatprep.subr.bf16.mxu0 0
        %3886 = vmatpush1.bf16.msra.mxu0 0
        %3887 = vmatprep.mubr.bf16.mxu0 0
        %3888 = vmatmul.mubr.bf16.gmra.mrb[0].mxu0 %v3832
        %v3889 = vpop.f32.mrb[0].mxu0
        %v3890 = vadd.f32 0.0, %v3889
        %v3891 = vpop.f32.mrb[0].mxu0
        %v3892 = vadd.f32 0.0, %v3891
        %v3893 = vpop.f32.mrb[0].mxu0
        %v3894 = vadd.f32 0.0, %v3893
        %v3895 = vpop.f32.mrb[0].mxu0
        %v3896 = vadd.f32 0.0, %v3895
        %3897 = vmatprep.mubr.bf16.mxu0 0
        %3898 = vmatmul.mubr.bf16.gmra.mrb[0].mxu0 %v3835
        %v3899 = vpop.f32.mrb[0].mxu0
        %v3900 = vadd.f32 0.0, %v3899
        %v3901 = vpop.f32.mrb[0].mxu0
        %v3902 = vadd.f32 0.0, %v3901
        %v3903 = vpop.f32.mrb[0].mxu0
        %v3904 = vadd.f32 0.0, %v3903
        %v3905 = vpop.f32.mrb[0].mxu0
        %v3906 = vadd.f32 0.0, %v3905
        %3907 = vmatprep.mubr.bf16.mxu0 0
        %3908 = vmatmul.mubr.bf16.gmra.mrb[0].mxu0 %v3838
        %v3909 = vpop.f32.mrb[0].mxu0
        %v3910 = vadd.f32 0.0, %v3909
        %v3911 = vpop.f32.mrb[0].mxu0
        %v3912 = vadd.f32 0.0, %v3911
        %v3913 = vpop.f32.mrb[0].mxu0
        %v3914 = vadd.f32 0.0, %v3913
        %v3915 = vpop.f32.mrb[0].mxu0
        %v3916 = vadd.f32 0.0, %v3915
        %3917 = vmatprep.mubr.bf16.mxu0 0
        %3918 = vmatmul.mubr.bf16.gmra.mrb[0].mxu0 %v3841
        %v3919 = vpop.f32.mrb[0].mxu0
        %v3920 = vadd.f32 0.0, %v3919
        %v3921 = vpop.f32.mrb[0].mxu0
        %v3922 = vadd.f32 0.0, %v3921
        %v3923 = vpop.f32.mrb[0].mxu0
        %v3924 = vadd.f32 0.0, %v3923
        %v3925 = vpop.f32.mrb[0].mxu0
        %v3926 = vadd.f32 0.0, %v3925
        %3927 = vmatprep.mubr.bf16.mxu0 0
        %3928 = vmatmul.mubr.bf16.gmra.mrb[0].mxu0 %v3844
        %v3929 = vpop.f32.mrb[0].mxu0
        %v3930 = vadd.f32 0.0, %v3929
        %v3931 = vpop.f32.mrb[0].mxu0
        %v3932 = vadd.f32 0.0, %v3931
        %v3933 = vpop.f32.mrb[0].mxu0
        %v3934 = vadd.f32 0.0, %v3933
        %v3935 = vpop.f32.mrb[0].mxu0
        %v3936 = vadd.f32 0.0, %v3935
        %3937 = vmatprep.mubr.bf16.mxu0 0
        %3938 = vmatmul.mubr.bf16.gmra.mrb[0].mxu0 %v3847
        %v3939 = vpop.f32.mrb[0].mxu0
        %v3940 = vadd.f32 0.0, %v3939
        %v3941 = vpop.f32.mrb[0].mxu0
        %v3942 = vadd.f32 0.0, %v3941
        %v3943 = vpop.f32.mrb[0].mxu0
        %v3944 = vadd.f32 0.0, %v3943
        %v3945 = vpop.f32.mrb[0].mxu0
        %v3946 = vadd.f32 0.0, %v3945
        %3947 = vmatprep.mubr.bf16.mxu0 0
        %3948 = vmatmul.mubr.bf16.gmra.mrb[0].mxu0 %v3850
        %v3949 = vpop.f32.mrb[0].mxu0
        %v3950 = vadd.f32 0.0, %v3949
        %v3951 = vpop.f32.mrb[0].mxu0
        %v3952 = vadd.f32 0.0, %v3951
        %v3953 = vpop.f32.mrb[0].mxu0
        %v3954 = vadd.f32 0.0, %v3953
        %v3955 = vpop.f32.mrb[0].mxu0
        %v3956 = vadd.f32 0.0, %v3955
        %3957 = vmatprep.mubr.bf16.mxu0 0
        %3958 = vmatmul.mubr.bf16.gmra.mrb[0].mxu0 %v3853
        %v3959 = vpop.f32.mrb[0].mxu0
        %v3960 = vadd.f32 0.0, %v3959
        %v3961 = vpop.f32.mrb[0].mxu0
        %v3962 = vadd.f32 0.0, %v3961
        %v3963 = vpop.f32.mrb[0].mxu0
        %v3964 = vadd.f32 0.0, %v3963
        %v3965 = vpop.f32.mrb[0].mxu0
        %v3966 = vadd.f32 0.0, %v3965
        %3967 = vdwg.mxu0
        %v3968 = vld [vmem:[#allocation10] sm:$0xff]
        %v3969 = vld [vmem:[#allocation10 + $0x8] sm:$0xff]
        %v3970 = vld [vmem:[#allocation10 + $0x10] sm:$0xff]
        %v3971 = vld [vmem:[#allocation10 + $0x18] sm:$0xff]
        %v3972 = vld [vmem:[#allocation10 + $0x20] sm:$0xff]
        %v3973 = vld [vmem:[#allocation10 + $0x28] sm:$0xff]
        %v3974 = vld [vmem:[#allocation10 + $0x30] sm:$0xff]
        %v3975 = vld [vmem:[#allocation10 + $0x38] sm:$0xff]
        %v3976 = vld [vmem:[#allocation10 + $0x40] sm:$0xff]
        %v3977 = vld [vmem:[#allocation10 + $0x48] sm:$0xff]
        %v3978 = vld [vmem:[#allocation10 + $0x50] sm:$0xff]
        %v3979 = vld [vmem:[#allocation10 + $0x58] sm:$0xff]
        %v3980 = vld [vmem:[#allocation10 + $0x60] sm:$0xff]
        %v3981 = vld [vmem:[#allocation10 + $0x68] sm:$0xff]
        %v3982 = vld [vmem:[#allocation10 + $0x70] sm:$0xff]
        %v3983 = vld [vmem:[#allocation10 + $0x78] sm:$0xff]
        %3984 = vrot.lane.b32.xlu0 %v3890, 34
        %v3985 = vpop.permute.xlu0 %3984
        %3986 = vrot.lane.b32.xlu0 %v3894, 34
        %v3987 = vpop.permute.xlu0 %3986
        %3988 = vrot.lane.b32.xlu0 %v3900, 34
        %v3989 = vpop.permute.xlu0 %3988
        %3990 = vrot.lane.b32.xlu0 %v3904, 34
        %v3991 = vpop.permute.xlu0 %3990
        %3992 = vrot.lane.b32.xlu0 %v3910, 34
        %v3993 = vpop.permute.xlu0 %3992
        %3994 = vrot.lane.b32.xlu0 %v3914, 34
        %v3995 = vpop.permute.xlu0 %3994
        %3996 = vrot.lane.b32.xlu0 %v3920, 34
        %v3997 = vpop.permute.xlu0 %3996
        %3998 = vrot.lane.b32.xlu0 %v3924, 34
        %v3999 = vpop.permute.xlu0 %3998
        %4000 = vrot.lane.b32.xlu0 %v3930, 34
        %v4001 = vpop.permute.xlu0 %4000
        %4002 = vrot.lane.b32.xlu0 %v3934, 34
        %v4003 = vpop.permute.xlu0 %4002
        %4004 = vrot.lane.b32.xlu0 %v3940, 34
        %v4005 = vpop.permute.xlu0 %4004
        %4006 = vrot.lane.b32.xlu0 %v3944, 34
        %v4007 = vpop.permute.xlu0 %4006
        %4008 = vrot.lane.b32.xlu0 %v3950, 34
        %v4009 = vpop.permute.xlu0 %4008
        %4010 = vrot.lane.b32.xlu0 %v3954, 34
        %v4011 = vpop.permute.xlu0 %4010
        %4012 = vrot.lane.b32.xlu0 %v3960, 34
        %v4013 = vpop.permute.xlu0 %4012
        %4014 = vrot.lane.b32.xlu0 %v3964, 34
        %v4015 = vpop.permute.xlu0 %4014
        %4016 = vrot.lane.b32.xlu0 %v3892, 34
        %v4017 = vpop.permute.xlu0 %4016
        %4018 = vrot.lane.b32.xlu0 %v3896, 34
        %v4019 = vpop.permute.xlu0 %4018
        %4020 = vrot.lane.b32.xlu0 %v3902, 34
        %v4021 = vpop.permute.xlu0 %4020
        %4022 = vrot.lane.b32.xlu0 %v3906, 34
        %v4023 = vpop.permute.xlu0 %4022
        %4024 = vrot.lane.b32.xlu0 %v3912, 34
        %v4025 = vpop.permute.xlu0 %4024
        %4026 = vrot.lane.b32.xlu0 %v3916, 34
        %v4027 = vpop.permute.xlu0 %4026
        %4028 = vrot.lane.b32.xlu0 %v3922, 34
        %v4029 = vpop.permute.xlu0 %4028
        %4030 = vrot.lane.b32.xlu0 %v3926, 34
        %v4031 = vpop.permute.xlu0 %4030
        %4032 = vrot.lane.b32.xlu0 %v3932, 34
        %v4033 = vpop.permute.xlu0 %4032
        %4034 = vrot.lane.b32.xlu0 %v3936, 34
        %v4035 = vpop.permute.xlu0 %4034
        %4036 = vrot.lane.b32.xlu0 %v3942, 34
        %v4037 = vpop.permute.xlu0 %4036
        %4038 = vrot.lane.b32.xlu0 %v3946, 34
        %v4039 = vpop.permute.xlu0 %4038
        %4040 = vrot.lane.b32.xlu0 %v3952, 34
        %v4041 = vpop.permute.xlu0 %4040
        %4042 = vrot.lane.b32.xlu0 %v3956, 34
        %v4043 = vpop.permute.xlu0 %4042
        %4044 = vrot.lane.b32.xlu0 %v3962, 34
        %v4045 = vpop.permute.xlu0 %4044
        %4046 = vrot.lane.b32.xlu0 %v3966, 34
        %v4047 = vpop.permute.xlu0 %4046
        %vm4048 = vcmp.lt.s32.totalorder %v671, 34
        %v4049 = vsel %vm4048, %v3985, %v4017
        %v4050 = vsel %vm4048, %v3987, %v4019
        %v4051 = vsel %vm4048, %v3989, %v4021
        %v4052 = vsel %vm4048, %v3991, %v4023
        %v4053 = vsel %vm4048, %v3993, %v4025
        %v4054 = vsel %vm4048, %v3995, %v4027
        %v4055 = vsel %vm4048, %v3997, %v4029
        %v4056 = vsel %vm4048, %v3999, %v4031
        %v4057 = vsel %vm4048, %v4001, %v4033
        %v4058 = vsel %vm4048, %v4003, %v4035
        %v4059 = vsel %vm4048, %v4005, %v4037
        %v4060 = vsel %vm4048, %v4007, %v4039
        %v4061 = vsel %vm4048, %v4009, %v4041
        %v4062 = vsel %vm4048, %v4011, %v4043
        %v4063 = vsel %vm4048, %v4013, %v4045
        %v4064 = vsel %vm4048, %v4015, %v4047
        %v4065 = vsel %vm4048, %v4017, %v3985
        %v4066 = vsel %vm4048, %v4019, %v3987
        %v4067 = vsel %vm4048, %v4021, %v3989
        %v4068 = vsel %vm4048, %v4023, %v3991
        %v4069 = vsel %vm4048, %v4025, %v3993
        %v4070 = vsel %vm4048, %v4027, %v3995
        %v4071 = vsel %vm4048, %v4029, %v3997
        %v4072 = vsel %vm4048, %v4031, %v3999
        %v4073 = vsel %vm4048, %v4033, %v4001
        %v4074 = vsel %vm4048, %v4035, %v4003
        %v4075 = vsel %vm4048, %v4037, %v4005
        %v4076 = vsel %vm4048, %v4039, %v4007
        %v4077 = vsel %vm4048, %v4041, %v4009
        %v4078 = vsel %vm4048, %v4043, %v4011
        %v4079 = vsel %vm4048, %v4045, %v4013
        %v4080 = vsel %vm4048, %v4047, %v4015
        %vm4081 = vcmp.ge.s32.totalorder %v395, 32
        %vm4082 = vcmp.ge.s32.totalorder %v395, 2
        %v4083 = vsel %vm4082, 1, 0
        %v4084 = vrot.slane %v4083, 7
        %v4085 = vrot.slane %v4084, 2
        %vm4086 = vcmp.ne.s32.totalorder %v4085, 0
        %vm4087 = vmand %vm4081, %vm4086
        %v4088 = vsel %vm4087, 1, 0
        %v4089 = vlaneseq
        %v4090 = vshrl.u32 %v4089, 7
        %v4091 = vsub.s32 0, %v4090
        %v4092 = vrot.slane %v4088, %v4091
        %v4093 = vlaneseq
        %v4094 = vshrl.u32 %v4093, 7
        %v4095 = vsub.s32 2, %v4094
        %v4096 = vrot.slane %v4088, %v4095
        %v4097 = vlaneseq
        %v4098 = vshrl.u32 %v4097, 7
        %v4099 = vsub.s32 0, %v4098
        %v4100 = vrot.slane %v4092, %v4099
        %v4101 = vlaneseq
        %v4102 = vshrl.u32 %v4101, 7
        %v4103 = vsub.s32 0, %v4102
        %v4104 = vrot.slane %v4096, %v4103
        %vm4105 = vcmp.eq.s32.totalorder %v4100, 1
        %vm4106 = vcmp.eq.s32.totalorder %v4104, 1
        %v4107 = vsel %vm4105, %v4065, 0.0
        %v4108 = vsel %vm4106, %v4049, 0.0
        %v4109 = vsel %vm4105, %v4066, 0.0
        %v4110 = vsel %vm4106, %v4050, 0.0
        %v4111 = vsel %vm4105, %v4067, 0.0
        %v4112 = vsel %vm4106, %v4051, 0.0
        %v4113 = vsel %vm4105, %v4068, 0.0
        %v4114 = vsel %vm4106, %v4052, 0.0
        %v4115 = vsel %vm4105, %v4069, 0.0
        %v4116 = vsel %vm4106, %v4053, 0.0
        %v4117 = vsel %vm4105, %v4070, 0.0
        %v4118 = vsel %vm4106, %v4054, 0.0
        %v4119 = vsel %vm4105, %v4071, 0.0
        %v4120 = vsel %vm4106, %v4055, 0.0
        %v4121 = vsel %vm4105, %v4072, 0.0
        %v4122 = vsel %vm4106, %v4056, 0.0
        %v4123 = vsel %vm4105, %v4073, 0.0
        %v4124 = vsel %vm4106, %v4057, 0.0
        %v4125 = vsel %vm4105, %v4074, 0.0
        %v4126 = vsel %vm4106, %v4058, 0.0
        %v4127 = vsel %vm4105, %v4075, 0.0
        %v4128 = vsel %vm4106, %v4059, 0.0
        %v4129 = vsel %vm4105, %v4076, 0.0
        %v4130 = vsel %vm4106, %v4060, 0.0
        %v4131 = vsel %vm4105, %v4077, 0.0
        %v4132 = vsel %vm4106, %v4061, 0.0
        %v4133 = vsel %vm4105, %v4078, 0.0
        %v4134 = vsel %vm4106, %v4062, 0.0
        %v4135 = vsel %vm4105, %v4079, 0.0
        %v4136 = vsel %vm4106, %v4063, 0.0
        %v4137 = vsel %vm4105, %v4080, 0.0
        %v4138 = vsel %vm4106, %v4064, 0.0
        %4140 = vset.pattern.permute.xlu0 0
        %4141 = vperm.xlu0 %4140, %v3968
        %v4142 = vpop.permute.xlu0 %4141
        %4145 = vset.pattern.permute.xlu0 0
        %4146 = vperm.xlu0 %4145, %v3969
        %v4147 = vpop.permute.xlu0 %4146
        %4150 = vset.pattern.permute.xlu0 0
        %4151 = vperm.xlu0 %4150, %v3970
        %v4152 = vpop.permute.xlu0 %4151
        %4155 = vset.pattern.permute.xlu0 0
        %4156 = vperm.xlu0 %4155, %v3971
        %v4157 = vpop.permute.xlu0 %4156
        %4160 = vset.pattern.permute.xlu0 0
        %4161 = vperm.xlu0 %4160, %v3972
        %v4162 = vpop.permute.xlu0 %4161
        %4165 = vset.pattern.permute.xlu0 0
        %4166 = vperm.xlu0 %4165, %v3973
        %v4167 = vpop.permute.xlu0 %4166
        %4170 = vset.pattern.permute.xlu0 0
        %4171 = vperm.xlu0 %4170, %v3974
        %v4172 = vpop.permute.xlu0 %4171
        %4175 = vset.pattern.permute.xlu0 0
        %4176 = vperm.xlu0 %4175, %v3975
        %v4177 = vpop.permute.xlu0 %4176
        %4180 = vset.pattern.permute.xlu0 0
        %4181 = vperm.xlu0 %4180, %v3976
        %v4182 = vpop.permute.xlu0 %4181
        %4185 = vset.pattern.permute.xlu0 0
        %4186 = vperm.xlu0 %4185, %v3977
        %v4187 = vpop.permute.xlu0 %4186
        %4190 = vset.pattern.permute.xlu0 0
        %4191 = vperm.xlu0 %4190, %v3978
        %v4192 = vpop.permute.xlu0 %4191
        %4195 = vset.pattern.permute.xlu0 0
        %4196 = vperm.xlu0 %4195, %v3979
        %v4197 = vpop.permute.xlu0 %4196
        %4200 = vset.pattern.permute.xlu0 0
        %4201 = vperm.xlu0 %4200, %v3980
        %v4202 = vpop.permute.xlu0 %4201
        %4205 = vset.pattern.permute.xlu0 0
        %4206 = vperm.xlu0 %4205, %v3981
        %v4207 = vpop.permute.xlu0 %4206
        %4210 = vset.pattern.permute.xlu0 0
        %4211 = vperm.xlu0 %4210, %v3982
        %v4212 = vpop.permute.xlu0 %4211
        %4215 = vset.pattern.permute.xlu0 0
        %4216 = vperm.xlu0 %4215, %v3983
        %v4217 = vpop.permute.xlu0 %4216
        %v4219 = vmul.f32 %v4107, %v4142
        %v4220 = vmul.f32 %v4108, %v4142
        %v4221 = vmul.f32 %v4109, %v4147
        %v4222 = vmul.f32 %v4110, %v4147
        %v4223 = vmul.f32 %v4111, %v4152
        %v4224 = vmul.f32 %v4112, %v4152
        %v4225 = vmul.f32 %v4113, %v4157
        %v4226 = vmul.f32 %v4114, %v4157
        %v4227 = vmul.f32 %v4115, %v4162
        %v4228 = vmul.f32 %v4116, %v4162
        %v4229 = vmul.f32 %v4117, %v4167
        %v4230 = vmul.f32 %v4118, %v4167
        %v4231 = vmul.f32 %v4119, %v4172
        %v4232 = vmul.f32 %v4120, %v4172
        %v4233 = vmul.f32 %v4121, %v4177
        %v4234 = vmul.f32 %v4122, %v4177
        %v4235 = vmul.f32 %v4123, %v4182
        %v4236 = vmul.f32 %v4124, %v4182
        %v4237 = vmul.f32 %v4125, %v4187
        %v4238 = vmul.f32 %v4126, %v4187
        %v4239 = vmul.f32 %v4127, %v4192
        %v4240 = vmul.f32 %v4128, %v4192
        %v4241 = vmul.f32 %v4129, %v4197
        %v4242 = vmul.f32 %v4130, %v4197
        %v4243 = vmul.f32 %v4131, %v4202
        %v4244 = vmul.f32 %v4132, %v4202
        %v4245 = vmul.f32 %v4133, %v4207
        %v4246 = vmul.f32 %v4134, %v4207
        %v4247 = vmul.f32 %v4135, %v4212
        %v4248 = vmul.f32 %v4136, %v4212
        %v4249 = vmul.f32 %v4137, %v4217
        %v4250 = vmul.f32 %v4138, %v4217
        %4251 = vrot.lane.b32.xlu0 %v3890, 32
        %v4252 = vpop.permute.xlu0 %4251
        %4253 = vrot.lane.b32.xlu0 %v3894, 32
        %v4254 = vpop.permute.xlu0 %4253
        %4255 = vrot.lane.b32.xlu0 %v3900, 32
        %v4256 = vpop.permute.xlu0 %4255
        %4257 = vrot.lane.b32.xlu0 %v3904, 32
        %v4258 = vpop.permute.xlu0 %4257
        %4259 = vrot.lane.b32.xlu0 %v3910, 32
        %v4260 = vpop.permute.xlu0 %4259
        %4261 = vrot.lane.b32.xlu0 %v3914, 32
        %v4262 = vpop.permute.xlu0 %4261
        %4263 = vrot.lane.b32.xlu0 %v3920, 32
        %v4264 = vpop.permute.xlu0 %4263
        %4265 = vrot.lane.b32.xlu0 %v3924, 32
        %v4266 = vpop.permute.xlu0 %4265
        %4267 = vrot.lane.b32.xlu0 %v3930, 32
        %v4268 = vpop.permute.xlu0 %4267
        %4269 = vrot.lane.b32.xlu0 %v3934, 32
        %v4270 = vpop.permute.xlu0 %4269
        %4271 = vrot.lane.b32.xlu0 %v3940, 32
        %v4272 = vpop.permute.xlu0 %4271
        %4273 = vrot.lane.b32.xlu0 %v3944, 32
        %v4274 = vpop.permute.xlu0 %4273
        %4275 = vrot.lane.b32.xlu0 %v3950, 32
        %v4276 = vpop.permute.xlu0 %4275
        %4277 = vrot.lane.b32.xlu0 %v3954, 32
        %v4278 = vpop.permute.xlu0 %4277
        %4279 = vrot.lane.b32.xlu0 %v3960, 32
        %v4280 = vpop.permute.xlu0 %4279
        %4281 = vrot.lane.b32.xlu0 %v3964, 32
        %v4282 = vpop.permute.xlu0 %4281
        %4283 = vrot.lane.b32.xlu0 %v3892, 32
        %v4284 = vpop.permute.xlu0 %4283
        %4285 = vrot.lane.b32.xlu0 %v3896, 32
        %v4286 = vpop.permute.xlu0 %4285
        %4287 = vrot.lane.b32.xlu0 %v3902, 32
        %v4288 = vpop.permute.xlu0 %4287
        %4289 = vrot.lane.b32.xlu0 %v3906, 32
        %v4290 = vpop.permute.xlu0 %4289
        %4291 = vrot.lane.b32.xlu0 %v3912, 32
        %v4292 = vpop.permute.xlu0 %4291
        %4293 = vrot.lane.b32.xlu0 %v3916, 32
        %v4294 = vpop.permute.xlu0 %4293
        %4295 = vrot.lane.b32.xlu0 %v3922, 32
        %v4296 = vpop.permute.xlu0 %4295
        %4297 = vrot.lane.b32.xlu0 %v3926, 32
        %v4298 = vpop.permute.xlu0 %4297
        %4299 = vrot.lane.b32.xlu0 %v3932, 32
        %v4300 = vpop.permute.xlu0 %4299
        %4301 = vrot.lane.b32.xlu0 %v3936, 32
        %v4302 = vpop.permute.xlu0 %4301
        %4303 = vrot.lane.b32.xlu0 %v3942, 32
        %v4304 = vpop.permute.xlu0 %4303
        %4305 = vrot.lane.b32.xlu0 %v3946, 32
        %v4306 = vpop.permute.xlu0 %4305
        %4307 = vrot.lane.b32.xlu0 %v3952, 32
        %v4308 = vpop.permute.xlu0 %4307
        %4309 = vrot.lane.b32.xlu0 %v3956, 32
        %v4310 = vpop.permute.xlu0 %4309
        %4311 = vrot.lane.b32.xlu0 %v3962, 32
        %v4312 = vpop.permute.xlu0 %4311
        %4313 = vrot.lane.b32.xlu0 %v3966, 32
        %v4314 = vpop.permute.xlu0 %4313
        %vm4315 = vcmp.lt.s32.totalorder %v671, 32
        %v4316 = vsel %vm4315, %v4252, %v4284
        %v4317 = vsel %vm4315, %v4254, %v4286
        %v4318 = vsel %vm4315, %v4256, %v4288
        %v4319 = vsel %vm4315, %v4258, %v4290
        %v4320 = vsel %vm4315, %v4260, %v4292
        %v4321 = vsel %vm4315, %v4262, %v4294
        %v4322 = vsel %vm4315, %v4264, %v4296
        %v4323 = vsel %vm4315, %v4266, %v4298
        %v4324 = vsel %vm4315, %v4268, %v4300
        %v4325 = vsel %vm4315, %v4270, %v4302
        %v4326 = vsel %vm4315, %v4272, %v4304
        %v4327 = vsel %vm4315, %v4274, %v4306
        %v4328 = vsel %vm4315, %v4276, %v4308
        %v4329 = vsel %vm4315, %v4278, %v4310
        %v4330 = vsel %vm4315, %v4280, %v4312
        %v4331 = vsel %vm4315, %v4282, %v4314
        %v4332 = vsel %vm4315, %v4284, %v4252
        %v4333 = vsel %vm4315, %v4286, %v4254
        %v4334 = vsel %vm4315, %v4288, %v4256
        %v4335 = vsel %vm4315, %v4290, %v4258
        %v4336 = vsel %vm4315, %v4292, %v4260
        %v4337 = vsel %vm4315, %v4294, %v4262
        %v4338 = vsel %vm4315, %v4296, %v4264
        %v4339 = vsel %vm4315, %v4298, %v4266
        %v4340 = vsel %vm4315, %v4300, %v4268
        %v4341 = vsel %vm4315, %v4302, %v4270
        %v4342 = vsel %vm4315, %v4304, %v4272
        %v4343 = vsel %vm4315, %v4306, %v4274
        %v4344 = vsel %vm4315, %v4308, %v4276
        %v4345 = vsel %vm4315, %v4310, %v4278
        %v4346 = vsel %vm4315, %v4312, %v4280
        %v4347 = vsel %vm4315, %v4314, %v4282
        %v4348 = vsel %vm4081, 1, 0
        %v4349 = vlaneseq
        %v4350 = vshrl.u32 %v4349, 7
        %v4351 = vsub.s32 0, %v4350
        %v4352 = vrot.slane %v4348, %v4351
        %v4353 = vlaneseq
        %v4354 = vshrl.u32 %v4353, 7
        %v4355 = vsub.s32 2, %v4354
        %v4356 = vrot.slane %v4348, %v4355
        %v4357 = vlaneseq
        %v4358 = vshrl.u32 %v4357, 7
        %v4359 = vsub.s32 0, %v4358
        %v4360 = vrot.slane %v4352, %v4359
        %v4361 = vlaneseq
        %v4362 = vshrl.u32 %v4361, 7
        %v4363 = vsub.s32 0, %v4362
        %v4364 = vrot.slane %v4356, %v4363
        %vm4365 = vcmp.eq.s32.totalorder %v4360, 1
        %vm4366 = vcmp.eq.s32.totalorder %v4364, 1
        %v4367 = vsel %vm4365, %v4332, 0.0
        %v4368 = vsel %vm4366, %v4316, 0.0
        %v4369 = vsel %vm4365, %v4333, 0.0
        %v4370 = vsel %vm4366, %v4317, 0.0
        %v4371 = vsel %vm4365, %v4334, 0.0
        %v4372 = vsel %vm4366, %v4318, 0.0
        %v4373 = vsel %vm4365, %v4335, 0.0
        %v4374 = vsel %vm4366, %v4319, 0.0
        %v4375 = vsel %vm4365, %v4336, 0.0
        %v4376 = vsel %vm4366, %v4320, 0.0
        %v4377 = vsel %vm4365, %v4337, 0.0
        %v4378 = vsel %vm4366, %v4321, 0.0
        %v4379 = vsel %vm4365, %v4338, 0.0
        %v4380 = vsel %vm4366, %v4322, 0.0
        %v4381 = vsel %vm4365, %v4339, 0.0
        %v4382 = vsel %vm4366, %v4323, 0.0
        %v4383 = vsel %vm4365, %v4340, 0.0
        %v4384 = vsel %vm4366, %v4324, 0.0
        %v4385 = vsel %vm4365, %v4341, 0.0
        %v4386 = vsel %vm4366, %v4325, 0.0
        %v4387 = vsel %vm4365, %v4342, 0.0
        %v4388 = vsel %vm4366, %v4326, 0.0
        %v4389 = vsel %vm4365, %v4343, 0.0
        %v4390 = vsel %vm4366, %v4327, 0.0
        %v4391 = vsel %vm4365, %v4344, 0.0
        %v4392 = vsel %vm4366, %v4328, 0.0
        %v4393 = vsel %vm4365, %v4345, 0.0
        %v4394 = vsel %vm4366, %v4329, 0.0
        %v4395 = vsel %vm4365, %v4346, 0.0
        %v4396 = vsel %vm4366, %v4330, 0.0
        %v4397 = vsel %vm4365, %v4347, 0.0
        %v4398 = vsel %vm4366, %v4331, 0.0
        %4399 = vset.pattern.permute.xlu0 1
        %4400 = vperm.xlu0 %4399, %v3968
        %v4401 = vpop.permute.xlu0 %4400
        %4403 = vset.pattern.permute.xlu0 1
        %4404 = vperm.xlu0 %4403, %v3969
        %v4405 = vpop.permute.xlu0 %4404
        %4407 = vset.pattern.permute.xlu0 1
        %4408 = vperm.xlu0 %4407, %v3970
        %v4409 = vpop.permute.xlu0 %4408
        %4411 = vset.pattern.permute.xlu0 1
        %4412 = vperm.xlu0 %4411, %v3971
        %v4413 = vpop.permute.xlu0 %4412
        %4415 = vset.pattern.permute.xlu0 1
        %4416 = vperm.xlu0 %4415, %v3972
        %v4417 = vpop.permute.xlu0 %4416
        %4419 = vset.pattern.permute.xlu0 1
        %4420 = vperm.xlu0 %4419, %v3973
        %v4421 = vpop.permute.xlu0 %4420
        %4423 = vset.pattern.permute.xlu0 1
        %4424 = vperm.xlu0 %4423, %v3974
        %v4425 = vpop.permute.xlu0 %4424
        %4427 = vset.pattern.permute.xlu0 1
        %4428 = vperm.xlu0 %4427, %v3975
        %v4429 = vpop.permute.xlu0 %4428
        %4431 = vset.pattern.permute.xlu0 1
        %4432 = vperm.xlu0 %4431, %v3976
        %v4433 = vpop.permute.xlu0 %4432
        %4435 = vset.pattern.permute.xlu0 1
        %4436 = vperm.xlu0 %4435, %v3977
        %v4437 = vpop.permute.xlu0 %4436
        %4439 = vset.pattern.permute.xlu0 1
        %4440 = vperm.xlu0 %4439, %v3978
        %v4441 = vpop.permute.xlu0 %4440
        %4443 = vset.pattern.permute.xlu0 1
        %4444 = vperm.xlu0 %4443, %v3979
        %v4445 = vpop.permute.xlu0 %4444
        %4447 = vset.pattern.permute.xlu0 1
        %4448 = vperm.xlu0 %4447, %v3980
        %v4449 = vpop.permute.xlu0 %4448
        %4451 = vset.pattern.permute.xlu0 1
        %4452 = vperm.xlu0 %4451, %v3981
        %v4453 = vpop.permute.xlu0 %4452
        %4455 = vset.pattern.permute.xlu0 1
        %4456 = vperm.xlu0 %4455, %v3982
        %v4457 = vpop.permute.xlu0 %4456
        %4459 = vset.pattern.permute.xlu0 1
        %4460 = vperm.xlu0 %4459, %v3983
        %v4461 = vpop.permute.xlu0 %4460
        %v4463 = vmul.f32 %v4367, %v4401
        %v4464 = vmul.f32 %v4368, %v4401
        %v4465 = vmul.f32 %v4369, %v4405
        %v4466 = vmul.f32 %v4370, %v4405
        %v4467 = vmul.f32 %v4371, %v4409
        %v4468 = vmul.f32 %v4372, %v4409
        %v4469 = vmul.f32 %v4373, %v4413
        %v4470 = vmul.f32 %v4374, %v4413
        %v4471 = vmul.f32 %v4375, %v4417
        %v4472 = vmul.f32 %v4376, %v4417
        %v4473 = vmul.f32 %v4377, %v4421
        %v4474 = vmul.f32 %v4378, %v4421
        %v4475 = vmul.f32 %v4379, %v4425
        %v4476 = vmul.f32 %v4380, %v4425
        %v4477 = vmul.f32 %v4381, %v4429
        %v4478 = vmul.f32 %v4382, %v4429
        %v4479 = vmul.f32 %v4383, %v4433
        %v4480 = vmul.f32 %v4384, %v4433
        %v4481 = vmul.f32 %v4385, %v4437
        %v4482 = vmul.f32 %v4386, %v4437
        %v4483 = vmul.f32 %v4387, %v4441
        %v4484 = vmul.f32 %v4388, %v4441
        %v4485 = vmul.f32 %v4389, %v4445
        %v4486 = vmul.f32 %v4390, %v4445
        %v4487 = vmul.f32 %v4391, %v4449
        %v4488 = vmul.f32 %v4392, %v4449
        %v4489 = vmul.f32 %v4393, %v4453
        %v4490 = vmul.f32 %v4394, %v4453
        %v4491 = vmul.f32 %v4395, %v4457
        %v4492 = vmul.f32 %v4396, %v4457
        %v4493 = vmul.f32 %v4397, %v4461
        %v4494 = vmul.f32 %v4398, %v4461
        %v4495 = vadd.f32 %v4219, %v4463
        %v4496 = vadd.f32 %v4220, %v4464
        %v4497 = vadd.f32 %v4221, %v4465
        %v4498 = vadd.f32 %v4222, %v4466
        %v4499 = vadd.f32 %v4223, %v4467
        %v4500 = vadd.f32 %v4224, %v4468
        %v4501 = vadd.f32 %v4225, %v4469
        %v4502 = vadd.f32 %v4226, %v4470
        %v4503 = vadd.f32 %v4227, %v4471
        %v4504 = vadd.f32 %v4228, %v4472
        %v4505 = vadd.f32 %v4229, %v4473
        %v4506 = vadd.f32 %v4230, %v4474
        %v4507 = vadd.f32 %v4231, %v4475
        %v4508 = vadd.f32 %v4232, %v4476
        %v4509 = vadd.f32 %v4233, %v4477
        %v4510 = vadd.f32 %v4234, %v4478
        %v4511 = vadd.f32 %v4235, %v4479
        %v4512 = vadd.f32 %v4236, %v4480
        %v4513 = vadd.f32 %v4237, %v4481
        %v4514 = vadd.f32 %v4238, %v4482
        %v4515 = vadd.f32 %v4239, %v4483
        %v4516 = vadd.f32 %v4240, %v4484
        %v4517 = vadd.f32 %v4241, %v4485
        %v4518 = vadd.f32 %v4242, %v4486
        %v4519 = vadd.f32 %v4243, %v4487
        %v4520 = vadd.f32 %v4244, %v4488
        %v4521 = vadd.f32 %v4245, %v4489
        %v4522 = vadd.f32 %v4246, %v4490
        %v4523 = vadd.f32 %v4247, %v4491
        %v4524 = vadd.f32 %v4248, %v4492
        %v4525 = vadd.f32 %v4249, %v4493
        %v4526 = vadd.f32 %v4250, %v4494
        %4527 = vrot.lane.b32.xlu0 %v3890, 30
        %v4528 = vpop.permute.xlu0 %4527
        %4529 = vrot.lane.b32.xlu0 %v3894, 30
        %v4530 = vpop.permute.xlu0 %4529
        %4531 = vrot.lane.b32.xlu0 %v3900, 30
        %v4532 = vpop.permute.xlu0 %4531
        %4533 = vrot.lane.b32.xlu0 %v3904, 30
        %v4534 = vpop.permute.xlu0 %4533
        %4535 = vrot.lane.b32.xlu0 %v3910, 30
        %v4536 = vpop.permute.xlu0 %4535
        %4537 = vrot.lane.b32.xlu0 %v3914, 30
        %v4538 = vpop.permute.xlu0 %4537
        %4539 = vrot.lane.b32.xlu0 %v3920, 30
        %v4540 = vpop.permute.xlu0 %4539
        %4541 = vrot.lane.b32.xlu0 %v3924, 30
        %v4542 = vpop.permute.xlu0 %4541
        %4543 = vrot.lane.b32.xlu0 %v3930, 30
        %v4544 = vpop.permute.xlu0 %4543
        %4545 = vrot.lane.b32.xlu0 %v3934, 30
        %v4546 = vpop.permute.xlu0 %4545
        %4547 = vrot.lane.b32.xlu0 %v3940, 30
        %v4548 = vpop.permute.xlu0 %4547
        %4549 = vrot.lane.b32.xlu0 %v3944, 30
        %v4550 = vpop.permute.xlu0 %4549
        %4551 = vrot.lane.b32.xlu0 %v3950, 30
        %v4552 = vpop.permute.xlu0 %4551
        %4553 = vrot.lane.b32.xlu0 %v3954, 30
        %v4554 = vpop.permute.xlu0 %4553
        %4555 = vrot.lane.b32.xlu0 %v3960, 30
        %v4556 = vpop.permute.xlu0 %4555
        %4557 = vrot.lane.b32.xlu0 %v3964, 30
        %v4558 = vpop.permute.xlu0 %4557
        %4559 = vrot.lane.b32.xlu0 %v3892, 30
        %v4560 = vpop.permute.xlu0 %4559
        %4561 = vrot.lane.b32.xlu0 %v3896, 30
        %v4562 = vpop.permute.xlu0 %4561
        %4563 = vrot.lane.b32.xlu0 %v3902, 30
        %v4564 = vpop.permute.xlu0 %4563
        %4565 = vrot.lane.b32.xlu0 %v3906, 30
        %v4566 = vpop.permute.xlu0 %4565
        %4567 = vrot.lane.b32.xlu0 %v3912, 30
        %v4568 = vpop.permute.xlu0 %4567
        %4569 = vrot.lane.b32.xlu0 %v3916, 30
        %v4570 = vpop.permute.xlu0 %4569
        %4571 = vrot.lane.b32.xlu0 %v3922, 30
        %v4572 = vpop.permute.xlu0 %4571
        %4573 = vrot.lane.b32.xlu0 %v3926, 30
        %v4574 = vpop.permute.xlu0 %4573
        %4575 = vrot.lane.b32.xlu0 %v3932, 30
        %v4576 = vpop.permute.xlu0 %4575
        %4577 = vrot.lane.b32.xlu0 %v3936, 30
        %v4578 = vpop.permute.xlu0 %4577
        %4579 = vrot.lane.b32.xlu0 %v3942, 30
        %v4580 = vpop.permute.xlu0 %4579
        %4581 = vrot.lane.b32.xlu0 %v3946, 30
        %v4582 = vpop.permute.xlu0 %4581
        %4583 = vrot.lane.b32.xlu0 %v3952, 30
        %v4584 = vpop.permute.xlu0 %4583
        %4585 = vrot.lane.b32.xlu0 %v3956, 30
        %v4586 = vpop.permute.xlu0 %4585
        %4587 = vrot.lane.b32.xlu0 %v3962, 30
        %v4588 = vpop.permute.xlu0 %4587
        %4589 = vrot.lane.b32.xlu0 %v3966, 30
        %v4590 = vpop.permute.xlu0 %4589
        %vm4591 = vcmp.lt.s32.totalorder %v671, 30
        %v4592 = vsel %vm4591, %v4528, %v4560
        %v4593 = vsel %vm4591, %v4530, %v4562
        %v4594 = vsel %vm4591, %v4532, %v4564
        %v4595 = vsel %vm4591, %v4534, %v4566
        %v4596 = vsel %vm4591, %v4536, %v4568
        %v4597 = vsel %vm4591, %v4538, %v4570
        %v4598 = vsel %vm4591, %v4540, %v4572
        %v4599 = vsel %vm4591, %v4542, %v4574
        %v4600 = vsel %vm4591, %v4544, %v4576
        %v4601 = vsel %vm4591, %v4546, %v4578
        %v4602 = vsel %vm4591, %v4548, %v4580
        %v4603 = vsel %vm4591, %v4550, %v4582
        %v4604 = vsel %vm4591, %v4552, %v4584
        %v4605 = vsel %vm4591, %v4554, %v4586
        %v4606 = vsel %vm4591, %v4556, %v4588
        %v4607 = vsel %vm4591, %v4558, %v4590
        %v4608 = vsel %vm4591, %v4560, %v4528
        %v4609 = vsel %vm4591, %v4562, %v4530
        %v4610 = vsel %vm4591, %v4564, %v4532
        %v4611 = vsel %vm4591, %v4566, %v4534
        %v4612 = vsel %vm4591, %v4568, %v4536
        %v4613 = vsel %vm4591, %v4570, %v4538
        %v4614 = vsel %vm4591, %v4572, %v4540
        %v4615 = vsel %vm4591, %v4574, %v4542
        %v4616 = vsel %vm4591, %v4576, %v4544
        %v4617 = vsel %vm4591, %v4578, %v4546
        %v4618 = vsel %vm4591, %v4580, %v4548
        %v4619 = vsel %vm4591, %v4582, %v4550
        %v4620 = vsel %vm4591, %v4584, %v4552
        %v4621 = vsel %vm4591, %v4586, %v4554
        %v4622 = vsel %vm4591, %v4588, %v4556
        %v4623 = vsel %vm4591, %v4590, %v4558
        %vm4624 = vcmp.lt.s32.totalorder %v395, 14
        %v4625 = vsel %vm4624, 1, 0
        %v4626 = vrot.slane %v4625, 7
        %v4627 = vrot.slane %v4626, 2
        %vm4628 = vcmp.ne.s32.totalorder %v4627, 0
        %vm4629 = vmand %vm4081, %vm4628
        %v4630 = vsel %vm4629, 1, 0
        %v4631 = vlaneseq
        %v4632 = vshrl.u32 %v4631, 7
        %v4633 = vsub.s32 0, %v4632
        %v4634 = vrot.slane %v4630, %v4633
        %v4635 = vlaneseq
        %v4636 = vshrl.u32 %v4635, 7
        %v4637 = vsub.s32 2, %v4636
        %v4638 = vrot.slane %v4630, %v4637
        %v4639 = vlaneseq
        %v4640 = vshrl.u32 %v4639, 7
        %v4641 = vsub.s32 0, %v4640
        %v4642 = vrot.slane %v4634, %v4641
        %v4643 = vlaneseq
        %v4644 = vshrl.u32 %v4643, 7
        %v4645 = vsub.s32 0, %v4644
        %v4646 = vrot.slane %v4638, %v4645
        %vm4647 = vcmp.eq.s32.totalorder %v4642, 1
        %vm4648 = vcmp.eq.s32.totalorder %v4646, 1
        %v4649 = vsel %vm4647, %v4608, 0.0
        %v4650 = vsel %vm4648, %v4592, 0.0
        %v4651 = vsel %vm4647, %v4609, 0.0
        %v4652 = vsel %vm4648, %v4593, 0.0
        %v4653 = vsel %vm4647, %v4610, 0.0
        %v4654 = vsel %vm4648, %v4594, 0.0
        %v4655 = vsel %vm4647, %v4611, 0.0
        %v4656 = vsel %vm4648, %v4595, 0.0
        %v4657 = vsel %vm4647, %v4612, 0.0
        %v4658 = vsel %vm4648, %v4596, 0.0
        %v4659 = vsel %vm4647, %v4613, 0.0
        %v4660 = vsel %vm4648, %v4597, 0.0
        %v4661 = vsel %vm4647, %v4614, 0.0
        %v4662 = vsel %vm4648, %v4598, 0.0
        %v4663 = vsel %vm4647, %v4615, 0.0
        %v4664 = vsel %vm4648, %v4599, 0.0
        %v4665 = vsel %vm4647, %v4616, 0.0
        %v4666 = vsel %vm4648, %v4600, 0.0
        %v4667 = vsel %vm4647, %v4617, 0.0
        %v4668 = vsel %vm4648, %v4601, 0.0
        %v4669 = vsel %vm4647, %v4618, 0.0
        %v4670 = vsel %vm4648, %v4602, 0.0
        %v4671 = vsel %vm4647, %v4619, 0.0
        %v4672 = vsel %vm4648, %v4603, 0.0
        %v4673 = vsel %vm4647, %v4620, 0.0
        %v4674 = vsel %vm4648, %v4604, 0.0
        %v4675 = vsel %vm4647, %v4621, 0.0
        %v4676 = vsel %vm4648, %v4605, 0.0
        %v4677 = vsel %vm4647, %v4622, 0.0
        %v4678 = vsel %vm4648, %v4606, 0.0
        %v4679 = vsel %vm4647, %v4623, 0.0
        %v4680 = vsel %vm4648, %v4607, 0.0
        %4681 = vset.pattern.permute.xlu0 2
        %4682 = vperm.xlu0 %4681, %v3968
        %v4683 = vpop.permute.xlu0 %4682
        %4685 = vset.pattern.permute.xlu0 2
        %4686 = vperm.xlu0 %4685, %v3969
        %v4687 = vpop.permute.xlu0 %4686
        %4689 = vset.pattern.permute.xlu0 2
        %4690 = vperm.xlu0 %4689, %v3970
        %v4691 = vpop.permute.xlu0 %4690
        %4693 = vset.pattern.permute.xlu0 2
        %4694 = vperm.xlu0 %4693, %v3971
        %v4695 = vpop.permute.xlu0 %4694
        %4697 = vset.pattern.permute.xlu0 2
        %4698 = vperm.xlu0 %4697, %v3972
        %v4699 = vpop.permute.xlu0 %4698
        %4701 = vset.pattern.permute.xlu0 2
        %4702 = vperm.xlu0 %4701, %v3973
        %v4703 = vpop.permute.xlu0 %4702
        %4705 = vset.pattern.permute.xlu0 2
        %4706 = vperm.xlu0 %4705, %v3974
        %v4707 = vpop.permute.xlu0 %4706
        %4709 = vset.pattern.permute.xlu0 2
        %4710 = vperm.xlu0 %4709, %v3975
        %v4711 = vpop.permute.xlu0 %4710
        %4713 = vset.pattern.permute.xlu0 2
        %4714 = vperm.xlu0 %4713, %v3976
        %v4715 = vpop.permute.xlu0 %4714
        %4717 = vset.pattern.permute.xlu0 2
        %4718 = vperm.xlu0 %4717, %v3977
        %v4719 = vpop.permute.xlu0 %4718
        %4721 = vset.pattern.permute.xlu0 2
        %4722 = vperm.xlu0 %4721, %v3978
        %v4723 = vpop.permute.xlu0 %4722
        %4725 = vset.pattern.permute.xlu0 2
        %4726 = vperm.xlu0 %4725, %v3979
        %v4727 = vpop.permute.xlu0 %4726
        %4729 = vset.pattern.permute.xlu0 2
        %4730 = vperm.xlu0 %4729, %v3980
        %v4731 = vpop.permute.xlu0 %4730
        %4733 = vset.pattern.permute.xlu0 2
        %4734 = vperm.xlu0 %4733, %v3981
        %v4735 = vpop.permute.xlu0 %4734
        %4737 = vset.pattern.permute.xlu0 2
        %4738 = vperm.xlu0 %4737, %v3982
        %v4739 = vpop.permute.xlu0 %4738
        %4741 = vset.pattern.permute.xlu0 2
        %4742 = vperm.xlu0 %4741, %v3983
        %v4743 = vpop.permute.xlu0 %4742
        %v4745 = vmul.f32 %v4649, %v4683
        %v4746 = vmul.f32 %v4650, %v4683
        %v4747 = vmul.f32 %v4651, %v4687
        %v4748 = vmul.f32 %v4652, %v4687
        %v4749 = vmul.f32 %v4653, %v4691
        %v4750 = vmul.f32 %v4654, %v4691
        %v4751 = vmul.f32 %v4655, %v4695
        %v4752 = vmul.f32 %v4656, %v4695
        %v4753 = vmul.f32 %v4657, %v4699
        %v4754 = vmul.f32 %v4658, %v4699
        %v4755 = vmul.f32 %v4659, %v4703
        %v4756 = vmul.f32 %v4660, %v4703
        %v4757 = vmul.f32 %v4661, %v4707
        %v4758 = vmul.f32 %v4662, %v4707
        %v4759 = vmul.f32 %v4663, %v4711
        %v4760 = vmul.f32 %v4664, %v4711
        %v4761 = vmul.f32 %v4665, %v4715
        %v4762 = vmul.f32 %v4666, %v4715
        %v4763 = vmul.f32 %v4667, %v4719
        %v4764 = vmul.f32 %v4668, %v4719
        %v4765 = vmul.f32 %v4669, %v4723
        %v4766 = vmul.f32 %v4670, %v4723
        %v4767 = vmul.f32 %v4671, %v4727
        %v4768 = vmul.f32 %v4672, %v4727
        %v4769 = vmul.f32 %v4673, %v4731
        %v4770 = vmul.f32 %v4674, %v4731
        %v4771 = vmul.f32 %v4675, %v4735
        %v4772 = vmul.f32 %v4676, %v4735
        %v4773 = vmul.f32 %v4677, %v4739
        %v4774 = vmul.f32 %v4678, %v4739
        %v4775 = vmul.f32 %v4679, %v4743
        %v4776 = vmul.f32 %v4680, %v4743
        %v4777 = vadd.f32 %v4495, %v4745
        %v4778 = vadd.f32 %v4496, %v4746
        %v4779 = vadd.f32 %v4497, %v4747
        %v4780 = vadd.f32 %v4498, %v4748
        %v4781 = vadd.f32 %v4499, %v4749
        %v4782 = vadd.f32 %v4500, %v4750
        %v4783 = vadd.f32 %v4501, %v4751
        %v4784 = vadd.f32 %v4502, %v4752
        %v4785 = vadd.f32 %v4503, %v4753
        %v4786 = vadd.f32 %v4504, %v4754
        %v4787 = vadd.f32 %v4505, %v4755
        %v4788 = vadd.f32 %v4506, %v4756
        %v4789 = vadd.f32 %v4507, %v4757
        %v4790 = vadd.f32 %v4508, %v4758
        %v4791 = vadd.f32 %v4509, %v4759
        %v4792 = vadd.f32 %v4510, %v4760
        %v4793 = vadd.f32 %v4511, %v4761
        %v4794 = vadd.f32 %v4512, %v4762
        %v4795 = vadd.f32 %v4513, %v4763
        %v4796 = vadd.f32 %v4514, %v4764
        %v4797 = vadd.f32 %v4515, %v4765
        %v4798 = vadd.f32 %v4516, %v4766
        %v4799 = vadd.f32 %v4517, %v4767
        %v4800 = vadd.f32 %v4518, %v4768
        %v4801 = vadd.f32 %v4519, %v4769
        %v4802 = vadd.f32 %v4520, %v4770
        %v4803 = vadd.f32 %v4521, %v4771
        %v4804 = vadd.f32 %v4522, %v4772
        %v4805 = vadd.f32 %v4523, %v4773
        %v4806 = vadd.f32 %v4524, %v4774
        %v4807 = vadd.f32 %v4525, %v4775
        %v4808 = vadd.f32 %v4526, %v4776
        %4809 = vrot.lane.b32.xlu0 %v3890, 2
        %v4810 = vpop.permute.xlu0 %4809
        %4811 = vrot.lane.b32.xlu0 %v3894, 2
        %v4812 = vpop.permute.xlu0 %4811
        %4813 = vrot.lane.b32.xlu0 %v3900, 2
        %v4814 = vpop.permute.xlu0 %4813
        %4815 = vrot.lane.b32.xlu0 %v3904, 2
        %v4816 = vpop.permute.xlu0 %4815
        %4817 = vrot.lane.b32.xlu0 %v3910, 2
        %v4818 = vpop.permute.xlu0 %4817
        %4819 = vrot.lane.b32.xlu0 %v3914, 2
        %v4820 = vpop.permute.xlu0 %4819
        %4821 = vrot.lane.b32.xlu0 %v3920, 2
        %v4822 = vpop.permute.xlu0 %4821
        %4823 = vrot.lane.b32.xlu0 %v3924, 2
        %v4824 = vpop.permute.xlu0 %4823
        %4825 = vrot.lane.b32.xlu0 %v3930, 2
        %v4826 = vpop.permute.xlu0 %4825
        %4827 = vrot.lane.b32.xlu0 %v3934, 2
        %v4828 = vpop.permute.xlu0 %4827
        %4829 = vrot.lane.b32.xlu0 %v3940, 2
        %v4830 = vpop.permute.xlu0 %4829
        %4831 = vrot.lane.b32.xlu0 %v3944, 2
        %v4832 = vpop.permute.xlu0 %4831
        %4833 = vrot.lane.b32.xlu0 %v3950, 2
        %v4834 = vpop.permute.xlu0 %4833
        %4835 = vrot.lane.b32.xlu0 %v3954, 2
        %v4836 = vpop.permute.xlu0 %4835
        %4837 = vrot.lane.b32.xlu0 %v3960, 2
        %v4838 = vpop.permute.xlu0 %4837
        %4839 = vrot.lane.b32.xlu0 %v3964, 2
        %v4840 = vpop.permute.xlu0 %4839
        %4841 = vrot.lane.b32.xlu0 %v3892, 2
        %v4842 = vpop.permute.xlu0 %4841
        %4843 = vrot.lane.b32.xlu0 %v3896, 2
        %v4844 = vpop.permute.xlu0 %4843
        %4845 = vrot.lane.b32.xlu0 %v3902, 2
        %v4846 = vpop.permute.xlu0 %4845
        %4847 = vrot.lane.b32.xlu0 %v3906, 2
        %v4848 = vpop.permute.xlu0 %4847
        %4849 = vrot.lane.b32.xlu0 %v3912, 2
        %v4850 = vpop.permute.xlu0 %4849
        %4851 = vrot.lane.b32.xlu0 %v3916, 2
        %v4852 = vpop.permute.xlu0 %4851
        %4853 = vrot.lane.b32.xlu0 %v3922, 2
        %v4854 = vpop.permute.xlu0 %4853
        %4855 = vrot.lane.b32.xlu0 %v3926, 2
        %v4856 = vpop.permute.xlu0 %4855
        %4857 = vrot.lane.b32.xlu0 %v3932, 2
        %v4858 = vpop.permute.xlu0 %4857
        %4859 = vrot.lane.b32.xlu0 %v3936, 2
        %v4860 = vpop.permute.xlu0 %4859
        %4861 = vrot.lane.b32.xlu0 %v3942, 2
        %v4862 = vpop.permute.xlu0 %4861
        %4863 = vrot.lane.b32.xlu0 %v3946, 2
        %v4864 = vpop.permute.xlu0 %4863
        %4865 = vrot.lane.b32.xlu0 %v3952, 2
        %v4866 = vpop.permute.xlu0 %4865
        %4867 = vrot.lane.b32.xlu0 %v3956, 2
        %v4868 = vpop.permute.xlu0 %4867
        %4869 = vrot.lane.b32.xlu0 %v3962, 2
        %v4870 = vpop.permute.xlu0 %4869
        %4871 = vrot.lane.b32.xlu0 %v3966, 2
        %v4872 = vpop.permute.xlu0 %4871
        %vm4873 = vcmp.lt.s32.totalorder %v671, 2
        %v4874 = vsel %vm4873, %v4810, %v4842
        %v4875 = vsel %vm4873, %v4812, %v4844
        %v4876 = vsel %vm4873, %v4814, %v4846
        %v4877 = vsel %vm4873, %v4816, %v4848
        %v4878 = vsel %vm4873, %v4818, %v4850
        %v4879 = vsel %vm4873, %v4820, %v4852
        %v4880 = vsel %vm4873, %v4822, %v4854
        %v4881 = vsel %vm4873, %v4824, %v4856
        %v4882 = vsel %vm4873, %v4826, %v4858
        %v4883 = vsel %vm4873, %v4828, %v4860
        %v4884 = vsel %vm4873, %v4830, %v4862
        %v4885 = vsel %vm4873, %v4832, %v4864
        %v4886 = vsel %vm4873, %v4834, %v4866
        %v4887 = vsel %vm4873, %v4836, %v4868
        %v4888 = vsel %vm4873, %v4838, %v4870
        %v4889 = vsel %vm4873, %v4840, %v4872
        %v4890 = vsel %vm4873, %v4842, %v4810
        %v4891 = vsel %vm4873, %v4844, %v4812
        %v4892 = vsel %vm4873, %v4846, %v4814
        %v4893 = vsel %vm4873, %v4848, %v4816
        %v4894 = vsel %vm4873, %v4850, %v4818
        %v4895 = vsel %vm4873, %v4852, %v4820
        %v4896 = vsel %vm4873, %v4854, %v4822
        %v4897 = vsel %vm4873, %v4856, %v4824
        %v4898 = vsel %vm4873, %v4858, %v4826
        %v4899 = vsel %vm4873, %v4860, %v4828
        %v4900 = vsel %vm4873, %v4862, %v4830
        %v4901 = vsel %vm4873, %v4864, %v4832
        %v4902 = vsel %vm4873, %v4866, %v4834
        %v4903 = vsel %vm4873, %v4868, %v4836
        %v4904 = vsel %vm4873, %v4870, %v4838
        %v4905 = vsel %vm4873, %v4872, %v4840
        %v4906 = vlaneseq
        %v4907 = vshrl.u32 %v4906, 7
        %v4908 = vsub.s32 1, %v4907
        %v4909 = vrot.slane %v4083, %v4908
        %v4910 = vlaneseq
        %v4911 = vshrl.u32 %v4910, 7
        %v4912 = vsub.s32 3, %v4911
        %v4913 = vrot.slane %v4083, %v4912
        %v4914 = vlaneseq
        %v4915 = vshrl.u32 %v4914, 7
        %v4916 = vsub.s32 1, %v4915
        %v4917 = vrot.slane %v4909, %v4916
        %v4918 = vlaneseq
        %v4919 = vshrl.u32 %v4918, 7
        %v4920 = vsub.s32 1, %v4919
        %v4921 = vrot.slane %v4913, %v4920
        %vm4922 = vcmp.eq.s32.totalorder %v4917, 1
        %vm4923 = vcmp.eq.s32.totalorder %v4921, 1
        %v4924 = vsel %vm4922, %v4890, 0.0
        %v4925 = vsel %vm4923, %v4874, 0.0
        %v4926 = vsel %vm4922, %v4891, 0.0
        %v4927 = vsel %vm4923, %v4875, 0.0
        %v4928 = vsel %vm4922, %v4892, 0.0
        %v4929 = vsel %vm4923, %v4876, 0.0
        %v4930 = vsel %vm4922, %v4893, 0.0
        %v4931 = vsel %vm4923, %v4877, 0.0
        %v4932 = vsel %vm4922, %v4894, 0.0
        %v4933 = vsel %vm4923, %v4878, 0.0
        %v4934 = vsel %vm4922, %v4895, 0.0
        %v4935 = vsel %vm4923, %v4879, 0.0
        %v4936 = vsel %vm4922, %v4896, 0.0
        %v4937 = vsel %vm4923, %v4880, 0.0
        %v4938 = vsel %vm4922, %v4897, 0.0
        %v4939 = vsel %vm4923, %v4881, 0.0
        %v4940 = vsel %vm4922, %v4898, 0.0
        %v4941 = vsel %vm4923, %v4882, 0.0
        %v4942 = vsel %vm4922, %v4899, 0.0
        %v4943 = vsel %vm4923, %v4883, 0.0
        %v4944 = vsel %vm4922, %v4900, 0.0
        %v4945 = vsel %vm4923, %v4884, 0.0
        %v4946 = vsel %vm4922, %v4901, 0.0
        %v4947 = vsel %vm4923, %v4885, 0.0
        %v4948 = vsel %vm4922, %v4902, 0.0
        %v4949 = vsel %vm4923, %v4886, 0.0
        %v4950 = vsel %vm4922, %v4903, 0.0
        %v4951 = vsel %vm4923, %v4887, 0.0
        %v4952 = vsel %vm4922, %v4904, 0.0
        %v4953 = vsel %vm4923, %v4888, 0.0
        %v4954 = vsel %vm4922, %v4905, 0.0
        %v4955 = vsel %vm4923, %v4889, 0.0
        %4956 = vset.pattern.permute.xlu0 3
        %4957 = vperm.xlu0 %4956, %v3968
        %v4958 = vpop.permute.xlu0 %4957
        %4960 = vset.pattern.permute.xlu0 3
        %4961 = vperm.xlu0 %4960, %v3969
        %v4962 = vpop.permute.xlu0 %4961
        %4964 = vset.pattern.permute.xlu0 3
        %4965 = vperm.xlu0 %4964, %v3970
        %v4966 = vpop.permute.xlu0 %4965
        %4968 = vset.pattern.permute.xlu0 3
        %4969 = vperm.xlu0 %4968, %v3971
        %v4970 = vpop.permute.xlu0 %4969
        %4972 = vset.pattern.permute.xlu0 3
        %4973 = vperm.xlu0 %4972, %v3972
        %v4974 = vpop.permute.xlu0 %4973
        %4976 = vset.pattern.permute.xlu0 3
        %4977 = vperm.xlu0 %4976, %v3973
        %v4978 = vpop.permute.xlu0 %4977
        %4980 = vset.pattern.permute.xlu0 3
        %4981 = vperm.xlu0 %4980, %v3974
        %v4982 = vpop.permute.xlu0 %4981
        %4984 = vset.pattern.permute.xlu0 3
        %4985 = vperm.xlu0 %4984, %v3975
        %v4986 = vpop.permute.xlu0 %4985
        %4988 = vset.pattern.permute.xlu0 3
        %4989 = vperm.xlu0 %4988, %v3976
        %v4990 = vpop.permute.xlu0 %4989
        %4992 = vset.pattern.permute.xlu0 3
        %4993 = vperm.xlu0 %4992, %v3977
        %v4994 = vpop.permute.xlu0 %4993
        %4996 = vset.pattern.permute.xlu0 3
        %4997 = vperm.xlu0 %4996, %v3978
        %v4998 = vpop.permute.xlu0 %4997
        %5000 = vset.pattern.permute.xlu0 3
        %5001 = vperm.xlu0 %5000, %v3979
        %v5002 = vpop.permute.xlu0 %5001
        %5004 = vset.pattern.permute.xlu0 3
        %5005 = vperm.xlu0 %5004, %v3980
        %v5006 = vpop.permute.xlu0 %5005
        %5008 = vset.pattern.permute.xlu0 3
        %5009 = vperm.xlu0 %5008, %v3981
        %v5010 = vpop.permute.xlu0 %5009
        %5012 = vset.pattern.permute.xlu0 3
        %5013 = vperm.xlu0 %5012, %v3982
        %v5014 = vpop.permute.xlu0 %5013
        %5016 = vset.pattern.permute.xlu0 3
        %5017 = vperm.xlu0 %5016, %v3983
        %v5018 = vpop.permute.xlu0 %5017
        %v5020 = vmul.f32 %v4924, %v4958
        %v5021 = vmul.f32 %v4925, %v4958
        %v5022 = vmul.f32 %v4926, %v4962
        %v5023 = vmul.f32 %v4927, %v4962
        %v5024 = vmul.f32 %v4928, %v4966
        %v5025 = vmul.f32 %v4929, %v4966
        %v5026 = vmul.f32 %v4930, %v4970
        %v5027 = vmul.f32 %v4931, %v4970
        %v5028 = vmul.f32 %v4932, %v4974
        %v5029 = vmul.f32 %v4933, %v4974
        %v5030 = vmul.f32 %v4934, %v4978
        %v5031 = vmul.f32 %v4935, %v4978
        %v5032 = vmul.f32 %v4936, %v4982
        %v5033 = vmul.f32 %v4937, %v4982
        %v5034 = vmul.f32 %v4938, %v4986
        %v5035 = vmul.f32 %v4939, %v4986
        %v5036 = vmul.f32 %v4940, %v4990
        %v5037 = vmul.f32 %v4941, %v4990
        %v5038 = vmul.f32 %v4942, %v4994
        %v5039 = vmul.f32 %v4943, %v4994
        %v5040 = vmul.f32 %v4944, %v4998
        %v5041 = vmul.f32 %v4945, %v4998
        %v5042 = vmul.f32 %v4946, %v5002
        %v5043 = vmul.f32 %v4947, %v5002
        %v5044 = vmul.f32 %v4948, %v5006
        %v5045 = vmul.f32 %v4949, %v5006
        %v5046 = vmul.f32 %v4950, %v5010
        %v5047 = vmul.f32 %v4951, %v5010
        %v5048 = vmul.f32 %v4952, %v5014
        %v5049 = vmul.f32 %v4953, %v5014
        %v5050 = vmul.f32 %v4954, %v5018
        %v5051 = vmul.f32 %v4955, %v5018
        %v5052 = vadd.f32 %v4777, %v5020
        %v5053 = vadd.f32 %v4778, %v5021
        %v5054 = vadd.f32 %v4779, %v5022
        %v5055 = vadd.f32 %v4780, %v5023
        %v5056 = vadd.f32 %v4781, %v5024
        %v5057 = vadd.f32 %v4782, %v5025
        %v5058 = vadd.f32 %v4783, %v5026
        %v5059 = vadd.f32 %v4784, %v5027
        %v5060 = vadd.f32 %v4785, %v5028
        %v5061 = vadd.f32 %v4786, %v5029
        %v5062 = vadd.f32 %v4787, %v5030
        %v5063 = vadd.f32 %v4788, %v5031
        %v5064 = vadd.f32 %v4789, %v5032
        %v5065 = vadd.f32 %v4790, %v5033
        %v5066 = vadd.f32 %v4791, %v5034
        %v5067 = vadd.f32 %v4792, %v5035
        %v5068 = vadd.f32 %v4793, %v5036
        %v5069 = vadd.f32 %v4794, %v5037
        %v5070 = vadd.f32 %v4795, %v5038
        %v5071 = vadd.f32 %v4796, %v5039
        %v5072 = vadd.f32 %v4797, %v5040
        %v5073 = vadd.f32 %v4798, %v5041
        %v5074 = vadd.f32 %v4799, %v5042
        %v5075 = vadd.f32 %v4800, %v5043
        %v5076 = vadd.f32 %v4801, %v5044
        %v5077 = vadd.f32 %v4802, %v5045
        %v5078 = vadd.f32 %v4803, %v5046
        %v5079 = vadd.f32 %v4804, %v5047
        %v5080 = vadd.f32 %v4805, %v5048
        %v5081 = vadd.f32 %v4806, %v5049
        %v5082 = vadd.f32 %v4807, %v5050
        %v5083 = vadd.f32 %v4808, %v5051
        %5084 = vset.pattern.permute.xlu0 4
        %5085 = vperm.xlu0 %5084, %v3968
        %v5086 = vpop.permute.xlu0 %5085
        %5088 = vset.pattern.permute.xlu0 4
        %5089 = vperm.xlu0 %5088, %v3969
        %v5090 = vpop.permute.xlu0 %5089
        %5092 = vset.pattern.permute.xlu0 4
        %5093 = vperm.xlu0 %5092, %v3970
        %v5094 = vpop.permute.xlu0 %5093
        %5096 = vset.pattern.permute.xlu0 4
        %5097 = vperm.xlu0 %5096, %v3971
        %v5098 = vpop.permute.xlu0 %5097
        %5100 = vset.pattern.permute.xlu0 4
        %5101 = vperm.xlu0 %5100, %v3972
        %v5102 = vpop.permute.xlu0 %5101
        %5104 = vset.pattern.permute.xlu0 4
        %5105 = vperm.xlu0 %5104, %v3973
        %v5106 = vpop.permute.xlu0 %5105
        %5108 = vset.pattern.permute.xlu0 4
        %5109 = vperm.xlu0 %5108, %v3974
        %v5110 = vpop.permute.xlu0 %5109
        %5112 = vset.pattern.permute.xlu0 4
        %5113 = vperm.xlu0 %5112, %v3975
        %v5114 = vpop.permute.xlu0 %5113
        %5116 = vset.pattern.permute.xlu0 4
        %5117 = vperm.xlu0 %5116, %v3976
        %v5118 = vpop.permute.xlu0 %5117
        %5120 = vset.pattern.permute.xlu0 4
        %5121 = vperm.xlu0 %5120, %v3977
        %v5122 = vpop.permute.xlu0 %5121
        %5124 = vset.pattern.permute.xlu0 4
        %5125 = vperm.xlu0 %5124, %v3978
        %v5126 = vpop.permute.xlu0 %5125
        %5128 = vset.pattern.permute.xlu0 4
        %5129 = vperm.xlu0 %5128, %v3979
        %v5130 = vpop.permute.xlu0 %5129
        %5132 = vset.pattern.permute.xlu0 4
        %5133 = vperm.xlu0 %5132, %v3980
        %v5134 = vpop.permute.xlu0 %5133
        %5136 = vset.pattern.permute.xlu0 4
        %5137 = vperm.xlu0 %5136, %v3981
        %v5138 = vpop.permute.xlu0 %5137
        %5140 = vset.pattern.permute.xlu0 4
        %5141 = vperm.xlu0 %5140, %v3982
        %v5142 = vpop.permute.xlu0 %5141
        %5144 = vset.pattern.permute.xlu0 4
        %5145 = vperm.xlu0 %5144, %v3983
        %v5146 = vpop.permute.xlu0 %5145
        %v5148 = vmul.f32 %v3890, %v5086
        %v5149 = vmul.f32 %v3892, %v5086
        %v5150 = vmul.f32 %v3894, %v5090
        %v5151 = vmul.f32 %v3896, %v5090
        %v5152 = vmul.f32 %v3900, %v5094
        %v5153 = vmul.f32 %v3902, %v5094
        %v5154 = vmul.f32 %v3904, %v5098
        %v5155 = vmul.f32 %v3906, %v5098
        %v5156 = vmul.f32 %v3910, %v5102
        %v5157 = vmul.f32 %v3912, %v5102
        %v5158 = vmul.f32 %v3914, %v5106
        %v5159 = vmul.f32 %v3916, %v5106
        %v5160 = vmul.f32 %v3920, %v5110
        %v5161 = vmul.f32 %v3922, %v5110
        %v5162 = vmul.f32 %v3924, %v5114
        %v5163 = vmul.f32 %v3926, %v5114
        %v5164 = vmul.f32 %v3930, %v5118
        %v5165 = vmul.f32 %v3932, %v5118
        %v5166 = vmul.f32 %v3934, %v5122
        %v5167 = vmul.f32 %v3936, %v5122
        %v5168 = vmul.f32 %v3940, %v5126
        %v5169 = vmul.f32 %v3942, %v5126
        %v5170 = vmul.f32 %v3944, %v5130
        %v5171 = vmul.f32 %v3946, %v5130
        %v5172 = vmul.f32 %v3950, %v5134
        %v5173 = vmul.f32 %v3952, %v5134
        %v5174 = vmul.f32 %v3954, %v5138
        %v5175 = vmul.f32 %v3956, %v5138
        %v5176 = vmul.f32 %v3960, %v5142
        %v5177 = vmul.f32 %v3962, %v5142
        %v5178 = vmul.f32 %v3964, %v5146
        %v5179 = vmul.f32 %v3966, %v5146
        %v5180 = vadd.f32 %v5052, %v5148
        %v5181 = vadd.f32 %v5053, %v5149
        %v5182 = vadd.f32 %v5054, %v5150
        %v5183 = vadd.f32 %v5055, %v5151
        %v5184 = vadd.f32 %v5056, %v5152
        %v5185 = vadd.f32 %v5057, %v5153
        %v5186 = vadd.f32 %v5058, %v5154
        %v5187 = vadd.f32 %v5059, %v5155
        %v5188 = vadd.f32 %v5060, %v5156
        %v5189 = vadd.f32 %v5061, %v5157
        %v5190 = vadd.f32 %v5062, %v5158
        %v5191 = vadd.f32 %v5063, %v5159
        %v5192 = vadd.f32 %v5064, %v5160
        %v5193 = vadd.f32 %v5065, %v5161
        %v5194 = vadd.f32 %v5066, %v5162
        %v5195 = vadd.f32 %v5067, %v5163
        %v5196 = vadd.f32 %v5068, %v5164
        %v5197 = vadd.f32 %v5069, %v5165
        %v5198 = vadd.f32 %v5070, %v5166
        %v5199 = vadd.f32 %v5071, %v5167
        %v5200 = vadd.f32 %v5072, %v5168
        %v5201 = vadd.f32 %v5073, %v5169
        %v5202 = vadd.f32 %v5074, %v5170
        %v5203 = vadd.f32 %v5075, %v5171
        %v5204 = vadd.f32 %v5076, %v5172
        %v5205 = vadd.f32 %v5077, %v5173
        %v5206 = vadd.f32 %v5078, %v5174
        %v5207 = vadd.f32 %v5079, %v5175
        %v5208 = vadd.f32 %v5080, %v5176
        %v5209 = vadd.f32 %v5081, %v5177
        %v5210 = vadd.f32 %v5082, %v5178
        %v5211 = vadd.f32 %v5083, %v5179
        %5212 = vrot.lane.b32.xlu0 %v3890, 126
        %v5213 = vpop.permute.xlu0 %5212
        %5214 = vrot.lane.b32.xlu0 %v3894, 126
        %v5215 = vpop.permute.xlu0 %5214
        %5216 = vrot.lane.b32.xlu0 %v3900, 126
        %v5217 = vpop.permute.xlu0 %5216
        %5218 = vrot.lane.b32.xlu0 %v3904, 126
        %v5219 = vpop.permute.xlu0 %5218
        %5220 = vrot.lane.b32.xlu0 %v3910, 126
        %v5221 = vpop.permute.xlu0 %5220
        %5222 = vrot.lane.b32.xlu0 %v3914, 126
        %v5223 = vpop.permute.xlu0 %5222
        %5224 = vrot.lane.b32.xlu0 %v3920, 126
        %v5225 = vpop.permute.xlu0 %5224
        %5226 = vrot.lane.b32.xlu0 %v3924, 126
        %v5227 = vpop.permute.xlu0 %5226
        %5228 = vrot.lane.b32.xlu0 %v3930, 126
        %v5229 = vpop.permute.xlu0 %5228
        %5230 = vrot.lane.b32.xlu0 %v3934, 126
        %v5231 = vpop.permute.xlu0 %5230
        %5232 = vrot.lane.b32.xlu0 %v3940, 126
        %v5233 = vpop.permute.xlu0 %5232
        %5234 = vrot.lane.b32.xlu0 %v3944, 126
        %v5235 = vpop.permute.xlu0 %5234
        %5236 = vrot.lane.b32.xlu0 %v3950, 126
        %v5237 = vpop.permute.xlu0 %5236
        %5238 = vrot.lane.b32.xlu0 %v3954, 126
        %v5239 = vpop.permute.xlu0 %5238
        %5240 = vrot.lane.b32.xlu0 %v3960, 126
        %v5241 = vpop.permute.xlu0 %5240
        %5242 = vrot.lane.b32.xlu0 %v3964, 126
        %v5243 = vpop.permute.xlu0 %5242
        %5244 = vrot.lane.b32.xlu0 %v3892, 126
        %v5245 = vpop.permute.xlu0 %5244
        %5246 = vrot.lane.b32.xlu0 %v3896, 126
        %v5247 = vpop.permute.xlu0 %5246
        %5248 = vrot.lane.b32.xlu0 %v3902, 126
        %v5249 = vpop.permute.xlu0 %5248
        %5250 = vrot.lane.b32.xlu0 %v3906, 126
        %v5251 = vpop.permute.xlu0 %5250
        %5252 = vrot.lane.b32.xlu0 %v3912, 126
        %v5253 = vpop.permute.xlu0 %5252
        %5254 = vrot.lane.b32.xlu0 %v3916, 126
        %v5255 = vpop.permute.xlu0 %5254
        %5256 = vrot.lane.b32.xlu0 %v3922, 126
        %v5257 = vpop.permute.xlu0 %5256
        %5258 = vrot.lane.b32.xlu0 %v3926, 126
        %v5259 = vpop.permute.xlu0 %5258
        %5260 = vrot.lane.b32.xlu0 %v3932, 126
        %v5261 = vpop.permute.xlu0 %5260
        %5262 = vrot.lane.b32.xlu0 %v3936, 126
        %v5263 = vpop.permute.xlu0 %5262
        %5264 = vrot.lane.b32.xlu0 %v3942, 126
        %v5265 = vpop.permute.xlu0 %5264
        %5266 = vrot.lane.b32.xlu0 %v3946, 126
        %v5267 = vpop.permute.xlu0 %5266
        %5268 = vrot.lane.b32.xlu0 %v3952, 126
        %v5269 = vpop.permute.xlu0 %5268
        %5270 = vrot.lane.b32.xlu0 %v3956, 126
        %v5271 = vpop.permute.xlu0 %5270
        %5272 = vrot.lane.b32.xlu0 %v3962, 126
        %v5273 = vpop.permute.xlu0 %5272
        %5274 = vrot.lane.b32.xlu0 %v3966, 126
        %v5275 = vpop.permute.xlu0 %5274
        %vm5276 = vcmp.lt.s32.totalorder %v671, 126
        %v5277 = vsel %vm5276, %v5213, %v5245
        %v5278 = vsel %vm5276, %v5215, %v5247
        %v5279 = vsel %vm5276, %v5217, %v5249
        %v5280 = vsel %vm5276, %v5219, %v5251
        %v5281 = vsel %vm5276, %v5221, %v5253
        %v5282 = vsel %vm5276, %v5223, %v5255
        %v5283 = vsel %vm5276, %v5225, %v5257
        %v5284 = vsel %vm5276, %v5227, %v5259
        %v5285 = vsel %vm5276, %v5229, %v5261
        %v5286 = vsel %vm5276, %v5231, %v5263
        %v5287 = vsel %vm5276, %v5233, %v5265
        %v5288 = vsel %vm5276, %v5235, %v5267
        %v5289 = vsel %vm5276, %v5237, %v5269
        %v5290 = vsel %vm5276, %v5239, %v5271
        %v5291 = vsel %vm5276, %v5241, %v5273
        %v5292 = vsel %vm5276, %v5243, %v5275
        %v5293 = vsel %vm5276, %v5245, %v5213
        %v5294 = vsel %vm5276, %v5247, %v5215
        %v5295 = vsel %vm5276, %v5249, %v5217
        %v5296 = vsel %vm5276, %v5251, %v5219
        %v5297 = vsel %vm5276, %v5253, %v5221
        %v5298 = vsel %vm5276, %v5255, %v5223
        %v5299 = vsel %vm5276, %v5257, %v5225
        %v5300 = vsel %vm5276, %v5259, %v5227
        %v5301 = vsel %vm5276, %v5261, %v5229
        %v5302 = vsel %vm5276, %v5263, %v5231
        %v5303 = vsel %vm5276, %v5265, %v5233
        %v5304 = vsel %vm5276, %v5267, %v5235
        %v5305 = vsel %vm5276, %v5269, %v5237
        %v5306 = vsel %vm5276, %v5271, %v5239
        %v5307 = vsel %vm5276, %v5273, %v5241
        %v5308 = vsel %vm5276, %v5275, %v5243
        %v5309 = vlaneseq
        %v5310 = vshrl.u32 %v5309, 7
        %v5311 = vsub.s32 1, %v5310
        %v5312 = vrot.slane %v4625, %v5311
        %v5313 = vlaneseq
        %v5314 = vshrl.u32 %v5313, 7
        %v5315 = vsub.s32 3, %v5314
        %v5316 = vrot.slane %v4625, %v5315
        %v5317 = vlaneseq
        %v5318 = vshrl.u32 %v5317, 7
        %v5319 = vsub.s32 1, %v5318
        %v5320 = vrot.slane %v5312, %v5319
        %v5321 = vlaneseq
        %v5322 = vshrl.u32 %v5321, 7
        %v5323 = vsub.s32 1, %v5322
        %v5324 = vrot.slane %v5316, %v5323
        %vm5325 = vcmp.eq.s32.totalorder %v5320, 1
        %vm5326 = vcmp.eq.s32.totalorder %v5324, 1
        %v5327 = vsel %vm5325, %v5277, 0.0
        %v5328 = vsel %vm5326, %v5293, 0.0
        %v5329 = vsel %vm5325, %v5278, 0.0
        %v5330 = vsel %vm5326, %v5294, 0.0
        %v5331 = vsel %vm5325, %v5279, 0.0
        %v5332 = vsel %vm5326, %v5295, 0.0
        %v5333 = vsel %vm5325, %v5280, 0.0
        %v5334 = vsel %vm5326, %v5296, 0.0
        %v5335 = vsel %vm5325, %v5281, 0.0
        %v5336 = vsel %vm5326, %v5297, 0.0
        %v5337 = vsel %vm5325, %v5282, 0.0
        %v5338 = vsel %vm5326, %v5298, 0.0
        %v5339 = vsel %vm5325, %v5283, 0.0
        %v5340 = vsel %vm5326, %v5299, 0.0
        %v5341 = vsel %vm5325, %v5284, 0.0
        %v5342 = vsel %vm5326, %v5300, 0.0
        %v5343 = vsel %vm5325, %v5285, 0.0
        %v5344 = vsel %vm5326, %v5301, 0.0
        %v5345 = vsel %vm5325, %v5286, 0.0
        %v5346 = vsel %vm5326, %v5302, 0.0
        %v5347 = vsel %vm5325, %v5287, 0.0
        %v5348 = vsel %vm5326, %v5303, 0.0
        %v5349 = vsel %vm5325, %v5288, 0.0
        %v5350 = vsel %vm5326, %v5304, 0.0
        %v5351 = vsel %vm5325, %v5289, 0.0
        %v5352 = vsel %vm5326, %v5305, 0.0
        %v5353 = vsel %vm5325, %v5290, 0.0
        %v5354 = vsel %vm5326, %v5306, 0.0
        %v5355 = vsel %vm5325, %v5291, 0.0
        %v5356 = vsel %vm5326, %v5307, 0.0
        %v5357 = vsel %vm5325, %v5292, 0.0
        %v5358 = vsel %vm5326, %v5308, 0.0
        %5359 = vset.pattern.permute.xlu0 5
        %5360 = vperm.xlu0 %5359, %v3968
        %v5361 = vpop.permute.xlu0 %5360
        %5363 = vset.pattern.permute.xlu0 5
        %5364 = vperm.xlu0 %5363, %v3969
        %v5365 = vpop.permute.xlu0 %5364
        %5367 = vset.pattern.permute.xlu0 5
        %5368 = vperm.xlu0 %5367, %v3970
        %v5369 = vpop.permute.xlu0 %5368
        %5371 = vset.pattern.permute.xlu0 5
        %5372 = vperm.xlu0 %5371, %v3971
        %v5373 = vpop.permute.xlu0 %5372
        %5375 = vset.pattern.permute.xlu0 5
        %5376 = vperm.xlu0 %5375, %v3972
        %v5377 = vpop.permute.xlu0 %5376
        %5379 = vset.pattern.permute.xlu0 5
        %5380 = vperm.xlu0 %5379, %v3973
        %v5381 = vpop.permute.xlu0 %5380
        %5383 = vset.pattern.permute.xlu0 5
        %5384 = vperm.xlu0 %5383, %v3974
        %v5385 = vpop.permute.xlu0 %5384
        %5387 = vset.pattern.permute.xlu0 5
        %5388 = vperm.xlu0 %5387, %v3975
        %v5389 = vpop.permute.xlu0 %5388
        %5391 = vset.pattern.permute.xlu0 5
        %5392 = vperm.xlu0 %5391, %v3976
        %v5393 = vpop.permute.xlu0 %5392
        %5395 = vset.pattern.permute.xlu0 5
        %5396 = vperm.xlu0 %5395, %v3977
        %v5397 = vpop.permute.xlu0 %5396
        %5399 = vset.pattern.permute.xlu0 5
        %5400 = vperm.xlu0 %5399, %v3978
        %v5401 = vpop.permute.xlu0 %5400
        %5403 = vset.pattern.permute.xlu0 5
        %5404 = vperm.xlu0 %5403, %v3979
        %v5405 = vpop.permute.xlu0 %5404
        %5407 = vset.pattern.permute.xlu0 5
        %5408 = vperm.xlu0 %5407, %v3980
        %v5409 = vpop.permute.xlu0 %5408
        %5411 = vset.pattern.permute.xlu0 5
        %5412 = vperm.xlu0 %5411, %v3981
        %v5413 = vpop.permute.xlu0 %5412
        %5415 = vset.pattern.permute.xlu0 5
        %5416 = vperm.xlu0 %5415, %v3982
        %v5417 = vpop.permute.xlu0 %5416
        %5419 = vset.pattern.permute.xlu0 5
        %5420 = vperm.xlu0 %5419, %v3983
        %v5421 = vpop.permute.xlu0 %5420
        %v5423 = vmul.f32 %v5327, %v5361
        %v5424 = vmul.f32 %v5328, %v5361
        %v5425 = vmul.f32 %v5329, %v5365
        %v5426 = vmul.f32 %v5330, %v5365
        %v5427 = vmul.f32 %v5331, %v5369
        %v5428 = vmul.f32 %v5332, %v5369
        %v5429 = vmul.f32 %v5333, %v5373
        %v5430 = vmul.f32 %v5334, %v5373
        %v5431 = vmul.f32 %v5335, %v5377
        %v5432 = vmul.f32 %v5336, %v5377
        %v5433 = vmul.f32 %v5337, %v5381
        %v5434 = vmul.f32 %v5338, %v5381
        %v5435 = vmul.f32 %v5339, %v5385
        %v5436 = vmul.f32 %v5340, %v5385
        %v5437 = vmul.f32 %v5341, %v5389
        %v5438 = vmul.f32 %v5342, %v5389
        %v5439 = vmul.f32 %v5343, %v5393
        %v5440 = vmul.f32 %v5344, %v5393
        %v5441 = vmul.f32 %v5345, %v5397
        %v5442 = vmul.f32 %v5346, %v5397
        %v5443 = vmul.f32 %v5347, %v5401
        %v5444 = vmul.f32 %v5348, %v5401
        %v5445 = vmul.f32 %v5349, %v5405
        %v5446 = vmul.f32 %v5350, %v5405
        %v5447 = vmul.f32 %v5351, %v5409
        %v5448 = vmul.f32 %v5352, %v5409
        %v5449 = vmul.f32 %v5353, %v5413
        %v5450 = vmul.f32 %v5354, %v5413
        %v5451 = vmul.f32 %v5355, %v5417
        %v5452 = vmul.f32 %v5356, %v5417
        %v5453 = vmul.f32 %v5357, %v5421
        %v5454 = vmul.f32 %v5358, %v5421
        %v5455 = vadd.f32 %v5180, %v5423
        %v5456 = vadd.f32 %v5181, %v5424
        %v5457 = vadd.f32 %v5182, %v5425
        %v5458 = vadd.f32 %v5183, %v5426
        %v5459 = vadd.f32 %v5184, %v5427
        %v5460 = vadd.f32 %v5185, %v5428
        %v5461 = vadd.f32 %v5186, %v5429
        %v5462 = vadd.f32 %v5187, %v5430
        %v5463 = vadd.f32 %v5188, %v5431
        %v5464 = vadd.f32 %v5189, %v5432
        %v5465 = vadd.f32 %v5190, %v5433
        %v5466 = vadd.f32 %v5191, %v5434
        %v5467 = vadd.f32 %v5192, %v5435
        %v5468 = vadd.f32 %v5193, %v5436
        %v5469 = vadd.f32 %v5194, %v5437
        %v5470 = vadd.f32 %v5195, %v5438
        %v5471 = vadd.f32 %v5196, %v5439
        %v5472 = vadd.f32 %v5197, %v5440
        %v5473 = vadd.f32 %v5198, %v5441
        %v5474 = vadd.f32 %v5199, %v5442
        %v5475 = vadd.f32 %v5200, %v5443
        %v5476 = vadd.f32 %v5201, %v5444
        %v5477 = vadd.f32 %v5202, %v5445
        %v5478 = vadd.f32 %v5203, %v5446
        %v5479 = vadd.f32 %v5204, %v5447
        %v5480 = vadd.f32 %v5205, %v5448
        %v5481 = vadd.f32 %v5206, %v5449
        %v5482 = vadd.f32 %v5207, %v5450
        %v5483 = vadd.f32 %v5208, %v5451
        %v5484 = vadd.f32 %v5209, %v5452
        %v5485 = vadd.f32 %v5210, %v5453
        %v5486 = vadd.f32 %v5211, %v5454
        %5487 = vrot.lane.b32.xlu0 %v3890, 98
        %v5488 = vpop.permute.xlu0 %5487
        %5489 = vrot.lane.b32.xlu0 %v3894, 98
        %v5490 = vpop.permute.xlu0 %5489
        %5491 = vrot.lane.b32.xlu0 %v3900, 98
        %v5492 = vpop.permute.xlu0 %5491
        %5493 = vrot.lane.b32.xlu0 %v3904, 98
        %v5494 = vpop.permute.xlu0 %5493
        %5495 = vrot.lane.b32.xlu0 %v3910, 98
        %v5496 = vpop.permute.xlu0 %5495
        %5497 = vrot.lane.b32.xlu0 %v3914, 98
        %v5498 = vpop.permute.xlu0 %5497
        %5499 = vrot.lane.b32.xlu0 %v3920, 98
        %v5500 = vpop.permute.xlu0 %5499
        %5501 = vrot.lane.b32.xlu0 %v3924, 98
        %v5502 = vpop.permute.xlu0 %5501
        %5503 = vrot.lane.b32.xlu0 %v3930, 98
        %v5504 = vpop.permute.xlu0 %5503
        %5505 = vrot.lane.b32.xlu0 %v3934, 98
        %v5506 = vpop.permute.xlu0 %5505
        %5507 = vrot.lane.b32.xlu0 %v3940, 98
        %v5508 = vpop.permute.xlu0 %5507
        %5509 = vrot.lane.b32.xlu0 %v3944, 98
        %v5510 = vpop.permute.xlu0 %5509
        %5511 = vrot.lane.b32.xlu0 %v3950, 98
        %v5512 = vpop.permute.xlu0 %5511
        %5513 = vrot.lane.b32.xlu0 %v3954, 98
        %v5514 = vpop.permute.xlu0 %5513
        %5515 = vrot.lane.b32.xlu0 %v3960, 98
        %v5516 = vpop.permute.xlu0 %5515
        %5517 = vrot.lane.b32.xlu0 %v3964, 98
        %v5518 = vpop.permute.xlu0 %5517
        %5519 = vrot.lane.b32.xlu0 %v3892, 98
        %v5520 = vpop.permute.xlu0 %5519
        %5521 = vrot.lane.b32.xlu0 %v3896, 98
        %v5522 = vpop.permute.xlu0 %5521
        %5523 = vrot.lane.b32.xlu0 %v3902, 98
        %v5524 = vpop.permute.xlu0 %5523
        %5525 = vrot.lane.b32.xlu0 %v3906, 98
        %v5526 = vpop.permute.xlu0 %5525
        %5527 = vrot.lane.b32.xlu0 %v3912, 98
        %v5528 = vpop.permute.xlu0 %5527
        %5529 = vrot.lane.b32.xlu0 %v3916, 98
        %v5530 = vpop.permute.xlu0 %5529
        %5531 = vrot.lane.b32.xlu0 %v3922, 98
        %v5532 = vpop.permute.xlu0 %5531
        %5533 = vrot.lane.b32.xlu0 %v3926, 98
        %v5534 = vpop.permute.xlu0 %5533
        %5535 = vrot.lane.b32.xlu0 %v3932, 98
        %v5536 = vpop.permute.xlu0 %5535
        %5537 = vrot.lane.b32.xlu0 %v3936, 98
        %v5538 = vpop.permute.xlu0 %5537
        %5539 = vrot.lane.b32.xlu0 %v3942, 98
        %v5540 = vpop.permute.xlu0 %5539
        %5541 = vrot.lane.b32.xlu0 %v3946, 98
        %v5542 = vpop.permute.xlu0 %5541
        %5543 = vrot.lane.b32.xlu0 %v3952, 98
        %v5544 = vpop.permute.xlu0 %5543
        %5545 = vrot.lane.b32.xlu0 %v3956, 98
        %v5546 = vpop.permute.xlu0 %5545
        %5547 = vrot.lane.b32.xlu0 %v3962, 98
        %v5548 = vpop.permute.xlu0 %5547
        %5549 = vrot.lane.b32.xlu0 %v3966, 98
        %v5550 = vpop.permute.xlu0 %5549
        %vm5551 = vcmp.lt.s32.totalorder %v671, 98
        %v5552 = vsel %vm5551, %v5488, %v5520
        %v5553 = vsel %vm5551, %v5490, %v5522
        %v5554 = vsel %vm5551, %v5492, %v5524
        %v5555 = vsel %vm5551, %v5494, %v5526
        %v5556 = vsel %vm5551, %v5496, %v5528
        %v5557 = vsel %vm5551, %v5498, %v5530
        %v5558 = vsel %vm5551, %v5500, %v5532
        %v5559 = vsel %vm5551, %v5502, %v5534
        %v5560 = vsel %vm5551, %v5504, %v5536
        %v5561 = vsel %vm5551, %v5506, %v5538
        %v5562 = vsel %vm5551, %v5508, %v5540
        %v5563 = vsel %vm5551, %v5510, %v5542
        %v5564 = vsel %vm5551, %v5512, %v5544
        %v5565 = vsel %vm5551, %v5514, %v5546
        %v5566 = vsel %vm5551, %v5516, %v5548
        %v5567 = vsel %vm5551, %v5518, %v5550
        %v5568 = vsel %vm5551, %v5520, %v5488
        %v5569 = vsel %vm5551, %v5522, %v5490
        %v5570 = vsel %vm5551, %v5524, %v5492
        %v5571 = vsel %vm5551, %v5526, %v5494
        %v5572 = vsel %vm5551, %v5528, %v5496
        %v5573 = vsel %vm5551, %v5530, %v5498
        %v5574 = vsel %vm5551, %v5532, %v5500
        %v5575 = vsel %vm5551, %v5534, %v5502
        %v5576 = vsel %vm5551, %v5536, %v5504
        %v5577 = vsel %vm5551, %v5538, %v5506
        %v5578 = vsel %vm5551, %v5540, %v5508
        %v5579 = vsel %vm5551, %v5542, %v5510
        %v5580 = vsel %vm5551, %v5544, %v5512
        %v5581 = vsel %vm5551, %v5546, %v5514
        %v5582 = vsel %vm5551, %v5548, %v5516
        %v5583 = vsel %vm5551, %v5550, %v5518
        %vm5584 = vcmp.lt.s32.totalorder %v395, 224
        %vm5585 = vmand %vm5584, %vm4086
        %v5586 = vsel %vm5585, 1, 0
        %v5587 = vlaneseq
        %v5588 = vshrl.u32 %v5587, 7
        %v5589 = vsub.s32 0, %v5588
        %v5590 = vrot.slane %v5586, %v5589
        %v5591 = vlaneseq
        %v5592 = vshrl.u32 %v5591, 7
        %v5593 = vsub.s32 2, %v5592
        %v5594 = vrot.slane %v5586, %v5593
        %v5595 = vlaneseq
        %v5596 = vshrl.u32 %v5595, 7
        %v5597 = vsub.s32 0, %v5596
        %v5598 = vrot.slane %v5590, %v5597
        %v5599 = vlaneseq
        %v5600 = vshrl.u32 %v5599, 7
        %v5601 = vsub.s32 0, %v5600
        %v5602 = vrot.slane %v5594, %v5601
        %vm5603 = vcmp.eq.s32.totalorder %v5598, 1
        %vm5604 = vcmp.eq.s32.totalorder %v5602, 1
        %v5605 = vsel %vm5603, %v5552, 0.0
        %v5606 = vsel %vm5604, %v5568, 0.0
        %v5607 = vsel %vm5603, %v5553, 0.0
        %v5608 = vsel %vm5604, %v5569, 0.0
        %v5609 = vsel %vm5603, %v5554, 0.0
        %v5610 = vsel %vm5604, %v5570, 0.0
        %v5611 = vsel %vm5603, %v5555, 0.0
        %v5612 = vsel %vm5604, %v5571, 0.0
        %v5613 = vsel %vm5603, %v5556, 0.0
        %v5614 = vsel %vm5604, %v5572, 0.0
        %v5615 = vsel %vm5603, %v5557, 0.0
        %v5616 = vsel %vm5604, %v5573, 0.0
        %v5617 = vsel %vm5603, %v5558, 0.0
        %v5618 = vsel %vm5604, %v5574, 0.0
        %v5619 = vsel %vm5603, %v5559, 0.0
        %v5620 = vsel %vm5604, %v5575, 0.0
        %v5621 = vsel %vm5603, %v5560, 0.0
        %v5622 = vsel %vm5604, %v5576, 0.0
        %v5623 = vsel %vm5603, %v5561, 0.0
        %v5624 = vsel %vm5604, %v5577, 0.0
        %v5625 = vsel %vm5603, %v5562, 0.0
        %v5626 = vsel %vm5604, %v5578, 0.0
        %v5627 = vsel %vm5603, %v5563, 0.0
        %v5628 = vsel %vm5604, %v5579, 0.0
        %v5629 = vsel %vm5603, %v5564, 0.0
        %v5630 = vsel %vm5604, %v5580, 0.0
        %v5631 = vsel %vm5603, %v5565, 0.0
        %v5632 = vsel %vm5604, %v5581, 0.0
        %v5633 = vsel %vm5603, %v5566, 0.0
        %v5634 = vsel %vm5604, %v5582, 0.0
        %v5635 = vsel %vm5603, %v5567, 0.0
        %v5636 = vsel %vm5604, %v5583, 0.0
        %5637 = vset.pattern.permute.xlu0 6
        %5638 = vperm.xlu0 %5637, %v3968
        %v5639 = vpop.permute.xlu0 %5638
        %5641 = vset.pattern.permute.xlu0 6
        %5642 = vperm.xlu0 %5641, %v3969
        %v5643 = vpop.permute.xlu0 %5642
        %5645 = vset.pattern.permute.xlu0 6
        %5646 = vperm.xlu0 %5645, %v3970
        %v5647 = vpop.permute.xlu0 %5646
        %5649 = vset.pattern.permute.xlu0 6
        %5650 = vperm.xlu0 %5649, %v3971
        %v5651 = vpop.permute.xlu0 %5650
        %5653 = vset.pattern.permute.xlu0 6
        %5654 = vperm.xlu0 %5653, %v3972
        %v5655 = vpop.permute.xlu0 %5654
        %5657 = vset.pattern.permute.xlu0 6
        %5658 = vperm.xlu0 %5657, %v3973
        %v5659 = vpop.permute.xlu0 %5658
        %5661 = vset.pattern.permute.xlu0 6
        %5662 = vperm.xlu0 %5661, %v3974
        %v5663 = vpop.permute.xlu0 %5662
        %5665 = vset.pattern.permute.xlu0 6
        %5666 = vperm.xlu0 %5665, %v3975
        %v5667 = vpop.permute.xlu0 %5666
        %5669 = vset.pattern.permute.xlu0 6
        %5670 = vperm.xlu0 %5669, %v3976
        %v5671 = vpop.permute.xlu0 %5670
        %5673 = vset.pattern.permute.xlu0 6
        %5674 = vperm.xlu0 %5673, %v3977
        %v5675 = vpop.permute.xlu0 %5674
        %5677 = vset.pattern.permute.xlu0 6
        %5678 = vperm.xlu0 %5677, %v3978
        %v5679 = vpop.permute.xlu0 %5678
        %5681 = vset.pattern.permute.xlu0 6
        %5682 = vperm.xlu0 %5681, %v3979
        %v5683 = vpop.permute.xlu0 %5682
        %5685 = vset.pattern.permute.xlu0 6
        %5686 = vperm.xlu0 %5685, %v3980
        %v5687 = vpop.permute.xlu0 %5686
        %5689 = vset.pattern.permute.xlu0 6
        %5690 = vperm.xlu0 %5689, %v3981
        %v5691 = vpop.permute.xlu0 %5690
        %5693 = vset.pattern.permute.xlu0 6
        %5694 = vperm.xlu0 %5693, %v3982
        %v5695 = vpop.permute.xlu0 %5694
        %5697 = vset.pattern.permute.xlu0 6
        %5698 = vperm.xlu0 %5697, %v3983
        %v5699 = vpop.permute.xlu0 %5698
        %v5701 = vmul.f32 %v5605, %v5639
        %v5702 = vmul.f32 %v5606, %v5639
        %v5703 = vmul.f32 %v5607, %v5643
        %v5704 = vmul.f32 %v5608, %v5643
        %v5705 = vmul.f32 %v5609, %v5647
        %v5706 = vmul.f32 %v5610, %v5647
        %v5707 = vmul.f32 %v5611, %v5651
        %v5708 = vmul.f32 %v5612, %v5651
        %v5709 = vmul.f32 %v5613, %v5655
        %v5710 = vmul.f32 %v5614, %v5655
        %v5711 = vmul.f32 %v5615, %v5659
        %v5712 = vmul.f32 %v5616, %v5659
        %v5713 = vmul.f32 %v5617, %v5663
        %v5714 = vmul.f32 %v5618, %v5663
        %v5715 = vmul.f32 %v5619, %v5667
        %v5716 = vmul.f32 %v5620, %v5667
        %v5717 = vmul.f32 %v5621, %v5671
        %v5718 = vmul.f32 %v5622, %v5671
        %v5719 = vmul.f32 %v5623, %v5675
        %v5720 = vmul.f32 %v5624, %v5675
        %v5721 = vmul.f32 %v5625, %v5679
        %v5722 = vmul.f32 %v5626, %v5679
        %v5723 = vmul.f32 %v5627, %v5683
        %v5724 = vmul.f32 %v5628, %v5683
        %v5725 = vmul.f32 %v5629, %v5687
        %v5726 = vmul.f32 %v5630, %v5687
        %v5727 = vmul.f32 %v5631, %v5691
        %v5728 = vmul.f32 %v5632, %v5691
        %v5729 = vmul.f32 %v5633, %v5695
        %v5730 = vmul.f32 %v5634, %v5695
        %v5731 = vmul.f32 %v5635, %v5699
        %v5732 = vmul.f32 %v5636, %v5699
        %v5733 = vadd.f32 %v5455, %v5701
        %v5734 = vadd.f32 %v5456, %v5702
        %v5735 = vadd.f32 %v5457, %v5703
        %v5736 = vadd.f32 %v5458, %v5704
        %v5737 = vadd.f32 %v5459, %v5705
        %v5738 = vadd.f32 %v5460, %v5706
        %v5739 = vadd.f32 %v5461, %v5707
        %v5740 = vadd.f32 %v5462, %v5708
        %v5741 = vadd.f32 %v5463, %v5709
        %v5742 = vadd.f32 %v5464, %v5710
        %v5743 = vadd.f32 %v5465, %v5711
        %v5744 = vadd.f32 %v5466, %v5712
        %v5745 = vadd.f32 %v5467, %v5713
        %v5746 = vadd.f32 %v5468, %v5714
        %v5747 = vadd.f32 %v5469, %v5715
        %v5748 = vadd.f32 %v5470, %v5716
        %v5749 = vadd.f32 %v5471, %v5717
        %v5750 = vadd.f32 %v5472, %v5718
        %v5751 = vadd.f32 %v5473, %v5719
        %v5752 = vadd.f32 %v5474, %v5720
        %v5753 = vadd.f32 %v5475, %v5721
        %v5754 = vadd.f32 %v5476, %v5722
        %v5755 = vadd.f32 %v5477, %v5723
        %v5756 = vadd.f32 %v5478, %v5724
        %v5757 = vadd.f32 %v5479, %v5725
        %v5758 = vadd.f32 %v5480, %v5726
        %v5759 = vadd.f32 %v5481, %v5727
        %v5760 = vadd.f32 %v5482, %v5728
        %v5761 = vadd.f32 %v5483, %v5729
        %v5762 = vadd.f32 %v5484, %v5730
        %v5763 = vadd.f32 %v5485, %v5731
        %v5764 = vadd.f32 %v5486, %v5732
        %5765 = vrot.lane.b32.xlu0 %v3890, 96
        %v5766 = vpop.permute.xlu0 %5765
        %5767 = vrot.lane.b32.xlu0 %v3894, 96
        %v5768 = vpop.permute.xlu0 %5767
        %5769 = vrot.lane.b32.xlu0 %v3900, 96
        %v5770 = vpop.permute.xlu0 %5769
        %5771 = vrot.lane.b32.xlu0 %v3904, 96
        %v5772 = vpop.permute.xlu0 %5771
        %5773 = vrot.lane.b32.xlu0 %v3910, 96
        %v5774 = vpop.permute.xlu0 %5773
        %5775 = vrot.lane.b32.xlu0 %v3914, 96
        %v5776 = vpop.permute.xlu0 %5775
        %5777 = vrot.lane.b32.xlu0 %v3920, 96
        %v5778 = vpop.permute.xlu0 %5777
        %5779 = vrot.lane.b32.xlu0 %v3924, 96
        %v5780 = vpop.permute.xlu0 %5779
        %5781 = vrot.lane.b32.xlu0 %v3930, 96
        %v5782 = vpop.permute.xlu0 %5781
        %5783 = vrot.lane.b32.xlu0 %v3934, 96
        %v5784 = vpop.permute.xlu0 %5783
        %5785 = vrot.lane.b32.xlu0 %v3940, 96
        %v5786 = vpop.permute.xlu0 %5785
        %5787 = vrot.lane.b32.xlu0 %v3944, 96
        %v5788 = vpop.permute.xlu0 %5787
        %5789 = vrot.lane.b32.xlu0 %v3950, 96
        %v5790 = vpop.permute.xlu0 %5789
        %5791 = vrot.lane.b32.xlu0 %v3954, 96
        %v5792 = vpop.permute.xlu0 %5791
        %5793 = vrot.lane.b32.xlu0 %v3960, 96
        %v5794 = vpop.permute.xlu0 %5793
        %5795 = vrot.lane.b32.xlu0 %v3964, 96
        %v5796 = vpop.permute.xlu0 %5795
        %5797 = vrot.lane.b32.xlu0 %v3892, 96
        %v5798 = vpop.permute.xlu0 %5797
        %5799 = vrot.lane.b32.xlu0 %v3896, 96
        %v5800 = vpop.permute.xlu0 %5799
        %5801 = vrot.lane.b32.xlu0 %v3902, 96
        %v5802 = vpop.permute.xlu0 %5801
        %5803 = vrot.lane.b32.xlu0 %v3906, 96
        %v5804 = vpop.permute.xlu0 %5803
        %5805 = vrot.lane.b32.xlu0 %v3912, 96
        %v5806 = vpop.permute.xlu0 %5805
        %5807 = vrot.lane.b32.xlu0 %v3916, 96
        %v5808 = vpop.permute.xlu0 %5807
        %5809 = vrot.lane.b32.xlu0 %v3922, 96
        %v5810 = vpop.permute.xlu0 %5809
        %5811 = vrot.lane.b32.xlu0 %v3926, 96
        %v5812 = vpop.permute.xlu0 %5811
        %5813 = vrot.lane.b32.xlu0 %v3932, 96
        %v5814 = vpop.permute.xlu0 %5813
        %5815 = vrot.lane.b32.xlu0 %v3936, 96
        %v5816 = vpop.permute.xlu0 %5815
        %5817 = vrot.lane.b32.xlu0 %v3942, 96
        %v5818 = vpop.permute.xlu0 %5817
        %5819 = vrot.lane.b32.xlu0 %v3946, 96
        %v5820 = vpop.permute.xlu0 %5819
        %5821 = vrot.lane.b32.xlu0 %v3952, 96
        %v5822 = vpop.permute.xlu0 %5821
        %5823 = vrot.lane.b32.xlu0 %v3956, 96
        %v5824 = vpop.permute.xlu0 %5823
        %5825 = vrot.lane.b32.xlu0 %v3962, 96
        %v5826 = vpop.permute.xlu0 %5825
        %5827 = vrot.lane.b32.xlu0 %v3966, 96
        %v5828 = vpop.permute.xlu0 %5827
        %vm5829 = vcmp.lt.s32.totalorder %v671, 96
        %v5830 = vsel %vm5829, %v5766, %v5798
        %v5831 = vsel %vm5829, %v5768, %v5800
        %v5832 = vsel %vm5829, %v5770, %v5802
        %v5833 = vsel %vm5829, %v5772, %v5804
        %v5834 = vsel %vm5829, %v5774, %v5806
        %v5835 = vsel %vm5829, %v5776, %v5808
        %v5836 = vsel %vm5829, %v5778, %v5810
        %v5837 = vsel %vm5829, %v5780, %v5812
        %v5838 = vsel %vm5829, %v5782, %v5814
        %v5839 = vsel %vm5829, %v5784, %v5816
        %v5840 = vsel %vm5829, %v5786, %v5818
        %v5841 = vsel %vm5829, %v5788, %v5820
        %v5842 = vsel %vm5829, %v5790, %v5822
        %v5843 = vsel %vm5829, %v5792, %v5824
        %v5844 = vsel %vm5829, %v5794, %v5826
        %v5845 = vsel %vm5829, %v5796, %v5828
        %v5846 = vsel %vm5829, %v5798, %v5766
        %v5847 = vsel %vm5829, %v5800, %v5768
        %v5848 = vsel %vm5829, %v5802, %v5770
        %v5849 = vsel %vm5829, %v5804, %v5772
        %v5850 = vsel %vm5829, %v5806, %v5774
        %v5851 = vsel %vm5829, %v5808, %v5776
        %v5852 = vsel %vm5829, %v5810, %v5778
        %v5853 = vsel %vm5829, %v5812, %v5780
        %v5854 = vsel %vm5829, %v5814, %v5782
        %v5855 = vsel %vm5829, %v5816, %v5784
        %v5856 = vsel %vm5829, %v5818, %v5786
        %v5857 = vsel %vm5829, %v5820, %v5788
        %v5858 = vsel %vm5829, %v5822, %v5790
        %v5859 = vsel %vm5829, %v5824, %v5792
        %v5860 = vsel %vm5829, %v5826, %v5794
        %v5861 = vsel %vm5829, %v5828, %v5796
        %v5862 = vsel %vm5584, 1, 0
        %v5863 = vlaneseq
        %v5864 = vshrl.u32 %v5863, 7
        %v5865 = vsub.s32 0, %v5864
        %v5866 = vrot.slane %v5862, %v5865
        %v5867 = vlaneseq
        %v5868 = vshrl.u32 %v5867, 7
        %v5869 = vsub.s32 2, %v5868
        %v5870 = vrot.slane %v5862, %v5869
        %v5871 = vlaneseq
        %v5872 = vshrl.u32 %v5871, 7
        %v5873 = vsub.s32 0, %v5872
        %v5874 = vrot.slane %v5866, %v5873
        %v5875 = vlaneseq
        %v5876 = vshrl.u32 %v5875, 7
        %v5877 = vsub.s32 0, %v5876
        %v5878 = vrot.slane %v5870, %v5877
        %vm5879 = vcmp.eq.s32.totalorder %v5874, 1
        %vm5880 = vcmp.eq.s32.totalorder %v5878, 1
        %v5881 = vsel %vm5879, %v5830, 0.0
        %v5882 = vsel %vm5880, %v5846, 0.0
        %v5883 = vsel %vm5879, %v5831, 0.0
        %v5884 = vsel %vm5880, %v5847, 0.0
        %v5885 = vsel %vm5879, %v5832, 0.0
        %v5886 = vsel %vm5880, %v5848, 0.0
        %v5887 = vsel %vm5879, %v5833, 0.0
        %v5888 = vsel %vm5880, %v5849, 0.0
        %v5889 = vsel %vm5879, %v5834, 0.0
        %v5890 = vsel %vm5880, %v5850, 0.0
        %v5891 = vsel %vm5879, %v5835, 0.0
        %v5892 = vsel %vm5880, %v5851, 0.0
        %v5893 = vsel %vm5879, %v5836, 0.0
        %v5894 = vsel %vm5880, %v5852, 0.0
        %v5895 = vsel %vm5879, %v5837, 0.0
        %v5896 = vsel %vm5880, %v5853, 0.0
        %v5897 = vsel %vm5879, %v5838, 0.0
        %v5898 = vsel %vm5880, %v5854, 0.0
        %v5899 = vsel %vm5879, %v5839, 0.0
        %v5900 = vsel %vm5880, %v5855, 0.0
        %v5901 = vsel %vm5879, %v5840, 0.0
        %v5902 = vsel %vm5880, %v5856, 0.0
        %v5903 = vsel %vm5879, %v5841, 0.0
        %v5904 = vsel %vm5880, %v5857, 0.0
        %v5905 = vsel %vm5879, %v5842, 0.0
        %v5906 = vsel %vm5880, %v5858, 0.0
        %v5907 = vsel %vm5879, %v5843, 0.0
        %v5908 = vsel %vm5880, %v5859, 0.0
        %v5909 = vsel %vm5879, %v5844, 0.0
        %v5910 = vsel %vm5880, %v5860, 0.0
        %v5911 = vsel %vm5879, %v5845, 0.0
        %v5912 = vsel %vm5880, %v5861, 0.0
        %5913 = vset.pattern.permute.xlu0 7
        %5914 = vperm.xlu0 %5913, %v3968
        %v5915 = vpop.permute.xlu0 %5914
        %5917 = vset.pattern.permute.xlu0 7
        %5918 = vperm.xlu0 %5917, %v3969
        %v5919 = vpop.permute.xlu0 %5918
        %5921 = vset.pattern.permute.xlu0 7
        %5922 = vperm.xlu0 %5921, %v3970
        %v5923 = vpop.permute.xlu0 %5922
        %5925 = vset.pattern.permute.xlu0 7
        %5926 = vperm.xlu0 %5925, %v3971
        %v5927 = vpop.permute.xlu0 %5926
        %5929 = vset.pattern.permute.xlu0 7
        %5930 = vperm.xlu0 %5929, %v3972
        %v5931 = vpop.permute.xlu0 %5930
        %5933 = vset.pattern.permute.xlu0 7
        %5934 = vperm.xlu0 %5933, %v3973
        %v5935 = vpop.permute.xlu0 %5934
        %5937 = vset.pattern.permute.xlu0 7
        %5938 = vperm.xlu0 %5937, %v3974
        %v5939 = vpop.permute.xlu0 %5938
        %5941 = vset.pattern.permute.xlu0 7
        %5942 = vperm.xlu0 %5941, %v3975
        %v5943 = vpop.permute.xlu0 %5942
        %5945 = vset.pattern.permute.xlu0 7
        %5946 = vperm.xlu0 %5945, %v3976
        %v5947 = vpop.permute.xlu0 %5946
        %5949 = vset.pattern.permute.xlu0 7
        %5950 = vperm.xlu0 %5949, %v3977
        %v5951 = vpop.permute.xlu0 %5950
        %5953 = vset.pattern.permute.xlu0 7
        %5954 = vperm.xlu0 %5953, %v3978
        %v5955 = vpop.permute.xlu0 %5954
        %5957 = vset.pattern.permute.xlu0 7
        %5958 = vperm.xlu0 %5957, %v3979
        %v5959 = vpop.permute.xlu0 %5958
        %5961 = vset.pattern.permute.xlu0 7
        %5962 = vperm.xlu0 %5961, %v3980
        %v5963 = vpop.permute.xlu0 %5962
        %5965 = vset.pattern.permute.xlu0 7
        %5966 = vperm.xlu0 %5965, %v3981
        %v5967 = vpop.permute.xlu0 %5966
        %5969 = vset.pattern.permute.xlu0 7
        %5970 = vperm.xlu0 %5969, %v3982
        %v5971 = vpop.permute.xlu0 %5970
        %5973 = vset.pattern.permute.xlu0 7
        %5974 = vperm.xlu0 %5973, %v3983
        %v5975 = vpop.permute.xlu0 %5974
        %v5977 = vmul.f32 %v5881, %v5915
        %v5978 = vmul.f32 %v5882, %v5915
        %v5979 = vmul.f32 %v5883, %v5919
        %v5980 = vmul.f32 %v5884, %v5919
        %v5981 = vmul.f32 %v5885, %v5923
        %v5982 = vmul.f32 %v5886, %v5923
        %v5983 = vmul.f32 %v5887, %v5927
        %v5984 = vmul.f32 %v5888, %v5927
        %v5985 = vmul.f32 %v5889, %v5931
        %v5986 = vmul.f32 %v5890, %v5931
        %v5987 = vmul.f32 %v5891, %v5935
        %v5988 = vmul.f32 %v5892, %v5935
        %v5989 = vmul.f32 %v5893, %v5939
        %v5990 = vmul.f32 %v5894, %v5939
        %v5991 = vmul.f32 %v5895, %v5943
        %v5992 = vmul.f32 %v5896, %v5943
        %v5993 = vmul.f32 %v5897, %v5947
        %v5994 = vmul.f32 %v5898, %v5947
        %v5995 = vmul.f32 %v5899, %v5951
        %v5996 = vmul.f32 %v5900, %v5951
        %v5997 = vmul.f32 %v5901, %v5955
        %v5998 = vmul.f32 %v5902, %v5955
        %v5999 = vmul.f32 %v5903, %v5959
        %v6000 = vmul.f32 %v5904, %v5959
        %v6001 = vmul.f32 %v5905, %v5963
        %v6002 = vmul.f32 %v5906, %v5963
        %v6003 = vmul.f32 %v5907, %v5967
        %v6004 = vmul.f32 %v5908, %v5967
        %v6005 = vmul.f32 %v5909, %v5971
        %v6006 = vmul.f32 %v5910, %v5971
        %v6007 = vmul.f32 %v5911, %v5975
        %v6008 = vmul.f32 %v5912, %v5975
        %v6009 = vadd.f32 %v5733, %v5977
        %v6010 = vadd.f32 %v5734, %v5978
        %v6011 = vadd.f32 %v5735, %v5979
        %v6012 = vadd.f32 %v5736, %v5980
        %v6013 = vadd.f32 %v5737, %v5981
        %v6014 = vadd.f32 %v5738, %v5982
        %v6015 = vadd.f32 %v5739, %v5983
        %v6016 = vadd.f32 %v5740, %v5984
        %v6017 = vadd.f32 %v5741, %v5985
        %v6018 = vadd.f32 %v5742, %v5986
        %v6019 = vadd.f32 %v5743, %v5987
        %v6020 = vadd.f32 %v5744, %v5988
        %v6021 = vadd.f32 %v5745, %v5989
        %v6022 = vadd.f32 %v5746, %v5990
        %v6023 = vadd.f32 %v5747, %v5991
        %v6024 = vadd.f32 %v5748, %v5992
        %v6025 = vadd.f32 %v5749, %v5993
        %v6026 = vadd.f32 %v5750, %v5994
        %v6027 = vadd.f32 %v5751, %v5995
        %v6028 = vadd.f32 %v5752, %v5996
        %v6029 = vadd.f32 %v5753, %v5997
        %v6030 = vadd.f32 %v5754, %v5998
        %v6031 = vadd.f32 %v5755, %v5999
        %v6032 = vadd.f32 %v5756, %v6000
        %v6033 = vadd.f32 %v5757, %v6001
        %v6034 = vadd.f32 %v5758, %v6002
        %v6035 = vadd.f32 %v5759, %v6003
        %v6036 = vadd.f32 %v5760, %v6004
        %v6037 = vadd.f32 %v5761, %v6005
        %v6038 = vadd.f32 %v5762, %v6006
        %v6039 = vadd.f32 %v5763, %v6007
        %v6040 = vadd.f32 %v5764, %v6008
        %6041 = vrot.lane.b32.xlu0 %v3890, 94
        %v6042 = vpop.permute.xlu0 %6041
        %6043 = vrot.lane.b32.xlu0 %v3894, 94
        %v6044 = vpop.permute.xlu0 %6043
        %6045 = vrot.lane.b32.xlu0 %v3900, 94
        %v6046 = vpop.permute.xlu0 %6045
        %6047 = vrot.lane.b32.xlu0 %v3904, 94
        %v6048 = vpop.permute.xlu0 %6047
        %6049 = vrot.lane.b32.xlu0 %v3910, 94
        %v6050 = vpop.permute.xlu0 %6049
        %6051 = vrot.lane.b32.xlu0 %v3914, 94
        %v6052 = vpop.permute.xlu0 %6051
        %6053 = vrot.lane.b32.xlu0 %v3920, 94
        %v6054 = vpop.permute.xlu0 %6053
        %6055 = vrot.lane.b32.xlu0 %v3924, 94
        %v6056 = vpop.permute.xlu0 %6055
        %6057 = vrot.lane.b32.xlu0 %v3930, 94
        %v6058 = vpop.permute.xlu0 %6057
        %6059 = vrot.lane.b32.xlu0 %v3934, 94
        %v6060 = vpop.permute.xlu0 %6059
        %6061 = vrot.lane.b32.xlu0 %v3940, 94
        %v6062 = vpop.permute.xlu0 %6061
        %6063 = vrot.lane.b32.xlu0 %v3944, 94
        %v6064 = vpop.permute.xlu0 %6063
        %6065 = vrot.lane.b32.xlu0 %v3950, 94
        %v6066 = vpop.permute.xlu0 %6065
        %6067 = vrot.lane.b32.xlu0 %v3954, 94
        %v6068 = vpop.permute.xlu0 %6067
        %6069 = vrot.lane.b32.xlu0 %v3960, 94
        %v6070 = vpop.permute.xlu0 %6069
        %6071 = vrot.lane.b32.xlu0 %v3964, 94
        %v6072 = vpop.permute.xlu0 %6071
        %6073 = vrot.lane.b32.xlu0 %v3892, 94
        %v6074 = vpop.permute.xlu0 %6073
        %6075 = vrot.lane.b32.xlu0 %v3896, 94
        %v6076 = vpop.permute.xlu0 %6075
        %6077 = vrot.lane.b32.xlu0 %v3902, 94
        %v6078 = vpop.permute.xlu0 %6077
        %6079 = vrot.lane.b32.xlu0 %v3906, 94
        %v6080 = vpop.permute.xlu0 %6079
        %6081 = vrot.lane.b32.xlu0 %v3912, 94
        %v6082 = vpop.permute.xlu0 %6081
        %6083 = vrot.lane.b32.xlu0 %v3916, 94
        %v6084 = vpop.permute.xlu0 %6083
        %6085 = vrot.lane.b32.xlu0 %v3922, 94
        %v6086 = vpop.permute.xlu0 %6085
        %6087 = vrot.lane.b32.xlu0 %v3926, 94
        %v6088 = vpop.permute.xlu0 %6087
        %6089 = vrot.lane.b32.xlu0 %v3932, 94
        %v6090 = vpop.permute.xlu0 %6089
        %6091 = vrot.lane.b32.xlu0 %v3936, 94
        %v6092 = vpop.permute.xlu0 %6091
        %6093 = vrot.lane.b32.xlu0 %v3942, 94
        %v6094 = vpop.permute.xlu0 %6093
        %6095 = vrot.lane.b32.xlu0 %v3946, 94
        %v6096 = vpop.permute.xlu0 %6095
        %6097 = vrot.lane.b32.xlu0 %v3952, 94
        %v6098 = vpop.permute.xlu0 %6097
        %6099 = vrot.lane.b32.xlu0 %v3956, 94
        %v6100 = vpop.permute.xlu0 %6099
        %6101 = vrot.lane.b32.xlu0 %v3962, 94
        %v6102 = vpop.permute.xlu0 %6101
        %6103 = vrot.lane.b32.xlu0 %v3966, 94
        %v6104 = vpop.permute.xlu0 %6103
        %vm6105 = vcmp.lt.s32.totalorder %v671, 94
        %v6106 = vsel %vm6105, %v6042, %v6074
        %v6107 = vsel %vm6105, %v6044, %v6076
        %v6108 = vsel %vm6105, %v6046, %v6078
        %v6109 = vsel %vm6105, %v6048, %v6080
        %v6110 = vsel %vm6105, %v6050, %v6082
        %v6111 = vsel %vm6105, %v6052, %v6084
        %v6112 = vsel %vm6105, %v6054, %v6086
        %v6113 = vsel %vm6105, %v6056, %v6088
        %v6114 = vsel %vm6105, %v6058, %v6090
        %v6115 = vsel %vm6105, %v6060, %v6092
        %v6116 = vsel %vm6105, %v6062, %v6094
        %v6117 = vsel %vm6105, %v6064, %v6096
        %v6118 = vsel %vm6105, %v6066, %v6098
        %v6119 = vsel %vm6105, %v6068, %v6100
        %v6120 = vsel %vm6105, %v6070, %v6102
        %v6121 = vsel %vm6105, %v6072, %v6104
        %v6122 = vsel %vm6105, %v6074, %v6042
        %v6123 = vsel %vm6105, %v6076, %v6044
        %v6124 = vsel %vm6105, %v6078, %v6046
        %v6125 = vsel %vm6105, %v6080, %v6048
        %v6126 = vsel %vm6105, %v6082, %v6050
        %v6127 = vsel %vm6105, %v6084, %v6052
        %v6128 = vsel %vm6105, %v6086, %v6054
        %v6129 = vsel %vm6105, %v6088, %v6056
        %v6130 = vsel %vm6105, %v6090, %v6058
        %v6131 = vsel %vm6105, %v6092, %v6060
        %v6132 = vsel %vm6105, %v6094, %v6062
        %v6133 = vsel %vm6105, %v6096, %v6064
        %v6134 = vsel %vm6105, %v6098, %v6066
        %v6135 = vsel %vm6105, %v6100, %v6068
        %v6136 = vsel %vm6105, %v6102, %v6070
        %v6137 = vsel %vm6105, %v6104, %v6072
        %vm6138 = vmand %vm5584, %vm4628
        %v6139 = vsel %vm6138, 1, 0
        %v6140 = vlaneseq
        %v6141 = vshrl.u32 %v6140, 7
        %v6142 = vsub.s32 0, %v6141
        %v6143 = vrot.slane %v6139, %v6142
        %v6144 = vlaneseq
        %v6145 = vshrl.u32 %v6144, 7
        %v6146 = vsub.s32 2, %v6145
        %v6147 = vrot.slane %v6139, %v6146
        %v6148 = vlaneseq
        %v6149 = vshrl.u32 %v6148, 7
        %v6150 = vsub.s32 0, %v6149
        %v6151 = vrot.slane %v6143, %v6150
        %v6152 = vlaneseq
        %v6153 = vshrl.u32 %v6152, 7
        %v6154 = vsub.s32 0, %v6153
        %v6155 = vrot.slane %v6147, %v6154
        %vm6156 = vcmp.eq.s32.totalorder %v6151, 1
        %vm6157 = vcmp.eq.s32.totalorder %v6155, 1
        %v6158 = vsel %vm6156, %v6106, 0.0
        %v6159 = vsel %vm6157, %v6122, 0.0
        %v6160 = vsel %vm6156, %v6107, 0.0
        %v6161 = vsel %vm6157, %v6123, 0.0
        %v6162 = vsel %vm6156, %v6108, 0.0
        %v6163 = vsel %vm6157, %v6124, 0.0
        %v6164 = vsel %vm6156, %v6109, 0.0
        %v6165 = vsel %vm6157, %v6125, 0.0
        %v6166 = vsel %vm6156, %v6110, 0.0
        %v6167 = vsel %vm6157, %v6126, 0.0
        %v6168 = vsel %vm6156, %v6111, 0.0
        %v6169 = vsel %vm6157, %v6127, 0.0
        %v6170 = vsel %vm6156, %v6112, 0.0
        %v6171 = vsel %vm6157, %v6128, 0.0
        %v6172 = vsel %vm6156, %v6113, 0.0
        %v6173 = vsel %vm6157, %v6129, 0.0
        %v6174 = vsel %vm6156, %v6114, 0.0
        %v6175 = vsel %vm6157, %v6130, 0.0
        %v6176 = vsel %vm6156, %v6115, 0.0
        %v6177 = vsel %vm6157, %v6131, 0.0
        %v6178 = vsel %vm6156, %v6116, 0.0
        %v6179 = vsel %vm6157, %v6132, 0.0
        %v6180 = vsel %vm6156, %v6117, 0.0
        %v6181 = vsel %vm6157, %v6133, 0.0
        %v6182 = vsel %vm6156, %v6118, 0.0
        %v6183 = vsel %vm6157, %v6134, 0.0
        %v6184 = vsel %vm6156, %v6119, 0.0
        %v6185 = vsel %vm6157, %v6135, 0.0
        %v6186 = vsel %vm6156, %v6120, 0.0
        %v6187 = vsel %vm6157, %v6136, 0.0
        %v6188 = vsel %vm6156, %v6121, 0.0
        %v6189 = vsel %vm6157, %v6137, 0.0
        %6190 = vset.pattern.permute.xlu0 8
        %6191 = vperm.xlu0 %6190, %v3968
        %v6192 = vpop.permute.xlu0 %6191
        %6194 = vset.pattern.permute.xlu0 8
        %6195 = vperm.xlu0 %6194, %v3969
        %v6196 = vpop.permute.xlu0 %6195
        %6198 = vset.pattern.permute.xlu0 8
        %6199 = vperm.xlu0 %6198, %v3970
        %v6200 = vpop.permute.xlu0 %6199
        %6202 = vset.pattern.permute.xlu0 8
        %6203 = vperm.xlu0 %6202, %v3971
        %v6204 = vpop.permute.xlu0 %6203
        %6206 = vset.pattern.permute.xlu0 8
        %6207 = vperm.xlu0 %6206, %v3972
        %v6208 = vpop.permute.xlu0 %6207
        %6210 = vset.pattern.permute.xlu0 8
        %6211 = vperm.xlu0 %6210, %v3973
        %v6212 = vpop.permute.xlu0 %6211
        %6214 = vset.pattern.permute.xlu0 8
        %6215 = vperm.xlu0 %6214, %v3974
        %v6216 = vpop.permute.xlu0 %6215
        %6218 = vset.pattern.permute.xlu0 8
        %6219 = vperm.xlu0 %6218, %v3975
        %v6220 = vpop.permute.xlu0 %6219
        %6222 = vset.pattern.permute.xlu0 8
        %6223 = vperm.xlu0 %6222, %v3976
        %v6224 = vpop.permute.xlu0 %6223
        %6226 = vset.pattern.permute.xlu0 8
        %6227 = vperm.xlu0 %6226, %v3977
        %v6228 = vpop.permute.xlu0 %6227
        %6230 = vset.pattern.permute.xlu0 8
        %6231 = vperm.xlu0 %6230, %v3978
        %v6232 = vpop.permute.xlu0 %6231
        %6234 = vset.pattern.permute.xlu0 8
        %6235 = vperm.xlu0 %6234, %v3979
        %v6236 = vpop.permute.xlu0 %6235
        %6238 = vset.pattern.permute.xlu0 8
        %6239 = vperm.xlu0 %6238, %v3980
        %v6240 = vpop.permute.xlu0 %6239
        %6242 = vset.pattern.permute.xlu0 8
        %6243 = vperm.xlu0 %6242, %v3981
        %v6244 = vpop.permute.xlu0 %6243
        %6246 = vset.pattern.permute.xlu0 8
        %6247 = vperm.xlu0 %6246, %v3982
        %v6248 = vpop.permute.xlu0 %6247
        %6250 = vset.pattern.permute.xlu0 8
        %6251 = vperm.xlu0 %6250, %v3983
        %v6252 = vpop.permute.xlu0 %6251
        %v6254 = vmul.f32 %v6158, %v6192
        %v6255 = vmul.f32 %v6159, %v6192
        %v6256 = vmul.f32 %v6160, %v6196
        %v6257 = vmul.f32 %v6161, %v6196
        %v6258 = vmul.f32 %v6162, %v6200
        %v6259 = vmul.f32 %v6163, %v6200
        %v6260 = vmul.f32 %v6164, %v6204
        %v6261 = vmul.f32 %v6165, %v6204
        %v6262 = vmul.f32 %v6166, %v6208
        %v6263 = vmul.f32 %v6167, %v6208
        %v6264 = vmul.f32 %v6168, %v6212
        %v6265 = vmul.f32 %v6169, %v6212
        %v6266 = vmul.f32 %v6170, %v6216
        %v6267 = vmul.f32 %v6171, %v6216
        %v6268 = vmul.f32 %v6172, %v6220
        %v6269 = vmul.f32 %v6173, %v6220
        %v6270 = vmul.f32 %v6174, %v6224
        %v6271 = vmul.f32 %v6175, %v6224
        %v6272 = vmul.f32 %v6176, %v6228
        %v6273 = vmul.f32 %v6177, %v6228
        %v6274 = vmul.f32 %v6178, %v6232
        %v6275 = vmul.f32 %v6179, %v6232
        %v6276 = vmul.f32 %v6180, %v6236
        %v6277 = vmul.f32 %v6181, %v6236
        %v6278 = vmul.f32 %v6182, %v6240
        %v6279 = vmul.f32 %v6183, %v6240
        %v6280 = vmul.f32 %v6184, %v6244
        %v6281 = vmul.f32 %v6185, %v6244
        %v6282 = vmul.f32 %v6186, %v6248
        %v6283 = vmul.f32 %v6187, %v6248
        %v6284 = vmul.f32 %v6188, %v6252
        %v6285 = vmul.f32 %v6189, %v6252
        %v6286 = vadd.f32 %v6009, %v6254
        %v6287 = vadd.f32 %v6010, %v6255
        %v6288 = vadd.f32 %v6011, %v6256
        %v6289 = vadd.f32 %v6012, %v6257
        %v6290 = vadd.f32 %v6013, %v6258
        %v6291 = vadd.f32 %v6014, %v6259
        %v6292 = vadd.f32 %v6015, %v6260
        %v6293 = vadd.f32 %v6016, %v6261
        %v6294 = vadd.f32 %v6017, %v6262
        %v6295 = vadd.f32 %v6018, %v6263
        %v6296 = vadd.f32 %v6019, %v6264
        %v6297 = vadd.f32 %v6020, %v6265
        %v6298 = vadd.f32 %v6021, %v6266
        %v6299 = vadd.f32 %v6022, %v6267
        %v6300 = vadd.f32 %v6023, %v6268
        %v6301 = vadd.f32 %v6024, %v6269
        %v6302 = vadd.f32 %v6025, %v6270
        %v6303 = vadd.f32 %v6026, %v6271
        %v6304 = vadd.f32 %v6027, %v6272
        %v6305 = vadd.f32 %v6028, %v6273
        %v6306 = vadd.f32 %v6029, %v6274
        %v6307 = vadd.f32 %v6030, %v6275
        %v6308 = vadd.f32 %v6031, %v6276
        %v6309 = vadd.f32 %v6032, %v6277
        %v6310 = vadd.f32 %v6033, %v6278
        %v6311 = vadd.f32 %v6034, %v6279
        %v6312 = vadd.f32 %v6035, %v6280
        %v6313 = vadd.f32 %v6036, %v6281
        %v6314 = vadd.f32 %v6037, %v6282
        %v6315 = vadd.f32 %v6038, %v6283
        %v6316 = vadd.f32 %v6039, %v6284
        %v6317 = vadd.f32 %v6040, %v6285
        %v6318 = vmul.f32 %v3742, %v6286
        %v6319 = vmul.f32 %v3743, %v6287
        %v6320 = vmul.f32 %v3744, %v6288
        %v6321 = vmul.f32 %v3745, %v6289
        %v6322 = vmul.f32 %v3746, %v6290
        %v6323 = vmul.f32 %v3747, %v6291
        %v6324 = vmul.f32 %v3748, %v6292
        %v6325 = vmul.f32 %v3749, %v6293
        %v6326 = vmul.f32 %v3750, %v6294
        %v6327 = vmul.f32 %v3751, %v6295
        %v6328 = vmul.f32 %v3752, %v6296
        %v6329 = vmul.f32 %v3753, %v6297
        %v6330 = vmul.f32 %v3754, %v6298
        %v6331 = vmul.f32 %v3755, %v6299
        %v6332 = vmul.f32 %v3756, %v6300
        %v6333 = vmul.f32 %v3757, %v6301
        %v6334 = vmul.f32 %v3758, %v6302
        %v6335 = vmul.f32 %v3759, %v6303
        %v6336 = vmul.f32 %v3760, %v6304
        %v6337 = vmul.f32 %v3761, %v6305
        %v6338 = vmul.f32 %v3762, %v6306
        %v6339 = vmul.f32 %v3763, %v6307
        %v6340 = vmul.f32 %v3764, %v6308
        %v6341 = vmul.f32 %v3765, %v6309
        %v6342 = vmul.f32 %v3766, %v6310
        %v6343 = vmul.f32 %v3767, %v6311
        %v6344 = vmul.f32 %v3768, %v6312
        %v6345 = vmul.f32 %v3769, %v6313
        %v6346 = vmul.f32 %v3770, %v6314
        %v6347 = vmul.f32 %v3771, %v6315
        %v6348 = vmul.f32 %v3772, %v6316
        %v6349 = vmul.f32 %v3773, %v6317
        %s6350 = scalar_lea.vmem [#allocation7], 128
        %v6351 = vld [vmem:[%s6350] sm:$0xf]
        %v6352 = vld [vmem:[%s6350 + $0x4] sm:$0xf]
        %v6353 = vld [vmem:[%s6350 + $0x8] sm:$0xf]
        %v6354 = vld [vmem:[%s6350 + $0xc] sm:$0xf]
        %v6355 = vld [vmem:[%s6350 + $0x10] sm:$0xf]
        %v6356 = vld [vmem:[%s6350 + $0x14] sm:$0xf]
        %v6357 = vld [vmem:[%s6350 + $0x18] sm:$0xf]
        %v6358 = vld [vmem:[%s6350 + $0x1c] sm:$0xf]
        %v6359 = vld [vmem:[%s6350 + $0x20] sm:$0xf]
        %v6360 = vld [vmem:[%s6350 + $0x24] sm:$0xf]
        %v6361 = vld [vmem:[%s6350 + $0x28] sm:$0xf]
        %v6362 = vld [vmem:[%s6350 + $0x2c] sm:$0xf]
        %v6363 = vld [vmem:[%s6350 + $0x30] sm:$0xf]
        %v6364 = vld [vmem:[%s6350 + $0x34] sm:$0xf]
        %v6365 = vld [vmem:[%s6350 + $0x38] sm:$0xf]
        %v6366 = vld [vmem:[%s6350 + $0x3c] sm:$0xf]
        %v6383 = vunpack.c.l.b16 %v6351
        %v6384 = vunpack.c.l.b16 %v6352
        %v6385 = vunpack.c.l.b16 %v6353
        %v6386 = vunpack.c.l.b16 %v6354
        %v6387 = vunpack.c.l.b16 %v6355
        %v6388 = vunpack.c.l.b16 %v6356
        %v6389 = vunpack.c.l.b16 %v6357
        %v6390 = vunpack.c.l.b16 %v6358
        %v6391 = vunpack.c.l.b16 %v6359
        %v6392 = vunpack.c.l.b16 %v6360
        %v6393 = vunpack.c.l.b16 %v6361
        %v6394 = vunpack.c.l.b16 %v6362
        %v6395 = vunpack.c.l.b16 %v6363
        %v6396 = vunpack.c.l.b16 %v6364
        %v6397 = vunpack.c.l.b16 %v6365
        %v6398 = vunpack.c.l.b16 %v6366
        %v6399 = vpack.c.b16 %v6384, %v6383
        %v6400 = vpack.c.b16 %v6386, %v6385
        %v6401 = vpack.c.b16 %v6388, %v6387
        %v6402 = vpack.c.b16 %v6390, %v6389
        %v6403 = vpack.c.b16 %v6392, %v6391
        %v6404 = vpack.c.b16 %v6394, %v6393
        %v6405 = vpack.c.b16 %v6396, %v6395
        %v6406 = vpack.c.b16 %v6398, %v6397
        %v6408 = vsel %vm452, %v6399, 0
        %v6411 = vsel %vm452, %v6400, 0
        %v6414 = vsel %vm452, %v6401, 0
        %v6417 = vsel %vm452, %v6402, 0
        %v6420 = vsel %vm452, %v6403, 0
        %v6423 = vsel %vm452, %v6404, 0
        %v6426 = vsel %vm452, %v6405, 0
        %v6429 = vsel %vm452, %v6406, 0
        %6431 = vmatprep.subr.bf16.mxu0 %v392
        %6432 = vmatpush1.bf16.msra.mxu0 %v391
        %6433 = vmatprep.subr.bf16.mxu0 %v394
        %6434 = vmatpush1.bf16.msra.mxu0 %v393
        %6435 = vmatprep.subr.bf16.mxu0 0
        %6436 = vmatpush1.bf16.msra.mxu0 0
        %6437 = vmatprep.subr.bf16.mxu0 0
        %6438 = vmatpush1.bf16.msra.mxu0 0
        %6439 = vmatprep.subr.bf16.mxu0 0
        %6440 = vmatpush1.bf16.msra.mxu0 0
        %6441 = vmatprep.subr.bf16.mxu0 0
        %6442 = vmatpush1.bf16.msra.mxu0 0
        %6443 = vmatprep.subr.bf16.mxu0 0
        %6444 = vmatpush1.bf16.msra.mxu0 0
        %6445 = vmatprep.subr.bf16.mxu0 0
        %6446 = vmatpush1.bf16.msra.mxu0 0
        %6447 = vmatprep.subr.bf16.mxu0 0
        %6448 = vmatpush1.bf16.msra.mxu0 0
        %6449 = vmatprep.subr.bf16.mxu0 0
        %6450 = vmatpush1.bf16.msra.mxu0 0
        %6451 = vmatprep.subr.bf16.mxu0 0
        %6452 = vmatpush1.bf16.msra.mxu0 0
        %6453 = vmatprep.subr.bf16.mxu0 0
        %6454 = vmatpush1.bf16.msra.mxu0 0
        %6455 = vmatprep.subr.bf16.mxu0 0
        %6456 = vmatpush1.bf16.msra.mxu0 0
        %6457 = vmatprep.subr.bf16.mxu0 0
        %6458 = vmatpush1.bf16.msra.mxu0 0
        %6459 = vmatprep.subr.bf16.mxu0 0
        %6460 = vmatpush1.bf16.msra.mxu0 0
        %6461 = vmatprep.subr.bf16.mxu0 0
        %6462 = vmatpush1.bf16.msra.mxu0 0
        %6463 = vmatprep.mubr.bf16.mxu0 0
        %6464 = vmatmul.mubr.bf16.gmra.mrb[0].mxu0 %v6408
        %v6465 = vpop.f32.mrb[0].mxu0
        %v6466 = vadd.f32 0.0, %v6465
        %v6467 = vpop.f32.mrb[0].mxu0
        %v6468 = vadd.f32 0.0, %v6467
        %v6469 = vpop.f32.mrb[0].mxu0
        %v6470 = vadd.f32 0.0, %v6469
        %v6471 = vpop.f32.mrb[0].mxu0
        %v6472 = vadd.f32 0.0, %v6471
        %6473 = vmatprep.mubr.bf16.mxu0 0
        %6474 = vmatmul.mubr.bf16.gmra.mrb[0].mxu0 %v6411
        %v6475 = vpop.f32.mrb[0].mxu0
        %v6476 = vadd.f32 0.0, %v6475
        %v6477 = vpop.f32.mrb[0].mxu0
        %v6478 = vadd.f32 0.0, %v6477
        %v6479 = vpop.f32.mrb[0].mxu0
        %v6480 = vadd.f32 0.0, %v6479
        %v6481 = vpop.f32.mrb[0].mxu0
        %v6482 = vadd.f32 0.0, %v6481
        %6483 = vmatprep.mubr.bf16.mxu0 0
        %6484 = vmatmul.mubr.bf16.gmra.mrb[0].mxu0 %v6414
        %v6485 = vpop.f32.mrb[0].mxu0
        %v6486 = vadd.f32 0.0, %v6485
        %v6487 = vpop.f32.mrb[0].mxu0
        %v6488 = vadd.f32 0.0, %v6487
        %v6489 = vpop.f32.mrb[0].mxu0
        %v6490 = vadd.f32 0.0, %v6489
        %v6491 = vpop.f32.mrb[0].mxu0
        %v6492 = vadd.f32 0.0, %v6491
        %6493 = vmatprep.mubr.bf16.mxu0 0
        %6494 = vmatmul.mubr.bf16.gmra.mrb[0].mxu0 %v6417
        %v6495 = vpop.f32.mrb[0].mxu0
        %v6496 = vadd.f32 0.0, %v6495
        %v6497 = vpop.f32.mrb[0].mxu0
        %v6498 = vadd.f32 0.0, %v6497
        %v6499 = vpop.f32.mrb[0].mxu0
        %v6500 = vadd.f32 0.0, %v6499
        %v6501 = vpop.f32.mrb[0].mxu0
        %v6502 = vadd.f32 0.0, %v6501
        %6503 = vmatprep.mubr.bf16.mxu0 0
        %6504 = vmatmul.mubr.bf16.gmra.mrb[0].mxu0 %v6420
        %v6505 = vpop.f32.mrb[0].mxu0
        %v6506 = vadd.f32 0.0, %v6505
        %v6507 = vpop.f32.mrb[0].mxu0
        %v6508 = vadd.f32 0.0, %v6507
        %v6509 = vpop.f32.mrb[0].mxu0
        %v6510 = vadd.f32 0.0, %v6509
        %v6511 = vpop.f32.mrb[0].mxu0
        %v6512 = vadd.f32 0.0, %v6511
        %6513 = vmatprep.mubr.bf16.mxu0 0
        %6514 = vmatmul.mubr.bf16.gmra.mrb[0].mxu0 %v6423
        %v6515 = vpop.f32.mrb[0].mxu0
        %v6516 = vadd.f32 0.0, %v6515
        %v6517 = vpop.f32.mrb[0].mxu0
        %v6518 = vadd.f32 0.0, %v6517
        %v6519 = vpop.f32.mrb[0].mxu0
        %v6520 = vadd.f32 0.0, %v6519
        %v6521 = vpop.f32.mrb[0].mxu0
        %v6522 = vadd.f32 0.0, %v6521
        %6523 = vmatprep.mubr.bf16.mxu0 0
        %6524 = vmatmul.mubr.bf16.gmra.mrb[0].mxu0 %v6426
        %v6525 = vpop.f32.mrb[0].mxu0
        %v6526 = vadd.f32 0.0, %v6525
        %v6527 = vpop.f32.mrb[0].mxu0
        %v6528 = vadd.f32 0.0, %v6527
        %v6529 = vpop.f32.mrb[0].mxu0
        %v6530 = vadd.f32 0.0, %v6529
        %v6531 = vpop.f32.mrb[0].mxu0
        %v6532 = vadd.f32 0.0, %v6531
        %6533 = vmatprep.mubr.bf16.mxu0 0
        %6534 = vmatmul.mubr.bf16.gmra.mrb[0].mxu0 %v6429
        %v6535 = vpop.f32.mrb[0].mxu0
        %v6536 = vadd.f32 0.0, %v6535
        %v6537 = vpop.f32.mrb[0].mxu0
        %v6538 = vadd.f32 0.0, %v6537
        %v6539 = vpop.f32.mrb[0].mxu0
        %v6540 = vadd.f32 0.0, %v6539
        %v6541 = vpop.f32.mrb[0].mxu0
        %v6542 = vadd.f32 0.0, %v6541
        %6543 = vdwg.mxu0
        %v6544 = vld [vmem:[#allocation11] sm:$0xff]
        %v6545 = vld [vmem:[#allocation11 + $0x8] sm:$0xff]
        %v6546 = vld [vmem:[#allocation11 + $0x10] sm:$0xff]
        %v6547 = vld [vmem:[#allocation11 + $0x18] sm:$0xff]
        %v6548 = vld [vmem:[#allocation11 + $0x20] sm:$0xff]
        %v6549 = vld [vmem:[#allocation11 + $0x28] sm:$0xff]
        %v6550 = vld [vmem:[#allocation11 + $0x30] sm:$0xff]
        %v6551 = vld [vmem:[#allocation11 + $0x38] sm:$0xff]
        %v6552 = vld [vmem:[#allocation11 + $0x40] sm:$0xff]
        %v6553 = vld [vmem:[#allocation11 + $0x48] sm:$0xff]
        %v6554 = vld [vmem:[#allocation11 + $0x50] sm:$0xff]
        %v6555 = vld [vmem:[#allocation11 + $0x58] sm:$0xff]
        %v6556 = vld [vmem:[#allocation11 + $0x60] sm:$0xff]
        %v6557 = vld [vmem:[#allocation11 + $0x68] sm:$0xff]
        %v6558 = vld [vmem:[#allocation11 + $0x70] sm:$0xff]
        %v6559 = vld [vmem:[#allocation11 + $0x78] sm:$0xff]
        %6560 = vrot.lane.b32.xlu0 %v6466, 51
        %v6561 = vpop.permute.xlu0 %6560
        %6562 = vrot.lane.b32.xlu0 %v6470, 51
        %v6563 = vpop.permute.xlu0 %6562
        %6564 = vrot.lane.b32.xlu0 %v6476, 51
        %v6565 = vpop.permute.xlu0 %6564
        %6566 = vrot.lane.b32.xlu0 %v6480, 51
        %v6567 = vpop.permute.xlu0 %6566
        %6568 = vrot.lane.b32.xlu0 %v6486, 51
        %v6569 = vpop.permute.xlu0 %6568
        %6570 = vrot.lane.b32.xlu0 %v6490, 51
        %v6571 = vpop.permute.xlu0 %6570
        %6572 = vrot.lane.b32.xlu0 %v6496, 51
        %v6573 = vpop.permute.xlu0 %6572
        %6574 = vrot.lane.b32.xlu0 %v6500, 51
        %v6575 = vpop.permute.xlu0 %6574
        %6576 = vrot.lane.b32.xlu0 %v6506, 51
        %v6577 = vpop.permute.xlu0 %6576
        %6578 = vrot.lane.b32.xlu0 %v6510, 51
        %v6579 = vpop.permute.xlu0 %6578
        %6580 = vrot.lane.b32.xlu0 %v6516, 51
        %v6581 = vpop.permute.xlu0 %6580
        %6582 = vrot.lane.b32.xlu0 %v6520, 51
        %v6583 = vpop.permute.xlu0 %6582
        %6584 = vrot.lane.b32.xlu0 %v6526, 51
        %v6585 = vpop.permute.xlu0 %6584
        %6586 = vrot.lane.b32.xlu0 %v6530, 51
        %v6587 = vpop.permute.xlu0 %6586
        %6588 = vrot.lane.b32.xlu0 %v6536, 51
        %v6589 = vpop.permute.xlu0 %6588
        %6590 = vrot.lane.b32.xlu0 %v6540, 51
        %v6591 = vpop.permute.xlu0 %6590
        %6592 = vrot.lane.b32.xlu0 %v6468, 51
        %v6593 = vpop.permute.xlu0 %6592
        %6594 = vrot.lane.b32.xlu0 %v6472, 51
        %v6595 = vpop.permute.xlu0 %6594
        %6596 = vrot.lane.b32.xlu0 %v6478, 51
        %v6597 = vpop.permute.xlu0 %6596
        %6598 = vrot.lane.b32.xlu0 %v6482, 51
        %v6599 = vpop.permute.xlu0 %6598
        %6600 = vrot.lane.b32.xlu0 %v6488, 51
        %v6601 = vpop.permute.xlu0 %6600
        %6602 = vrot.lane.b32.xlu0 %v6492, 51
        %v6603 = vpop.permute.xlu0 %6602
        %6604 = vrot.lane.b32.xlu0 %v6498, 51
        %v6605 = vpop.permute.xlu0 %6604
        %6606 = vrot.lane.b32.xlu0 %v6502, 51
        %v6607 = vpop.permute.xlu0 %6606
        %6608 = vrot.lane.b32.xlu0 %v6508, 51
        %v6609 = vpop.permute.xlu0 %6608
        %6610 = vrot.lane.b32.xlu0 %v6512, 51
        %v6611 = vpop.permute.xlu0 %6610
        %6612 = vrot.lane.b32.xlu0 %v6518, 51
        %v6613 = vpop.permute.xlu0 %6612
        %6614 = vrot.lane.b32.xlu0 %v6522, 51
        %v6615 = vpop.permute.xlu0 %6614
        %6616 = vrot.lane.b32.xlu0 %v6528, 51
        %v6617 = vpop.permute.xlu0 %6616
        %6618 = vrot.lane.b32.xlu0 %v6532, 51
        %v6619 = vpop.permute.xlu0 %6618
        %6620 = vrot.lane.b32.xlu0 %v6538, 51
        %v6621 = vpop.permute.xlu0 %6620
        %6622 = vrot.lane.b32.xlu0 %v6542, 51
        %v6623 = vpop.permute.xlu0 %6622
        %vm6624 = vcmp.lt.s32.totalorder %v671, 51
        %v6625 = vsel %vm6624, %v6561, %v6593
        %v6626 = vsel %vm6624, %v6563, %v6595
        %v6627 = vsel %vm6624, %v6565, %v6597
        %v6628 = vsel %vm6624, %v6567, %v6599
        %v6629 = vsel %vm6624, %v6569, %v6601
        %v6630 = vsel %vm6624, %v6571, %v6603
        %v6631 = vsel %vm6624, %v6573, %v6605
        %v6632 = vsel %vm6624, %v6575, %v6607
        %v6633 = vsel %vm6624, %v6577, %v6609
        %v6634 = vsel %vm6624, %v6579, %v6611
        %v6635 = vsel %vm6624, %v6581, %v6613
        %v6636 = vsel %vm6624, %v6583, %v6615
        %v6637 = vsel %vm6624, %v6585, %v6617
        %v6638 = vsel %vm6624, %v6587, %v6619
        %v6639 = vsel %vm6624, %v6589, %v6621
        %v6640 = vsel %vm6624, %v6591, %v6623
        %v6641 = vsel %vm6624, %v6593, %v6561
        %v6642 = vsel %vm6624, %v6595, %v6563
        %v6643 = vsel %vm6624, %v6597, %v6565
        %v6644 = vsel %vm6624, %v6599, %v6567
        %v6645 = vsel %vm6624, %v6601, %v6569
        %v6646 = vsel %vm6624, %v6603, %v6571
        %v6647 = vsel %vm6624, %v6605, %v6573
        %v6648 = vsel %vm6624, %v6607, %v6575
        %v6649 = vsel %vm6624, %v6609, %v6577
        %v6650 = vsel %vm6624, %v6611, %v6579
        %v6651 = vsel %vm6624, %v6613, %v6581
        %v6652 = vsel %vm6624, %v6615, %v6583
        %v6653 = vsel %vm6624, %v6617, %v6585
        %v6654 = vsel %vm6624, %v6619, %v6587
        %v6655 = vsel %vm6624, %v6621, %v6589
        %v6656 = vsel %vm6624, %v6623, %v6591
        %vm6657 = vcmp.ge.s32.totalorder %v395, 48
        %vm6658 = vcmp.ge.s32.totalorder %v395, 3
        %v6659 = vsel %vm6658, 1, 0
        %v6660 = vrot.slane %v6659, 7
        %v6661 = vrot.slane %v6660, 2
        %vm6662 = vcmp.ne.s32.totalorder %v6661, 0
        %vm6663 = vmand %vm6657, %vm6662
        %v6664 = vsel %vm6663, 1, 0
        %v6665 = vlaneseq
        %v6666 = vshrl.u32 %v6665, 7
        %v6667 = vsub.s32 0, %v6666
        %v6668 = vrot.slane %v6664, %v6667
        %v6669 = vlaneseq
        %v6670 = vshrl.u32 %v6669, 7
        %v6671 = vsub.s32 2, %v6670
        %v6672 = vrot.slane %v6664, %v6671
        %v6673 = vlaneseq
        %v6674 = vshrl.u32 %v6673, 7
        %v6675 = vsub.s32 0, %v6674
        %v6676 = vrot.slane %v6668, %v6675
        %v6677 = vlaneseq
        %v6678 = vshrl.u32 %v6677, 7
        %v6679 = vsub.s32 0, %v6678
        %v6680 = vrot.slane %v6672, %v6679
        %vm6681 = vcmp.eq.s32.totalorder %v6676, 1
        %vm6682 = vcmp.eq.s32.totalorder %v6680, 1
        %v6683 = vsel %vm6681, %v6641, 0.0
        %v6684 = vsel %vm6682, %v6625, 0.0
        %v6685 = vsel %vm6681, %v6642, 0.0
        %v6686 = vsel %vm6682, %v6626, 0.0
        %v6687 = vsel %vm6681, %v6643, 0.0
        %v6688 = vsel %vm6682, %v6627, 0.0
        %v6689 = vsel %vm6681, %v6644, 0.0
        %v6690 = vsel %vm6682, %v6628, 0.0
        %v6691 = vsel %vm6681, %v6645, 0.0
        %v6692 = vsel %vm6682, %v6629, 0.0
        %v6693 = vsel %vm6681, %v6646, 0.0
        %v6694 = vsel %vm6682, %v6630, 0.0
        %v6695 = vsel %vm6681, %v6647, 0.0
        %v6696 = vsel %vm6682, %v6631, 0.0
        %v6697 = vsel %vm6681, %v6648, 0.0
        %v6698 = vsel %vm6682, %v6632, 0.0
        %v6699 = vsel %vm6681, %v6649, 0.0
        %v6700 = vsel %vm6682, %v6633, 0.0
        %v6701 = vsel %vm6681, %v6650, 0.0
        %v6702 = vsel %vm6682, %v6634, 0.0
        %v6703 = vsel %vm6681, %v6651, 0.0
        %v6704 = vsel %vm6682, %v6635, 0.0
        %v6705 = vsel %vm6681, %v6652, 0.0
        %v6706 = vsel %vm6682, %v6636, 0.0
        %v6707 = vsel %vm6681, %v6653, 0.0
        %v6708 = vsel %vm6682, %v6637, 0.0
        %v6709 = vsel %vm6681, %v6654, 0.0
        %v6710 = vsel %vm6682, %v6638, 0.0
        %v6711 = vsel %vm6681, %v6655, 0.0
        %v6712 = vsel %vm6682, %v6639, 0.0
        %v6713 = vsel %vm6681, %v6656, 0.0
        %v6714 = vsel %vm6682, %v6640, 0.0
        %6716 = vset.pattern.permute.xlu0 0
        %6717 = vperm.xlu0 %6716, %v6544
        %v6718 = vpop.permute.xlu0 %6717
        %6721 = vset.pattern.permute.xlu0 0
        %6722 = vperm.xlu0 %6721, %v6545
        %v6723 = vpop.permute.xlu0 %6722
        %6726 = vset.pattern.permute.xlu0 0
        %6727 = vperm.xlu0 %6726, %v6546
        %v6728 = vpop.permute.xlu0 %6727
        %6731 = vset.pattern.permute.xlu0 0
        %6732 = vperm.xlu0 %6731, %v6547
        %v6733 = vpop.permute.xlu0 %6732
        %6736 = vset.pattern.permute.xlu0 0
        %6737 = vperm.xlu0 %6736, %v6548
        %v6738 = vpop.permute.xlu0 %6737
        %6741 = vset.pattern.permute.xlu0 0
        %6742 = vperm.xlu0 %6741, %v6549
        %v6743 = vpop.permute.xlu0 %6742
        %6746 = vset.pattern.permute.xlu0 0
        %6747 = vperm.xlu0 %6746, %v6550
        %v6748 = vpop.permute.xlu0 %6747
        %6751 = vset.pattern.permute.xlu0 0
        %6752 = vperm.xlu0 %6751, %v6551
        %v6753 = vpop.permute.xlu0 %6752
        %6756 = vset.pattern.permute.xlu0 0
        %6757 = vperm.xlu0 %6756, %v6552
        %v6758 = vpop.permute.xlu0 %6757
        %6761 = vset.pattern.permute.xlu0 0
        %6762 = vperm.xlu0 %6761, %v6553
        %v6763 = vpop.permute.xlu0 %6762
        %6766 = vset.pattern.permute.xlu0 0
        %6767 = vperm.xlu0 %6766, %v6554
        %v6768 = vpop.permute.xlu0 %6767
        %6771 = vset.pattern.permute.xlu0 0
        %6772 = vperm.xlu0 %6771, %v6555
        %v6773 = vpop.permute.xlu0 %6772
        %6776 = vset.pattern.permute.xlu0 0
        %6777 = vperm.xlu0 %6776, %v6556
        %v6778 = vpop.permute.xlu0 %6777
        %6781 = vset.pattern.permute.xlu0 0
        %6782 = vperm.xlu0 %6781, %v6557
        %v6783 = vpop.permute.xlu0 %6782
        %6786 = vset.pattern.permute.xlu0 0
        %6787 = vperm.xlu0 %6786, %v6558
        %v6788 = vpop.permute.xlu0 %6787
        %6791 = vset.pattern.permute.xlu0 0
        %6792 = vperm.xlu0 %6791, %v6559
        %v6793 = vpop.permute.xlu0 %6792
        %v6795 = vmul.f32 %v6683, %v6718
        %v6796 = vmul.f32 %v6684, %v6718
        %v6797 = vmul.f32 %v6685, %v6723
        %v6798 = vmul.f32 %v6686, %v6723
        %v6799 = vmul.f32 %v6687, %v6728
        %v6800 = vmul.f32 %v6688, %v6728
        %v6801 = vmul.f32 %v6689, %v6733
        %v6802 = vmul.f32 %v6690, %v6733
        %v6803 = vmul.f32 %v6691, %v6738
        %v6804 = vmul.f32 %v6692, %v6738
        %v6805 = vmul.f32 %v6693, %v6743
        %v6806 = vmul.f32 %v6694, %v6743
        %v6807 = vmul.f32 %v6695, %v6748
        %v6808 = vmul.f32 %v6696, %v6748
        %v6809 = vmul.f32 %v6697, %v6753
        %v6810 = vmul.f32 %v6698, %v6753
        %v6811 = vmul.f32 %v6699, %v6758
        %v6812 = vmul.f32 %v6700, %v6758
        %v6813 = vmul.f32 %v6701, %v6763
        %v6814 = vmul.f32 %v6702, %v6763
        %v6815 = vmul.f32 %v6703, %v6768
        %v6816 = vmul.f32 %v6704, %v6768
        %v6817 = vmul.f32 %v6705, %v6773
        %v6818 = vmul.f32 %v6706, %v6773
        %v6819 = vmul.f32 %v6707, %v6778
        %v6820 = vmul.f32 %v6708, %v6778
        %v6821 = vmul.f32 %v6709, %v6783
        %v6822 = vmul.f32 %v6710, %v6783
        %v6823 = vmul.f32 %v6711, %v6788
        %v6824 = vmul.f32 %v6712, %v6788
        %v6825 = vmul.f32 %v6713, %v6793
        %v6826 = vmul.f32 %v6714, %v6793
        %6827 = vrot.lane.b32.xlu0 %v6466, 48
        %v6828 = vpop.permute.xlu0 %6827
        %6829 = vrot.lane.b32.xlu0 %v6470, 48
        %v6830 = vpop.permute.xlu0 %6829
        %6831 = vrot.lane.b32.xlu0 %v6476, 48
        %v6832 = vpop.permute.xlu0 %6831
        %6833 = vrot.lane.b32.xlu0 %v6480, 48
        %v6834 = vpop.permute.xlu0 %6833
        %6835 = vrot.lane.b32.xlu0 %v6486, 48
        %v6836 = vpop.permute.xlu0 %6835
        %6837 = vrot.lane.b32.xlu0 %v6490, 48
        %v6838 = vpop.permute.xlu0 %6837
        %6839 = vrot.lane.b32.xlu0 %v6496, 48
        %v6840 = vpop.permute.xlu0 %6839
        %6841 = vrot.lane.b32.xlu0 %v6500, 48
        %v6842 = vpop.permute.xlu0 %6841
        %6843 = vrot.lane.b32.xlu0 %v6506, 48
        %v6844 = vpop.permute.xlu0 %6843
        %6845 = vrot.lane.b32.xlu0 %v6510, 48
        %v6846 = vpop.permute.xlu0 %6845
        %6847 = vrot.lane.b32.xlu0 %v6516, 48
        %v6848 = vpop.permute.xlu0 %6847
        %6849 = vrot.lane.b32.xlu0 %v6520, 48
        %v6850 = vpop.permute.xlu0 %6849
        %6851 = vrot.lane.b32.xlu0 %v6526, 48
        %v6852 = vpop.permute.xlu0 %6851
        %6853 = vrot.lane.b32.xlu0 %v6530, 48
        %v6854 = vpop.permute.xlu0 %6853
        %6855 = vrot.lane.b32.xlu0 %v6536, 48
        %v6856 = vpop.permute.xlu0 %6855
        %6857 = vrot.lane.b32.xlu0 %v6540, 48
        %v6858 = vpop.permute.xlu0 %6857
        %6859 = vrot.lane.b32.xlu0 %v6468, 48
        %v6860 = vpop.permute.xlu0 %6859
        %6861 = vrot.lane.b32.xlu0 %v6472, 48
        %v6862 = vpop.permute.xlu0 %6861
        %6863 = vrot.lane.b32.xlu0 %v6478, 48
        %v6864 = vpop.permute.xlu0 %6863
        %6865 = vrot.lane.b32.xlu0 %v6482, 48
        %v6866 = vpop.permute.xlu0 %6865
        %6867 = vrot.lane.b32.xlu0 %v6488, 48
        %v6868 = vpop.permute.xlu0 %6867
        %6869 = vrot.lane.b32.xlu0 %v6492, 48
        %v6870 = vpop.permute.xlu0 %6869
        %6871 = vrot.lane.b32.xlu0 %v6498, 48
        %v6872 = vpop.permute.xlu0 %6871
        %6873 = vrot.lane.b32.xlu0 %v6502, 48
        %v6874 = vpop.permute.xlu0 %6873
        %6875 = vrot.lane.b32.xlu0 %v6508, 48
        %v6876 = vpop.permute.xlu0 %6875
        %6877 = vrot.lane.b32.xlu0 %v6512, 48
        %v6878 = vpop.permute.xlu0 %6877
        %6879 = vrot.lane.b32.xlu0 %v6518, 48
        %v6880 = vpop.permute.xlu0 %6879
        %6881 = vrot.lane.b32.xlu0 %v6522, 48
        %v6882 = vpop.permute.xlu0 %6881
        %6883 = vrot.lane.b32.xlu0 %v6528, 48
        %v6884 = vpop.permute.xlu0 %6883
        %6885 = vrot.lane.b32.xlu0 %v6532, 48
        %v6886 = vpop.permute.xlu0 %6885
        %6887 = vrot.lane.b32.xlu0 %v6538, 48
        %v6888 = vpop.permute.xlu0 %6887
        %6889 = vrot.lane.b32.xlu0 %v6542, 48
        %v6890 = vpop.permute.xlu0 %6889
        %vm6891 = vcmp.lt.s32.totalorder %v671, 48
        %v6892 = vsel %vm6891, %v6828, %v6860
        %v6893 = vsel %vm6891, %v6830, %v6862
        %v6894 = vsel %vm6891, %v6832, %v6864
        %v6895 = vsel %vm6891, %v6834, %v6866
        %v6896 = vsel %vm6891, %v6836, %v6868
        %v6897 = vsel %vm6891, %v6838, %v6870
        %v6898 = vsel %vm6891, %v6840, %v6872
        %v6899 = vsel %vm6891, %v6842, %v6874
        %v6900 = vsel %vm6891, %v6844, %v6876
        %v6901 = vsel %vm6891, %v6846, %v6878
        %v6902 = vsel %vm6891, %v6848, %v6880
        %v6903 = vsel %vm6891, %v6850, %v6882
        %v6904 = vsel %vm6891, %v6852, %v6884
        %v6905 = vsel %vm6891, %v6854, %v6886
        %v6906 = vsel %vm6891, %v6856, %v6888
        %v6907 = vsel %vm6891, %v6858, %v6890
        %v6908 = vsel %vm6891, %v6860, %v6828
        %v6909 = vsel %vm6891, %v6862, %v6830
        %v6910 = vsel %vm6891, %v6864, %v6832
        %v6911 = vsel %vm6891, %v6866, %v6834
        %v6912 = vsel %vm6891, %v6868, %v6836
        %v6913 = vsel %vm6891, %v6870, %v6838
        %v6914 = vsel %vm6891, %v6872, %v6840
        %v6915 = vsel %vm6891, %v6874, %v6842
        %v6916 = vsel %vm6891, %v6876, %v6844
        %v6917 = vsel %vm6891, %v6878, %v6846
        %v6918 = vsel %vm6891, %v6880, %v6848
        %v6919 = vsel %vm6891, %v6882, %v6850
        %v6920 = vsel %vm6891, %v6884, %v6852
        %v6921 = vsel %vm6891, %v6886, %v6854
        %v6922 = vsel %vm6891, %v6888, %v6856
        %v6923 = vsel %vm6891, %v6890, %v6858
        %v6924 = vsel %vm6657, 1, 0
        %v6925 = vlaneseq
        %v6926 = vshrl.u32 %v6925, 7
        %v6927 = vsub.s32 0, %v6926
        %v6928 = vrot.slane %v6924, %v6927
        %v6929 = vlaneseq
        %v6930 = vshrl.u32 %v6929, 7
        %v6931 = vsub.s32 2, %v6930
        %v6932 = vrot.slane %v6924, %v6931
        %v6933 = vlaneseq
        %v6934 = vshrl.u32 %v6933, 7
        %v6935 = vsub.s32 0, %v6934
        %v6936 = vrot.slane %v6928, %v6935
        %v6937 = vlaneseq
        %v6938 = vshrl.u32 %v6937, 7
        %v6939 = vsub.s32 0, %v6938
        %v6940 = vrot.slane %v6932, %v6939
        %vm6941 = vcmp.eq.s32.totalorder %v6936, 1
        %vm6942 = vcmp.eq.s32.totalorder %v6940, 1
        %v6943 = vsel %vm6941, %v6908, 0.0
        %v6944 = vsel %vm6942, %v6892, 0.0
        %v6945 = vsel %vm6941, %v6909, 0.0
        %v6946 = vsel %vm6942, %v6893, 0.0
        %v6947 = vsel %vm6941, %v6910, 0.0
        %v6948 = vsel %vm6942, %v6894, 0.0
        %v6949 = vsel %vm6941, %v6911, 0.0
        %v6950 = vsel %vm6942, %v6895, 0.0
        %v6951 = vsel %vm6941, %v6912, 0.0
        %v6952 = vsel %vm6942, %v6896, 0.0
        %v6953 = vsel %vm6941, %v6913, 0.0
        %v6954 = vsel %vm6942, %v6897, 0.0
        %v6955 = vsel %vm6941, %v6914, 0.0
        %v6956 = vsel %vm6942, %v6898, 0.0
        %v6957 = vsel %vm6941, %v6915, 0.0
        %v6958 = vsel %vm6942, %v6899, 0.0
        %v6959 = vsel %vm6941, %v6916, 0.0
        %v6960 = vsel %vm6942, %v6900, 0.0
        %v6961 = vsel %vm6941, %v6917, 0.0
        %v6962 = vsel %vm6942, %v6901, 0.0
        %v6963 = vsel %vm6941, %v6918, 0.0
        %v6964 = vsel %vm6942, %v6902, 0.0
        %v6965 = vsel %vm6941, %v6919, 0.0
        %v6966 = vsel %vm6942, %v6903, 0.0
        %v6967 = vsel %vm6941, %v6920, 0.0
        %v6968 = vsel %vm6942, %v6904, 0.0
        %v6969 = vsel %vm6941, %v6921, 0.0
        %v6970 = vsel %vm6942, %v6905, 0.0
        %v6971 = vsel %vm6941, %v6922, 0.0
        %v6972 = vsel %vm6942, %v6906, 0.0
        %v6973 = vsel %vm6941, %v6923, 0.0
        %v6974 = vsel %vm6942, %v6907, 0.0
        %6975 = vset.pattern.permute.xlu0 1
        %6976 = vperm.xlu0 %6975, %v6544
        %v6977 = vpop.permute.xlu0 %6976
        %6979 = vset.pattern.permute.xlu0 1
        %6980 = vperm.xlu0 %6979, %v6545
        %v6981 = vpop.permute.xlu0 %6980
        %6983 = vset.pattern.permute.xlu0 1
        %6984 = vperm.xlu0 %6983, %v6546
        %v6985 = vpop.permute.xlu0 %6984
        %6987 = vset.pattern.permute.xlu0 1
        %6988 = vperm.xlu0 %6987, %v6547
        %v6989 = vpop.permute.xlu0 %6988
        %6991 = vset.pattern.permute.xlu0 1
        %6992 = vperm.xlu0 %6991, %v6548
        %v6993 = vpop.permute.xlu0 %6992
        %6995 = vset.pattern.permute.xlu0 1
        %6996 = vperm.xlu0 %6995, %v6549
        %v6997 = vpop.permute.xlu0 %6996
        %6999 = vset.pattern.permute.xlu0 1
        %7000 = vperm.xlu0 %6999, %v6550
        %v7001 = vpop.permute.xlu0 %7000
        %7003 = vset.pattern.permute.xlu0 1
        %7004 = vperm.xlu0 %7003, %v6551
        %v7005 = vpop.permute.xlu0 %7004
        %7007 = vset.pattern.permute.xlu0 1
        %7008 = vperm.xlu0 %7007, %v6552
        %v7009 = vpop.permute.xlu0 %7008
        %7011 = vset.pattern.permute.xlu0 1
        %7012 = vperm.xlu0 %7011, %v6553
        %v7013 = vpop.permute.xlu0 %7012
        %7015 = vset.pattern.permute.xlu0 1
        %7016 = vperm.xlu0 %7015, %v6554
        %v7017 = vpop.permute.xlu0 %7016
        %7019 = vset.pattern.permute.xlu0 1
        %7020 = vperm.xlu0 %7019, %v6555
        %v7021 = vpop.permute.xlu0 %7020
        %7023 = vset.pattern.permute.xlu0 1
        %7024 = vperm.xlu0 %7023, %v6556
        %v7025 = vpop.permute.xlu0 %7024
        %7027 = vset.pattern.permute.xlu0 1
        %7028 = vperm.xlu0 %7027, %v6557
        %v7029 = vpop.permute.xlu0 %7028
        %7031 = vset.pattern.permute.xlu0 1
        %7032 = vperm.xlu0 %7031, %v6558
        %v7033 = vpop.permute.xlu0 %7032
        %7035 = vset.pattern.permute.xlu0 1
        %7036 = vperm.xlu0 %7035, %v6559
        %v7037 = vpop.permute.xlu0 %7036
        %v7039 = vmul.f32 %v6943, %v6977
        %v7040 = vmul.f32 %v6944, %v6977
        %v7041 = vmul.f32 %v6945, %v6981
        %v7042 = vmul.f32 %v6946, %v6981
        %v7043 = vmul.f32 %v6947, %v6985
        %v7044 = vmul.f32 %v6948, %v6985
        %v7045 = vmul.f32 %v6949, %v6989
        %v7046 = vmul.f32 %v6950, %v6989
        %v7047 = vmul.f32 %v6951, %v6993
        %v7048 = vmul.f32 %v6952, %v6993
        %v7049 = vmul.f32 %v6953, %v6997
        %v7050 = vmul.f32 %v6954, %v6997
        %v7051 = vmul.f32 %v6955, %v7001
        %v7052 = vmul.f32 %v6956, %v7001
        %v7053 = vmul.f32 %v6957, %v7005
        %v7054 = vmul.f32 %v6958, %v7005
        %v7055 = vmul.f32 %v6959, %v7009
        %v7056 = vmul.f32 %v6960, %v7009
        %v7057 = vmul.f32 %v6961, %v7013
        %v7058 = vmul.f32 %v6962, %v7013
        %v7059 = vmul.f32 %v6963, %v7017
        %v7060 = vmul.f32 %v6964, %v7017
        %v7061 = vmul.f32 %v6965, %v7021
        %v7062 = vmul.f32 %v6966, %v7021
        %v7063 = vmul.f32 %v6967, %v7025
        %v7064 = vmul.f32 %v6968, %v7025
        %v7065 = vmul.f32 %v6969, %v7029
        %v7066 = vmul.f32 %v6970, %v7029
        %v7067 = vmul.f32 %v6971, %v7033
        %v7068 = vmul.f32 %v6972, %v7033
        %v7069 = vmul.f32 %v6973, %v7037
        %v7070 = vmul.f32 %v6974, %v7037
        %v7071 = vadd.f32 %v6795, %v7039
        %v7072 = vadd.f32 %v6796, %v7040
        %v7073 = vadd.f32 %v6797, %v7041
        %v7074 = vadd.f32 %v6798, %v7042
        %v7075 = vadd.f32 %v6799, %v7043
        %v7076 = vadd.f32 %v6800, %v7044
        %v7077 = vadd.f32 %v6801, %v7045
        %v7078 = vadd.f32 %v6802, %v7046
        %v7079 = vadd.f32 %v6803, %v7047
        %v7080 = vadd.f32 %v6804, %v7048
        %v7081 = vadd.f32 %v6805, %v7049
        %v7082 = vadd.f32 %v6806, %v7050
        %v7083 = vadd.f32 %v6807, %v7051
        %v7084 = vadd.f32 %v6808, %v7052
        %v7085 = vadd.f32 %v6809, %v7053
        %v7086 = vadd.f32 %v6810, %v7054
        %v7087 = vadd.f32 %v6811, %v7055
        %v7088 = vadd.f32 %v6812, %v7056
        %v7089 = vadd.f32 %v6813, %v7057
        %v7090 = vadd.f32 %v6814, %v7058
        %v7091 = vadd.f32 %v6815, %v7059
        %v7092 = vadd.f32 %v6816, %v7060
        %v7093 = vadd.f32 %v6817, %v7061
        %v7094 = vadd.f32 %v6818, %v7062
        %v7095 = vadd.f32 %v6819, %v7063
        %v7096 = vadd.f32 %v6820, %v7064
        %v7097 = vadd.f32 %v6821, %v7065
        %v7098 = vadd.f32 %v6822, %v7066
        %v7099 = vadd.f32 %v6823, %v7067
        %v7100 = vadd.f32 %v6824, %v7068
        %v7101 = vadd.f32 %v6825, %v7069
        %v7102 = vadd.f32 %v6826, %v7070
        %7103 = vrot.lane.b32.xlu0 %v6466, 45
        %v7104 = vpop.permute.xlu0 %7103
        %7105 = vrot.lane.b32.xlu0 %v6470, 45
        %v7106 = vpop.permute.xlu0 %7105
        %7107 = vrot.lane.b32.xlu0 %v6476, 45
        %v7108 = vpop.permute.xlu0 %7107
        %7109 = vrot.lane.b32.xlu0 %v6480, 45
        %v7110 = vpop.permute.xlu0 %7109
        %7111 = vrot.lane.b32.xlu0 %v6486, 45
        %v7112 = vpop.permute.xlu0 %7111
        %7113 = vrot.lane.b32.xlu0 %v6490, 45
        %v7114 = vpop.permute.xlu0 %7113
        %7115 = vrot.lane.b32.xlu0 %v6496, 45
        %v7116 = vpop.permute.xlu0 %7115
        %7117 = vrot.lane.b32.xlu0 %v6500, 45
        %v7118 = vpop.permute.xlu0 %7117
        %7119 = vrot.lane.b32.xlu0 %v6506, 45
        %v7120 = vpop.permute.xlu0 %7119
        %7121 = vrot.lane.b32.xlu0 %v6510, 45
        %v7122 = vpop.permute.xlu0 %7121
        %7123 = vrot.lane.b32.xlu0 %v6516, 45
        %v7124 = vpop.permute.xlu0 %7123
        %7125 = vrot.lane.b32.xlu0 %v6520, 45
        %v7126 = vpop.permute.xlu0 %7125
        %7127 = vrot.lane.b32.xlu0 %v6526, 45
        %v7128 = vpop.permute.xlu0 %7127
        %7129 = vrot.lane.b32.xlu0 %v6530, 45
        %v7130 = vpop.permute.xlu0 %7129
        %7131 = vrot.lane.b32.xlu0 %v6536, 45
        %v7132 = vpop.permute.xlu0 %7131
        %7133 = vrot.lane.b32.xlu0 %v6540, 45
        %v7134 = vpop.permute.xlu0 %7133
        %7135 = vrot.lane.b32.xlu0 %v6468, 45
        %v7136 = vpop.permute.xlu0 %7135
        %7137 = vrot.lane.b32.xlu0 %v6472, 45
        %v7138 = vpop.permute.xlu0 %7137
        %7139 = vrot.lane.b32.xlu0 %v6478, 45
        %v7140 = vpop.permute.xlu0 %7139
        %7141 = vrot.lane.b32.xlu0 %v6482, 45
        %v7142 = vpop.permute.xlu0 %7141
        %7143 = vrot.lane.b32.xlu0 %v6488, 45
        %v7144 = vpop.permute.xlu0 %7143
        %7145 = vrot.lane.b32.xlu0 %v6492, 45
        %v7146 = vpop.permute.xlu0 %7145
        %7147 = vrot.lane.b32.xlu0 %v6498, 45
        %v7148 = vpop.permute.xlu0 %7147
        %7149 = vrot.lane.b32.xlu0 %v6502, 45
        %v7150 = vpop.permute.xlu0 %7149
        %7151 = vrot.lane.b32.xlu0 %v6508, 45
        %v7152 = vpop.permute.xlu0 %7151
        %7153 = vrot.lane.b32.xlu0 %v6512, 45
        %v7154 = vpop.permute.xlu0 %7153
        %7155 = vrot.lane.b32.xlu0 %v6518, 45
        %v7156 = vpop.permute.xlu0 %7155
        %7157 = vrot.lane.b32.xlu0 %v6522, 45
        %v7158 = vpop.permute.xlu0 %7157
        %7159 = vrot.lane.b32.xlu0 %v6528, 45
        %v7160 = vpop.permute.xlu0 %7159
        %7161 = vrot.lane.b32.xlu0 %v6532, 45
        %v7162 = vpop.permute.xlu0 %7161
        %7163 = vrot.lane.b32.xlu0 %v6538, 45
        %v7164 = vpop.permute.xlu0 %7163
        %7165 = vrot.lane.b32.xlu0 %v6542, 45
        %v7166 = vpop.permute.xlu0 %7165
        %vm7167 = vcmp.lt.s32.totalorder %v671, 45
        %v7168 = vsel %vm7167, %v7104, %v7136
        %v7169 = vsel %vm7167, %v7106, %v7138
        %v7170 = vsel %vm7167, %v7108, %v7140
        %v7171 = vsel %vm7167, %v7110, %v7142
        %v7172 = vsel %vm7167, %v7112, %v7144
        %v7173 = vsel %vm7167, %v7114, %v7146
        %v7174 = vsel %vm7167, %v7116, %v7148
        %v7175 = vsel %vm7167, %v7118, %v7150
        %v7176 = vsel %vm7167, %v7120, %v7152
        %v7177 = vsel %vm7167, %v7122, %v7154
        %v7178 = vsel %vm7167, %v7124, %v7156
        %v7179 = vsel %vm7167, %v7126, %v7158
        %v7180 = vsel %vm7167, %v7128, %v7160
        %v7181 = vsel %vm7167, %v7130, %v7162
        %v7182 = vsel %vm7167, %v7132, %v7164
        %v7183 = vsel %vm7167, %v7134, %v7166
        %v7184 = vsel %vm7167, %v7136, %v7104
        %v7185 = vsel %vm7167, %v7138, %v7106
        %v7186 = vsel %vm7167, %v7140, %v7108
        %v7187 = vsel %vm7167, %v7142, %v7110
        %v7188 = vsel %vm7167, %v7144, %v7112
        %v7189 = vsel %vm7167, %v7146, %v7114
        %v7190 = vsel %vm7167, %v7148, %v7116
        %v7191 = vsel %vm7167, %v7150, %v7118
        %v7192 = vsel %vm7167, %v7152, %v7120
        %v7193 = vsel %vm7167, %v7154, %v7122
        %v7194 = vsel %vm7167, %v7156, %v7124
        %v7195 = vsel %vm7167, %v7158, %v7126
        %v7196 = vsel %vm7167, %v7160, %v7128
        %v7197 = vsel %vm7167, %v7162, %v7130
        %v7198 = vsel %vm7167, %v7164, %v7132
        %v7199 = vsel %vm7167, %v7166, %v7134
        %vm7200 = vcmp.lt.s32.totalorder %v395, 13
        %v7201 = vsel %vm7200, 1, 0
        %v7202 = vrot.slane %v7201, 7
        %v7203 = vrot.slane %v7202, 2
        %vm7204 = vcmp.ne.s32.totalorder %v7203, 0
        %vm7205 = vmand %vm6657, %vm7204
        %v7206 = vsel %vm7205, 1, 0
        %v7207 = vlaneseq
        %v7208 = vshrl.u32 %v7207, 7
        %v7209 = vsub.s32 0, %v7208
        %v7210 = vrot.slane %v7206, %v7209
        %v7211 = vlaneseq
        %v7212 = vshrl.u32 %v7211, 7
        %v7213 = vsub.s32 2, %v7212
        %v7214 = vrot.slane %v7206, %v7213
        %v7215 = vlaneseq
        %v7216 = vshrl.u32 %v7215, 7
        %v7217 = vsub.s32 0, %v7216
        %v7218 = vrot.slane %v7210, %v7217
        %v7219 = vlaneseq
        %v7220 = vshrl.u32 %v7219, 7
        %v7221 = vsub.s32 0, %v7220
        %v7222 = vrot.slane %v7214, %v7221
        %vm7223 = vcmp.eq.s32.totalorder %v7218, 1
        %vm7224 = vcmp.eq.s32.totalorder %v7222, 1
        %v7225 = vsel %vm7223, %v7184, 0.0
        %v7226 = vsel %vm7224, %v7168, 0.0
        %v7227 = vsel %vm7223, %v7185, 0.0
        %v7228 = vsel %vm7224, %v7169, 0.0
        %v7229 = vsel %vm7223, %v7186, 0.0
        %v7230 = vsel %vm7224, %v7170, 0.0
        %v7231 = vsel %vm7223, %v7187, 0.0
        %v7232 = vsel %vm7224, %v7171, 0.0
        %v7233 = vsel %vm7223, %v7188, 0.0
        %v7234 = vsel %vm7224, %v7172, 0.0
        %v7235 = vsel %vm7223, %v7189, 0.0
        %v7236 = vsel %vm7224, %v7173, 0.0
        %v7237 = vsel %vm7223, %v7190, 0.0
        %v7238 = vsel %vm7224, %v7174, 0.0
        %v7239 = vsel %vm7223, %v7191, 0.0
        %v7240 = vsel %vm7224, %v7175, 0.0
        %v7241 = vsel %vm7223, %v7192, 0.0
        %v7242 = vsel %vm7224, %v7176, 0.0
        %v7243 = vsel %vm7223, %v7193, 0.0
        %v7244 = vsel %vm7224, %v7177, 0.0
        %v7245 = vsel %vm7223, %v7194, 0.0
        %v7246 = vsel %vm7224, %v7178, 0.0
        %v7247 = vsel %vm7223, %v7195, 0.0
        %v7248 = vsel %vm7224, %v7179, 0.0
        %v7249 = vsel %vm7223, %v7196, 0.0
        %v7250 = vsel %vm7224, %v7180, 0.0
        %v7251 = vsel %vm7223, %v7197, 0.0
        %v7252 = vsel %vm7224, %v7181, 0.0
        %v7253 = vsel %vm7223, %v7198, 0.0
        %v7254 = vsel %vm7224, %v7182, 0.0
        %v7255 = vsel %vm7223, %v7199, 0.0
        %v7256 = vsel %vm7224, %v7183, 0.0
        %7257 = vset.pattern.permute.xlu0 2
        %7258 = vperm.xlu0 %7257, %v6544
        %v7259 = vpop.permute.xlu0 %7258
        %7261 = vset.pattern.permute.xlu0 2
        %7262 = vperm.xlu0 %7261, %v6545
        %v7263 = vpop.permute.xlu0 %7262
        %7265 = vset.pattern.permute.xlu0 2
        %7266 = vperm.xlu0 %7265, %v6546
        %v7267 = vpop.permute.xlu0 %7266
        %7269 = vset.pattern.permute.xlu0 2
        %7270 = vperm.xlu0 %7269, %v6547
        %v7271 = vpop.permute.xlu0 %7270
        %7273 = vset.pattern.permute.xlu0 2
        %7274 = vperm.xlu0 %7273, %v6548
        %v7275 = vpop.permute.xlu0 %7274
        %7277 = vset.pattern.permute.xlu0 2
        %7278 = vperm.xlu0 %7277, %v6549
        %v7279 = vpop.permute.xlu0 %7278
        %7281 = vset.pattern.permute.xlu0 2
        %7282 = vperm.xlu0 %7281, %v6550
        %v7283 = vpop.permute.xlu0 %7282
        %7285 = vset.pattern.permute.xlu0 2
        %7286 = vperm.xlu0 %7285, %v6551
        %v7287 = vpop.permute.xlu0 %7286
        %7289 = vset.pattern.permute.xlu0 2
        %7290 = vperm.xlu0 %7289, %v6552
        %v7291 = vpop.permute.xlu0 %7290
        %7293 = vset.pattern.permute.xlu0 2
        %7294 = vperm.xlu0 %7293, %v6553
        %v7295 = vpop.permute.xlu0 %7294
        %7297 = vset.pattern.permute.xlu0 2
        %7298 = vperm.xlu0 %7297, %v6554
        %v7299 = vpop.permute.xlu0 %7298
        %7301 = vset.pattern.permute.xlu0 2
        %7302 = vperm.xlu0 %7301, %v6555
        %v7303 = vpop.permute.xlu0 %7302
        %7305 = vset.pattern.permute.xlu0 2
        %7306 = vperm.xlu0 %7305, %v6556
        %v7307 = vpop.permute.xlu0 %7306
        %7309 = vset.pattern.permute.xlu0 2
        %7310 = vperm.xlu0 %7309, %v6557
        %v7311 = vpop.permute.xlu0 %7310
        %7313 = vset.pattern.permute.xlu0 2
        %7314 = vperm.xlu0 %7313, %v6558
        %v7315 = vpop.permute.xlu0 %7314
        %7317 = vset.pattern.permute.xlu0 2
        %7318 = vperm.xlu0 %7317, %v6559
        %v7319 = vpop.permute.xlu0 %7318
        %v7321 = vmul.f32 %v7225, %v7259
        %v7322 = vmul.f32 %v7226, %v7259
        %v7323 = vmul.f32 %v7227, %v7263
        %v7324 = vmul.f32 %v7228, %v7263
        %v7325 = vmul.f32 %v7229, %v7267
        %v7326 = vmul.f32 %v7230, %v7267
        %v7327 = vmul.f32 %v7231, %v7271
        %v7328 = vmul.f32 %v7232, %v7271
        %v7329 = vmul.f32 %v7233, %v7275
        %v7330 = vmul.f32 %v7234, %v7275
        %v7331 = vmul.f32 %v7235, %v7279
        %v7332 = vmul.f32 %v7236, %v7279
        %v7333 = vmul.f32 %v7237, %v7283
        %v7334 = vmul.f32 %v7238, %v7283
        %v7335 = vmul.f32 %v7239, %v7287
        %v7336 = vmul.f32 %v7240, %v7287
        %v7337 = vmul.f32 %v7241, %v7291
        %v7338 = vmul.f32 %v7242, %v7291
        %v7339 = vmul.f32 %v7243, %v7295
        %v7340 = vmul.f32 %v7244, %v7295
        %v7341 = vmul.f32 %v7245, %v7299
        %v7342 = vmul.f32 %v7246, %v7299
        %v7343 = vmul.f32 %v7247, %v7303
        %v7344 = vmul.f32 %v7248, %v7303
        %v7345 = vmul.f32 %v7249, %v7307
        %v7346 = vmul.f32 %v7250, %v7307
        %v7347 = vmul.f32 %v7251, %v7311
        %v7348 = vmul.f32 %v7252, %v7311
        %v7349 = vmul.f32 %v7253, %v7315
        %v7350 = vmul.f32 %v7254, %v7315
        %v7351 = vmul.f32 %v7255, %v7319
        %v7352 = vmul.f32 %v7256, %v7319
        %v7353 = vadd.f32 %v7071, %v7321
        %v7354 = vadd.f32 %v7072, %v7322
        %v7355 = vadd.f32 %v7073, %v7323
        %v7356 = vadd.f32 %v7074, %v7324
        %v7357 = vadd.f32 %v7075, %v7325
        %v7358 = vadd.f32 %v7076, %v7326
        %v7359 = vadd.f32 %v7077, %v7327
        %v7360 = vadd.f32 %v7078, %v7328
        %v7361 = vadd.f32 %v7079, %v7329
        %v7362 = vadd.f32 %v7080, %v7330
        %v7363 = vadd.f32 %v7081, %v7331
        %v7364 = vadd.f32 %v7082, %v7332
        %v7365 = vadd.f32 %v7083, %v7333
        %v7366 = vadd.f32 %v7084, %v7334
        %v7367 = vadd.f32 %v7085, %v7335
        %v7368 = vadd.f32 %v7086, %v7336
        %v7369 = vadd.f32 %v7087, %v7337
        %v7370 = vadd.f32 %v7088, %v7338
        %v7371 = vadd.f32 %v7089, %v7339
        %v7372 = vadd.f32 %v7090, %v7340
        %v7373 = vadd.f32 %v7091, %v7341
        %v7374 = vadd.f32 %v7092, %v7342
        %v7375 = vadd.f32 %v7093, %v7343
        %v7376 = vadd.f32 %v7094, %v7344
        %v7377 = vadd.f32 %v7095, %v7345
        %v7378 = vadd.f32 %v7096, %v7346
        %v7379 = vadd.f32 %v7097, %v7347
        %v7380 = vadd.f32 %v7098, %v7348
        %v7381 = vadd.f32 %v7099, %v7349
        %v7382 = vadd.f32 %v7100, %v7350
        %v7383 = vadd.f32 %v7101, %v7351
        %v7384 = vadd.f32 %v7102, %v7352
        %7385 = vrot.lane.b32.xlu0 %v6466, 3
        %v7386 = vpop.permute.xlu0 %7385
        %7387 = vrot.lane.b32.xlu0 %v6470, 3
        %v7388 = vpop.permute.xlu0 %7387
        %7389 = vrot.lane.b32.xlu0 %v6476, 3
        %v7390 = vpop.permute.xlu0 %7389
        %7391 = vrot.lane.b32.xlu0 %v6480, 3
        %v7392 = vpop.permute.xlu0 %7391
        %7393 = vrot.lane.b32.xlu0 %v6486, 3
        %v7394 = vpop.permute.xlu0 %7393
        %7395 = vrot.lane.b32.xlu0 %v6490, 3
        %v7396 = vpop.permute.xlu0 %7395
        %7397 = vrot.lane.b32.xlu0 %v6496, 3
        %v7398 = vpop.permute.xlu0 %7397
        %7399 = vrot.lane.b32.xlu0 %v6500, 3
        %v7400 = vpop.permute.xlu0 %7399
        %7401 = vrot.lane.b32.xlu0 %v6506, 3
        %v7402 = vpop.permute.xlu0 %7401
        %7403 = vrot.lane.b32.xlu0 %v6510, 3
        %v7404 = vpop.permute.xlu0 %7403
        %7405 = vrot.lane.b32.xlu0 %v6516, 3
        %v7406 = vpop.permute.xlu0 %7405
        %7407 = vrot.lane.b32.xlu0 %v6520, 3
        %v7408 = vpop.permute.xlu0 %7407
        %7409 = vrot.lane.b32.xlu0 %v6526, 3
        %v7410 = vpop.permute.xlu0 %7409
        %7411 = vrot.lane.b32.xlu0 %v6530, 3
        %v7412 = vpop.permute.xlu0 %7411
        %7413 = vrot.lane.b32.xlu0 %v6536, 3
        %v7414 = vpop.permute.xlu0 %7413
        %7415 = vrot.lane.b32.xlu0 %v6540, 3
        %v7416 = vpop.permute.xlu0 %7415
        %7417 = vrot.lane.b32.xlu0 %v6468, 3
        %v7418 = vpop.permute.xlu0 %7417
        %7419 = vrot.lane.b32.xlu0 %v6472, 3
        %v7420 = vpop.permute.xlu0 %7419
        %7421 = vrot.lane.b32.xlu0 %v6478, 3
        %v7422 = vpop.permute.xlu0 %7421
        %7423 = vrot.lane.b32.xlu0 %v6482, 3
        %v7424 = vpop.permute.xlu0 %7423
        %7425 = vrot.lane.b32.xlu0 %v6488, 3
        %v7426 = vpop.permute.xlu0 %7425
        %7427 = vrot.lane.b32.xlu0 %v6492, 3
        %v7428 = vpop.permute.xlu0 %7427
        %7429 = vrot.lane.b32.xlu0 %v6498, 3
        %v7430 = vpop.permute.xlu0 %7429
        %7431 = vrot.lane.b32.xlu0 %v6502, 3
        %v7432 = vpop.permute.xlu0 %7431
        %7433 = vrot.lane.b32.xlu0 %v6508, 3
        %v7434 = vpop.permute.xlu0 %7433
        %7435 = vrot.lane.b32.xlu0 %v6512, 3
        %v7436 = vpop.permute.xlu0 %7435
        %7437 = vrot.lane.b32.xlu0 %v6518, 3
        %v7438 = vpop.permute.xlu0 %7437
        %7439 = vrot.lane.b32.xlu0 %v6522, 3
        %v7440 = vpop.permute.xlu0 %7439
        %7441 = vrot.lane.b32.xlu0 %v6528, 3
        %v7442 = vpop.permute.xlu0 %7441
        %7443 = vrot.lane.b32.xlu0 %v6532, 3
        %v7444 = vpop.permute.xlu0 %7443
        %7445 = vrot.lane.b32.xlu0 %v6538, 3
        %v7446 = vpop.permute.xlu0 %7445
        %7447 = vrot.lane.b32.xlu0 %v6542, 3
        %v7448 = vpop.permute.xlu0 %7447
        %vm7449 = vcmp.lt.s32.totalorder %v671, 3
        %v7450 = vsel %vm7449, %v7386, %v7418
        %v7451 = vsel %vm7449, %v7388, %v7420
        %v7452 = vsel %vm7449, %v7390, %v7422
        %v7453 = vsel %vm7449, %v7392, %v7424
        %v7454 = vsel %vm7449, %v7394, %v7426
        %v7455 = vsel %vm7449, %v7396, %v7428
        %v7456 = vsel %vm7449, %v7398, %v7430
        %v7457 = vsel %vm7449, %v7400, %v7432
        %v7458 = vsel %vm7449, %v7402, %v7434
        %v7459 = vsel %vm7449, %v7404, %v7436
        %v7460 = vsel %vm7449, %v7406, %v7438
        %v7461 = vsel %vm7449, %v7408, %v7440
        %v7462 = vsel %vm7449, %v7410, %v7442
        %v7463 = vsel %vm7449, %v7412, %v7444
        %v7464 = vsel %vm7449, %v7414, %v7446
        %v7465 = vsel %vm7449, %v7416, %v7448
        %v7466 = vsel %vm7449, %v7418, %v7386
        %v7467 = vsel %vm7449, %v7420, %v7388
        %v7468 = vsel %vm7449, %v7422, %v7390
        %v7469 = vsel %vm7449, %v7424, %v7392
        %v7470 = vsel %vm7449, %v7426, %v7394
        %v7471 = vsel %vm7449, %v7428, %v7396
        %v7472 = vsel %vm7449, %v7430, %v7398
        %v7473 = vsel %vm7449, %v7432, %v7400
        %v7474 = vsel %vm7449, %v7434, %v7402
        %v7475 = vsel %vm7449, %v7436, %v7404
        %v7476 = vsel %vm7449, %v7438, %v7406
        %v7477 = vsel %vm7449, %v7440, %v7408
        %v7478 = vsel %vm7449, %v7442, %v7410
        %v7479 = vsel %vm7449, %v7444, %v7412
        %v7480 = vsel %vm7449, %v7446, %v7414
        %v7481 = vsel %vm7449, %v7448, %v7416
        %v7482 = vlaneseq
        %v7483 = vshrl.u32 %v7482, 7
        %v7484 = vsub.s32 1, %v7483
        %v7485 = vrot.slane %v6659, %v7484
        %v7486 = vlaneseq
        %v7487 = vshrl.u32 %v7486, 7
        %v7488 = vsub.s32 3, %v7487
        %v7489 = vrot.slane %v6659, %v7488
        %v7490 = vlaneseq
        %v7491 = vshrl.u32 %v7490, 7
        %v7492 = vsub.s32 1, %v7491
        %v7493 = vrot.slane %v7485, %v7492
        %v7494 = vlaneseq
        %v7495 = vshrl.u32 %v7494, 7
        %v7496 = vsub.s32 1, %v7495
        %v7497 = vrot.slane %v7489, %v7496
        %vm7498 = vcmp.eq.s32.totalorder %v7493, 1
        %vm7499 = vcmp.eq.s32.totalorder %v7497, 1
        %v7500 = vsel %vm7498, %v7466, 0.0
        %v7501 = vsel %vm7499, %v7450, 0.0
        %v7502 = vsel %vm7498, %v7467, 0.0
        %v7503 = vsel %vm7499, %v7451, 0.0
        %v7504 = vsel %vm7498, %v7468, 0.0
        %v7505 = vsel %vm7499, %v7452, 0.0
        %v7506 = vsel %vm7498, %v7469, 0.0
        %v7507 = vsel %vm7499, %v7453, 0.0
        %v7508 = vsel %vm7498, %v7470, 0.0
        %v7509 = vsel %vm7499, %v7454, 0.0
        %v7510 = vsel %vm7498, %v7471, 0.0
        %v7511 = vsel %vm7499, %v7455, 0.0
        %v7512 = vsel %vm7498, %v7472, 0.0
        %v7513 = vsel %vm7499, %v7456, 0.0
        %v7514 = vsel %vm7498, %v7473, 0.0
        %v7515 = vsel %vm7499, %v7457, 0.0
        %v7516 = vsel %vm7498, %v7474, 0.0
        %v7517 = vsel %vm7499, %v7458, 0.0
        %v7518 = vsel %vm7498, %v7475, 0.0
        %v7519 = vsel %vm7499, %v7459, 0.0
        %v7520 = vsel %vm7498, %v7476, 0.0
        %v7521 = vsel %vm7499, %v7460, 0.0
        %v7522 = vsel %vm7498, %v7477, 0.0
        %v7523 = vsel %vm7499, %v7461, 0.0
        %v7524 = vsel %vm7498, %v7478, 0.0
        %v7525 = vsel %vm7499, %v7462, 0.0
        %v7526 = vsel %vm7498, %v7479, 0.0
        %v7527 = vsel %vm7499, %v7463, 0.0
        %v7528 = vsel %vm7498, %v7480, 0.0
        %v7529 = vsel %vm7499, %v7464, 0.0
        %v7530 = vsel %vm7498, %v7481, 0.0
        %v7531 = vsel %vm7499, %v7465, 0.0
        %7532 = vset.pattern.permute.xlu0 3
        %7533 = vperm.xlu0 %7532, %v6544
        %v7534 = vpop.permute.xlu0 %7533
        %7536 = vset.pattern.permute.xlu0 3
        %7537 = vperm.xlu0 %7536, %v6545
        %v7538 = vpop.permute.xlu0 %7537
        %7540 = vset.pattern.permute.xlu0 3
        %7541 = vperm.xlu0 %7540, %v6546
        %v7542 = vpop.permute.xlu0 %7541
        %7544 = vset.pattern.permute.xlu0 3
        %7545 = vperm.xlu0 %7544, %v6547
        %v7546 = vpop.permute.xlu0 %7545
        %7548 = vset.pattern.permute.xlu0 3
        %7549 = vperm.xlu0 %7548, %v6548
        %v7550 = vpop.permute.xlu0 %7549
        %7552 = vset.pattern.permute.xlu0 3
        %7553 = vperm.xlu0 %7552, %v6549
        %v7554 = vpop.permute.xlu0 %7553
        %7556 = vset.pattern.permute.xlu0 3
        %7557 = vperm.xlu0 %7556, %v6550
        %v7558 = vpop.permute.xlu0 %7557
        %7560 = vset.pattern.permute.xlu0 3
        %7561 = vperm.xlu0 %7560, %v6551
        %v7562 = vpop.permute.xlu0 %7561
        %7564 = vset.pattern.permute.xlu0 3
        %7565 = vperm.xlu0 %7564, %v6552
        %v7566 = vpop.permute.xlu0 %7565
        %7568 = vset.pattern.permute.xlu0 3
        %7569 = vperm.xlu0 %7568, %v6553
        %v7570 = vpop.permute.xlu0 %7569
        %7572 = vset.pattern.permute.xlu0 3
        %7573 = vperm.xlu0 %7572, %v6554
        %v7574 = vpop.permute.xlu0 %7573
        %7576 = vset.pattern.permute.xlu0 3
        %7577 = vperm.xlu0 %7576, %v6555
        %v7578 = vpop.permute.xlu0 %7577
        %7580 = vset.pattern.permute.xlu0 3
        %7581 = vperm.xlu0 %7580, %v6556
        %v7582 = vpop.permute.xlu0 %7581
        %7584 = vset.pattern.permute.xlu0 3
        %7585 = vperm.xlu0 %7584, %v6557
        %v7586 = vpop.permute.xlu0 %7585
        %7588 = vset.pattern.permute.xlu0 3
        %7589 = vperm.xlu0 %7588, %v6558
        %v7590 = vpop.permute.xlu0 %7589
        %7592 = vset.pattern.permute.xlu0 3
        %7593 = vperm.xlu0 %7592, %v6559
        %v7594 = vpop.permute.xlu0 %7593
        %v7596 = vmul.f32 %v7500, %v7534
        %v7597 = vmul.f32 %v7501, %v7534
        %v7598 = vmul.f32 %v7502, %v7538
        %v7599 = vmul.f32 %v7503, %v7538
        %v7600 = vmul.f32 %v7504, %v7542
        %v7601 = vmul.f32 %v7505, %v7542
        %v7602 = vmul.f32 %v7506, %v7546
        %v7603 = vmul.f32 %v7507, %v7546
        %v7604 = vmul.f32 %v7508, %v7550
        %v7605 = vmul.f32 %v7509, %v7550
        %v7606 = vmul.f32 %v7510, %v7554
        %v7607 = vmul.f32 %v7511, %v7554
        %v7608 = vmul.f32 %v7512, %v7558
        %v7609 = vmul.f32 %v7513, %v7558
        %v7610 = vmul.f32 %v7514, %v7562
        %v7611 = vmul.f32 %v7515, %v7562
        %v7612 = vmul.f32 %v7516, %v7566
        %v7613 = vmul.f32 %v7517, %v7566
        %v7614 = vmul.f32 %v7518, %v7570
        %v7615 = vmul.f32 %v7519, %v7570
        %v7616 = vmul.f32 %v7520, %v7574
        %v7617 = vmul.f32 %v7521, %v7574
        %v7618 = vmul.f32 %v7522, %v7578
        %v7619 = vmul.f32 %v7523, %v7578
        %v7620 = vmul.f32 %v7524, %v7582
        %v7621 = vmul.f32 %v7525, %v7582
        %v7622 = vmul.f32 %v7526, %v7586
        %v7623 = vmul.f32 %v7527, %v7586
        %v7624 = vmul.f32 %v7528, %v7590
        %v7625 = vmul.f32 %v7529, %v7590
        %v7626 = vmul.f32 %v7530, %v7594
        %v7627 = vmul.f32 %v7531, %v7594
        %v7628 = vadd.f32 %v7353, %v7596
        %v7629 = vadd.f32 %v7354, %v7597
        %v7630 = vadd.f32 %v7355, %v7598
        %v7631 = vadd.f32 %v7356, %v7599
        %v7632 = vadd.f32 %v7357, %v7600
        %v7633 = vadd.f32 %v7358, %v7601
        %v7634 = vadd.f32 %v7359, %v7602
        %v7635 = vadd.f32 %v7360, %v7603
        %v7636 = vadd.f32 %v7361, %v7604
        %v7637 = vadd.f32 %v7362, %v7605
        %v7638 = vadd.f32 %v7363, %v7606
        %v7639 = vadd.f32 %v7364, %v7607
        %v7640 = vadd.f32 %v7365, %v7608
        %v7641 = vadd.f32 %v7366, %v7609
        %v7642 = vadd.f32 %v7367, %v7610
        %v7643 = vadd.f32 %v7368, %v7611
        %v7644 = vadd.f32 %v7369, %v7612
        %v7645 = vadd.f32 %v7370, %v7613
        %v7646 = vadd.f32 %v7371, %v7614
        %v7647 = vadd.f32 %v7372, %v7615
        %v7648 = vadd.f32 %v7373, %v7616
        %v7649 = vadd.f32 %v7374, %v7617
        %v7650 = vadd.f32 %v7375, %v7618
        %v7651 = vadd.f32 %v7376, %v7619
        %v7652 = vadd.f32 %v7377, %v7620
        %v7653 = vadd.f32 %v7378, %v7621
        %v7654 = vadd.f32 %v7379, %v7622
        %v7655 = vadd.f32 %v7380, %v7623
        %v7656 = vadd.f32 %v7381, %v7624
        %v7657 = vadd.f32 %v7382, %v7625
        %v7658 = vadd.f32 %v7383, %v7626
        %v7659 = vadd.f32 %v7384, %v7627
        %7660 = vset.pattern.permute.xlu0 4
        %7661 = vperm.xlu0 %7660, %v6544
        %v7662 = vpop.permute.xlu0 %7661
        %7664 = vset.pattern.permute.xlu0 4
        %7665 = vperm.xlu0 %7664, %v6545
        %v7666 = vpop.permute.xlu0 %7665
        %7668 = vset.pattern.permute.xlu0 4
        %7669 = vperm.xlu0 %7668, %v6546
        %v7670 = vpop.permute.xlu0 %7669
        %7672 = vset.pattern.permute.xlu0 4
        %7673 = vperm.xlu0 %7672, %v6547
        %v7674 = vpop.permute.xlu0 %7673
        %7676 = vset.pattern.permute.xlu0 4
        %7677 = vperm.xlu0 %7676, %v6548
        %v7678 = vpop.permute.xlu0 %7677
        %7680 = vset.pattern.permute.xlu0 4
        %7681 = vperm.xlu0 %7680, %v6549
        %v7682 = vpop.permute.xlu0 %7681
        %7684 = vset.pattern.permute.xlu0 4
        %7685 = vperm.xlu0 %7684, %v6550
        %v7686 = vpop.permute.xlu0 %7685
        %7688 = vset.pattern.permute.xlu0 4
        %7689 = vperm.xlu0 %7688, %v6551
        %v7690 = vpop.permute.xlu0 %7689
        %7692 = vset.pattern.permute.xlu0 4
        %7693 = vperm.xlu0 %7692, %v6552
        %v7694 = vpop.permute.xlu0 %7693
        %7696 = vset.pattern.permute.xlu0 4
        %7697 = vperm.xlu0 %7696, %v6553
        %v7698 = vpop.permute.xlu0 %7697
        %7700 = vset.pattern.permute.xlu0 4
        %7701 = vperm.xlu0 %7700, %v6554
        %v7702 = vpop.permute.xlu0 %7701
        %7704 = vset.pattern.permute.xlu0 4
        %7705 = vperm.xlu0 %7704, %v6555
        %v7706 = vpop.permute.xlu0 %7705
        %7708 = vset.pattern.permute.xlu0 4
        %7709 = vperm.xlu0 %7708, %v6556
        %v7710 = vpop.permute.xlu0 %7709
        %7712 = vset.pattern.permute.xlu0 4
        %7713 = vperm.xlu0 %7712, %v6557
        %v7714 = vpop.permute.xlu0 %7713
        %7716 = vset.pattern.permute.xlu0 4
        %7717 = vperm.xlu0 %7716, %v6558
        %v7718 = vpop.permute.xlu0 %7717
        %7720 = vset.pattern.permute.xlu0 4
        %7721 = vperm.xlu0 %7720, %v6559
        %v7722 = vpop.permute.xlu0 %7721
        %v7724 = vmul.f32 %v6466, %v7662
        %v7725 = vmul.f32 %v6468, %v7662
        %v7726 = vmul.f32 %v6470, %v7666
        %v7727 = vmul.f32 %v6472, %v7666
        %v7728 = vmul.f32 %v6476, %v7670
        %v7729 = vmul.f32 %v6478, %v7670
        %v7730 = vmul.f32 %v6480, %v7674
        %v7731 = vmul.f32 %v6482, %v7674
        %v7732 = vmul.f32 %v6486, %v7678
        %v7733 = vmul.f32 %v6488, %v7678
        %v7734 = vmul.f32 %v6490, %v7682
        %v7735 = vmul.f32 %v6492, %v7682
        %v7736 = vmul.f32 %v6496, %v7686
        %v7737 = vmul.f32 %v6498, %v7686
        %v7738 = vmul.f32 %v6500, %v7690
        %v7739 = vmul.f32 %v6502, %v7690
        %v7740 = vmul.f32 %v6506, %v7694
        %v7741 = vmul.f32 %v6508, %v7694
        %v7742 = vmul.f32 %v6510, %v7698
        %v7743 = vmul.f32 %v6512, %v7698
        %v7744 = vmul.f32 %v6516, %v7702
        %v7745 = vmul.f32 %v6518, %v7702
        %v7746 = vmul.f32 %v6520, %v7706
        %v7747 = vmul.f32 %v6522, %v7706
        %v7748 = vmul.f32 %v6526, %v7710
        %v7749 = vmul.f32 %v6528, %v7710
        %v7750 = vmul.f32 %v6530, %v7714
        %v7751 = vmul.f32 %v6532, %v7714
        %v7752 = vmul.f32 %v6536, %v7718
        %v7753 = vmul.f32 %v6538, %v7718
        %v7754 = vmul.f32 %v6540, %v7722
        %v7755 = vmul.f32 %v6542, %v7722
        %v7756 = vadd.f32 %v7628, %v7724
        %v7757 = vadd.f32 %v7629, %v7725
        %v7758 = vadd.f32 %v7630, %v7726
        %v7759 = vadd.f32 %v7631, %v7727
        %v7760 = vadd.f32 %v7632, %v7728
        %v7761 = vadd.f32 %v7633, %v7729
        %v7762 = vadd.f32 %v7634, %v7730
        %v7763 = vadd.f32 %v7635, %v7731
        %v7764 = vadd.f32 %v7636, %v7732
        %v7765 = vadd.f32 %v7637, %v7733
        %v7766 = vadd.f32 %v7638, %v7734
        %v7767 = vadd.f32 %v7639, %v7735
        %v7768 = vadd.f32 %v7640, %v7736
        %v7769 = vadd.f32 %v7641, %v7737
        %v7770 = vadd.f32 %v7642, %v7738
        %v7771 = vadd.f32 %v7643, %v7739
        %v7772 = vadd.f32 %v7644, %v7740
        %v7773 = vadd.f32 %v7645, %v7741
        %v7774 = vadd.f32 %v7646, %v7742
        %v7775 = vadd.f32 %v7647, %v7743
        %v7776 = vadd.f32 %v7648, %v7744
        %v7777 = vadd.f32 %v7649, %v7745
        %v7778 = vadd.f32 %v7650, %v7746
        %v7779 = vadd.f32 %v7651, %v7747
        %v7780 = vadd.f32 %v7652, %v7748
        %v7781 = vadd.f32 %v7653, %v7749
        %v7782 = vadd.f32 %v7654, %v7750
        %v7783 = vadd.f32 %v7655, %v7751
        %v7784 = vadd.f32 %v7656, %v7752
        %v7785 = vadd.f32 %v7657, %v7753
        %v7786 = vadd.f32 %v7658, %v7754
        %v7787 = vadd.f32 %v7659, %v7755
        %7788 = vrot.lane.b32.xlu0 %v6466, 125
        %v7789 = vpop.permute.xlu0 %7788
        %7790 = vrot.lane.b32.xlu0 %v6470, 125
        %v7791 = vpop.permute.xlu0 %7790
        %7792 = vrot.lane.b32.xlu0 %v6476, 125
        %v7793 = vpop.permute.xlu0 %7792
        %7794 = vrot.lane.b32.xlu0 %v6480, 125
        %v7795 = vpop.permute.xlu0 %7794
        %7796 = vrot.lane.b32.xlu0 %v6486, 125
        %v7797 = vpop.permute.xlu0 %7796
        %7798 = vrot.lane.b32.xlu0 %v6490, 125
        %v7799 = vpop.permute.xlu0 %7798
        %7800 = vrot.lane.b32.xlu0 %v6496, 125
        %v7801 = vpop.permute.xlu0 %7800
        %7802 = vrot.lane.b32.xlu0 %v6500, 125
        %v7803 = vpop.permute.xlu0 %7802
        %7804 = vrot.lane.b32.xlu0 %v6506, 125
        %v7805 = vpop.permute.xlu0 %7804
        %7806 = vrot.lane.b32.xlu0 %v6510, 125
        %v7807 = vpop.permute.xlu0 %7806
        %7808 = vrot.lane.b32.xlu0 %v6516, 125
        %v7809 = vpop.permute.xlu0 %7808
        %7810 = vrot.lane.b32.xlu0 %v6520, 125
        %v7811 = vpop.permute.xlu0 %7810
        %7812 = vrot.lane.b32.xlu0 %v6526, 125
        %v7813 = vpop.permute.xlu0 %7812
        %7814 = vrot.lane.b32.xlu0 %v6530, 125
        %v7815 = vpop.permute.xlu0 %7814
        %7816 = vrot.lane.b32.xlu0 %v6536, 125
        %v7817 = vpop.permute.xlu0 %7816
        %7818 = vrot.lane.b32.xlu0 %v6540, 125
        %v7819 = vpop.permute.xlu0 %7818
        %7820 = vrot.lane.b32.xlu0 %v6468, 125
        %v7821 = vpop.permute.xlu0 %7820
        %7822 = vrot.lane.b32.xlu0 %v6472, 125
        %v7823 = vpop.permute.xlu0 %7822
        %7824 = vrot.lane.b32.xlu0 %v6478, 125
        %v7825 = vpop.permute.xlu0 %7824
        %7826 = vrot.lane.b32.xlu0 %v6482, 125
        %v7827 = vpop.permute.xlu0 %7826
        %7828 = vrot.lane.b32.xlu0 %v6488, 125
        %v7829 = vpop.permute.xlu0 %7828
        %7830 = vrot.lane.b32.xlu0 %v6492, 125
        %v7831 = vpop.permute.xlu0 %7830
        %7832 = vrot.lane.b32.xlu0 %v6498, 125
        %v7833 = vpop.permute.xlu0 %7832
        %7834 = vrot.lane.b32.xlu0 %v6502, 125
        %v7835 = vpop.permute.xlu0 %7834
        %7836 = vrot.lane.b32.xlu0 %v6508, 125
        %v7837 = vpop.permute.xlu0 %7836
        %7838 = vrot.lane.b32.xlu0 %v6512, 125
        %v7839 = vpop.permute.xlu0 %7838
        %7840 = vrot.lane.b32.xlu0 %v6518, 125
        %v7841 = vpop.permute.xlu0 %7840
        %7842 = vrot.lane.b32.xlu0 %v6522, 125
        %v7843 = vpop.permute.xlu0 %7842
        %7844 = vrot.lane.b32.xlu0 %v6528, 125
        %v7845 = vpop.permute.xlu0 %7844
        %7846 = vrot.lane.b32.xlu0 %v6532, 125
        %v7847 = vpop.permute.xlu0 %7846
        %7848 = vrot.lane.b32.xlu0 %v6538, 125
        %v7849 = vpop.permute.xlu0 %7848
        %7850 = vrot.lane.b32.xlu0 %v6542, 125
        %v7851 = vpop.permute.xlu0 %7850
        %vm7852 = vcmp.lt.s32.totalorder %v671, 125
        %v7853 = vsel %vm7852, %v7789, %v7821
        %v7854 = vsel %vm7852, %v7791, %v7823
        %v7855 = vsel %vm7852, %v7793, %v7825
        %v7856 = vsel %vm7852, %v7795, %v7827
        %v7857 = vsel %vm7852, %v7797, %v7829
        %v7858 = vsel %vm7852, %v7799, %v7831
        %v7859 = vsel %vm7852, %v7801, %v7833
        %v7860 = vsel %vm7852, %v7803, %v7835
        %v7861 = vsel %vm7852, %v7805, %v7837
        %v7862 = vsel %vm7852, %v7807, %v7839
        %v7863 = vsel %vm7852, %v7809, %v7841
        %v7864 = vsel %vm7852, %v7811, %v7843
        %v7865 = vsel %vm7852, %v7813, %v7845
        %v7866 = vsel %vm7852, %v7815, %v7847
        %v7867 = vsel %vm7852, %v7817, %v7849
        %v7868 = vsel %vm7852, %v7819, %v7851
        %v7869 = vsel %vm7852, %v7821, %v7789
        %v7870 = vsel %vm7852, %v7823, %v7791
        %v7871 = vsel %vm7852, %v7825, %v7793
        %v7872 = vsel %vm7852, %v7827, %v7795
        %v7873 = vsel %vm7852, %v7829, %v7797
        %v7874 = vsel %vm7852, %v7831, %v7799
        %v7875 = vsel %vm7852, %v7833, %v7801
        %v7876 = vsel %vm7852, %v7835, %v7803
        %v7877 = vsel %vm7852, %v7837, %v7805
        %v7878 = vsel %vm7852, %v7839, %v7807
        %v7879 = vsel %vm7852, %v7841, %v7809
        %v7880 = vsel %vm7852, %v7843, %v7811
        %v7881 = vsel %vm7852, %v7845, %v7813
        %v7882 = vsel %vm7852, %v7847, %v7815
        %v7883 = vsel %vm7852, %v7849, %v7817
        %v7884 = vsel %vm7852, %v7851, %v7819
        %v7885 = vlaneseq
        %v7886 = vshrl.u32 %v7885, 7
        %v7887 = vsub.s32 1, %v7886
        %v7888 = vrot.slane %v7201, %v7887
        %v7889 = vlaneseq
        %v7890 = vshrl.u32 %v7889, 7
        %v7891 = vsub.s32 3, %v7890
        %v7892 = vrot.slane %v7201, %v7891
        %v7893 = vlaneseq
        %v7894 = vshrl.u32 %v7893, 7
        %v7895 = vsub.s32 1, %v7894
        %v7896 = vrot.slane %v7888, %v7895
        %v7897 = vlaneseq
        %v7898 = vshrl.u32 %v7897, 7
        %v7899 = vsub.s32 1, %v7898
        %v7900 = vrot.slane %v7892, %v7899
        %vm7901 = vcmp.eq.s32.totalorder %v7896, 1
        %vm7902 = vcmp.eq.s32.totalorder %v7900, 1
        %v7903 = vsel %vm7901, %v7853, 0.0
        %v7904 = vsel %vm7902, %v7869, 0.0
        %v7905 = vsel %vm7901, %v7854, 0.0
        %v7906 = vsel %vm7902, %v7870, 0.0
        %v7907 = vsel %vm7901, %v7855, 0.0
        %v7908 = vsel %vm7902, %v7871, 0.0
        %v7909 = vsel %vm7901, %v7856, 0.0
        %v7910 = vsel %vm7902, %v7872, 0.0
        %v7911 = vsel %vm7901, %v7857, 0.0
        %v7912 = vsel %vm7902, %v7873, 0.0
        %v7913 = vsel %vm7901, %v7858, 0.0
        %v7914 = vsel %vm7902, %v7874, 0.0
        %v7915 = vsel %vm7901, %v7859, 0.0
        %v7916 = vsel %vm7902, %v7875, 0.0
        %v7917 = vsel %vm7901, %v7860, 0.0
        %v7918 = vsel %vm7902, %v7876, 0.0
        %v7919 = vsel %vm7901, %v7861, 0.0
        %v7920 = vsel %vm7902, %v7877, 0.0
        %v7921 = vsel %vm7901, %v7862, 0.0
        %v7922 = vsel %vm7902, %v7878, 0.0
        %v7923 = vsel %vm7901, %v7863, 0.0
        %v7924 = vsel %vm7902, %v7879, 0.0
        %v7925 = vsel %vm7901, %v7864, 0.0
        %v7926 = vsel %vm7902, %v7880, 0.0
        %v7927 = vsel %vm7901, %v7865, 0.0
        %v7928 = vsel %vm7902, %v7881, 0.0
        %v7929 = vsel %vm7901, %v7866, 0.0
        %v7930 = vsel %vm7902, %v7882, 0.0
        %v7931 = vsel %vm7901, %v7867, 0.0
        %v7932 = vsel %vm7902, %v7883, 0.0
        %v7933 = vsel %vm7901, %v7868, 0.0
        %v7934 = vsel %vm7902, %v7884, 0.0
        %7935 = vset.pattern.permute.xlu0 5
        %7936 = vperm.xlu0 %7935, %v6544
        %v7937 = vpop.permute.xlu0 %7936
        %7939 = vset.pattern.permute.xlu0 5
        %7940 = vperm.xlu0 %7939, %v6545
        %v7941 = vpop.permute.xlu0 %7940
        %7943 = vset.pattern.permute.xlu0 5
        %7944 = vperm.xlu0 %7943, %v6546
        %v7945 = vpop.permute.xlu0 %7944
        %7947 = vset.pattern.permute.xlu0 5
        %7948 = vperm.xlu0 %7947, %v6547
        %v7949 = vpop.permute.xlu0 %7948
        %7951 = vset.pattern.permute.xlu0 5
        %7952 = vperm.xlu0 %7951, %v6548
        %v7953 = vpop.permute.xlu0 %7952
        %7955 = vset.pattern.permute.xlu0 5
        %7956 = vperm.xlu0 %7955, %v6549
        %v7957 = vpop.permute.xlu0 %7956
        %7959 = vset.pattern.permute.xlu0 5
        %7960 = vperm.xlu0 %7959, %v6550
        %v7961 = vpop.permute.xlu0 %7960
        %7963 = vset.pattern.permute.xlu0 5
        %7964 = vperm.xlu0 %7963, %v6551
        %v7965 = vpop.permute.xlu0 %7964
        %7967 = vset.pattern.permute.xlu0 5
        %7968 = vperm.xlu0 %7967, %v6552
        %v7969 = vpop.permute.xlu0 %7968
        %7971 = vset.pattern.permute.xlu0 5
        %7972 = vperm.xlu0 %7971, %v6553
        %v7973 = vpop.permute.xlu0 %7972
        %7975 = vset.pattern.permute.xlu0 5
        %7976 = vperm.xlu0 %7975, %v6554
        %v7977 = vpop.permute.xlu0 %7976
        %7979 = vset.pattern.permute.xlu0 5
        %7980 = vperm.xlu0 %7979, %v6555
        %v7981 = vpop.permute.xlu0 %7980
        %7983 = vset.pattern.permute.xlu0 5
        %7984 = vperm.xlu0 %7983, %v6556
        %v7985 = vpop.permute.xlu0 %7984
        %7987 = vset.pattern.permute.xlu0 5
        %7988 = vperm.xlu0 %7987, %v6557
        %v7989 = vpop.permute.xlu0 %7988
        %7991 = vset.pattern.permute.xlu0 5
        %7992 = vperm.xlu0 %7991, %v6558
        %v7993 = vpop.permute.xlu0 %7992
        %7995 = vset.pattern.permute.xlu0 5
        %7996 = vperm.xlu0 %7995, %v6559
        %v7997 = vpop.permute.xlu0 %7996
        %v7999 = vmul.f32 %v7903, %v7937
        %v8000 = vmul.f32 %v7904, %v7937
        %v8001 = vmul.f32 %v7905, %v7941
        %v8002 = vmul.f32 %v7906, %v7941
        %v8003 = vmul.f32 %v7907, %v7945
        %v8004 = vmul.f32 %v7908, %v7945
        %v8005 = vmul.f32 %v7909, %v7949
        %v8006 = vmul.f32 %v7910, %v7949
        %v8007 = vmul.f32 %v7911, %v7953
        %v8008 = vmul.f32 %v7912, %v7953
        %v8009 = vmul.f32 %v7913, %v7957
        %v8010 = vmul.f32 %v7914, %v7957
        %v8011 = vmul.f32 %v7915, %v7961
        %v8012 = vmul.f32 %v7916, %v7961
        %v8013 = vmul.f32 %v7917, %v7965
        %v8014 = vmul.f32 %v7918, %v7965
        %v8015 = vmul.f32 %v7919, %v7969
        %v8016 = vmul.f32 %v7920, %v7969
        %v8017 = vmul.f32 %v7921, %v7973
        %v8018 = vmul.f32 %v7922, %v7973
        %v8019 = vmul.f32 %v7923, %v7977
        %v8020 = vmul.f32 %v7924, %v7977
        %v8021 = vmul.f32 %v7925, %v7981
        %v8022 = vmul.f32 %v7926, %v7981
        %v8023 = vmul.f32 %v7927, %v7985
        %v8024 = vmul.f32 %v7928, %v7985
        %v8025 = vmul.f32 %v7929, %v7989
        %v8026 = vmul.f32 %v7930, %v7989
        %v8027 = vmul.f32 %v7931, %v7993
        %v8028 = vmul.f32 %v7932, %v7993
        %v8029 = vmul.f32 %v7933, %v7997
        %v8030 = vmul.f32 %v7934, %v7997
        %v8031 = vadd.f32 %v7756, %v7999
        %v8032 = vadd.f32 %v7757, %v8000
        %v8033 = vadd.f32 %v7758, %v8001
        %v8034 = vadd.f32 %v7759, %v8002
        %v8035 = vadd.f32 %v7760, %v8003
        %v8036 = vadd.f32 %v7761, %v8004
        %v8037 = vadd.f32 %v7762, %v8005
        %v8038 = vadd.f32 %v7763, %v8006
        %v8039 = vadd.f32 %v7764, %v8007
        %v8040 = vadd.f32 %v7765, %v8008
        %v8041 = vadd.f32 %v7766, %v8009
        %v8042 = vadd.f32 %v7767, %v8010
        %v8043 = vadd.f32 %v7768, %v8011
        %v8044 = vadd.f32 %v7769, %v8012
        %v8045 = vadd.f32 %v7770, %v8013
        %v8046 = vadd.f32 %v7771, %v8014
        %v8047 = vadd.f32 %v7772, %v8015
        %v8048 = vadd.f32 %v7773, %v8016
        %v8049 = vadd.f32 %v7774, %v8017
        %v8050 = vadd.f32 %v7775, %v8018
        %v8051 = vadd.f32 %v7776, %v8019
        %v8052 = vadd.f32 %v7777, %v8020
        %v8053 = vadd.f32 %v7778, %v8021
        %v8054 = vadd.f32 %v7779, %v8022
        %v8055 = vadd.f32 %v7780, %v8023
        %v8056 = vadd.f32 %v7781, %v8024
        %v8057 = vadd.f32 %v7782, %v8025
        %v8058 = vadd.f32 %v7783, %v8026
        %v8059 = vadd.f32 %v7784, %v8027
        %v8060 = vadd.f32 %v7785, %v8028
        %v8061 = vadd.f32 %v7786, %v8029
        %v8062 = vadd.f32 %v7787, %v8030
        %8063 = vrot.lane.b32.xlu0 %v6466, 83
        %v8064 = vpop.permute.xlu0 %8063
        %8065 = vrot.lane.b32.xlu0 %v6470, 83
        %v8066 = vpop.permute.xlu0 %8065
        %8067 = vrot.lane.b32.xlu0 %v6476, 83
        %v8068 = vpop.permute.xlu0 %8067
        %8069 = vrot.lane.b32.xlu0 %v6480, 83
        %v8070 = vpop.permute.xlu0 %8069
        %8071 = vrot.lane.b32.xlu0 %v6486, 83
        %v8072 = vpop.permute.xlu0 %8071
        %8073 = vrot.lane.b32.xlu0 %v6490, 83
        %v8074 = vpop.permute.xlu0 %8073
        %8075 = vrot.lane.b32.xlu0 %v6496, 83
        %v8076 = vpop.permute.xlu0 %8075
        %8077 = vrot.lane.b32.xlu0 %v6500, 83
        %v8078 = vpop.permute.xlu0 %8077
        %8079 = vrot.lane.b32.xlu0 %v6506, 83
        %v8080 = vpop.permute.xlu0 %8079
        %8081 = vrot.lane.b32.xlu0 %v6510, 83
        %v8082 = vpop.permute.xlu0 %8081
        %8083 = vrot.lane.b32.xlu0 %v6516, 83
        %v8084 = vpop.permute.xlu0 %8083
        %8085 = vrot.lane.b32.xlu0 %v6520, 83
        %v8086 = vpop.permute.xlu0 %8085
        %8087 = vrot.lane.b32.xlu0 %v6526, 83
        %v8088 = vpop.permute.xlu0 %8087
        %8089 = vrot.lane.b32.xlu0 %v6530, 83
        %v8090 = vpop.permute.xlu0 %8089
        %8091 = vrot.lane.b32.xlu0 %v6536, 83
        %v8092 = vpop.permute.xlu0 %8091
        %8093 = vrot.lane.b32.xlu0 %v6540, 83
        %v8094 = vpop.permute.xlu0 %8093
        %8095 = vrot.lane.b32.xlu0 %v6468, 83
        %v8096 = vpop.permute.xlu0 %8095
        %8097 = vrot.lane.b32.xlu0 %v6472, 83
        %v8098 = vpop.permute.xlu0 %8097
        %8099 = vrot.lane.b32.xlu0 %v6478, 83
        %v8100 = vpop.permute.xlu0 %8099
        %8101 = vrot.lane.b32.xlu0 %v6482, 83
        %v8102 = vpop.permute.xlu0 %8101
        %8103 = vrot.lane.b32.xlu0 %v6488, 83
        %v8104 = vpop.permute.xlu0 %8103
        %8105 = vrot.lane.b32.xlu0 %v6492, 83
        %v8106 = vpop.permute.xlu0 %8105
        %8107 = vrot.lane.b32.xlu0 %v6498, 83
        %v8108 = vpop.permute.xlu0 %8107
        %8109 = vrot.lane.b32.xlu0 %v6502, 83
        %v8110 = vpop.permute.xlu0 %8109
        %8111 = vrot.lane.b32.xlu0 %v6508, 83
        %v8112 = vpop.permute.xlu0 %8111
        %8113 = vrot.lane.b32.xlu0 %v6512, 83
        %v8114 = vpop.permute.xlu0 %8113
        %8115 = vrot.lane.b32.xlu0 %v6518, 83
        %v8116 = vpop.permute.xlu0 %8115
        %8117 = vrot.lane.b32.xlu0 %v6522, 83
        %v8118 = vpop.permute.xlu0 %8117
        %8119 = vrot.lane.b32.xlu0 %v6528, 83
        %v8120 = vpop.permute.xlu0 %8119
        %8121 = vrot.lane.b32.xlu0 %v6532, 83
        %v8122 = vpop.permute.xlu0 %8121
        %8123 = vrot.lane.b32.xlu0 %v6538, 83
        %v8124 = vpop.permute.xlu0 %8123
        %8125 = vrot.lane.b32.xlu0 %v6542, 83
        %v8126 = vpop.permute.xlu0 %8125
        %vm8127 = vcmp.lt.s32.totalorder %v671, 83
        %v8128 = vsel %vm8127, %v8064, %v8096
        %v8129 = vsel %vm8127, %v8066, %v8098
        %v8130 = vsel %vm8127, %v8068, %v8100
        %v8131 = vsel %vm8127, %v8070, %v8102
        %v8132 = vsel %vm8127, %v8072, %v8104
        %v8133 = vsel %vm8127, %v8074, %v8106
        %v8134 = vsel %vm8127, %v8076, %v8108
        %v8135 = vsel %vm8127, %v8078, %v8110
        %v8136 = vsel %vm8127, %v8080, %v8112
        %v8137 = vsel %vm8127, %v8082, %v8114
        %v8138 = vsel %vm8127, %v8084, %v8116
        %v8139 = vsel %vm8127, %v8086, %v8118
        %v8140 = vsel %vm8127, %v8088, %v8120
        %v8141 = vsel %vm8127, %v8090, %v8122
        %v8142 = vsel %vm8127, %v8092, %v8124
        %v8143 = vsel %vm8127, %v8094, %v8126
        %v8144 = vsel %vm8127, %v8096, %v8064
        %v8145 = vsel %vm8127, %v8098, %v8066
        %v8146 = vsel %vm8127, %v8100, %v8068
        %v8147 = vsel %vm8127, %v8102, %v8070
        %v8148 = vsel %vm8127, %v8104, %v8072
        %v8149 = vsel %vm8127, %v8106, %v8074
        %v8150 = vsel %vm8127, %v8108, %v8076
        %v8151 = vsel %vm8127, %v8110, %v8078
        %v8152 = vsel %vm8127, %v8112, %v8080
        %v8153 = vsel %vm8127, %v8114, %v8082
        %v8154 = vsel %vm8127, %v8116, %v8084
        %v8155 = vsel %vm8127, %v8118, %v8086
        %v8156 = vsel %vm8127, %v8120, %v8088
        %v8157 = vsel %vm8127, %v8122, %v8090
        %v8158 = vsel %vm8127, %v8124, %v8092
        %v8159 = vsel %vm8127, %v8126, %v8094
        %vm8160 = vcmp.lt.s32.totalorder %v395, 208
        %vm8161 = vmand %vm8160, %vm6662
        %v8162 = vsel %vm8161, 1, 0
        %v8163 = vlaneseq
        %v8164 = vshrl.u32 %v8163, 7
        %v8165 = vsub.s32 0, %v8164
        %v8166 = vrot.slane %v8162, %v8165
        %v8167 = vlaneseq
        %v8168 = vshrl.u32 %v8167, 7
        %v8169 = vsub.s32 2, %v8168
        %v8170 = vrot.slane %v8162, %v8169
        %v8171 = vlaneseq
        %v8172 = vshrl.u32 %v8171, 7
        %v8173 = vsub.s32 0, %v8172
        %v8174 = vrot.slane %v8166, %v8173
        %v8175 = vlaneseq
        %v8176 = vshrl.u32 %v8175, 7
        %v8177 = vsub.s32 0, %v8176
        %v8178 = vrot.slane %v8170, %v8177
        %vm8179 = vcmp.eq.s32.totalorder %v8174, 1
        %vm8180 = vcmp.eq.s32.totalorder %v8178, 1
        %v8181 = vsel %vm8179, %v8128, 0.0
        %v8182 = vsel %vm8180, %v8144, 0.0
        %v8183 = vsel %vm8179, %v8129, 0.0
        %v8184 = vsel %vm8180, %v8145, 0.0
        %v8185 = vsel %vm8179, %v8130, 0.0
        %v8186 = vsel %vm8180, %v8146, 0.0
        %v8187 = vsel %vm8179, %v8131, 0.0
        %v8188 = vsel %vm8180, %v8147, 0.0
        %v8189 = vsel %vm8179, %v8132, 0.0
        %v8190 = vsel %vm8180, %v8148, 0.0
        %v8191 = vsel %vm8179, %v8133, 0.0
        %v8192 = vsel %vm8180, %v8149, 0.0
        %v8193 = vsel %vm8179, %v8134, 0.0
        %v8194 = vsel %vm8180, %v8150, 0.0
        %v8195 = vsel %vm8179, %v8135, 0.0
        %v8196 = vsel %vm8180, %v8151, 0.0
        %v8197 = vsel %vm8179, %v8136, 0.0
        %v8198 = vsel %vm8180, %v8152, 0.0
        %v8199 = vsel %vm8179, %v8137, 0.0
        %v8200 = vsel %vm8180, %v8153, 0.0
        %v8201 = vsel %vm8179, %v8138, 0.0
        %v8202 = vsel %vm8180, %v8154, 0.0
        %v8203 = vsel %vm8179, %v8139, 0.0
        %v8204 = vsel %vm8180, %v8155, 0.0
        %v8205 = vsel %vm8179, %v8140, 0.0
        %v8206 = vsel %vm8180, %v8156, 0.0
        %v8207 = vsel %vm8179, %v8141, 0.0
        %v8208 = vsel %vm8180, %v8157, 0.0
        %v8209 = vsel %vm8179, %v8142, 0.0
        %v8210 = vsel %vm8180, %v8158, 0.0
        %v8211 = vsel %vm8179, %v8143, 0.0
        %v8212 = vsel %vm8180, %v8159, 0.0
        %8213 = vset.pattern.permute.xlu0 6
        %8214 = vperm.xlu0 %8213, %v6544
        %v8215 = vpop.permute.xlu0 %8214
        %8217 = vset.pattern.permute.xlu0 6
        %8218 = vperm.xlu0 %8217, %v6545
        %v8219 = vpop.permute.xlu0 %8218
        %8221 = vset.pattern.permute.xlu0 6
        %8222 = vperm.xlu0 %8221, %v6546
        %v8223 = vpop.permute.xlu0 %8222
        %8225 = vset.pattern.permute.xlu0 6
        %8226 = vperm.xlu0 %8225, %v6547
        %v8227 = vpop.permute.xlu0 %8226
        %8229 = vset.pattern.permute.xlu0 6
        %8230 = vperm.xlu0 %8229, %v6548
        %v8231 = vpop.permute.xlu0 %8230
        %8233 = vset.pattern.permute.xlu0 6
        %8234 = vperm.xlu0 %8233, %v6549
        %v8235 = vpop.permute.xlu0 %8234
        %8237 = vset.pattern.permute.xlu0 6
        %8238 = vperm.xlu0 %8237, %v6550
        %v8239 = vpop.permute.xlu0 %8238
        %8241 = vset.pattern.permute.xlu0 6
        %8242 = vperm.xlu0 %8241, %v6551
        %v8243 = vpop.permute.xlu0 %8242
        %8245 = vset.pattern.permute.xlu0 6
        %8246 = vperm.xlu0 %8245, %v6552
        %v8247 = vpop.permute.xlu0 %8246
        %8249 = vset.pattern.permute.xlu0 6
        %8250 = vperm.xlu0 %8249, %v6553
        %v8251 = vpop.permute.xlu0 %8250
        %8253 = vset.pattern.permute.xlu0 6
        %8254 = vperm.xlu0 %8253, %v6554
        %v8255 = vpop.permute.xlu0 %8254
        %8257 = vset.pattern.permute.xlu0 6
        %8258 = vperm.xlu0 %8257, %v6555
        %v8259 = vpop.permute.xlu0 %8258
        %8261 = vset.pattern.permute.xlu0 6
        %8262 = vperm.xlu0 %8261, %v6556
        %v8263 = vpop.permute.xlu0 %8262
        %8265 = vset.pattern.permute.xlu0 6
        %8266 = vperm.xlu0 %8265, %v6557
        %v8267 = vpop.permute.xlu0 %8266
        %8269 = vset.pattern.permute.xlu0 6
        %8270 = vperm.xlu0 %8269, %v6558
        %v8271 = vpop.permute.xlu0 %8270
        %8273 = vset.pattern.permute.xlu0 6
        %8274 = vperm.xlu0 %8273, %v6559
        %v8275 = vpop.permute.xlu0 %8274
        %v8277 = vmul.f32 %v8181, %v8215
        %v8278 = vmul.f32 %v8182, %v8215
        %v8279 = vmul.f32 %v8183, %v8219
        %v8280 = vmul.f32 %v8184, %v8219
        %v8281 = vmul.f32 %v8185, %v8223
        %v8282 = vmul.f32 %v8186, %v8223
        %v8283 = vmul.f32 %v8187, %v8227
        %v8284 = vmul.f32 %v8188, %v8227
        %v8285 = vmul.f32 %v8189, %v8231
        %v8286 = vmul.f32 %v8190, %v8231
        %v8287 = vmul.f32 %v8191, %v8235
        %v8288 = vmul.f32 %v8192, %v8235
        %v8289 = vmul.f32 %v8193, %v8239
        %v8290 = vmul.f32 %v8194, %v8239
        %v8291 = vmul.f32 %v8195, %v8243
        %v8292 = vmul.f32 %v8196, %v8243
        %v8293 = vmul.f32 %v8197, %v8247
        %v8294 = vmul.f32 %v8198, %v8247
        %v8295 = vmul.f32 %v8199, %v8251
        %v8296 = vmul.f32 %v8200, %v8251
        %v8297 = vmul.f32 %v8201, %v8255
        %v8298 = vmul.f32 %v8202, %v8255
        %v8299 = vmul.f32 %v8203, %v8259
        %v8300 = vmul.f32 %v8204, %v8259
        %v8301 = vmul.f32 %v8205, %v8263
        %v8302 = vmul.f32 %v8206, %v8263
        %v8303 = vmul.f32 %v8207, %v8267
        %v8304 = vmul.f32 %v8208, %v8267
        %v8305 = vmul.f32 %v8209, %v8271
        %v8306 = vmul.f32 %v8210, %v8271
        %v8307 = vmul.f32 %v8211, %v8275
        %v8308 = vmul.f32 %v8212, %v8275
        %v8309 = vadd.f32 %v8031, %v8277
        %v8310 = vadd.f32 %v8032, %v8278
        %v8311 = vadd.f32 %v8033, %v8279
        %v8312 = vadd.f32 %v8034, %v8280
        %v8313 = vadd.f32 %v8035, %v8281
        %v8314 = vadd.f32 %v8036, %v8282
        %v8315 = vadd.f32 %v8037, %v8283
        %v8316 = vadd.f32 %v8038, %v8284
        %v8317 = vadd.f32 %v8039, %v8285
        %v8318 = vadd.f32 %v8040, %v8286
        %v8319 = vadd.f32 %v8041, %v8287
        %v8320 = vadd.f32 %v8042, %v8288
        %v8321 = vadd.f32 %v8043, %v8289
        %v8322 = vadd.f32 %v8044, %v8290
        %v8323 = vadd.f32 %v8045, %v8291
        %v8324 = vadd.f32 %v8046, %v8292
        %v8325 = vadd.f32 %v8047, %v8293
        %v8326 = vadd.f32 %v8048, %v8294
        %v8327 = vadd.f32 %v8049, %v8295
        %v8328 = vadd.f32 %v8050, %v8296
        %v8329 = vadd.f32 %v8051, %v8297
        %v8330 = vadd.f32 %v8052, %v8298
        %v8331 = vadd.f32 %v8053, %v8299
        %v8332 = vadd.f32 %v8054, %v8300
        %v8333 = vadd.f32 %v8055, %v8301
        %v8334 = vadd.f32 %v8056, %v8302
        %v8335 = vadd.f32 %v8057, %v8303
        %v8336 = vadd.f32 %v8058, %v8304
        %v8337 = vadd.f32 %v8059, %v8305
        %v8338 = vadd.f32 %v8060, %v8306
        %v8339 = vadd.f32 %v8061, %v8307
        %v8340 = vadd.f32 %v8062, %v8308
        %8341 = vrot.lane.b32.xlu0 %v6466, 80
        %v8342 = vpop.permute.xlu0 %8341
        %8343 = vrot.lane.b32.xlu0 %v6470, 80
        %v8344 = vpop.permute.xlu0 %8343
        %8345 = vrot.lane.b32.xlu0 %v6476, 80
        %v8346 = vpop.permute.xlu0 %8345
        %8347 = vrot.lane.b32.xlu0 %v6480, 80
        %v8348 = vpop.permute.xlu0 %8347
        %8349 = vrot.lane.b32.xlu0 %v6486, 80
        %v8350 = vpop.permute.xlu0 %8349
        %8351 = vrot.lane.b32.xlu0 %v6490, 80
        %v8352 = vpop.permute.xlu0 %8351
        %8353 = vrot.lane.b32.xlu0 %v6496, 80
        %v8354 = vpop.permute.xlu0 %8353
        %8355 = vrot.lane.b32.xlu0 %v6500, 80
        %v8356 = vpop.permute.xlu0 %8355
        %8357 = vrot.lane.b32.xlu0 %v6506, 80
        %v8358 = vpop.permute.xlu0 %8357
        %8359 = vrot.lane.b32.xlu0 %v6510, 80
        %v8360 = vpop.permute.xlu0 %8359
        %8361 = vrot.lane.b32.xlu0 %v6516, 80
        %v8362 = vpop.permute.xlu0 %8361
        %8363 = vrot.lane.b32.xlu0 %v6520, 80
        %v8364 = vpop.permute.xlu0 %8363
        %8365 = vrot.lane.b32.xlu0 %v6526, 80
        %v8366 = vpop.permute.xlu0 %8365
        %8367 = vrot.lane.b32.xlu0 %v6530, 80
        %v8368 = vpop.permute.xlu0 %8367
        %8369 = vrot.lane.b32.xlu0 %v6536, 80
        %v8370 = vpop.permute.xlu0 %8369
        %8371 = vrot.lane.b32.xlu0 %v6540, 80
        %v8372 = vpop.permute.xlu0 %8371
        %8373 = vrot.lane.b32.xlu0 %v6468, 80
        %v8374 = vpop.permute.xlu0 %8373
        %8375 = vrot.lane.b32.xlu0 %v6472, 80
        %v8376 = vpop.permute.xlu0 %8375
        %8377 = vrot.lane.b32.xlu0 %v6478, 80
        %v8378 = vpop.permute.xlu0 %8377
        %8379 = vrot.lane.b32.xlu0 %v6482, 80
        %v8380 = vpop.permute.xlu0 %8379
        %8381 = vrot.lane.b32.xlu0 %v6488, 80
        %v8382 = vpop.permute.xlu0 %8381
        %8383 = vrot.lane.b32.xlu0 %v6492, 80
        %v8384 = vpop.permute.xlu0 %8383
        %8385 = vrot.lane.b32.xlu0 %v6498, 80
        %v8386 = vpop.permute.xlu0 %8385
        %8387 = vrot.lane.b32.xlu0 %v6502, 80
        %v8388 = vpop.permute.xlu0 %8387
        %8389 = vrot.lane.b32.xlu0 %v6508, 80
        %v8390 = vpop.permute.xlu0 %8389
        %8391 = vrot.lane.b32.xlu0 %v6512, 80
        %v8392 = vpop.permute.xlu0 %8391
        %8393 = vrot.lane.b32.xlu0 %v6518, 80
        %v8394 = vpop.permute.xlu0 %8393
        %8395 = vrot.lane.b32.xlu0 %v6522, 80
        %v8396 = vpop.permute.xlu0 %8395
        %8397 = vrot.lane.b32.xlu0 %v6528, 80
        %v8398 = vpop.permute.xlu0 %8397
        %8399 = vrot.lane.b32.xlu0 %v6532, 80
        %v8400 = vpop.permute.xlu0 %8399
        %8401 = vrot.lane.b32.xlu0 %v6538, 80
        %v8402 = vpop.permute.xlu0 %8401
        %8403 = vrot.lane.b32.xlu0 %v6542, 80
        %v8404 = vpop.permute.xlu0 %8403
        %vm8405 = vcmp.lt.s32.totalorder %v671, 80
        %v8406 = vsel %vm8405, %v8342, %v8374
        %v8407 = vsel %vm8405, %v8344, %v8376
        %v8408 = vsel %vm8405, %v8346, %v8378
        %v8409 = vsel %vm8405, %v8348, %v8380
        %v8410 = vsel %vm8405, %v8350, %v8382
        %v8411 = vsel %vm8405, %v8352, %v8384
        %v8412 = vsel %vm8405, %v8354, %v8386
        %v8413 = vsel %vm8405, %v8356, %v8388
        %v8414 = vsel %vm8405, %v8358, %v8390
        %v8415 = vsel %vm8405, %v8360, %v8392
        %v8416 = vsel %vm8405, %v8362, %v8394
        %v8417 = vsel %vm8405, %v8364, %v8396
        %v8418 = vsel %vm8405, %v8366, %v8398
        %v8419 = vsel %vm8405, %v8368, %v8400
        %v8420 = vsel %vm8405, %v8370, %v8402
        %v8421 = vsel %vm8405, %v8372, %v8404
        %v8422 = vsel %vm8405, %v8374, %v8342
        %v8423 = vsel %vm8405, %v8376, %v8344
        %v8424 = vsel %vm8405, %v8378, %v8346
        %v8425 = vsel %vm8405, %v8380, %v8348
        %v8426 = vsel %vm8405, %v8382, %v8350
        %v8427 = vsel %vm8405, %v8384, %v8352
        %v8428 = vsel %vm8405, %v8386, %v8354
        %v8429 = vsel %vm8405, %v8388, %v8356
        %v8430 = vsel %vm8405, %v8390, %v8358
        %v8431 = vsel %vm8405, %v8392, %v8360
        %v8432 = vsel %vm8405, %v8394, %v8362
        %v8433 = vsel %vm8405, %v8396, %v8364
        %v8434 = vsel %vm8405, %v8398, %v8366
        %v8435 = vsel %vm8405, %v8400, %v8368
        %v8436 = vsel %vm8405, %v8402, %v8370
        %v8437 = vsel %vm8405, %v8404, %v8372
        %v8438 = vsel %vm8160, 1, 0
        %v8439 = vlaneseq
        %v8440 = vshrl.u32 %v8439, 7
        %v8441 = vsub.s32 0, %v8440
        %v8442 = vrot.slane %v8438, %v8441
        %v8443 = vlaneseq
        %v8444 = vshrl.u32 %v8443, 7
        %v8445 = vsub.s32 2, %v8444
        %v8446 = vrot.slane %v8438, %v8445
        %v8447 = vlaneseq
        %v8448 = vshrl.u32 %v8447, 7
        %v8449 = vsub.s32 0, %v8448
        %v8450 = vrot.slane %v8442, %v8449
        %v8451 = vlaneseq
        %v8452 = vshrl.u32 %v8451, 7
        %v8453 = vsub.s32 0, %v8452
        %v8454 = vrot.slane %v8446, %v8453
        %vm8455 = vcmp.eq.s32.totalorder %v8450, 1
        %vm8456 = vcmp.eq.s32.totalorder %v8454, 1
        %v8457 = vsel %vm8455, %v8406, 0.0
        %v8458 = vsel %vm8456, %v8422, 0.0
        %v8459 = vsel %vm8455, %v8407, 0.0
        %v8460 = vsel %vm8456, %v8423, 0.0
        %v8461 = vsel %vm8455, %v8408, 0.0
        %v8462 = vsel %vm8456, %v8424, 0.0
        %v8463 = vsel %vm8455, %v8409, 0.0
        %v8464 = vsel %vm8456, %v8425, 0.0
        %v8465 = vsel %vm8455, %v8410, 0.0
        %v8466 = vsel %vm8456, %v8426, 0.0
        %v8467 = vsel %vm8455, %v8411, 0.0
        %v8468 = vsel %vm8456, %v8427, 0.0
        %v8469 = vsel %vm8455, %v8412, 0.0
        %v8470 = vsel %vm8456, %v8428, 0.0
        %v8471 = vsel %vm8455, %v8413, 0.0
        %v8472 = vsel %vm8456, %v8429, 0.0
        %v8473 = vsel %vm8455, %v8414, 0.0
        %v8474 = vsel %vm8456, %v8430, 0.0
        %v8475 = vsel %vm8455, %v8415, 0.0
        %v8476 = vsel %vm8456, %v8431, 0.0
        %v8477 = vsel %vm8455, %v8416, 0.0
        %v8478 = vsel %vm8456, %v8432, 0.0
        %v8479 = vsel %vm8455, %v8417, 0.0
        %v8480 = vsel %vm8456, %v8433, 0.0
        %v8481 = vsel %vm8455, %v8418, 0.0
        %v8482 = vsel %vm8456, %v8434, 0.0
        %v8483 = vsel %vm8455, %v8419, 0.0
        %v8484 = vsel %vm8456, %v8435, 0.0
        %v8485 = vsel %vm8455, %v8420, 0.0
        %v8486 = vsel %vm8456, %v8436, 0.0
        %v8487 = vsel %vm8455, %v8421, 0.0
        %v8488 = vsel %vm8456, %v8437, 0.0
        %8489 = vset.pattern.permute.xlu0 7
        %8490 = vperm.xlu0 %8489, %v6544
        %v8491 = vpop.permute.xlu0 %8490
        %8493 = vset.pattern.permute.xlu0 7
        %8494 = vperm.xlu0 %8493, %v6545
        %v8495 = vpop.permute.xlu0 %8494
        %8497 = vset.pattern.permute.xlu0 7
        %8498 = vperm.xlu0 %8497, %v6546
        %v8499 = vpop.permute.xlu0 %8498
        %8501 = vset.pattern.permute.xlu0 7
        %8502 = vperm.xlu0 %8501, %v6547
        %v8503 = vpop.permute.xlu0 %8502
        %8505 = vset.pattern.permute.xlu0 7
        %8506 = vperm.xlu0 %8505, %v6548
        %v8507 = vpop.permute.xlu0 %8506
        %8509 = vset.pattern.permute.xlu0 7
        %8510 = vperm.xlu0 %8509, %v6549
        %v8511 = vpop.permute.xlu0 %8510
        %8513 = vset.pattern.permute.xlu0 7
        %8514 = vperm.xlu0 %8513, %v6550
        %v8515 = vpop.permute.xlu0 %8514
        %8517 = vset.pattern.permute.xlu0 7
        %8518 = vperm.xlu0 %8517, %v6551
        %v8519 = vpop.permute.xlu0 %8518
        %8521 = vset.pattern.permute.xlu0 7
        %8522 = vperm.xlu0 %8521, %v6552
        %v8523 = vpop.permute.xlu0 %8522
        %8525 = vset.pattern.permute.xlu0 7
        %8526 = vperm.xlu0 %8525, %v6553
        %v8527 = vpop.permute.xlu0 %8526
        %8529 = vset.pattern.permute.xlu0 7
        %8530 = vperm.xlu0 %8529, %v6554
        %v8531 = vpop.permute.xlu0 %8530
        %8533 = vset.pattern.permute.xlu0 7
        %8534 = vperm.xlu0 %8533, %v6555
        %v8535 = vpop.permute.xlu0 %8534
        %8537 = vset.pattern.permute.xlu0 7
        %8538 = vperm.xlu0 %8537, %v6556
        %v8539 = vpop.permute.xlu0 %8538
        %8541 = vset.pattern.permute.xlu0 7
        %8542 = vperm.xlu0 %8541, %v6557
        %v8543 = vpop.permute.xlu0 %8542
        %8545 = vset.pattern.permute.xlu0 7
        %8546 = vperm.xlu0 %8545, %v6558
        %v8547 = vpop.permute.xlu0 %8546
        %8549 = vset.pattern.permute.xlu0 7
        %8550 = vperm.xlu0 %8549, %v6559
        %v8551 = vpop.permute.xlu0 %8550
        %v8553 = vmul.f32 %v8457, %v8491
        %v8554 = vmul.f32 %v8458, %v8491
        %v8555 = vmul.f32 %v8459, %v8495
        %v8556 = vmul.f32 %v8460, %v8495
        %v8557 = vmul.f32 %v8461, %v8499
        %v8558 = vmul.f32 %v8462, %v8499
        %v8559 = vmul.f32 %v8463, %v8503
        %v8560 = vmul.f32 %v8464, %v8503
        %v8561 = vmul.f32 %v8465, %v8507
        %v8562 = vmul.f32 %v8466, %v8507
        %v8563 = vmul.f32 %v8467, %v8511
        %v8564 = vmul.f32 %v8468, %v8511
        %v8565 = vmul.f32 %v8469, %v8515
        %v8566 = vmul.f32 %v8470, %v8515
        %v8567 = vmul.f32 %v8471, %v8519
        %v8568 = vmul.f32 %v8472, %v8519
        %v8569 = vmul.f32 %v8473, %v8523
        %v8570 = vmul.f32 %v8474, %v8523
        %v8571 = vmul.f32 %v8475, %v8527
        %v8572 = vmul.f32 %v8476, %v8527
        %v8573 = vmul.f32 %v8477, %v8531
        %v8574 = vmul.f32 %v8478, %v8531
        %v8575 = vmul.f32 %v8479, %v8535
        %v8576 = vmul.f32 %v8480, %v8535
        %v8577 = vmul.f32 %v8481, %v8539
        %v8578 = vmul.f32 %v8482, %v8539
        %v8579 = vmul.f32 %v8483, %v8543
        %v8580 = vmul.f32 %v8484, %v8543
        %v8581 = vmul.f32 %v8485, %v8547
        %v8582 = vmul.f32 %v8486, %v8547
        %v8583 = vmul.f32 %v8487, %v8551
        %v8584 = vmul.f32 %v8488, %v8551
        %v8585 = vadd.f32 %v8309, %v8553
        %v8586 = vadd.f32 %v8310, %v8554
        %v8587 = vadd.f32 %v8311, %v8555
        %v8588 = vadd.f32 %v8312, %v8556
        %v8589 = vadd.f32 %v8313, %v8557
        %v8590 = vadd.f32 %v8314, %v8558
        %v8591 = vadd.f32 %v8315, %v8559
        %v8592 = vadd.f32 %v8316, %v8560
        %v8593 = vadd.f32 %v8317, %v8561
        %v8594 = vadd.f32 %v8318, %v8562
        %v8595 = vadd.f32 %v8319, %v8563
        %v8596 = vadd.f32 %v8320, %v8564
        %v8597 = vadd.f32 %v8321, %v8565
        %v8598 = vadd.f32 %v8322, %v8566
        %v8599 = vadd.f32 %v8323, %v8567
        %v8600 = vadd.f32 %v8324, %v8568
        %v8601 = vadd.f32 %v8325, %v8569
        %v8602 = vadd.f32 %v8326, %v8570
        %v8603 = vadd.f32 %v8327, %v8571
        %v8604 = vadd.f32 %v8328, %v8572
        %v8605 = vadd.f32 %v8329, %v8573
        %v8606 = vadd.f32 %v8330, %v8574
        %v8607 = vadd.f32 %v8331, %v8575
        %v8608 = vadd.f32 %v8332, %v8576
        %v8609 = vadd.f32 %v8333, %v8577
        %v8610 = vadd.f32 %v8334, %v8578
        %v8611 = vadd.f32 %v8335, %v8579
        %v8612 = vadd.f32 %v8336, %v8580
        %v8613 = vadd.f32 %v8337, %v8581
        %v8614 = vadd.f32 %v8338, %v8582
        %v8615 = vadd.f32 %v8339, %v8583
        %v8616 = vadd.f32 %v8340, %v8584
        %8617 = vrot.lane.b32.xlu0 %v6466, 77
        %v8618 = vpop.permute.xlu0 %8617
        %8619 = vrot.lane.b32.xlu0 %v6470, 77
        %v8620 = vpop.permute.xlu0 %8619
        %8621 = vrot.lane.b32.xlu0 %v6476, 77
        %v8622 = vpop.permute.xlu0 %8621
        %8623 = vrot.lane.b32.xlu0 %v6480, 77
        %v8624 = vpop.permute.xlu0 %8623
        %8625 = vrot.lane.b32.xlu0 %v6486, 77
        %v8626 = vpop.permute.xlu0 %8625
        %8627 = vrot.lane.b32.xlu0 %v6490, 77
        %v8628 = vpop.permute.xlu0 %8627
        %8629 = vrot.lane.b32.xlu0 %v6496, 77
        %v8630 = vpop.permute.xlu0 %8629
        %8631 = vrot.lane.b32.xlu0 %v6500, 77
        %v8632 = vpop.permute.xlu0 %8631
        %8633 = vrot.lane.b32.xlu0 %v6506, 77
        %v8634 = vpop.permute.xlu0 %8633
        %8635 = vrot.lane.b32.xlu0 %v6510, 77
        %v8636 = vpop.permute.xlu0 %8635
        %8637 = vrot.lane.b32.xlu0 %v6516, 77
        %v8638 = vpop.permute.xlu0 %8637
        %8639 = vrot.lane.b32.xlu0 %v6520, 77
        %v8640 = vpop.permute.xlu0 %8639
        %8641 = vrot.lane.b32.xlu0 %v6526, 77
        %v8642 = vpop.permute.xlu0 %8641
        %8643 = vrot.lane.b32.xlu0 %v6530, 77
        %v8644 = vpop.permute.xlu0 %8643
        %8645 = vrot.lane.b32.xlu0 %v6536, 77
        %v8646 = vpop.permute.xlu0 %8645
        %8647 = vrot.lane.b32.xlu0 %v6540, 77
        %v8648 = vpop.permute.xlu0 %8647
        %8649 = vrot.lane.b32.xlu0 %v6468, 77
        %v8650 = vpop.permute.xlu0 %8649
        %8651 = vrot.lane.b32.xlu0 %v6472, 77
        %v8652 = vpop.permute.xlu0 %8651
        %8653 = vrot.lane.b32.xlu0 %v6478, 77
        %v8654 = vpop.permute.xlu0 %8653
        %8655 = vrot.lane.b32.xlu0 %v6482, 77
        %v8656 = vpop.permute.xlu0 %8655
        %8657 = vrot.lane.b32.xlu0 %v6488, 77
        %v8658 = vpop.permute.xlu0 %8657
        %8659 = vrot.lane.b32.xlu0 %v6492, 77
        %v8660 = vpop.permute.xlu0 %8659
        %8661 = vrot.lane.b32.xlu0 %v6498, 77
        %v8662 = vpop.permute.xlu0 %8661
        %8663 = vrot.lane.b32.xlu0 %v6502, 77
        %v8664 = vpop.permute.xlu0 %8663
        %8665 = vrot.lane.b32.xlu0 %v6508, 77
        %v8666 = vpop.permute.xlu0 %8665
        %8667 = vrot.lane.b32.xlu0 %v6512, 77
        %v8668 = vpop.permute.xlu0 %8667
        %8669 = vrot.lane.b32.xlu0 %v6518, 77
        %v8670 = vpop.permute.xlu0 %8669
        %8671 = vrot.lane.b32.xlu0 %v6522, 77
        %v8672 = vpop.permute.xlu0 %8671
        %8673 = vrot.lane.b32.xlu0 %v6528, 77
        %v8674 = vpop.permute.xlu0 %8673
        %8675 = vrot.lane.b32.xlu0 %v6532, 77
        %v8676 = vpop.permute.xlu0 %8675
        %8677 = vrot.lane.b32.xlu0 %v6538, 77
        %v8678 = vpop.permute.xlu0 %8677
        %8679 = vrot.lane.b32.xlu0 %v6542, 77
        %v8680 = vpop.permute.xlu0 %8679
        %vm8681 = vcmp.lt.s32.totalorder %v671, 77
        %v8682 = vsel %vm8681, %v8618, %v8650
        %v8683 = vsel %vm8681, %v8620, %v8652
        %v8684 = vsel %vm8681, %v8622, %v8654
        %v8685 = vsel %vm8681, %v8624, %v8656
        %v8686 = vsel %vm8681, %v8626, %v8658
        %v8687 = vsel %vm8681, %v8628, %v8660
        %v8688 = vsel %vm8681, %v8630, %v8662
        %v8689 = vsel %vm8681, %v8632, %v8664
        %v8690 = vsel %vm8681, %v8634, %v8666
        %v8691 = vsel %vm8681, %v8636, %v8668
        %v8692 = vsel %vm8681, %v8638, %v8670
        %v8693 = vsel %vm8681, %v8640, %v8672
        %v8694 = vsel %vm8681, %v8642, %v8674
        %v8695 = vsel %vm8681, %v8644, %v8676
        %v8696 = vsel %vm8681, %v8646, %v8678
        %v8697 = vsel %vm8681, %v8648, %v8680
        %v8698 = vsel %vm8681, %v8650, %v8618
        %v8699 = vsel %vm8681, %v8652, %v8620
        %v8700 = vsel %vm8681, %v8654, %v8622
        %v8701 = vsel %vm8681, %v8656, %v8624
        %v8702 = vsel %vm8681, %v8658, %v8626
        %v8703 = vsel %vm8681, %v8660, %v8628
        %v8704 = vsel %vm8681, %v8662, %v8630
        %v8705 = vsel %vm8681, %v8664, %v8632
        %v8706 = vsel %vm8681, %v8666, %v8634
        %v8707 = vsel %vm8681, %v8668, %v8636
        %v8708 = vsel %vm8681, %v8670, %v8638
        %v8709 = vsel %vm8681, %v8672, %v8640
        %v8710 = vsel %vm8681, %v8674, %v8642
        %v8711 = vsel %vm8681, %v8676, %v8644
        %v8712 = vsel %vm8681, %v8678, %v8646
        %v8713 = vsel %vm8681, %v8680, %v8648
        %vm8714 = vmand %vm8160, %vm7204
        %v8715 = vsel %vm8714, 1, 0
        %v8716 = vlaneseq
        %v8717 = vshrl.u32 %v8716, 7
        %v8718 = vsub.s32 0, %v8717
        %v8719 = vrot.slane %v8715, %v8718
        %v8720 = vlaneseq
        %v8721 = vshrl.u32 %v8720, 7
        %v8722 = vsub.s32 2, %v8721
        %v8723 = vrot.slane %v8715, %v8722
        %v8724 = vlaneseq
        %v8725 = vshrl.u32 %v8724, 7
        %v8726 = vsub.s32 0, %v8725
        %v8727 = vrot.slane %v8719, %v8726
        %v8728 = vlaneseq
        %v8729 = vshrl.u32 %v8728, 7
        %v8730 = vsub.s32 0, %v8729
        %v8731 = vrot.slane %v8723, %v8730
        %vm8732 = vcmp.eq.s32.totalorder %v8727, 1
        %vm8733 = vcmp.eq.s32.totalorder %v8731, 1
        %v8734 = vsel %vm8732, %v8682, 0.0
        %v8735 = vsel %vm8733, %v8698, 0.0
        %v8736 = vsel %vm8732, %v8683, 0.0
        %v8737 = vsel %vm8733, %v8699, 0.0
        %v8738 = vsel %vm8732, %v8684, 0.0
        %v8739 = vsel %vm8733, %v8700, 0.0
        %v8740 = vsel %vm8732, %v8685, 0.0
        %v8741 = vsel %vm8733, %v8701, 0.0
        %v8742 = vsel %vm8732, %v8686, 0.0
        %v8743 = vsel %vm8733, %v8702, 0.0
        %v8744 = vsel %vm8732, %v8687, 0.0
        %v8745 = vsel %vm8733, %v8703, 0.0
        %v8746 = vsel %vm8732, %v8688, 0.0
        %v8747 = vsel %vm8733, %v8704, 0.0
        %v8748 = vsel %vm8732, %v8689, 0.0
        %v8749 = vsel %vm8733, %v8705, 0.0
        %v8750 = vsel %vm8732, %v8690, 0.0
        %v8751 = vsel %vm8733, %v8706, 0.0
        %v8752 = vsel %vm8732, %v8691, 0.0
        %v8753 = vsel %vm8733, %v8707, 0.0
        %v8754 = vsel %vm8732, %v8692, 0.0
        %v8755 = vsel %vm8733, %v8708, 0.0
        %v8756 = vsel %vm8732, %v8693, 0.0
        %v8757 = vsel %vm8733, %v8709, 0.0
        %v8758 = vsel %vm8732, %v8694, 0.0
        %v8759 = vsel %vm8733, %v8710, 0.0
        %v8760 = vsel %vm8732, %v8695, 0.0
        %v8761 = vsel %vm8733, %v8711, 0.0
        %v8762 = vsel %vm8732, %v8696, 0.0
        %v8763 = vsel %vm8733, %v8712, 0.0
        %v8764 = vsel %vm8732, %v8697, 0.0
        %v8765 = vsel %vm8733, %v8713, 0.0
        %8766 = vset.pattern.permute.xlu0 8
        %8767 = vperm.xlu0 %8766, %v6544
        %v8768 = vpop.permute.xlu0 %8767
        %8770 = vset.pattern.permute.xlu0 8
        %8771 = vperm.xlu0 %8770, %v6545
        %v8772 = vpop.permute.xlu0 %8771
        %8774 = vset.pattern.permute.xlu0 8
        %8775 = vperm.xlu0 %8774, %v6546
        %v8776 = vpop.permute.xlu0 %8775
        %8778 = vset.pattern.permute.xlu0 8
        %8779 = vperm.xlu0 %8778, %v6547
        %v8780 = vpop.permute.xlu0 %8779
        %8782 = vset.pattern.permute.xlu0 8
        %8783 = vperm.xlu0 %8782, %v6548
        %v8784 = vpop.permute.xlu0 %8783
        %8786 = vset.pattern.permute.xlu0 8
        %8787 = vperm.xlu0 %8786, %v6549
        %v8788 = vpop.permute.xlu0 %8787
        %8790 = vset.pattern.permute.xlu0 8
        %8791 = vperm.xlu0 %8790, %v6550
        %v8792 = vpop.permute.xlu0 %8791
        %8794 = vset.pattern.permute.xlu0 8
        %8795 = vperm.xlu0 %8794, %v6551
        %v8796 = vpop.permute.xlu0 %8795
        %8798 = vset.pattern.permute.xlu0 8
        %8799 = vperm.xlu0 %8798, %v6552
        %v8800 = vpop.permute.xlu0 %8799
        %8802 = vset.pattern.permute.xlu0 8
        %8803 = vperm.xlu0 %8802, %v6553
        %v8804 = vpop.permute.xlu0 %8803
        %8806 = vset.pattern.permute.xlu0 8
        %8807 = vperm.xlu0 %8806, %v6554
        %v8808 = vpop.permute.xlu0 %8807
        %8810 = vset.pattern.permute.xlu0 8
        %8811 = vperm.xlu0 %8810, %v6555
        %v8812 = vpop.permute.xlu0 %8811
        %8814 = vset.pattern.permute.xlu0 8
        %8815 = vperm.xlu0 %8814, %v6556
        %v8816 = vpop.permute.xlu0 %8815
        %8818 = vset.pattern.permute.xlu0 8
        %8819 = vperm.xlu0 %8818, %v6557
        %v8820 = vpop.permute.xlu0 %8819
        %8822 = vset.pattern.permute.xlu0 8
        %8823 = vperm.xlu0 %8822, %v6558
        %v8824 = vpop.permute.xlu0 %8823
        %8826 = vset.pattern.permute.xlu0 8
        %8827 = vperm.xlu0 %8826, %v6559
        %v8828 = vpop.permute.xlu0 %8827
        %v8830 = vmul.f32 %v8734, %v8768
        %v8831 = vmul.f32 %v8735, %v8768
        %v8832 = vmul.f32 %v8736, %v8772
        %v8833 = vmul.f32 %v8737, %v8772
        %v8834 = vmul.f32 %v8738, %v8776
        %v8835 = vmul.f32 %v8739, %v8776
        %v8836 = vmul.f32 %v8740, %v8780
        %v8837 = vmul.f32 %v8741, %v8780
        %v8838 = vmul.f32 %v8742, %v8784
        %v8839 = vmul.f32 %v8743, %v8784
        %v8840 = vmul.f32 %v8744, %v8788
        %v8841 = vmul.f32 %v8745, %v8788
        %v8842 = vmul.f32 %v8746, %v8792
        %v8843 = vmul.f32 %v8747, %v8792
        %v8844 = vmul.f32 %v8748, %v8796
        %v8845 = vmul.f32 %v8749, %v8796
        %v8846 = vmul.f32 %v8750, %v8800
        %v8847 = vmul.f32 %v8751, %v8800
        %v8848 = vmul.f32 %v8752, %v8804
        %v8849 = vmul.f32 %v8753, %v8804
        %v8850 = vmul.f32 %v8754, %v8808
        %v8851 = vmul.f32 %v8755, %v8808
        %v8852 = vmul.f32 %v8756, %v8812
        %v8853 = vmul.f32 %v8757, %v8812
        %v8854 = vmul.f32 %v8758, %v8816
        %v8855 = vmul.f32 %v8759, %v8816
        %v8856 = vmul.f32 %v8760, %v8820
        %v8857 = vmul.f32 %v8761, %v8820
        %v8858 = vmul.f32 %v8762, %v8824
        %v8859 = vmul.f32 %v8763, %v8824
        %v8860 = vmul.f32 %v8764, %v8828
        %v8861 = vmul.f32 %v8765, %v8828
        %v8862 = vadd.f32 %v8585, %v8830
        %v8863 = vadd.f32 %v8586, %v8831
        %v8864 = vadd.f32 %v8587, %v8832
        %v8865 = vadd.f32 %v8588, %v8833
        %v8866 = vadd.f32 %v8589, %v8834
        %v8867 = vadd.f32 %v8590, %v8835
        %v8868 = vadd.f32 %v8591, %v8836
        %v8869 = vadd.f32 %v8592, %v8837
        %v8870 = vadd.f32 %v8593, %v8838
        %v8871 = vadd.f32 %v8594, %v8839
        %v8872 = vadd.f32 %v8595, %v8840
        %v8873 = vadd.f32 %v8596, %v8841
        %v8874 = vadd.f32 %v8597, %v8842
        %v8875 = vadd.f32 %v8598, %v8843
        %v8876 = vadd.f32 %v8599, %v8844
        %v8877 = vadd.f32 %v8600, %v8845
        %v8878 = vadd.f32 %v8601, %v8846
        %v8879 = vadd.f32 %v8602, %v8847
        %v8880 = vadd.f32 %v8603, %v8848
        %v8881 = vadd.f32 %v8604, %v8849
        %v8882 = vadd.f32 %v8605, %v8850
        %v8883 = vadd.f32 %v8606, %v8851
        %v8884 = vadd.f32 %v8607, %v8852
        %v8885 = vadd.f32 %v8608, %v8853
        %v8886 = vadd.f32 %v8609, %v8854
        %v8887 = vadd.f32 %v8610, %v8855
        %v8888 = vadd.f32 %v8611, %v8856
        %v8889 = vadd.f32 %v8612, %v8857
        %v8890 = vadd.f32 %v8613, %v8858
        %v8891 = vadd.f32 %v8614, %v8859
        %v8892 = vadd.f32 %v8615, %v8860
        %v8893 = vadd.f32 %v8616, %v8861
        %v8894 = vmul.f32 %v6318, %v8862
        %v8895 = vmul.f32 %v6319, %v8863
        %v8896 = vmul.f32 %v6320, %v8864
        %v8897 = vmul.f32 %v6321, %v8865
        %v8898 = vmul.f32 %v6322, %v8866
        %v8899 = vmul.f32 %v6323, %v8867
        %v8900 = vmul.f32 %v6324, %v8868
        %v8901 = vmul.f32 %v6325, %v8869
        %v8902 = vmul.f32 %v6326, %v8870
        %v8903 = vmul.f32 %v6327, %v8871
        %v8904 = vmul.f32 %v6328, %v8872
        %v8905 = vmul.f32 %v6329, %v8873
        %v8906 = vmul.f32 %v6330, %v8874
        %v8907 = vmul.f32 %v6331, %v8875
        %v8908 = vmul.f32 %v6332, %v8876
        %v8909 = vmul.f32 %v6333, %v8877
        %v8910 = vmul.f32 %v6334, %v8878
        %v8911 = vmul.f32 %v6335, %v8879
        %v8912 = vmul.f32 %v6336, %v8880
        %v8913 = vmul.f32 %v6337, %v8881
        %v8914 = vmul.f32 %v6338, %v8882
        %v8915 = vmul.f32 %v6339, %v8883
        %v8916 = vmul.f32 %v6340, %v8884
        %v8917 = vmul.f32 %v6341, %v8885
        %v8918 = vmul.f32 %v6342, %v8886
        %v8919 = vmul.f32 %v6343, %v8887
        %v8920 = vmul.f32 %v6344, %v8888
        %v8921 = vmul.f32 %v6345, %v8889
        %v8922 = vmul.f32 %v6346, %v8890
        %v8923 = vmul.f32 %v6347, %v8891
        %v8924 = vmul.f32 %v6348, %v8892
        %v8925 = vmul.f32 %v6349, %v8893
        %v8926 = vld [vmem:[#allocation13] sm:$0xf]
        %v8927 = vld [vmem:[#allocation13 + $0x4] sm:$0xf]
        %v8928 = vld [vmem:[#allocation13 + $0x8] sm:$0xf]
        %v8929 = vld [vmem:[#allocation13 + $0xc] sm:$0xf]
        %v8930 = vpack.c.bf16 %v8896, %v8894
        %v8931 = vpack.c.bf16 %v8897, %v8895
        %v8932 = vpack.c.bf16 %v8900, %v8898
        %v8933 = vpack.c.bf16 %v8901, %v8899
        %v8934 = vpack.c.bf16 %v8904, %v8902
        %v8935 = vpack.c.bf16 %v8905, %v8903
        %v8936 = vpack.c.bf16 %v8908, %v8906
        %v8937 = vpack.c.bf16 %v8909, %v8907
        %v8938 = vpack.c.bf16 %v8912, %v8910
        %v8939 = vpack.c.bf16 %v8913, %v8911
        %v8940 = vpack.c.bf16 %v8916, %v8914
        %v8941 = vpack.c.bf16 %v8917, %v8915
        %v8942 = vpack.c.bf16 %v8920, %v8918
        %v8943 = vpack.c.bf16 %v8921, %v8919
        %v8944 = vpack.c.bf16 %v8924, %v8922
        %v8945 = vpack.c.bf16 %v8925, %v8923
        %v8950 = vunpack.c.l.b16 %v8926
        %v8951 = vunpack.c.l.b16 %v8927
        %v8952 = vunpack.c.l.b16 %v8928
        %v8953 = vunpack.c.l.b16 %v8929
        %v8954 = vpack.c.b16 %v8951, %v8950
        %v8955 = vpack.c.b16 %v8953, %v8952
        %8958 = vmatprep.subr.bf16.mxu0 %v8931
        %8959 = vmatpush1.bf16.msra.mxu0 %v8930
        %8960 = vmatprep.subr.bf16.mxu0 %v8933
        %8961 = vmatpush1.bf16.msra.mxu0 %v8932
        %8962 = vmatprep.subr.bf16.mxu0 %v8935
        %8963 = vmatpush1.bf16.msra.mxu0 %v8934
        %8964 = vmatprep.subr.bf16.mxu0 %v8937
        %8965 = vmatpush1.bf16.msra.mxu0 %v8936
        %8966 = vmatprep.subr.bf16.mxu0 %v8939
        %8967 = vmatpush1.bf16.msra.mxu0 %v8938
        %8968 = vmatprep.subr.bf16.mxu0 %v8941
        %8969 = vmatpush1.bf16.msra.mxu0 %v8940
        %8970 = vmatprep.subr.bf16.mxu0 %v8943
        %8971 = vmatpush1.bf16.msra.mxu0 %v8942
        %8972 = vmatprep.subr.bf16.mxu0 %v8945
        %8973 = vmatpush1.bf16.msra.mxu0 %v8944
        %8974 = vmatprep.subr.bf16.mxu0 0
        %8975 = vmatpush1.bf16.msra.mxu0 0
        %8976 = vmatprep.subr.bf16.mxu0 0
        %8977 = vmatpush1.bf16.msra.mxu0 0
        %8978 = vmatprep.subr.bf16.mxu0 0
        %8979 = vmatpush1.bf16.msra.mxu0 0
        %8980 = vmatprep.subr.bf16.mxu0 0
        %8981 = vmatpush1.bf16.msra.mxu0 0
        %8982 = vmatprep.subr.bf16.mxu0 0
        %8983 = vmatpush1.bf16.msra.mxu0 0
        %8984 = vmatprep.subr.bf16.mxu0 0
        %8985 = vmatpush1.bf16.msra.mxu0 0
        %8986 = vmatprep.subr.bf16.mxu0 0
        %8987 = vmatpush1.bf16.msra.mxu0 0
        %8988 = vmatprep.subr.bf16.mxu0 0
        %8989 = vmatpush1.bf16.msra.mxu0 0
        %8990 = vmatprep.mubr.bf16.mxu0 0
        %8991 = vmatmul.mubr.bf16.gmra.mrb[0].mxu0 %v8954
        %v8992 = vpop.f32.mrb[0].mxu0
        %v8993 = vadd.f32 0.0, %v8992
        %v8994 = vpop.f32.mrb[0].mxu0
        %v8995 = vadd.f32 0.0, %v8994
        %v8996 = vpop.f32.mrb[0].mxu0
        %v8997 = vadd.f32 0.0, %v8996
        %v8998 = vpop.f32.mrb[0].mxu0
        %v8999 = vadd.f32 0.0, %v8998
        %9000 = vmatprep.mubr.bf16.mxu0 0
        %9001 = vmatmul.mubr.bf16.gmra.mrb[0].mxu0 %v8955
        %v9002 = vpop.f32.mrb[0].mxu0
        %v9003 = vadd.f32 0.0, %v9002
        %v9004 = vpop.f32.mrb[0].mxu0
        %v9005 = vadd.f32 0.0, %v9004
        %v9006 = vpop.f32.mrb[0].mxu0
        %v9007 = vadd.f32 0.0, %v9006
        %v9008 = vpop.f32.mrb[0].mxu0
        %v9009 = vadd.f32 0.0, %v9008
        %9010 = vdwg.mxu0
        %9011 = vst [vmem:[%s381] sm:$0xff] %v8993
        %9012 = vst [vmem:[%s381 + $0x8] sm:$0xff] %v8995
        %9013 = vst [vmem:[%s381 + $0x10] sm:$0xff] %v8997
        %9014 = vst [vmem:[%s381 + $0x18] sm:$0xff] %v8999
        %9015 = vst [vmem:[%s381 + $0x20] sm:$0xff] %v9003
        %9016 = vst [vmem:[%s381 + $0x28] sm:$0xff] %v9005
        %9017 = vst [vmem:[%s381 + $0x30] sm:$0xff] %v9007
        %9018 = vst [vmem:[%s381 + $0x38] sm:$0xff] %v9009
        %s9019 = sand.u32 %s187, 1
        %s9020 = scalar_lea.sflag [#allocation4], %s9019
        %s9021 = sand.u32 %s187, 1
        %s9022 = smul.addr %s9021, 64
        %s9023 = scalar_lea.vmem [#allocation14], %s9022
        // Predicated region
        $region77: #{msfn_forward.1} parent=47 // pred_check
          %p9024 = pneg %p197
        $region78: #{msfn_forward.1} parent=47 // pred_check_branch
          %9026 = sbr.rel (%p9024) target = $region80
        $region79: #{msfn_forward.1} parent=47 // pred_region
          %s9028 = ssub.s32 1024, 1024
          %9029 = vsyncadd %s9020, %s9028
          %s9030 = smul.addr %s27, 8
          %s9031 = smul.addr %s9030, 128
          %s9032 = scalar_lea.hbm %s7, %s9031
          %s9033 = sshll.u32 %s9023, 4
          %s9034 = int_to_ptr.vmem [resolvable:$true] %s9033
          %9039 = dma.vmem_to_hbm [thread:$0]  %s9034, 1024, %s9032, %s9020, 256, 256, 16
        $region80: #{msfn_forward.1} parent=47 // pred_fallthru
          _
      $region48: #{msfn_forward.1} parent=5 // pred_fallthru
        _
      %p9040 = scmp.le.s32.totalorder 2, %s22
      // Predicated region
      $region81: #{msfn_forward.1} parent=5 // pred_check
        %p9041 = pneg %p9040
      $region82: #{msfn_forward.1} parent=5 // pred_check_branch
        %9043 = sbr.rel (%p9041) target = $region84
      $region83: #{msfn_forward.1} parent=5 // pred_region
        %s9044 = ssub.s32 %s22, 2
        // Predicated region
        $region85: #{msfn_forward.1} parent=83 // pred_check
          %p9045 = pneg %p203
        $region86: #{msfn_forward.1} parent=83 // pred_check_branch
          %9047 = sbr.rel (%p9045) target = $region88
        $region87: #{msfn_forward.1} parent=83 // pred_region
          %s9048 = sand.u32 %s188, 1
          %s9049 = scalar_lea.sflag [#allocation4], %s9048
          %s9050 = sand.u32 %s188, 1
          %s9051 = smul.addr %s9050, 64
          %s9052 = scalar_lea.vmem [#allocation14], %s9051
          %9053 = dma.done %s9049, 1024
        $region88: #{msfn_forward.1} parent=83 // pred_fallthru
          _
      $region84: #{msfn_forward.1} parent=5 // pred_fallthru
        _
    $region6: #{msfn_forward.1} parent=1 // loop_footer
      %s26 = sadd.s32 1, %s22
    $region7: #{msfn_forward.1} parent=1 // loop_footer_branch
      %21 = sbr.rel target = $region3
    $region8: #{msfn_forward.1} parent=1 // loop_exit
      _
    %9054 = vsyncpa [#allocation3], 1
    %s9055 = scalar_lea.sflag [#allocation3], 1
    %9056 = vsyncpa %s9055, 1
    %9057 = vsyncpa [#allocation6], 1
    %s9058 = scalar_lea.sflag [#allocation6], 1
    %9059 = vsyncpa %s9058, 1
    %9060 = vsyncpa [#allocation9], 1
    %9061 = vsyncpa [#allocation12], 1
    %9062 = vsyncpa [#allocation4], 1
    %s9063 = scalar_lea.sflag [#allocation4], 1
    %9064 = vsyncpa %s9063, 1

</llo_original>
